<compile_context>
chip_gen: v5e
topology: v5e:2x2
jax: 0.10.0
libtpu: 0.0.40
codegen_flags: <defaults>
</compile_context>

<pallas_src>
import numpy as np
import jax
import jax.numpy as jnp
from jax.experimental import pallas as pl
from jax.experimental.pallas import tpu as pltpu

LANE = 128  # TPU lane width; every channel-like dim is zero-padded to this.

_CONV_CFG = [
    # (cin, cout, k, stride, pad)
    (1, 8, 5, 2, 2),
    (8, 16, 3, 2, 1),
    (16, 32, 3, 2, 1),
    (32, 64, 3, 2, 1),
]
_KK0 = _CONV_CFG[0][2] ** 2   # 25 taps, layer 0
_KK = 9                       # 3x3 taps, layers 1..3


def _round_up(x, m):
    return ((x + m - 1) // m) * m


# --------------------------------------------------------------------------
# Fused Pallas kernel: 4 conv blocks + head, all VMEM resident.
# --------------------------------------------------------------------------
def _fused_audio_classifier_kernel(
        x_ref,                              # (N*H*W, 128) bf16, input bcast over lanes
        g0_ref, w0_ref,                     # layer 0: stacked gather + weight rows
        g1_ref, wk1_ref,                    # layers 1..3: stacked gather + K-stacked W
        g2_ref, wk2_ref,
        g3_ref, wk3_ref,
        epi_ref,                            # (4, 3, 128): bias / bn_scale / bn_shift
        pool_ref, wfc_ref, bfc_ref,         # head: avg-pool matrix, FC weights/biases
        o_ref):                             # (n_pad, 128) f32 padded logits
    f32 = jnp.float32
    bf16 = jnp.bfloat16

    def epilogue(acc, layer):
        # Conv bias -> ReLU -> eval-mode BatchNorm affine (module order).
        # Padded LANES stay exactly 0 (bias/scale/shift are zero-padded).
        # Padded ROWS may pick up ReLU(bias)-style garbage; this is safe by
        # construction: every downstream gather / pool matrix has all-zero
        # columns for pad rows and the wrapper slices [:n, :10].
        y = jnp.maximum(acc + epi_ref[layer, 0:1, :], 0.0)
        return y * epi_ref[layer, 1:2, :] + epi_ref[layer, 2:3, :]
        # TODO(synk): Dropout(0.5) is identity in eval mode; training-mode
        # stochastic masking is not implemented.

    # ---- conv block 0 (Cin = 1): one stacked gather matmul + VPU FMAs ------
    # big0[t*M0 + m, :] = input value read by output position m, tap t,
    # replicated across all 128 lanes (x_ref is lane-broadcast).
    big0 = jnp.dot(g0_ref[...], x_ref[...], preferred_element_type=f32)
    m0 = big0.shape[0] // _KK0
    acc0 = jnp.zeros((m0, LANE), f32)
    for t in range(_KK0):                               # static unroll, VPU FMAs
        acc0 = acc0 + big0[t * m0:(t + 1) * m0, :] * w0_ref[t:t + 1, :]
    x = epilogue(acc0, 0)                               # (M0, 128) f32

    # ---- conv blocks 1..3: 2 MXU issues each ------------------------------
    def conv_block(x_prev, g_ref, wk_ref, layer):
        xb = x_prev.astype(bf16)
        # One sublane-stacked gather matmul: rows grouped by tap.
        big = jnp.dot(g_ref[...], xb, preferred_element_type=f32)
        m_out = big.shape[0] // _KK
        # Tile-aligned row slices + lane concat -> (m_out, 9*128) patch slab.
        patches = jnp.concatenate(
            [big[t * m_out:(t + 1) * m_out, :] for t in range(_KK)], axis=-1)
        # One K-stacked weight matmul (K = 9*128), f32 accumulation on the MXU.
        acc = jnp.dot(patches.astype(bf16), wk_ref[...],
                      preferred_element_type=f32)
        return epilogue(acc, layer)

    x = conv_block(x, g1_ref, wk1_ref, 1)               # (M1, 128)
    x = conv_block(x, g2_ref, wk2_ref, 2)               # (M2, 128)
    x = conv_block(x, g3_ref, wk3_ref, 3)               # (M3_pad, 128)

    # ---- head: AdaptiveAvgPool2d(1) as a constant matmul, then FC stack ----
    pooled = jnp.dot(pool_ref[...], x.astype(bf16),
                     preferred_element_type=f32)        # (n_pad, 128)
    h = jnp.dot(pooled.astype(bf16), wfc_ref[0], preferred_element_type=f32)
    h = jnp.maximum(h + bfc_ref[0:1, :], 0.0)
    out = jnp.dot(h.astype(bf16), wfc_ref[1], preferred_element_type=f32)
    o_ref[...] = out + bfc_ref[1:2, :]                  # lane-dense (n_pad,128) store


# --------------------------------------------------------------------------
# Host-side constant construction (numpy, executed ONCE in prepare_params)
# --------------------------------------------------------------------------
def _build_gather_stacked(n, h_in, w_in, k, stride, pad, m_in_rows, m_out_rows):
    """Sublane-stacked 0/1 im2col row-gather: row t*m_out_rows + m is 1 at the
    input row read by output position m's tap t; out-of-bounds taps (spatial
    zero padding) and pad output rows simply stay all-zero."""
    h_out = (h_in + 2 * pad - k) // stride + 1
    w_out = (w_in + 2 * pad - k) // stride + 1
    g = np.zeros((k * k * m_out_rows, m_in_rows), np.float32)
    for b in range(n):
        for ho in range(h_out):
            for wo in range(w_out):
                m = (b * h_out + ho) * w_out + wo
                for i in range(k):
                    hi = ho * stride + i - pad
                    if hi < 0 or hi >= h_in:
                        continue
                    for j in range(k):
                        wi = wo * stride + j - pad
                        if wi < 0 or wi >= w_in:
                            continue
                        t = i * k + j
                        g[t * m_out_rows + m, (b * h_in + hi) * w_in + wi] = 1.0
    return g


def prepare_params(params, input_shape):
    """One-time packing of every parameter-derived kernel constant.  Nothing
    here runs in the per-call path."""
    n, cin0, h, w = input_shape
    assert cin0 == _CONV_CFG[0][0] == 1
    packed = {}

    # ---- layer 0: stacked gather over the flat input + per-tap weight rows -
    _, cout0, k0, s0, p0 = _CONV_CFG[0]
    h_out = (h + 2 * p0 - k0) // s0 + 1
    w_out = (w + 2 * p0 - k0) // s0 + 1
    m_in = n * h * w
    assert m_in % 8 == 0, "flattened input rows must be a multiple of 8"
    m0 = _round_up(n * h_out * w_out, 8)
    packed["g0"] = jnp.asarray(
        _build_gather_stacked(n, h, w, k0, s0, p0, m_in, m0), jnp.bfloat16)
    w0 = np.asarray(params["conv0"]["w"]).reshape(k0 * k0, cout0)   # cin == 1
    w0row = np.zeros((_round_up(k0 * k0, 8), LANE), np.float32)
    w0row[:k0 * k0, :cout0] = w0
    packed["w0row"] = jnp.asarray(w0row)

    # ---- layers 1..3: stacked gather matrices + K-stacked tap weights ------
    h_in, w_in, m_prev = h_out, w_out, m0
    for li in range(1, 4):
        cin_l, cout_l, k_l, s_l, p_l = _CONV_CFG[li]
        h_out = (h_in + 2 * p_l - k_l) // s_l + 1
        w_out = (w_in + 2 * p_l - k_l) // s_l + 1
        m_out = _round_up(n * h_out * w_out, 8)
        packed[f"g{li}"] = jnp.asarray(
            _build_gather_stacked(n, h_in, w_in, k_l, s_l, p_l, m_prev, m_out),
            jnp.bfloat16)
        wl = np.asarray(params[f"conv{li}"]["w"])          # (k, k, cin, cout)
        wk = np.zeros((k_l * k_l * LANE, LANE), np.float32)
        for i in range(k_l):
            for j in range(k_l):
                t = i * k_l + j
                wk[t * LANE:t * LANE + cin_l, :cout_l] = wl[i, j]
        packed[f"wk{li}"] = jnp.asarray(wk, jnp.bfloat16)
        h_in, w_in, m_prev = h_out, w_out, m_out

    # ---- per-layer epilogue constants: [bias; bn_scale; bn_shift] ----------
    epi = np.zeros((4, 3, LANE), np.float32)
    for li, (_, cout_l, *_r) in enumerate(_CONV_CFG):
        pr = {kk: np.asarray(vv) for kk, vv in params[f"conv{li}"].items()}
        scale = pr["gamma"] / np.sqrt(pr["var"] + 1e-5)
        shift = pr["beta"] - pr["mean"] * scale
        epi[li, 0, :cout_l] = pr["b"]
        epi[li, 1, :cout_l] = scale
        epi[li, 2, :cout_l] = shift
    packed["epi"] = jnp.asarray(epi)

    # ---- head: pooling matrix (zeroes pad rows) + padded FC params ---------
    n_pad = _round_up(n, 8)
    hw = h_in * w_in
    pool = np.zeros((n_pad, m_prev), np.float32)
    for b in range(n):
        pool[b, b * hw:(b + 1) * hw] = 1.0 / hw
    packed["pool"] = jnp.asarray(pool, jnp.bfloat16)

    fc1_w = np.asarray(params["fc1_w"]); fc2_w = np.asarray(params["fc2_w"])
    fc1_b = np.asarray(params["fc1_b"]); fc2_b = np.asarray(params["fc2_b"])
    wfc = np.zeros((2, LANE, LANE), np.float32)
    wfc[0, :fc1_w.shape[0], :fc1_w.shape[1]] = fc1_w
    wfc[1, :fc2_w.shape[0], :fc2_w.shape[1]] = fc2_w
    packed["wfc"] = jnp.asarray(wfc, jnp.bfloat16)
    bfc = np.zeros((2, LANE), np.float32)
    bfc[0, :fc1_b.shape[0]] = fc1_b
    bfc[1, :fc2_b.shape[0]] = fc2_b
    packed["bfc"] = jnp.asarray(bfc)
    return packed


# --------------------------------------------------------------------------
# Full forward pass (single grid-less pallas_call)
# --------------------------------------------------------------------------
def audio_classifier_forward(packed, x_nchw):
    n = x_nchw.shape[0]
    n_pad = packed["pool"].shape[0]
    # Only x-dependent per-call prep: flatten the 1-channel input and broadcast
    # it across lanes (fuses into a single tiny XLA op, ~128 KB).
    x_rep = jnp.broadcast_to(
        x_nchw.reshape(-1)[:, None], (x_nchw.size, LANE)).astype(jnp.bfloat16)

    operands = (x_rep, packed["g0"], packed["w0row"],
                packed["g1"], packed["wk1"],
                packed["g2"], packed["wk2"],
                packed["g3"], packed["wk3"],
                packed["epi"], packed["pool"], packed["wfc"], packed["bfc"])

    logits_padded = pl.pallas_call(
        _fused_audio_classifier_kernel,
        out_shape=jax.ShapeDtypeStruct((n_pad, LANE), jnp.float32),
        # No grid: whole arrays resident in VMEM, no double-buffering.
        compiler_params=pltpu.CompilerParams(
            vmem_limit_bytes=32 * 1024 * 1024),
    )(*operands)
    return logits_padded[:n, :10]


# --------------------------------------------------------------------------
# Deterministic parameter construction (matches nn.Module shapes)
# --------------------------------------------------------------------------
def init_params(key):
    params = {}
    keys = jax.random.split(key, 2 * len(_CONV_CFG) + 4)
    ki = 0
    for li, (cin, cout, k, _, _) in enumerate(_CONV_CFG):
        fan_in = cin * k * k
        wscale = 1.0 / jnp.sqrt(jnp.float32(fan_in))
        params[f"conv{li}"] = {
            "w": jax.random.normal(keys[ki], (k, k, cin, cout),
                                   jnp.float32) * wscale,
            "b": jax.random.normal(keys[ki + 1], (cout,), jnp.float32) * 0.01,
            "gamma": jnp.ones((cout,), jnp.float32),
            "beta": jnp.zeros((cout,), jnp.float32),
            "mean": jnp.zeros((cout,), jnp.float32),
            "var": jnp.ones((cout,), jnp.float32),
        }
        ki += 2
    params["fc1_w"] = jax.random.normal(keys[ki], (64, 32),
                                        jnp.float32) / jnp.sqrt(64.0)
    params["fc1_b"] = jax.random.normal(keys[ki + 1], (32,), jnp.float32) * 0.01
    params["fc2_w"] = jax.random.normal(keys[ki + 2], (32, 10),
                                        jnp.float32) / jnp.sqrt(32.0)
    params["fc2_b"] = jax.random.normal(keys[ki + 3], (10,), jnp.float32) * 0.01
    return params


# --------------------------------------------------------------------------
# Pure-JAX reference (eval mode) for a correctness sanity check
# --------------------------------------------------------------------------
def _reference_forward(params, x_nchw):
    x = jnp.transpose(x_nchw, (0, 2, 3, 1))
    for li, (cin, cout, k, s, p) in enumerate(_CONV_CFG):
        pr = params[f"conv{li}"]
        x = jax.lax.conv_general_dilated(
            x, pr["w"], window_strides=(s, s), padding=((p, p), (p, p)),
            dimension_numbers=("NHWC", "HWIO", "NHWC"))
        x = jnp.maximum(x + pr["b"], 0.0)
        scale = pr["gamma"] / jnp.sqrt(pr["var"] + 1e-5)
        x = x * scale + (pr["beta"] - pr["mean"] * scale)
    pooled = jnp.mean(x, axis=(1, 2))
    h = jnp.maximum(pooled @ params["fc1_w"] + params["fc1_b"], 0.0)
    return h @ params["fc2_w"] + params["fc2_b"]


if __name__ == "__main__":
    key = jax.random.PRNGKey(0)
    pkey, xkey = jax.random.split(key)
    params = init_params(pkey)
    # Spectrogram-like input, PyTorch NCHW convention: (batch=2, C=1, 16, 16)
    x = jax.random.normal(xkey, (2, 1, 16, 16), jnp.float32)

    packed = prepare_params(params, x.shape)        # one-time packing
    fwd = jax.jit(audio_classifier_forward)
    logits = fwd(packed, x)
    jax.block_until_ready(logits)
    assert logits.shape == (2, 10)

    # Loose tolerance: MXU operands are bf16 with f32 accumulation.
    ref = _reference_forward(params, x)
    err = float(jnp.max(jnp.abs(logits - ref)))
    assert err < 0.15, f"mismatch vs reference: max abs err = {err}"

    print("KERNEL_OK")
</pallas_src>

<mosaic_0001>
module attributes {stable_mosaic.version = 11 : i64} {
  func.func @_fused_audio_classifier_kernel(%arg0: memref<512x128xbf16, #tpu.memory_space<vmem>>, %arg1: memref<3200x512xbf16, #tpu.memory_space<vmem>>, %arg2: memref<32x128xf32, #tpu.memory_space<vmem>>, %arg3: memref<288x128xbf16, #tpu.memory_space<vmem>>, %arg4: memref<1152x128xbf16, #tpu.memory_space<vmem>>, %arg5: memref<72x32xbf16, #tpu.memory_space<vmem>>, %arg6: memref<1152x128xbf16, #tpu.memory_space<vmem>>, %arg7: memref<72x8xbf16, #tpu.memory_space<vmem>>, %arg8: memref<1152x128xbf16, #tpu.memory_space<vmem>>, %arg9: memref<4x3x128xf32, #tpu.memory_space<vmem>>, %arg10: memref<8x8xbf16, #tpu.memory_space<vmem>>, %arg11: memref<2x128x128xbf16, #tpu.memory_space<vmem>>, %arg12: memref<2x128xf32, #tpu.memory_space<vmem>>, %arg13: memref<8x128xf32, #tpu.memory_space<vmem>>) attributes {dimension_semantics = [], scalar_prefetch = 0 : i64, scratch_operands = 0 : i64, tpu.core_type = #tpu.core_type<tc>} {
    %c0 = arith.constant 0 : index
    %c0_0 = arith.constant 0 : index
    %0 = vector.load %arg1[%c0, %c0_0] : memref<3200x512xbf16, #tpu.memory_space<vmem>>, vector<3200x512xbf16>
    %c0_1 = arith.constant 0 : index
    %c0_2 = arith.constant 0 : index
    %1 = vector.load %arg0[%c0_1, %c0_2] : memref<512x128xbf16, #tpu.memory_space<vmem>>, vector<512x128xbf16>
    %cst = arith.constant dense<0.000000e+00> : vector<3200x128xf32>
    %2 = tpu.matmul %0, %1, %cst {dimension_numbers = #tpu.dot_dimension_numbers<[1], [0], [0], [1], [0, 0, 1, 1], [], []>} : vector<3200x512xbf16>, vector<512x128xbf16>, vector<3200x128xf32> -> vector<3200x128xf32>
    %cst_3 = arith.constant 0.000000e+00 : f32
    %3 = vector.broadcast %cst_3 : f32 to vector<128x128xf32>
    %4 = vector.extract_strided_slice %2 {offsets = [0, 0], sizes = [128, 128], strides = [1, 1]} : vector<3200x128xf32> to vector<128x128xf32>
    %c0_4 = arith.constant 0 : index
    %c0_5 = arith.constant 0 : index
    %5 = vector.load %arg2[%c0_4, %c0_5] : memref<32x128xf32, #tpu.memory_space<vmem>>, vector<1x128xf32>
    %6 = vector.broadcast %5 : vector<1x128xf32> to vector<128x128xf32>
    %7 = arith.mulf %4, %6 : vector<128x128xf32>
    %8 = arith.addf %3, %7 : vector<128x128xf32>
    %9 = vector.extract_strided_slice %2 {offsets = [128, 0], sizes = [128, 128], strides = [1, 1]} : vector<3200x128xf32> to vector<128x128xf32>
    %c1 = arith.constant 1 : index
    %c0_6 = arith.constant 0 : index
    %10 = vector.load %arg2[%c1, %c0_6] : memref<32x128xf32, #tpu.memory_space<vmem>>, vector<1x128xf32>
    %11 = vector.broadcast %10 : vector<1x128xf32> to vector<128x128xf32>
    %12 = arith.mulf %9, %11 : vector<128x128xf32>
    %13 = arith.addf %8, %12 : vector<128x128xf32>
    %14 = vector.extract_strided_slice %2 {offsets = [256, 0], sizes = [128, 128], strides = [1, 1]} : vector<3200x128xf32> to vector<128x128xf32>
    %c2 = arith.constant 2 : index
    %c0_7 = arith.constant 0 : index
    %15 = vector.load %arg2[%c2, %c0_7] : memref<32x128xf32, #tpu.memory_space<vmem>>, vector<1x128xf32>
    %16 = vector.broadcast %15 : vector<1x128xf32> to vector<128x128xf32>
    %17 = arith.mulf %14, %16 : vector<128x128xf32>
    %18 = arith.addf %13, %17 : vector<128x128xf32>
    %19 = vector.extract_strided_slice %2 {offsets = [384, 0], sizes = [128, 128], strides = [1, 1]} : vector<3200x128xf32> to vector<128x128xf32>
    %c3 = arith.constant 3 : index
    %c0_8 = arith.constant 0 : index
    %20 = vector.load %arg2[%c3, %c0_8] : memref<32x128xf32, #tpu.memory_space<vmem>>, vector<1x128xf32>
    %21 = vector.broadcast %20 : vector<1x128xf32> to vector<128x128xf32>
    %22 = arith.mulf %19, %21 : vector<128x128xf32>
    %23 = arith.addf %18, %22 : vector<128x128xf32>
    %24 = vector.extract_strided_slice %2 {offsets = [512, 0], sizes = [128, 128], strides = [1, 1]} : vector<3200x128xf32> to vector<128x128xf32>
    %c4 = arith.constant 4 : index
    %c0_9 = arith.constant 0 : index
    %25 = vector.load %arg2[%c4, %c0_9] : memref<32x128xf32, #tpu.memory_space<vmem>>, vector<1x128xf32>
    %26 = vector.broadcast %25 : vector<1x128xf32> to vector<128x128xf32>
    %27 = arith.mulf %24, %26 : vector<128x128xf32>
    %28 = arith.addf %23, %27 : vector<128x128xf32>
    %29 = vector.extract_strided_slice %2 {offsets = [640, 0], sizes = [128, 128], strides = [1, 1]} : vector<3200x128xf32> to vector<128x128xf32>
    %c5 = arith.constant 5 : index
    %c0_10 = arith.constant 0 : index
    %30 = vector.load %arg2[%c5, %c0_10] : memref<32x128xf32, #tpu.memory_space<vmem>>, vector<1x128xf32>
    %31 = vector.broadcast %30 : vector<1x128xf32> to vector<128x128xf32>
    %32 = arith.mulf %29, %31 : vector<128x128xf32>
    %33 = arith.addf %28, %32 : vector<128x128xf32>
    %34 = vector.extract_strided_slice %2 {offsets = [768, 0], sizes = [128, 128], strides = [1, 1]} : vector<3200x128xf32> to vector<128x128xf32>
    %c6 = arith.constant 6 : index
    %c0_11 = arith.constant 0 : index
    %35 = vector.load %arg2[%c6, %c0_11] : memref<32x128xf32, #tpu.memory_space<vmem>>, vector<1x128xf32>
    %36 = vector.broadcast %35 : vector<1x128xf32> to vector<128x128xf32>
    %37 = arith.mulf %34, %36 : vector<128x128xf32>
    %38 = arith.addf %33, %37 : vector<128x128xf32>
    %39 = vector.extract_strided_slice %2 {offsets = [896, 0], sizes = [128, 128], strides = [1, 1]} : vector<3200x128xf32> to vector<128x128xf32>
    %c7 = arith.constant 7 : index
    %c0_12 = arith.constant 0 : index
    %40 = vector.load %arg2[%c7, %c0_12] : memref<32x128xf32, #tpu.memory_space<vmem>>, vector<1x128xf32>
    %41 = vector.broadcast %40 : vector<1x128xf32> to vector<128x128xf32>
    %42 = arith.mulf %39, %41 : vector<128x128xf32>
    %43 = arith.addf %38, %42 : vector<128x128xf32>
    %44 = vector.extract_strided_slice %2 {offsets = [1024, 0], sizes = [128, 128], strides = [1, 1]} : vector<3200x128xf32> to vector<128x128xf32>
    %c8 = arith.constant 8 : index
    %c0_13 = arith.constant 0 : index
    %45 = vector.load %arg2[%c8, %c0_13] : memref<32x128xf32, #tpu.memory_space<vmem>>, vector<1x128xf32>
    %46 = vector.broadcast %45 : vector<1x128xf32> to vector<128x128xf32>
    %47 = arith.mulf %44, %46 : vector<128x128xf32>
    %48 = arith.addf %43, %47 : vector<128x128xf32>
    %49 = vector.extract_strided_slice %2 {offsets = [1152, 0], sizes = [128, 128], strides = [1, 1]} : vector<3200x128xf32> to vector<128x128xf32>
    %c9 = arith.constant 9 : index
    %c0_14 = arith.constant 0 : index
    %50 = vector.load %arg2[%c9, %c0_14] : memref<32x128xf32, #tpu.memory_space<vmem>>, vector<1x128xf32>
    %51 = vector.broadcast %50 : vector<1x128xf32> to vector<128x128xf32>
    %52 = arith.mulf %49, %51 : vector<128x128xf32>
    %53 = arith.addf %48, %52 : vector<128x128xf32>
    %54 = vector.extract_strided_slice %2 {offsets = [1280, 0], sizes = [128, 128], strides = [1, 1]} : vector<3200x128xf32> to vector<128x128xf32>
    %c10 = arith.constant 10 : index
    %c0_15 = arith.constant 0 : index
    %55 = vector.load %arg2[%c10, %c0_15] : memref<32x128xf32, #tpu.memory_space<vmem>>, vector<1x128xf32>
    %56 = vector.broadcast %55 : vector<1x128xf32> to vector<128x128xf32>
    %57 = arith.mulf %54, %56 : vector<128x128xf32>
    %58 = arith.addf %53, %57 : vector<128x128xf32>
    %59 = vector.extract_strided_slice %2 {offsets = [1408, 0], sizes = [128, 128], strides = [1, 1]} : vector<3200x128xf32> to vector<128x128xf32>
    %c11 = arith.constant 11 : index
    %c0_16 = arith.constant 0 : index
    %60 = vector.load %arg2[%c11, %c0_16] : memref<32x128xf32, #tpu.memory_space<vmem>>, vector<1x128xf32>
    %61 = vector.broadcast %60 : vector<1x128xf32> to vector<128x128xf32>
    %62 = arith.mulf %59, %61 : vector<128x128xf32>
    %63 = arith.addf %58, %62 : vector<128x128xf32>
    %64 = vector.extract_strided_slice %2 {offsets = [1536, 0], sizes = [128, 128], strides = [1, 1]} : vector<3200x128xf32> to vector<128x128xf32>
    %c12 = arith.constant 12 : index
    %c0_17 = arith.constant 0 : index
    %65 = vector.load %arg2[%c12, %c0_17] : memref<32x128xf32, #tpu.memory_space<vmem>>, vector<1x128xf32>
    %66 = vector.broadcast %65 : vector<1x128xf32> to vector<128x128xf32>
    %67 = arith.mulf %64, %66 : vector<128x128xf32>
    %68 = arith.addf %63, %67 : vector<128x128xf32>
    %69 = vector.extract_strided_slice %2 {offsets = [1664, 0], sizes = [128, 128], strides = [1, 1]} : vector<3200x128xf32> to vector<128x128xf32>
    %c13 = arith.constant 13 : index
    %c0_18 = arith.constant 0 : index
    %70 = vector.load %arg2[%c13, %c0_18] : memref<32x128xf32, #tpu.memory_space<vmem>>, vector<1x128xf32>
    %71 = vector.broadcast %70 : vector<1x128xf32> to vector<128x128xf32>
    %72 = arith.mulf %69, %71 : vector<128x128xf32>
    %73 = arith.addf %68, %72 : vector<128x128xf32>
    %74 = vector.extract_strided_slice %2 {offsets = [1792, 0], sizes = [128, 128], strides = [1, 1]} : vector<3200x128xf32> to vector<128x128xf32>
    %c14 = arith.constant 14 : index
    %c0_19 = arith.constant 0 : index
    %75 = vector.load %arg2[%c14, %c0_19] : memref<32x128xf32, #tpu.memory_space<vmem>>, vector<1x128xf32>
    %76 = vector.broadcast %75 : vector<1x128xf32> to vector<128x128xf32>
    %77 = arith.mulf %74, %76 : vector<128x128xf32>
    %78 = arith.addf %73, %77 : vector<128x128xf32>
    %79 = vector.extract_strided_slice %2 {offsets = [1920, 0], sizes = [128, 128], strides = [1, 1]} : vector<3200x128xf32> to vector<128x128xf32>
    %c15 = arith.constant 15 : index
    %c0_20 = arith.constant 0 : index
    %80 = vector.load %arg2[%c15, %c0_20] : memref<32x128xf32, #tpu.memory_space<vmem>>, vector<1x128xf32>
    %81 = vector.broadcast %80 : vector<1x128xf32> to vector<128x128xf32>
    %82 = arith.mulf %79, %81 : vector<128x128xf32>
    %83 = arith.addf %78, %82 : vector<128x128xf32>
    %84 = vector.extract_strided_slice %2 {offsets = [2048, 0], sizes = [128, 128], strides = [1, 1]} : vector<3200x128xf32> to vector<128x128xf32>
    %c16 = arith.constant 16 : index
    %c0_21 = arith.constant 0 : index
    %85 = vector.load %arg2[%c16, %c0_21] : memref<32x128xf32, #tpu.memory_space<vmem>>, vector<1x128xf32>
    %86 = vector.broadcast %85 : vector<1x128xf32> to vector<128x128xf32>
    %87 = arith.mulf %84, %86 : vector<128x128xf32>
    %88 = arith.addf %83, %87 : vector<128x128xf32>
    %89 = vector.extract_strided_slice %2 {offsets = [2176, 0], sizes = [128, 128], strides = [1, 1]} : vector<3200x128xf32> to vector<128x128xf32>
    %c17 = arith.constant 17 : index
    %c0_22 = arith.constant 0 : index
    %90 = vector.load %arg2[%c17, %c0_22] : memref<32x128xf32, #tpu.memory_space<vmem>>, vector<1x128xf32>
    %91 = vector.broadcast %90 : vector<1x128xf32> to vector<128x128xf32>
    %92 = arith.mulf %89, %91 : vector<128x128xf32>
    %93 = arith.addf %88, %92 : vector<128x128xf32>
    %94 = vector.extract_strided_slice %2 {offsets = [2304, 0], sizes = [128, 128], strides = [1, 1]} : vector<3200x128xf32> to vector<128x128xf32>
    %c18 = arith.constant 18 : index
    %c0_23 = arith.constant 0 : index
    %95 = vector.load %arg2[%c18, %c0_23] : memref<32x128xf32, #tpu.memory_space<vmem>>, vector<1x128xf32>
    %96 = vector.broadcast %95 : vector<1x128xf32> to vector<128x128xf32>
    %97 = arith.mulf %94, %96 : vector<128x128xf32>
    %98 = arith.addf %93, %97 : vector<128x128xf32>
    %99 = vector.extract_strided_slice %2 {offsets = [2432, 0], sizes = [128, 128], strides = [1, 1]} : vector<3200x128xf32> to vector<128x128xf32>
    %c19 = arith.constant 19 : index
    %c0_24 = arith.constant 0 : index
    %100 = vector.load %arg2[%c19, %c0_24] : memref<32x128xf32, #tpu.memory_space<vmem>>, vector<1x128xf32>
    %101 = vector.broadcast %100 : vector<1x128xf32> to vector<128x128xf32>
    %102 = arith.mulf %99, %101 : vector<128x128xf32>
    %103 = arith.addf %98, %102 : vector<128x128xf32>
    %104 = vector.extract_strided_slice %2 {offsets = [2560, 0], sizes = [128, 128], strides = [1, 1]} : vector<3200x128xf32> to vector<128x128xf32>
    %c20 = arith.constant 20 : index
    %c0_25 = arith.constant 0 : index
    %105 = vector.load %arg2[%c20, %c0_25] : memref<32x128xf32, #tpu.memory_space<vmem>>, vector<1x128xf32>
    %106 = vector.broadcast %105 : vector<1x128xf32> to vector<128x128xf32>
    %107 = arith.mulf %104, %106 : vector<128x128xf32>
    %108 = arith.addf %103, %107 : vector<128x128xf32>
    %109 = vector.extract_strided_slice %2 {offsets = [2688, 0], sizes = [128, 128], strides = [1, 1]} : vector<3200x128xf32> to vector<128x128xf32>
    %c21 = arith.constant 21 : index
    %c0_26 = arith.constant 0 : index
    %110 = vector.load %arg2[%c21, %c0_26] : memref<32x128xf32, #tpu.memory_space<vmem>>, vector<1x128xf32>
    %111 = vector.broadcast %110 : vector<1x128xf32> to vector<128x128xf32>
    %112 = arith.mulf %109, %111 : vector<128x128xf32>
    %113 = arith.addf %108, %112 : vector<128x128xf32>
    %114 = vector.extract_strided_slice %2 {offsets = [2816, 0], sizes = [128, 128], strides = [1, 1]} : vector<3200x128xf32> to vector<128x128xf32>
    %c22 = arith.constant 22 : index
    %c0_27 = arith.constant 0 : index
    %115 = vector.load %arg2[%c22, %c0_27] : memref<32x128xf32, #tpu.memory_space<vmem>>, vector<1x128xf32>
    %116 = vector.broadcast %115 : vector<1x128xf32> to vector<128x128xf32>
    %117 = arith.mulf %114, %116 : vector<128x128xf32>
    %118 = arith.addf %113, %117 : vector<128x128xf32>
    %119 = vector.extract_strided_slice %2 {offsets = [2944, 0], sizes = [128, 128], strides = [1, 1]} : vector<3200x128xf32> to vector<128x128xf32>
    %c23 = arith.constant 23 : index
    %c0_28 = arith.constant 0 : index
    %120 = vector.load %arg2[%c23, %c0_28] : memref<32x128xf32, #tpu.memory_space<vmem>>, vector<1x128xf32>
    %121 = vector.broadcast %120 : vector<1x128xf32> to vector<128x128xf32>
    %122 = arith.mulf %119, %121 : vector<128x128xf32>
    %123 = arith.addf %118, %122 : vector<128x128xf32>
    %124 = vector.extract_strided_slice %2 {offsets = [3072, 0], sizes = [128, 128], strides = [1, 1]} : vector<3200x128xf32> to vector<128x128xf32>
    %c24 = arith.constant 24 : index
    %c0_29 = arith.constant 0 : index
    %125 = vector.load %arg2[%c24, %c0_29] : memref<32x128xf32, #tpu.memory_space<vmem>>, vector<1x128xf32>
    %126 = vector.broadcast %125 : vector<1x128xf32> to vector<128x128xf32>
    %127 = arith.mulf %124, %126 : vector<128x128xf32>
    %128 = arith.addf %123, %127 : vector<128x128xf32>
    %c0_30 = arith.constant 0 : index
    %c0_31 = arith.constant 0 : index
    %c0_32 = arith.constant 0 : index
    %129 = vector.load %arg9[%c0_30, %c0_31, %c0_32] : memref<4x3x128xf32, #tpu.memory_space<vmem>>, vector<1x1x128xf32>
    %130 = vector.shape_cast %129 : vector<1x1x128xf32> to vector<1x128xf32>
    %131 = vector.broadcast %130 : vector<1x128xf32> to vector<128x128xf32>
    %132 = arith.addf %128, %131 : vector<128x128xf32>
    %cst_33 = arith.constant 0.000000e+00 : f32
    %133 = vector.broadcast %cst_33 : f32 to vector<128x128xf32>
    %134 = arith.maximumf %132, %133 : vector<128x128xf32>
    %c0_34 = arith.constant 0 : index
    %c1_35 = arith.constant 1 : index
    %c0_36 = arith.constant 0 : index
    %135 = vector.load %arg9[%c0_34, %c1_35, %c0_36] : memref<4x3x128xf32, #tpu.memory_space<vmem>>, vector<1x1x128xf32>
    %136 = vector.shape_cast %135 : vector<1x1x128xf32> to vector<1x128xf32>
    %137 = vector.broadcast %136 : vector<1x128xf32> to vector<128x128xf32>
    %138 = arith.mulf %134, %137 : vector<128x128xf32>
    %c0_37 = arith.constant 0 : index
    %c2_38 = arith.constant 2 : index
    %c0_39 = arith.constant 0 : index
    %139 = vector.load %arg9[%c0_37, %c2_38, %c0_39] : memref<4x3x128xf32, #tpu.memory_space<vmem>>, vector<1x1x128xf32>
    %140 = vector.shape_cast %139 : vector<1x1x128xf32> to vector<1x128xf32>
    %141 = vector.broadcast %140 : vector<1x128xf32> to vector<128x128xf32>
    %142 = arith.addf %138, %141 : vector<128x128xf32>
    %143 = arith.truncf %142 : vector<128x128xf32> to vector<128x128xbf16>
    %c0_40 = arith.constant 0 : index
    %c0_41 = arith.constant 0 : index
    %144 = vector.load %arg3[%c0_40, %c0_41] : memref<288x128xbf16, #tpu.memory_space<vmem>>, vector<288x128xbf16>
    %cst_42 = arith.constant dense<0.000000e+00> : vector<288x128xf32>
    %145 = tpu.matmul %144, %143, %cst_42 {dimension_numbers = #tpu.dot_dimension_numbers<[1], [0], [0], [1], [0, 0, 1, 1], [], []>} : vector<288x128xbf16>, vector<128x128xbf16>, vector<288x128xf32> -> vector<288x128xf32>
    %146 = vector.extract_strided_slice %145 {offsets = [0, 0], sizes = [32, 128], strides = [1, 1]} : vector<288x128xf32> to vector<32x128xf32>
    %147 = vector.extract_strided_slice %145 {offsets = [32, 0], sizes = [32, 128], strides = [1, 1]} : vector<288x128xf32> to vector<32x128xf32>
    %148 = vector.extract_strided_slice %145 {offsets = [64, 0], sizes = [32, 128], strides = [1, 1]} : vector<288x128xf32> to vector<32x128xf32>
    %149 = vector.extract_strided_slice %145 {offsets = [96, 0], sizes = [32, 128], strides = [1, 1]} : vector<288x128xf32> to vector<32x128xf32>
    %150 = vector.extract_strided_slice %145 {offsets = [128, 0], sizes = [32, 128], strides = [1, 1]} : vector<288x128xf32> to vector<32x128xf32>
    %151 = vector.extract_strided_slice %145 {offsets = [160, 0], sizes = [32, 128], strides = [1, 1]} : vector<288x128xf32> to vector<32x128xf32>
    %152 = vector.extract_strided_slice %145 {offsets = [192, 0], sizes = [32, 128], strides = [1, 1]} : vector<288x128xf32> to vector<32x128xf32>
    %153 = vector.extract_strided_slice %145 {offsets = [224, 0], sizes = [32, 128], strides = [1, 1]} : vector<288x128xf32> to vector<32x128xf32>
    %154 = vector.extract_strided_slice %145 {offsets = [256, 0], sizes = [32, 128], strides = [1, 1]} : vector<288x128xf32> to vector<32x128xf32>
    %155 = tpu.concatenate %146, %147, %148, %149, %150, %151, %152, %153, %154 in 1 : vector<32x128xf32>, vector<32x128xf32>, vector<32x128xf32>, vector<32x128xf32>, vector<32x128xf32>, vector<32x128xf32>, vector<32x128xf32>, vector<32x128xf32>, vector<32x128xf32> -> vector<32x1152xf32>
    %156 = arith.truncf %155 : vector<32x1152xf32> to vector<32x1152xbf16>
    %c0_43 = arith.constant 0 : index
    %c0_44 = arith.constant 0 : index
    %157 = vector.load %arg4[%c0_43, %c0_44] : memref<1152x128xbf16, #tpu.memory_space<vmem>>, vector<1152x128xbf16>
    %cst_45 = arith.constant dense<0.000000e+00> : vector<32x128xf32>
    %158 = tpu.matmul %156, %157, %cst_45 {dimension_numbers = #tpu.dot_dimension_numbers<[1], [0], [0], [1], [0, 0, 1, 1], [], []>} : vector<32x1152xbf16>, vector<1152x128xbf16>, vector<32x128xf32> -> vector<32x128xf32>
    %c1_46 = arith.constant 1 : index
    %c0_47 = arith.constant 0 : index
    %c0_48 = arith.constant 0 : index
    %159 = vector.load %arg9[%c1_46, %c0_47, %c0_48] : memref<4x3x128xf32, #tpu.memory_space<vmem>>, vector<1x1x128xf32>
    %160 = vector.shape_cast %159 : vector<1x1x128xf32> to vector<1x128xf32>
    %161 = vector.broadcast %160 : vector<1x128xf32> to vector<32x128xf32>
    %162 = arith.addf %158, %161 : vector<32x128xf32>
    %cst_49 = arith.constant 0.000000e+00 : f32
    %163 = vector.broadcast %cst_49 : f32 to vector<32x128xf32>
    %164 = arith.maximumf %162, %163 : vector<32x128xf32>
    %c1_50 = arith.constant 1 : index
    %c1_51 = arith.constant 1 : index
    %c0_52 = arith.constant 0 : index
    %165 = vector.load %arg9[%c1_50, %c1_51, %c0_52] : memref<4x3x128xf32, #tpu.memory_space<vmem>>, vector<1x1x128xf32>
    %166 = vector.shape_cast %165 : vector<1x1x128xf32> to vector<1x128xf32>
    %167 = vector.broadcast %166 : vector<1x128xf32> to vector<32x128xf32>
    %168 = arith.mulf %164, %167 : vector<32x128xf32>
    %c1_53 = arith.constant 1 : index
    %c2_54 = arith.constant 2 : index
    %c0_55 = arith.constant 0 : index
    %169 = vector.load %arg9[%c1_53, %c2_54, %c0_55] : memref<4x3x128xf32, #tpu.memory_space<vmem>>, vector<1x1x128xf32>
    %170 = vector.shape_cast %169 : vector<1x1x128xf32> to vector<1x128xf32>
    %171 = vector.broadcast %170 : vector<1x128xf32> to vector<32x128xf32>
    %172 = arith.addf %168, %171 : vector<32x128xf32>
    %173 = arith.truncf %172 : vector<32x128xf32> to vector<32x128xbf16>
    %c0_56 = arith.constant 0 : index
    %c0_57 = arith.constant 0 : index
    %174 = vector.load %arg5[%c0_56, %c0_57] : memref<72x32xbf16, #tpu.memory_space<vmem>>, vector<72x32xbf16>
    %cst_58 = arith.constant dense<0.000000e+00> : vector<72x128xf32>
    %175 = tpu.matmul %174, %173, %cst_58 {dimension_numbers = #tpu.dot_dimension_numbers<[1], [0], [0], [1], [0, 0, 1, 1], [], []>} : vector<72x32xbf16>, vector<32x128xbf16>, vector<72x128xf32> -> vector<72x128xf32>
    %176 = vector.extract_strided_slice %175 {offsets = [0, 0], sizes = [8, 128], strides = [1, 1]} : vector<72x128xf32> to vector<8x128xf32>
    %177 = vector.extract_strided_slice %175 {offsets = [8, 0], sizes = [8, 128], strides = [1, 1]} : vector<72x128xf32> to vector<8x128xf32>
    %178 = vector.extract_strided_slice %175 {offsets = [16, 0], sizes = [8, 128], strides = [1, 1]} : vector<72x128xf32> to vector<8x128xf32>
    %179 = vector.extract_strided_slice %175 {offsets = [24, 0], sizes = [8, 128], strides = [1, 1]} : vector<72x128xf32> to vector<8x128xf32>
    %180 = vector.extract_strided_slice %175 {offsets = [32, 0], sizes = [8, 128], strides = [1, 1]} : vector<72x128xf32> to vector<8x128xf32>
    %181 = vector.extract_strided_slice %175 {offsets = [40, 0], sizes = [8, 128], strides = [1, 1]} : vector<72x128xf32> to vector<8x128xf32>
    %182 = vector.extract_strided_slice %175 {offsets = [48, 0], sizes = [8, 128], strides = [1, 1]} : vector<72x128xf32> to vector<8x128xf32>
    %183 = vector.extract_strided_slice %175 {offsets = [56, 0], sizes = [8, 128], strides = [1, 1]} : vector<72x128xf32> to vector<8x128xf32>
    %184 = vector.extract_strided_slice %175 {offsets = [64, 0], sizes = [8, 128], strides = [1, 1]} : vector<72x128xf32> to vector<8x128xf32>
    %185 = tpu.concatenate %176, %177, %178, %179, %180, %181, %182, %183, %184 in 1 : vector<8x128xf32>, vector<8x128xf32>, vector<8x128xf32>, vector<8x128xf32>, vector<8x128xf32>, vector<8x128xf32>, vector<8x128xf32>, vector<8x128xf32>, vector<8x128xf32> -> vector<8x1152xf32>
    %186 = arith.truncf %185 : vector<8x1152xf32> to vector<8x1152xbf16>
    %c0_59 = arith.constant 0 : index
    %c0_60 = arith.constant 0 : index
    %187 = vector.load %arg6[%c0_59, %c0_60] : memref<1152x128xbf16, #tpu.memory_space<vmem>>, vector<1152x128xbf16>
    %cst_61 = arith.constant dense<0.000000e+00> : vector<8x128xf32>
    %188 = tpu.matmul %186, %187, %cst_61 {dimension_numbers = #tpu.dot_dimension_numbers<[1], [0], [0], [1], [0, 0, 1, 1], [], []>} : vector<8x1152xbf16>, vector<1152x128xbf16>, vector<8x128xf32> -> vector<8x128xf32>
    %c2_62 = arith.constant 2 : index
    %c0_63 = arith.constant 0 : index
    %c0_64 = arith.constant 0 : index
    %189 = vector.load %arg9[%c2_62, %c0_63, %c0_64] : memref<4x3x128xf32, #tpu.memory_space<vmem>>, vector<1x1x128xf32>
    %190 = vector.shape_cast %189 : vector<1x1x128xf32> to vector<1x128xf32>
    %191 = vector.broadcast %190 : vector<1x128xf32> to vector<8x128xf32>
    %192 = arith.addf %188, %191 : vector<8x128xf32>
    %cst_65 = arith.constant 0.000000e+00 : f32
    %193 = vector.broadcast %cst_65 : f32 to vector<8x128xf32>
    %194 = arith.maximumf %192, %193 : vector<8x128xf32>
    %c2_66 = arith.constant 2 : index
    %c1_67 = arith.constant 1 : index
    %c0_68 = arith.constant 0 : index
    %195 = vector.load %arg9[%c2_66, %c1_67, %c0_68] : memref<4x3x128xf32, #tpu.memory_space<vmem>>, vector<1x1x128xf32>
    %196 = vector.shape_cast %195 : vector<1x1x128xf32> to vector<1x128xf32>
    %197 = vector.broadcast %196 : vector<1x128xf32> to vector<8x128xf32>
    %198 = arith.mulf %194, %197 : vector<8x128xf32>
    %c2_69 = arith.constant 2 : index
    %c2_70 = arith.constant 2 : index
    %c0_71 = arith.constant 0 : index
    %199 = vector.load %arg9[%c2_69, %c2_70, %c0_71] : memref<4x3x128xf32, #tpu.memory_space<vmem>>, vector<1x1x128xf32>
    %200 = vector.shape_cast %199 : vector<1x1x128xf32> to vector<1x128xf32>
    %201 = vector.broadcast %200 : vector<1x128xf32> to vector<8x128xf32>
    %202 = arith.addf %198, %201 : vector<8x128xf32>
    %203 = arith.truncf %202 : vector<8x128xf32> to vector<8x128xbf16>
    %c0_72 = arith.constant 0 : index
    %c0_73 = arith.constant 0 : index
    %204 = vector.load %arg7[%c0_72, %c0_73] : memref<72x8xbf16, #tpu.memory_space<vmem>>, vector<72x8xbf16>
    %cst_74 = arith.constant dense<0.000000e+00> : vector<72x128xf32>
    %205 = tpu.matmul %204, %203, %cst_74 {dimension_numbers = #tpu.dot_dimension_numbers<[1], [0], [0], [1], [0, 0, 1, 1], [], []>} : vector<72x8xbf16>, vector<8x128xbf16>, vector<72x128xf32> -> vector<72x128xf32>
    %206 = vector.extract_strided_slice %205 {offsets = [0, 0], sizes = [8, 128], strides = [1, 1]} : vector<72x128xf32> to vector<8x128xf32>
    %207 = vector.extract_strided_slice %205 {offsets = [8, 0], sizes = [8, 128], strides = [1, 1]} : vector<72x128xf32> to vector<8x128xf32>
    %208 = vector.extract_strided_slice %205 {offsets = [16, 0], sizes = [8, 128], strides = [1, 1]} : vector<72x128xf32> to vector<8x128xf32>
    %209 = vector.extract_strided_slice %205 {offsets = [24, 0], sizes = [8, 128], strides = [1, 1]} : vector<72x128xf32> to vector<8x128xf32>
    %210 = vector.extract_strided_slice %205 {offsets = [32, 0], sizes = [8, 128], strides = [1, 1]} : vector<72x128xf32> to vector<8x128xf32>
    %211 = vector.extract_strided_slice %205 {offsets = [40, 0], sizes = [8, 128], strides = [1, 1]} : vector<72x128xf32> to vector<8x128xf32>
    %212 = vector.extract_strided_slice %205 {offsets = [48, 0], sizes = [8, 128], strides = [1, 1]} : vector<72x128xf32> to vector<8x128xf32>
    %213 = vector.extract_strided_slice %205 {offsets = [56, 0], sizes = [8, 128], strides = [1, 1]} : vector<72x128xf32> to vector<8x128xf32>
    %214 = vector.extract_strided_slice %205 {offsets = [64, 0], sizes = [8, 128], strides = [1, 1]} : vector<72x128xf32> to vector<8x128xf32>
    %215 = tpu.concatenate %206, %207, %208, %209, %210, %211, %212, %213, %214 in 1 : vector<8x128xf32>, vector<8x128xf32>, vector<8x128xf32>, vector<8x128xf32>, vector<8x128xf32>, vector<8x128xf32>, vector<8x128xf32>, vector<8x128xf32>, vector<8x128xf32> -> vector<8x1152xf32>
    %216 = arith.truncf %215 : vector<8x1152xf32> to vector<8x1152xbf16>
    %c0_75 = arith.constant 0 : index
    %c0_76 = arith.constant 0 : index
    %217 = vector.load %arg8[%c0_75, %c0_76] : memref<1152x128xbf16, #tpu.memory_space<vmem>>, vector<1152x128xbf16>
    %cst_77 = arith.constant dense<0.000000e+00> : vector<8x128xf32>
    %218 = tpu.matmul %216, %217, %cst_77 {dimension_numbers = #tpu.dot_dimension_numbers<[1], [0], [0], [1], [0, 0, 1, 1], [], []>} : vector<8x1152xbf16>, vector<1152x128xbf16>, vector<8x128xf32> -> vector<8x128xf32>
    %c3_78 = arith.constant 3 : index
    %c0_79 = arith.constant 0 : index
    %c0_80 = arith.constant 0 : index
    %219 = vector.load %arg9[%c3_78, %c0_79, %c0_80] : memref<4x3x128xf32, #tpu.memory_space<vmem>>, vector<1x1x128xf32>
    %220 = vector.shape_cast %219 : vector<1x1x128xf32> to vector<1x128xf32>
    %221 = vector.broadcast %220 : vector<1x128xf32> to vector<8x128xf32>
    %222 = arith.addf %218, %221 : vector<8x128xf32>
    %cst_81 = arith.constant 0.000000e+00 : f32
    %223 = vector.broadcast %cst_81 : f32 to vector<8x128xf32>
    %224 = arith.maximumf %222, %223 : vector<8x128xf32>
    %c3_82 = arith.constant 3 : index
    %c1_83 = arith.constant 1 : index
    %c0_84 = arith.constant 0 : index
    %225 = vector.load %arg9[%c3_82, %c1_83, %c0_84] : memref<4x3x128xf32, #tpu.memory_space<vmem>>, vector<1x1x128xf32>
    %226 = vector.shape_cast %225 : vector<1x1x128xf32> to vector<1x128xf32>
    %227 = vector.broadcast %226 : vector<1x128xf32> to vector<8x128xf32>
    %228 = arith.mulf %224, %227 : vector<8x128xf32>
    %c3_85 = arith.constant 3 : index
    %c2_86 = arith.constant 2 : index
    %c0_87 = arith.constant 0 : index
    %229 = vector.load %arg9[%c3_85, %c2_86, %c0_87] : memref<4x3x128xf32, #tpu.memory_space<vmem>>, vector<1x1x128xf32>
    %230 = vector.shape_cast %229 : vector<1x1x128xf32> to vector<1x128xf32>
    %231 = vector.broadcast %230 : vector<1x128xf32> to vector<8x128xf32>
    %232 = arith.addf %228, %231 : vector<8x128xf32>
    %c0_88 = arith.constant 0 : index
    %c0_89 = arith.constant 0 : index
    %233 = vector.load %arg10[%c0_88, %c0_89] : memref<8x8xbf16, #tpu.memory_space<vmem>>, vector<8x8xbf16>
    %234 = arith.truncf %232 : vector<8x128xf32> to vector<8x128xbf16>
    %cst_90 = arith.constant dense<0.000000e+00> : vector<8x128xf32>
    %235 = tpu.matmul %233, %234, %cst_90 {dimension_numbers = #tpu.dot_dimension_numbers<[1], [0], [0], [1], [0, 0, 1, 1], [], []>} : vector<8x8xbf16>, vector<8x128xbf16>, vector<8x128xf32> -> vector<8x128xf32>
    %236 = arith.truncf %235 : vector<8x128xf32> to vector<8x128xbf16>
    %c0_91 = arith.constant 0 : index
    %c0_92 = arith.constant 0 : index
    %c0_93 = arith.constant 0 : index
    %237 = vector.load %arg11[%c0_91, %c0_92, %c0_93] : memref<2x128x128xbf16, #tpu.memory_space<vmem>>, vector<1x128x128xbf16>
    %238 = vector.shape_cast %237 : vector<1x128x128xbf16> to vector<128x128xbf16>
    %cst_94 = arith.constant dense<0.000000e+00> : vector<8x128xf32>
    %239 = tpu.matmul %236, %238, %cst_94 {dimension_numbers = #tpu.dot_dimension_numbers<[1], [0], [0], [1], [0, 0, 1, 1], [], []>} : vector<8x128xbf16>, vector<128x128xbf16>, vector<8x128xf32> -> vector<8x128xf32>
    %c0_95 = arith.constant 0 : index
    %c0_96 = arith.constant 0 : index
    %240 = vector.load %arg12[%c0_95, %c0_96] : memref<2x128xf32, #tpu.memory_space<vmem>>, vector<1x128xf32>
    %241 = vector.broadcast %240 : vector<1x128xf32> to vector<8x128xf32>
    %242 = arith.addf %239, %241 : vector<8x128xf32>
    %cst_97 = arith.constant 0.000000e+00 : f32
    %243 = vector.broadcast %cst_97 : f32 to vector<8x128xf32>
    %244 = arith.maximumf %242, %243 : vector<8x128xf32>
    %245 = arith.truncf %244 : vector<8x128xf32> to vector<8x128xbf16>
    %c1_98 = arith.constant 1 : index
    %c0_99 = arith.constant 0 : index
    %c0_100 = arith.constant 0 : index
    %246 = vector.load %arg11[%c1_98, %c0_99, %c0_100] : memref<2x128x128xbf16, #tpu.memory_space<vmem>>, vector<1x128x128xbf16>
    %247 = vector.shape_cast %246 : vector<1x128x128xbf16> to vector<128x128xbf16>
    %cst_101 = arith.constant dense<0.000000e+00> : vector<8x128xf32>
    %248 = tpu.matmul %245, %247, %cst_101 {dimension_numbers = #tpu.dot_dimension_numbers<[1], [0], [0], [1], [0, 0, 1, 1], [], []>} : vector<8x128xbf16>, vector<128x128xbf16>, vector<8x128xf32> -> vector<8x128xf32>
    %c1_102 = arith.constant 1 : index
    %c0_103 = arith.constant 0 : index
    %249 = vector.load %arg12[%c1_102, %c0_103] : memref<2x128xf32, #tpu.memory_space<vmem>>, vector<1x128xf32>
    %250 = vector.broadcast %249 : vector<1x128xf32> to vector<8x128xf32>
    %251 = arith.addf %248, %250 : vector<8x128xf32>
    %c0_104 = arith.constant 0 : index
    %c0_105 = arith.constant 0 : index
    %252 = vector.load %arg13[%c0_104, %c0_105] : memref<8x128xf32, #tpu.memory_space<vmem>>, vector<8x128xf32>
    tpu.vector_store %arg13[%c0_104, %c0_105], %251 {strides = array<i32>} : memref<8x128xf32, #tpu.memory_space<vmem>>, vector<8x128xf32>,
    return
  }
}

</mosaic_0001>

<llo_original>
// kernel: audio_classifier_forward.1
$region0: #{audio_classifier_forward.1}
  #allocation0 [shape = 'u32[]', space=smem, size = 0x4, offset = 0x4, fixed_abs, tag = 'smem constant byte address 0x4 - core index']
  #allocation1 [shape = 'u32[72,128]{1,0:T(1,128)}', space=vmem, size = 0x9000, scoped, tag = 'internal scratch']
  %s0 = inlined_call_operand.vmem [shape: bf16[512,128], index: 0, kind: input, shape index: {}]
  %s1 = inlined_call_operand.hbm [shape: bf16[3200,512], index: 1, kind: input, shape index: {}]
  %s2 = inlined_call_operand.hbm [shape: f32[32,128], index: 2, kind: input, shape index: {}]
  %s3 = inlined_call_operand.hbm [shape: bf16[288,128], index: 3, kind: input, shape index: {}]
  %s4 = inlined_call_operand.hbm [shape: bf16[1152,128], index: 4, kind: input, shape index: {}]
  %s5 = inlined_call_operand.vmem [shape: bf16[72,32], index: 5, kind: input, shape index: {}]
  %s6 = inlined_call_operand.hbm [shape: bf16[1152,128], index: 6, kind: input, shape index: {}]
  %s7 = inlined_call_operand.vmem [shape: bf16[72,8], index: 7, kind: input, shape index: {}]
  %s8 = inlined_call_operand.hbm [shape: bf16[1152,128], index: 8, kind: input, shape index: {}]
  %s9 = inlined_call_operand.vmem [shape: f32[4,3,128], index: 9, kind: input, shape index: {}]
  %s10 = inlined_call_operand.hbm [shape: bf16[8,8], index: 10, kind: input, shape index: {}]
  %s11 = inlined_call_operand.hbm [shape: bf16[2,128,128], index: 11, kind: input, shape index: {}]
  %s12 = inlined_call_operand.hbm [shape: f32[2,128], index: 12, kind: input, shape index: {}]
  %s13 = inlined_call_operand.vmem [shape: f32[8,128], index: 13, kind: output, shape index: {}]
  %s14 = sld [smem:[#allocation0]]
  $region98: #{audio_classifier_forward.1} parent=0
    _
  %s16 = ssub.s32 1, %s14
  %s17 = scalar_select 0, %s16, %s14
  $region1: #{audio_classifier_forward.1} parent=0
    #allocation2 [shape = 'u8[3276800]{0}', space=vmem, size = 0x320000, scoped, tag = 'input window, operand 1, single buffered']
    #allocation3 [shape = 's32[1]{0}', space=sflag, size = 0x4, scoped, tag = 'scoped memory for audio_classifier_forward.1']
    #allocation4 [shape = 'u8[16384]{0}', space=vmem, size = 0x4000, scoped, tag = 'input window, operand 2, single buffered']
    #allocation5 [shape = 's32[1]{0}', space=sflag, size = 0x4, scoped, tag = 'scoped memory for audio_classifier_forward.1']
    #allocation6 [shape = 'u8[73728]{0}', space=vmem, size = 0x12000, scoped, tag = 'input window, operand 3, single buffered']
    #allocation7 [shape = 'u8[294912]{0}', space=vmem, size = 0x48000, scoped, tag = 'input window, operand 4, single buffered']
    #allocation8 [shape = 's32[1]{0}', space=sflag, size = 0x4, scoped, tag = 'scoped memory for audio_classifier_forward.1']
    #allocation9 [shape = 'u8[294912]{0}', space=vmem, size = 0x48000, scoped, tag = 'input window, operand 6, single buffered']
    #allocation10 [shape = 'u8[294912]{0}', space=vmem, size = 0x48000, scoped, tag = 'input window, operand 8, single buffered']
    #allocation11 [shape = 's32[1]{0}', space=sflag, size = 0x4, scoped, tag = 'scoped memory for audio_classifier_forward.1']
    #allocation12 [shape = 'u8[2048]{0}', space=vmem, size = 0x800, scoped, tag = 'input window, operand 10, single buffered']
    #allocation13 [shape = 'u8[65536]{0}', space=vmem, size = 0x10000, scoped, tag = 'input window, operand 11, single buffered']
    #allocation14 [shape = 's32[1]{0}', space=sflag, size = 0x4, scoped, tag = 'scoped memory for audio_classifier_forward.1']
    #allocation15 [shape = 'u8[1024]{0}', space=vmem, size = 0x400, scoped, tag = 'input window, operand 12, single buffered']
    %18 = vsyncpa [#allocation3], 0
    %19 = vsyncpa [#allocation5], 0
    %20 = vsyncpa [#allocation8], 0
    %21 = vsyncpa [#allocation11], 0
    %22 = vsyncpa [#allocation14], 0
    // Predicated region
    $region2: #{audio_classifier_forward.1} parent=1 // pred_check
      _
    $region3: #{audio_classifier_forward.1} parent=1 // pred_check_branch
      %24 = sbr.rel (0) target = $region5
    $region4: #{audio_classifier_forward.1} parent=1 // pred_region
      _
    $region5: #{audio_classifier_forward.1} parent=1 // pred_fallthru
      _
    // Predicated region
    $region6: #{audio_classifier_forward.1} parent=1 // pred_check
      _
    $region7: #{audio_classifier_forward.1} parent=1 // pred_check_branch
      %26 = sbr.rel (0) target = $region9
    $region8: #{audio_classifier_forward.1} parent=1 // pred_region
      %28 = vsyncadd [#allocation3], 0
      %s29 = sshll.u32 %s1, 4
      %s30 = int_to_ptr.hbm [resolvable:$true] %s29
      %s31 = sshll.u32 [#allocation2], 4
      %s32 = int_to_ptr.vmem [resolvable:$true] %s31
      %37 = dma.hbm_to_vmem [thread:$0]  %s30, 102400, %s32, [#allocation3], 256, 256, 16
    $region9: #{audio_classifier_forward.1} parent=1 // pred_fallthru
      _
    // Predicated region
    $region10: #{audio_classifier_forward.1} parent=1 // pred_check
      _
    $region11: #{audio_classifier_forward.1} parent=1 // pred_check_branch
      %39 = sbr.rel (0) target = $region13
    $region12: #{audio_classifier_forward.1} parent=1 // pred_region
      %41 = vsyncadd [#allocation5], 0
      %s42 = sshll.u32 %s2, 4
      %s43 = int_to_ptr.hbm [resolvable:$true] %s42
      %s44 = sshll.u32 [#allocation4], 4
      %s45 = int_to_ptr.vmem [resolvable:$true] %s44
      %50 = dma.hbm_to_vmem [thread:$0]  %s43, 512, %s45, [#allocation5], 128, 128, 8
    $region13: #{audio_classifier_forward.1} parent=1 // pred_fallthru
      _
    // Predicated region
    $region14: #{audio_classifier_forward.1} parent=1 // pred_check
      _
    $region15: #{audio_classifier_forward.1} parent=1 // pred_check_branch
      %52 = sbr.rel (0) target = $region17
    $region16: #{audio_classifier_forward.1} parent=1 // pred_region
      %54 = vsyncadd [#allocation5], 0
      %s55 = sshll.u32 %s3, 4
      %s56 = int_to_ptr.hbm [resolvable:$true] %s55
      %s57 = sshll.u32 [#allocation6], 4
      %s58 = int_to_ptr.vmem [resolvable:$true] %s57
      %63 = dma.hbm_to_vmem [thread:$0]  %s56, 2304, %s58, [#allocation5], 64, 64, 4
    $region17: #{audio_classifier_forward.1} parent=1 // pred_fallthru
      _
    // Predicated region
    $region18: #{audio_classifier_forward.1} parent=1 // pred_check
      _
    $region19: #{audio_classifier_forward.1} parent=1 // pred_check_branch
      %65 = sbr.rel (0) target = $region21
    $region20: #{audio_classifier_forward.1} parent=1 // pred_region
      %67 = vsyncadd [#allocation8], 0
      %s68 = sshll.u32 %s4, 4
      %s69 = int_to_ptr.hbm [resolvable:$true] %s68
      %s70 = sshll.u32 [#allocation7], 4
      %s71 = int_to_ptr.vmem [resolvable:$true] %s70
      %76 = dma.hbm_to_vmem [thread:$0]  %s69, 9216, %s71, [#allocation8], 64, 64, 4
    $region21: #{audio_classifier_forward.1} parent=1 // pred_fallthru
      _
    // Predicated region
    $region22: #{audio_classifier_forward.1} parent=1 // pred_check
      _
    $region23: #{audio_classifier_forward.1} parent=1 // pred_check_branch
      %78 = sbr.rel (0) target = $region25
    $region24: #{audio_classifier_forward.1} parent=1 // pred_region
      _
    $region25: #{audio_classifier_forward.1} parent=1 // pred_fallthru
      _
    // Predicated region
    $region26: #{audio_classifier_forward.1} parent=1 // pred_check
      _
    $region27: #{audio_classifier_forward.1} parent=1 // pred_check_branch
      %80 = sbr.rel (0) target = $region29
    $region28: #{audio_classifier_forward.1} parent=1 // pred_region
      %82 = vsyncadd [#allocation8], 0
      %s83 = sshll.u32 %s6, 4
      %s84 = int_to_ptr.hbm [resolvable:$true] %s83
      %s85 = sshll.u32 [#allocation9], 4
      %s86 = int_to_ptr.vmem [resolvable:$true] %s85
      %91 = dma.hbm_to_vmem [thread:$0]  %s84, 9216, %s86, [#allocation8], 64, 64, 4
    $region29: #{audio_classifier_forward.1} parent=1 // pred_fallthru
      _
    // Predicated region
    $region30: #{audio_classifier_forward.1} parent=1 // pred_check
      _
    $region31: #{audio_classifier_forward.1} parent=1 // pred_check_branch
      %93 = sbr.rel (0) target = $region33
    $region32: #{audio_classifier_forward.1} parent=1 // pred_region
      _
    $region33: #{audio_classifier_forward.1} parent=1 // pred_fallthru
      _
    // Predicated region
    $region34: #{audio_classifier_forward.1} parent=1 // pred_check
      _
    $region35: #{audio_classifier_forward.1} parent=1 // pred_check_branch
      %95 = sbr.rel (0) target = $region37
    $region36: #{audio_classifier_forward.1} parent=1 // pred_region
      %97 = vsyncadd [#allocation11], 0
      %s98 = sshll.u32 %s8, 4
      %s99 = int_to_ptr.hbm [resolvable:$true] %s98
      %s100 = sshll.u32 [#allocation10], 4
      %s101 = int_to_ptr.vmem [resolvable:$true] %s100
      %106 = dma.hbm_to_vmem [thread:$0]  %s99, 9216, %s101, [#allocation11], 64, 64, 4
    $region37: #{audio_classifier_forward.1} parent=1 // pred_fallthru
      _
    // Predicated region
    $region38: #{audio_classifier_forward.1} parent=1 // pred_check
      _
    $region39: #{audio_classifier_forward.1} parent=1 // pred_check_branch
      %108 = sbr.rel (0) target = $region41
    $region40: #{audio_classifier_forward.1} parent=1 // pred_region
      _
    $region41: #{audio_classifier_forward.1} parent=1 // pred_fallthru
      _
    // Predicated region
    $region42: #{audio_classifier_forward.1} parent=1 // pred_check
      _
    $region43: #{audio_classifier_forward.1} parent=1 // pred_check_branch
      %110 = sbr.rel (0) target = $region45
    $region44: #{audio_classifier_forward.1} parent=1 // pred_region
      %112 = vsyncadd [#allocation11], 0
      %s114 = sshll.u32 %s10, 4
      %s115 = int_to_ptr.hbm [resolvable:$true] %s114
      %s116 = sshll.u32 [#allocation12], 4
      %s117 = int_to_ptr.vmem [resolvable:$true] %s116
      %119 = dma.hbm_to_vmem [thread:$0]  %s115, 64, %s117, [#allocation11]
    $region45: #{audio_classifier_forward.1} parent=1 // pred_fallthru
      _
    // Predicated region
    $region46: #{audio_classifier_forward.1} parent=1 // pred_check
      _
    $region47: #{audio_classifier_forward.1} parent=1 // pred_check_branch
      %121 = sbr.rel (0) target = $region49
    $region48: #{audio_classifier_forward.1} parent=1 // pred_region
      %123 = vsyncadd [#allocation14], 0
      %s124 = sshll.u32 %s11, 4
      %s125 = int_to_ptr.hbm [resolvable:$true] %s124
      %s126 = sshll.u32 [#allocation13], 4
      %s127 = int_to_ptr.vmem [resolvable:$true] %s126
      %132 = dma.hbm_to_vmem [thread:$0]  %s125, 2048, %s127, [#allocation14], 64, 64, 4
    $region49: #{audio_classifier_forward.1} parent=1 // pred_fallthru
      _
    // Predicated region
    $region50: #{audio_classifier_forward.1} parent=1 // pred_check
      _
    $region51: #{audio_classifier_forward.1} parent=1 // pred_check_branch
      %134 = sbr.rel (0) target = $region53
    $region52: #{audio_classifier_forward.1} parent=1 // pred_region
      %136 = vsyncadd [#allocation14], 0
      %s138 = sshll.u32 %s12, 4
      %s139 = int_to_ptr.hbm [resolvable:$true] %s138
      %s140 = sshll.u32 [#allocation15], 4
      %s141 = int_to_ptr.vmem [resolvable:$true] %s140
      %143 = dma.hbm_to_vmem [thread:$0]  %s139, 32, %s141, [#allocation14]
    $region53: #{audio_classifier_forward.1} parent=1 // pred_fallthru
      _
    // Predicated region
    $region54: #{audio_classifier_forward.1} parent=1 // pred_check
      _
    $region55: #{audio_classifier_forward.1} parent=1 // pred_check_branch
      %145 = sbr.rel (0) target = $region57
    $region56: #{audio_classifier_forward.1} parent=1 // pred_region
      %147 = dma.done [#allocation3], 102400
    $region57: #{audio_classifier_forward.1} parent=1 // pred_fallthru
      _
    // Predicated region
    $region58: #{audio_classifier_forward.1} parent=1 // pred_check
      _
    $region59: #{audio_classifier_forward.1} parent=1 // pred_check_branch
      %149 = sbr.rel (0) target = $region61
    $region60: #{audio_classifier_forward.1} parent=1 // pred_region
      %151 = dma.done [#allocation5], 512
    $region61: #{audio_classifier_forward.1} parent=1 // pred_fallthru
      _
    // Predicated region
    $region62: #{audio_classifier_forward.1} parent=1 // pred_check
      _
    $region63: #{audio_classifier_forward.1} parent=1 // pred_check_branch
      %153 = sbr.rel (0) target = $region65
    $region64: #{audio_classifier_forward.1} parent=1 // pred_region
      %155 = dma.done [#allocation5], 2304
    $region65: #{audio_classifier_forward.1} parent=1 // pred_fallthru
      _
    // Predicated region
    $region66: #{audio_classifier_forward.1} parent=1 // pred_check
      _
    $region67: #{audio_classifier_forward.1} parent=1 // pred_check_branch
      %157 = sbr.rel (0) target = $region69
    $region68: #{audio_classifier_forward.1} parent=1 // pred_region
      %159 = dma.done [#allocation8], 9216
    $region69: #{audio_classifier_forward.1} parent=1 // pred_fallthru
      _
    // Predicated region
    $region70: #{audio_classifier_forward.1} parent=1 // pred_check
      _
    $region71: #{audio_classifier_forward.1} parent=1 // pred_check_branch
      %161 = sbr.rel (0) target = $region73
    $region72: #{audio_classifier_forward.1} parent=1 // pred_region
      %163 = dma.done [#allocation8], 9216
    $region73: #{audio_classifier_forward.1} parent=1 // pred_fallthru
      _
    // Predicated region
    $region74: #{audio_classifier_forward.1} parent=1 // pred_check
      _
    $region75: #{audio_classifier_forward.1} parent=1 // pred_check_branch
      %165 = sbr.rel (0) target = $region77
    $region76: #{audio_classifier_forward.1} parent=1 // pred_region
      %167 = dma.done [#allocation11], 9216
    $region77: #{audio_classifier_forward.1} parent=1 // pred_fallthru
      _
    // Predicated region
    $region78: #{audio_classifier_forward.1} parent=1 // pred_check
      _
    $region79: #{audio_classifier_forward.1} parent=1 // pred_check_branch
      %169 = sbr.rel (0) target = $region81
    $region80: #{audio_classifier_forward.1} parent=1 // pred_region
      %171 = dma.done [#allocation11], 64
    $region81: #{audio_classifier_forward.1} parent=1 // pred_fallthru
      _
    // Predicated region
    $region82: #{audio_classifier_forward.1} parent=1 // pred_check
      _
    $region83: #{audio_classifier_forward.1} parent=1 // pred_check_branch
      %173 = sbr.rel (0) target = $region85
    $region84: #{audio_classifier_forward.1} parent=1 // pred_region
      %175 = dma.done [#allocation14], 2048
    $region85: #{audio_classifier_forward.1} parent=1 // pred_fallthru
      _
    // Predicated region
    $region86: #{audio_classifier_forward.1} parent=1 // pred_check
      _
    $region87: #{audio_classifier_forward.1} parent=1 // pred_check_branch
      %177 = sbr.rel (0) target = $region89
    $region88: #{audio_classifier_forward.1} parent=1 // pred_region
      %179 = dma.done [#allocation14], 32
    $region89: #{audio_classifier_forward.1} parent=1 // pred_fallthru
      _
    %v181 = vld [vmem:[#allocation2] sm:$0xff]
    %v182 = vld [vmem:[#allocation2 + $0x8] sm:$0xff]
    %v183 = vld [vmem:[#allocation2 + $0x10] sm:$0xff]
    %v184 = vld [vmem:[#allocation2 + $0x18] sm:$0xff]
    %v185 = vld [vmem:[#allocation2 + $0x20] sm:$0xff]
    %v186 = vld [vmem:[#allocation2 + $0x28] sm:$0xff]
    %v187 = vld [vmem:[#allocation2 + $0x30] sm:$0xff]
    %v188 = vld [vmem:[#allocation2 + $0x38] sm:$0xff]
    %v189 = vld [vmem:[#allocation2 + $0x40] sm:$0xff]
    %v190 = vld [vmem:[#allocation2 + $0x48] sm:$0xff]
    %v191 = vld [vmem:[#allocation2 + $0x50] sm:$0xff]
    %v192 = vld [vmem:[#allocation2 + $0x58] sm:$0xff]
    %v193 = vld [vmem:[#allocation2 + $0x60] sm:$0xff]
    %v194 = vld [vmem:[#allocation2 + $0x68] sm:$0xff]
    %v195 = vld [vmem:[#allocation2 + $0x70] sm:$0xff]
    %v196 = vld [vmem:[#allocation2 + $0x78] sm:$0xff]
    %v197 = vld [vmem:[#allocation2 + $0x80] sm:$0xff]
    %v198 = vld [vmem:[#allocation2 + $0x88] sm:$0xff]
    %v199 = vld [vmem:[#allocation2 + $0x90] sm:$0xff]
    %v200 = vld [vmem:[#allocation2 + $0x98] sm:$0xff]
    %v201 = vld [vmem:[#allocation2 + $0xa0] sm:$0xff]
    %v202 = vld [vmem:[#allocation2 + $0xa8] sm:$0xff]
    %v203 = vld [vmem:[#allocation2 + $0xb0] sm:$0xff]
    %v204 = vld [vmem:[#allocation2 + $0xb8] sm:$0xff]
    %v205 = vld [vmem:[#allocation2 + $0xc0] sm:$0xff]
    %v206 = vld [vmem:[#allocation2 + $0xc8] sm:$0xff]
    %v207 = vld [vmem:[#allocation2 + $0xd0] sm:$0xff]
    %v208 = vld [vmem:[#allocation2 + $0xd8] sm:$0xff]
    %v209 = vld [vmem:[#allocation2 + $0xe0] sm:$0xff]
    %v210 = vld [vmem:[#allocation2 + $0xe8] sm:$0xff]
    %v211 = vld [vmem:[#allocation2 + $0xf0] sm:$0xff]
    %v212 = vld [vmem:[#allocation2 + $0xf8] sm:$0xff]
    %v213 = vld [vmem:[#allocation2 + $0x100] sm:$0xff]
    %v214 = vld [vmem:[#allocation2 + $0x108] sm:$0xff]
    %v215 = vld [vmem:[#allocation2 + $0x110] sm:$0xff]
    %v216 = vld [vmem:[#allocation2 + $0x118] sm:$0xff]
    %v217 = vld [vmem:[#allocation2 + $0x120] sm:$0xff]
    %v218 = vld [vmem:[#allocation2 + $0x128] sm:$0xff]
    %v219 = vld [vmem:[#allocation2 + $0x130] sm:$0xff]
    %v220 = vld [vmem:[#allocation2 + $0x138] sm:$0xff]
    %v221 = vld [vmem:[#allocation2 + $0x140] sm:$0xff]
    %v222 = vld [vmem:[#allocation2 + $0x148] sm:$0xff]
    %v223 = vld [vmem:[#allocation2 + $0x150] sm:$0xff]
    %v224 = vld [vmem:[#allocation2 + $0x158] sm:$0xff]
    %v225 = vld [vmem:[#allocation2 + $0x160] sm:$0xff]
    %v226 = vld [vmem:[#allocation2 + $0x168] sm:$0xff]
    %v227 = vld [vmem:[#allocation2 + $0x170] sm:$0xff]
    %v228 = vld [vmem:[#allocation2 + $0x178] sm:$0xff]
    %v229 = vld [vmem:[#allocation2 + $0x180] sm:$0xff]
    %v230 = vld [vmem:[#allocation2 + $0x188] sm:$0xff]
    %v231 = vld [vmem:[#allocation2 + $0x190] sm:$0xff]
    %v232 = vld [vmem:[#allocation2 + $0x198] sm:$0xff]
    %v233 = vld [vmem:[#allocation2 + $0x1a0] sm:$0xff]
    %v234 = vld [vmem:[#allocation2 + $0x1a8] sm:$0xff]
    %v235 = vld [vmem:[#allocation2 + $0x1b0] sm:$0xff]
    %v236 = vld [vmem:[#allocation2 + $0x1b8] sm:$0xff]
    %v237 = vld [vmem:[#allocation2 + $0x1c0] sm:$0xff]
    %v238 = vld [vmem:[#allocation2 + $0x1c8] sm:$0xff]
    %v239 = vld [vmem:[#allocation2 + $0x1d0] sm:$0xff]
    %v240 = vld [vmem:[#allocation2 + $0x1d8] sm:$0xff]
    %v241 = vld [vmem:[#allocation2 + $0x1e0] sm:$0xff]
    %v242 = vld [vmem:[#allocation2 + $0x1e8] sm:$0xff]
    %v243 = vld [vmem:[#allocation2 + $0x1f0] sm:$0xff]
    %v244 = vld [vmem:[#allocation2 + $0x1f8] sm:$0xff]
    %v245 = vld [vmem:[#allocation2 + $0x200] sm:$0xff]
    %v246 = vld [vmem:[#allocation2 + $0x208] sm:$0xff]
    %v247 = vld [vmem:[#allocation2 + $0x210] sm:$0xff]
    %v248 = vld [vmem:[#allocation2 + $0x218] sm:$0xff]
    %v249 = vld [vmem:[#allocation2 + $0x220] sm:$0xff]
    %v250 = vld [vmem:[#allocation2 + $0x228] sm:$0xff]
    %v251 = vld [vmem:[#allocation2 + $0x230] sm:$0xff]
    %v252 = vld [vmem:[#allocation2 + $0x238] sm:$0xff]
    %v253 = vld [vmem:[#allocation2 + $0x240] sm:$0xff]
    %v254 = vld [vmem:[#allocation2 + $0x248] sm:$0xff]
    %v255 = vld [vmem:[#allocation2 + $0x250] sm:$0xff]
    %v256 = vld [vmem:[#allocation2 + $0x258] sm:$0xff]
    %v257 = vld [vmem:[#allocation2 + $0x260] sm:$0xff]
    %v258 = vld [vmem:[#allocation2 + $0x268] sm:$0xff]
    %v259 = vld [vmem:[#allocation2 + $0x270] sm:$0xff]
    %v260 = vld [vmem:[#allocation2 + $0x278] sm:$0xff]
    %v261 = vld [vmem:[#allocation2 + $0x280] sm:$0xff]
    %v262 = vld [vmem:[#allocation2 + $0x288] sm:$0xff]
    %v263 = vld [vmem:[#allocation2 + $0x290] sm:$0xff]
    %v264 = vld [vmem:[#allocation2 + $0x298] sm:$0xff]
    %v265 = vld [vmem:[#allocation2 + $0x2a0] sm:$0xff]
    %v266 = vld [vmem:[#allocation2 + $0x2a8] sm:$0xff]
    %v267 = vld [vmem:[#allocation2 + $0x2b0] sm:$0xff]
    %v268 = vld [vmem:[#allocation2 + $0x2b8] sm:$0xff]
    %v269 = vld [vmem:[#allocation2 + $0x2c0] sm:$0xff]
    %v270 = vld [vmem:[#allocation2 + $0x2c8] sm:$0xff]
    %v271 = vld [vmem:[#allocation2 + $0x2d0] sm:$0xff]
    %v272 = vld [vmem:[#allocation2 + $0x2d8] sm:$0xff]
    %v273 = vld [vmem:[#allocation2 + $0x2e0] sm:$0xff]
    %v274 = vld [vmem:[#allocation2 + $0x2e8] sm:$0xff]
    %v275 = vld [vmem:[#allocation2 + $0x2f0] sm:$0xff]
    %v276 = vld [vmem:[#allocation2 + $0x2f8] sm:$0xff]
    %v277 = vld [vmem:[#allocation2 + $0x300] sm:$0xff]
    %v278 = vld [vmem:[#allocation2 + $0x308] sm:$0xff]
    %v279 = vld [vmem:[#allocation2 + $0x310] sm:$0xff]
    %v280 = vld [vmem:[#allocation2 + $0x318] sm:$0xff]
    %v281 = vld [vmem:[#allocation2 + $0x320] sm:$0xff]
    %v282 = vld [vmem:[#allocation2 + $0x328] sm:$0xff]
    %v283 = vld [vmem:[#allocation2 + $0x330] sm:$0xff]
    %v284 = vld [vmem:[#allocation2 + $0x338] sm:$0xff]
    %v285 = vld [vmem:[#allocation2 + $0x340] sm:$0xff]
    %v286 = vld [vmem:[#allocation2 + $0x348] sm:$0xff]
    %v287 = vld [vmem:[#allocation2 + $0x350] sm:$0xff]
    %v288 = vld [vmem:[#allocation2 + $0x358] sm:$0xff]
    %v289 = vld [vmem:[#allocation2 + $0x360] sm:$0xff]
    %v290 = vld [vmem:[#allocation2 + $0x368] sm:$0xff]
    %v291 = vld [vmem:[#allocation2 + $0x370] sm:$0xff]
    %v292 = vld [vmem:[#allocation2 + $0x378] sm:$0xff]
    %v293 = vld [vmem:[#allocation2 + $0x380] sm:$0xff]
    %v294 = vld [vmem:[#allocation2 + $0x388] sm:$0xff]
    %v295 = vld [vmem:[#allocation2 + $0x390] sm:$0xff]
    %v296 = vld [vmem:[#allocation2 + $0x398] sm:$0xff]
    %v297 = vld [vmem:[#allocation2 + $0x3a0] sm:$0xff]
    %v298 = vld [vmem:[#allocation2 + $0x3a8] sm:$0xff]
    %v299 = vld [vmem:[#allocation2 + $0x3b0] sm:$0xff]
    %v300 = vld [vmem:[#allocation2 + $0x3b8] sm:$0xff]
    %v301 = vld [vmem:[#allocation2 + $0x3c0] sm:$0xff]
    %v302 = vld [vmem:[#allocation2 + $0x3c8] sm:$0xff]
    %v303 = vld [vmem:[#allocation2 + $0x3d0] sm:$0xff]
    %v304 = vld [vmem:[#allocation2 + $0x3d8] sm:$0xff]
    %v305 = vld [vmem:[#allocation2 + $0x3e0] sm:$0xff]
    %v306 = vld [vmem:[#allocation2 + $0x3e8] sm:$0xff]
    %v307 = vld [vmem:[#allocation2 + $0x3f0] sm:$0xff]
    %v308 = vld [vmem:[#allocation2 + $0x3f8] sm:$0xff]
    %v309 = vld [vmem:[#allocation2 + $0x400] sm:$0xff]
    %v310 = vld [vmem:[#allocation2 + $0x408] sm:$0xff]
    %v311 = vld [vmem:[#allocation2 + $0x410] sm:$0xff]
    %v312 = vld [vmem:[#allocation2 + $0x418] sm:$0xff]
    %v313 = vld [vmem:[#allocation2 + $0x420] sm:$0xff]
    %v314 = vld [vmem:[#allocation2 + $0x428] sm:$0xff]
    %v315 = vld [vmem:[#allocation2 + $0x430] sm:$0xff]
    %v316 = vld [vmem:[#allocation2 + $0x438] sm:$0xff]
    %v317 = vld [vmem:[#allocation2 + $0x440] sm:$0xff]
    %v318 = vld [vmem:[#allocation2 + $0x448] sm:$0xff]
    %v319 = vld [vmem:[#allocation2 + $0x450] sm:$0xff]
    %v320 = vld [vmem:[#allocation2 + $0x458] sm:$0xff]
    %v321 = vld [vmem:[#allocation2 + $0x460] sm:$0xff]
    %v322 = vld [vmem:[#allocation2 + $0x468] sm:$0xff]
    %v323 = vld [vmem:[#allocation2 + $0x470] sm:$0xff]
    %v324 = vld [vmem:[#allocation2 + $0x478] sm:$0xff]
    %v325 = vld [vmem:[#allocation2 + $0x480] sm:$0xff]
    %v326 = vld [vmem:[#allocation2 + $0x488] sm:$0xff]
    %v327 = vld [vmem:[#allocation2 + $0x490] sm:$0xff]
    %v328 = vld [vmem:[#allocation2 + $0x498] sm:$0xff]
    %v329 = vld [vmem:[#allocation2 + $0x4a0] sm:$0xff]
    %v330 = vld [vmem:[#allocation2 + $0x4a8] sm:$0xff]
    %v331 = vld [vmem:[#allocation2 + $0x4b0] sm:$0xff]
    %v332 = vld [vmem:[#allocation2 + $0x4b8] sm:$0xff]
    %v333 = vld [vmem:[#allocation2 + $0x4c0] sm:$0xff]
    %v334 = vld [vmem:[#allocation2 + $0x4c8] sm:$0xff]
    %v335 = vld [vmem:[#allocation2 + $0x4d0] sm:$0xff]
    %v336 = vld [vmem:[#allocation2 + $0x4d8] sm:$0xff]
    %v337 = vld [vmem:[#allocation2 + $0x4e0] sm:$0xff]
    %v338 = vld [vmem:[#allocation2 + $0x4e8] sm:$0xff]
    %v339 = vld [vmem:[#allocation2 + $0x4f0] sm:$0xff]
    %v340 = vld [vmem:[#allocation2 + $0x4f8] sm:$0xff]
    %v341 = vld [vmem:[#allocation2 + $0x500] sm:$0xff]
    %v342 = vld [vmem:[#allocation2 + $0x508] sm:$0xff]
    %v343 = vld [vmem:[#allocation2 + $0x510] sm:$0xff]
    %v344 = vld [vmem:[#allocation2 + $0x518] sm:$0xff]
    %v345 = vld [vmem:[#allocation2 + $0x520] sm:$0xff]
    %v346 = vld [vmem:[#allocation2 + $0x528] sm:$0xff]
    %v347 = vld [vmem:[#allocation2 + $0x530] sm:$0xff]
    %v348 = vld [vmem:[#allocation2 + $0x538] sm:$0xff]
    %v349 = vld [vmem:[#allocation2 + $0x540] sm:$0xff]
    %v350 = vld [vmem:[#allocation2 + $0x548] sm:$0xff]
    %v351 = vld [vmem:[#allocation2 + $0x550] sm:$0xff]
    %v352 = vld [vmem:[#allocation2 + $0x558] sm:$0xff]
    %v353 = vld [vmem:[#allocation2 + $0x560] sm:$0xff]
    %v354 = vld [vmem:[#allocation2 + $0x568] sm:$0xff]
    %v355 = vld [vmem:[#allocation2 + $0x570] sm:$0xff]
    %v356 = vld [vmem:[#allocation2 + $0x578] sm:$0xff]
    %v357 = vld [vmem:[#allocation2 + $0x580] sm:$0xff]
    %v358 = vld [vmem:[#allocation2 + $0x588] sm:$0xff]
    %v359 = vld [vmem:[#allocation2 + $0x590] sm:$0xff]
    %v360 = vld [vmem:[#allocation2 + $0x598] sm:$0xff]
    %v361 = vld [vmem:[#allocation2 + $0x5a0] sm:$0xff]
    %v362 = vld [vmem:[#allocation2 + $0x5a8] sm:$0xff]
    %v363 = vld [vmem:[#allocation2 + $0x5b0] sm:$0xff]
    %v364 = vld [vmem:[#allocation2 + $0x5b8] sm:$0xff]
    %v365 = vld [vmem:[#allocation2 + $0x5c0] sm:$0xff]
    %v366 = vld [vmem:[#allocation2 + $0x5c8] sm:$0xff]
    %v367 = vld [vmem:[#allocation2 + $0x5d0] sm:$0xff]
    %v368 = vld [vmem:[#allocation2 + $0x5d8] sm:$0xff]
    %v369 = vld [vmem:[#allocation2 + $0x5e0] sm:$0xff]
    %v370 = vld [vmem:[#allocation2 + $0x5e8] sm:$0xff]
    %v371 = vld [vmem:[#allocation2 + $0x5f0] sm:$0xff]
    %v372 = vld [vmem:[#allocation2 + $0x5f8] sm:$0xff]
    %v373 = vld [vmem:[#allocation2 + $0x600] sm:$0xff]
    %v374 = vld [vmem:[#allocation2 + $0x608] sm:$0xff]
    %v375 = vld [vmem:[#allocation2 + $0x610] sm:$0xff]
    %v376 = vld [vmem:[#allocation2 + $0x618] sm:$0xff]
    %v377 = vld [vmem:[#allocation2 + $0x620] sm:$0xff]
    %v378 = vld [vmem:[#allocation2 + $0x628] sm:$0xff]
    %v379 = vld [vmem:[#allocation2 + $0x630] sm:$0xff]
    %v380 = vld [vmem:[#allocation2 + $0x638] sm:$0xff]
    %v381 = vld [vmem:[#allocation2 + $0x640] sm:$0xff]
    %v382 = vld [vmem:[#allocation2 + $0x648] sm:$0xff]
    %v383 = vld [vmem:[#allocation2 + $0x650] sm:$0xff]
    %v384 = vld [vmem:[#allocation2 + $0x658] sm:$0xff]
    %v385 = vld [vmem:[#allocation2 + $0x660] sm:$0xff]
    %v386 = vld [vmem:[#allocation2 + $0x668] sm:$0xff]
    %v387 = vld [vmem:[#allocation2 + $0x670] sm:$0xff]
    %v388 = vld [vmem:[#allocation2 + $0x678] sm:$0xff]
    %v389 = vld [vmem:[#allocation2 + $0x680] sm:$0xff]
    %v390 = vld [vmem:[#allocation2 + $0x688] sm:$0xff]
    %v391 = vld [vmem:[#allocation2 + $0x690] sm:$0xff]
    %v392 = vld [vmem:[#allocation2 + $0x698] sm:$0xff]
    %v393 = vld [vmem:[#allocation2 + $0x6a0] sm:$0xff]
    %v394 = vld [vmem:[#allocation2 + $0x6a8] sm:$0xff]
    %v395 = vld [vmem:[#allocation2 + $0x6b0] sm:$0xff]
    %v396 = vld [vmem:[#allocation2 + $0x6b8] sm:$0xff]
    %v397 = vld [vmem:[#allocation2 + $0x6c0] sm:$0xff]
    %v398 = vld [vmem:[#allocation2 + $0x6c8] sm:$0xff]
    %v399 = vld [vmem:[#allocation2 + $0x6d0] sm:$0xff]
    %v400 = vld [vmem:[#allocation2 + $0x6d8] sm:$0xff]
    %v401 = vld [vmem:[#allocation2 + $0x6e0] sm:$0xff]
    %v402 = vld [vmem:[#allocation2 + $0x6e8] sm:$0xff]
    %v403 = vld [vmem:[#allocation2 + $0x6f0] sm:$0xff]
    %v404 = vld [vmem:[#allocation2 + $0x6f8] sm:$0xff]
    %v405 = vld [vmem:[#allocation2 + $0x700] sm:$0xff]
    %v406 = vld [vmem:[#allocation2 + $0x708] sm:$0xff]
    %v407 = vld [vmem:[#allocation2 + $0x710] sm:$0xff]
    %v408 = vld [vmem:[#allocation2 + $0x718] sm:$0xff]
    %v409 = vld [vmem:[#allocation2 + $0x720] sm:$0xff]
    %v410 = vld [vmem:[#allocation2 + $0x728] sm:$0xff]
    %v411 = vld [vmem:[#allocation2 + $0x730] sm:$0xff]
    %v412 = vld [vmem:[#allocation2 + $0x738] sm:$0xff]
    %v413 = vld [vmem:[#allocation2 + $0x740] sm:$0xff]
    %v414 = vld [vmem:[#allocation2 + $0x748] sm:$0xff]
    %v415 = vld [vmem:[#allocation2 + $0x750] sm:$0xff]
    %v416 = vld [vmem:[#allocation2 + $0x758] sm:$0xff]
    %v417 = vld [vmem:[#allocation2 + $0x760] sm:$0xff]
    %v418 = vld [vmem:[#allocation2 + $0x768] sm:$0xff]
    %v419 = vld [vmem:[#allocation2 + $0x770] sm:$0xff]
    %v420 = vld [vmem:[#allocation2 + $0x778] sm:$0xff]
    %v421 = vld [vmem:[#allocation2 + $0x780] sm:$0xff]
    %v422 = vld [vmem:[#allocation2 + $0x788] sm:$0xff]
    %v423 = vld [vmem:[#allocation2 + $0x790] sm:$0xff]
    %v424 = vld [vmem:[#allocation2 + $0x798] sm:$0xff]
    %v425 = vld [vmem:[#allocation2 + $0x7a0] sm:$0xff]
    %v426 = vld [vmem:[#allocation2 + $0x7a8] sm:$0xff]
    %v427 = vld [vmem:[#allocation2 + $0x7b0] sm:$0xff]
    %v428 = vld [vmem:[#allocation2 + $0x7b8] sm:$0xff]
    %v429 = vld [vmem:[#allocation2 + $0x7c0] sm:$0xff]
    %v430 = vld [vmem:[#allocation2 + $0x7c8] sm:$0xff]
    %v431 = vld [vmem:[#allocation2 + $0x7d0] sm:$0xff]
    %v432 = vld [vmem:[#allocation2 + $0x7d8] sm:$0xff]
    %v433 = vld [vmem:[#allocation2 + $0x7e0] sm:$0xff]
    %v434 = vld [vmem:[#allocation2 + $0x7e8] sm:$0xff]
    %v435 = vld [vmem:[#allocation2 + $0x7f0] sm:$0xff]
    %v436 = vld [vmem:[#allocation2 + $0x7f8] sm:$0xff]
    %v437 = vld [vmem:[#allocation2 + $0x800] sm:$0xff]
    %v438 = vld [vmem:[#allocation2 + $0x808] sm:$0xff]
    %v439 = vld [vmem:[#allocation2 + $0x810] sm:$0xff]
    %v440 = vld [vmem:[#allocation2 + $0x818] sm:$0xff]
    %v441 = vld [vmem:[#allocation2 + $0x820] sm:$0xff]
    %v442 = vld [vmem:[#allocation2 + $0x828] sm:$0xff]
    %v443 = vld [vmem:[#allocation2 + $0x830] sm:$0xff]
    %v444 = vld [vmem:[#allocation2 + $0x838] sm:$0xff]
    %v445 = vld [vmem:[#allocation2 + $0x840] sm:$0xff]
    %v446 = vld [vmem:[#allocation2 + $0x848] sm:$0xff]
    %v447 = vld [vmem:[#allocation2 + $0x850] sm:$0xff]
    %v448 = vld [vmem:[#allocation2 + $0x858] sm:$0xff]
    %v449 = vld [vmem:[#allocation2 + $0x860] sm:$0xff]
    %v450 = vld [vmem:[#allocation2 + $0x868] sm:$0xff]
    %v451 = vld [vmem:[#allocation2 + $0x870] sm:$0xff]
    %v452 = vld [vmem:[#allocation2 + $0x878] sm:$0xff]
    %v453 = vld [vmem:[#allocation2 + $0x880] sm:$0xff]
    %v454 = vld [vmem:[#allocation2 + $0x888] sm:$0xff]
    %v455 = vld [vmem:[#allocation2 + $0x890] sm:$0xff]
    %v456 = vld [vmem:[#allocation2 + $0x898] sm:$0xff]
    %v457 = vld [vmem:[#allocation2 + $0x8a0] sm:$0xff]
    %v458 = vld [vmem:[#allocation2 + $0x8a8] sm:$0xff]
    %v459 = vld [vmem:[#allocation2 + $0x8b0] sm:$0xff]
    %v460 = vld [vmem:[#allocation2 + $0x8b8] sm:$0xff]
    %v461 = vld [vmem:[#allocation2 + $0x8c0] sm:$0xff]
    %v462 = vld [vmem:[#allocation2 + $0x8c8] sm:$0xff]
    %v463 = vld [vmem:[#allocation2 + $0x8d0] sm:$0xff]
    %v464 = vld [vmem:[#allocation2 + $0x8d8] sm:$0xff]
    %v465 = vld [vmem:[#allocation2 + $0x8e0] sm:$0xff]
    %v466 = vld [vmem:[#allocation2 + $0x8e8] sm:$0xff]
    %v467 = vld [vmem:[#allocation2 + $0x8f0] sm:$0xff]
    %v468 = vld [vmem:[#allocation2 + $0x8f8] sm:$0xff]
    %v469 = vld [vmem:[#allocation2 + $0x900] sm:$0xff]
    %v470 = vld [vmem:[#allocation2 + $0x908] sm:$0xff]
    %v471 = vld [vmem:[#allocation2 + $0x910] sm:$0xff]
    %v472 = vld [vmem:[#allocation2 + $0x918] sm:$0xff]
    %v473 = vld [vmem:[#allocation2 + $0x920] sm:$0xff]
    %v474 = vld [vmem:[#allocation2 + $0x928] sm:$0xff]
    %v475 = vld [vmem:[#allocation2 + $0x930] sm:$0xff]
    %v476 = vld [vmem:[#allocation2 + $0x938] sm:$0xff]
    %v477 = vld [vmem:[#allocation2 + $0x940] sm:$0xff]
    %v478 = vld [vmem:[#allocation2 + $0x948] sm:$0xff]
    %v479 = vld [vmem:[#allocation2 + $0x950] sm:$0xff]
    %v480 = vld [vmem:[#allocation2 + $0x958] sm:$0xff]
    %v481 = vld [vmem:[#allocation2 + $0x960] sm:$0xff]
    %v482 = vld [vmem:[#allocation2 + $0x968] sm:$0xff]
    %v483 = vld [vmem:[#allocation2 + $0x970] sm:$0xff]
    %v484 = vld [vmem:[#allocation2 + $0x978] sm:$0xff]
    %v485 = vld [vmem:[#allocation2 + $0x980] sm:$0xff]
    %v486 = vld [vmem:[#allocation2 + $0x988] sm:$0xff]
    %v487 = vld [vmem:[#allocation2 + $0x990] sm:$0xff]
    %v488 = vld [vmem:[#allocation2 + $0x998] sm:$0xff]
    %v489 = vld [vmem:[#allocation2 + $0x9a0] sm:$0xff]
    %v490 = vld [vmem:[#allocation2 + $0x9a8] sm:$0xff]
    %v491 = vld [vmem:[#allocation2 + $0x9b0] sm:$0xff]
    %v492 = vld [vmem:[#allocation2 + $0x9b8] sm:$0xff]
    %v493 = vld [vmem:[#allocation2 + $0x9c0] sm:$0xff]
    %v494 = vld [vmem:[#allocation2 + $0x9c8] sm:$0xff]
    %v495 = vld [vmem:[#allocation2 + $0x9d0] sm:$0xff]
    %v496 = vld [vmem:[#allocation2 + $0x9d8] sm:$0xff]
    %v497 = vld [vmem:[#allocation2 + $0x9e0] sm:$0xff]
    %v498 = vld [vmem:[#allocation2 + $0x9e8] sm:$0xff]
    %v499 = vld [vmem:[#allocation2 + $0x9f0] sm:$0xff]
    %v500 = vld [vmem:[#allocation2 + $0x9f8] sm:$0xff]
    %v501 = vld [vmem:[#allocation2 + $0xa00] sm:$0xff]
    %v502 = vld [vmem:[#allocation2 + $0xa08] sm:$0xff]
    %v503 = vld [vmem:[#allocation2 + $0xa10] sm:$0xff]
    %v504 = vld [vmem:[#allocation2 + $0xa18] sm:$0xff]
    %v505 = vld [vmem:[#allocation2 + $0xa20] sm:$0xff]
    %v506 = vld [vmem:[#allocation2 + $0xa28] sm:$0xff]
    %v507 = vld [vmem:[#allocation2 + $0xa30] sm:$0xff]
    %v508 = vld [vmem:[#allocation2 + $0xa38] sm:$0xff]
    %v509 = vld [vmem:[#allocation2 + $0xa40] sm:$0xff]
    %v510 = vld [vmem:[#allocation2 + $0xa48] sm:$0xff]
    %v511 = vld [vmem:[#allocation2 + $0xa50] sm:$0xff]
    %v512 = vld [vmem:[#allocation2 + $0xa58] sm:$0xff]
    %v513 = vld [vmem:[#allocation2 + $0xa60] sm:$0xff]
    %v514 = vld [vmem:[#allocation2 + $0xa68] sm:$0xff]
    %v515 = vld [vmem:[#allocation2 + $0xa70] sm:$0xff]
    %v516 = vld [vmem:[#allocation2 + $0xa78] sm:$0xff]
    %v517 = vld [vmem:[#allocation2 + $0xa80] sm:$0xff]
    %v518 = vld [vmem:[#allocation2 + $0xa88] sm:$0xff]
    %v519 = vld [vmem:[#allocation2 + $0xa90] sm:$0xff]
    %v520 = vld [vmem:[#allocation2 + $0xa98] sm:$0xff]
    %v521 = vld [vmem:[#allocation2 + $0xaa0] sm:$0xff]
    %v522 = vld [vmem:[#allocation2 + $0xaa8] sm:$0xff]
    %v523 = vld [vmem:[#allocation2 + $0xab0] sm:$0xff]
    %v524 = vld [vmem:[#allocation2 + $0xab8] sm:$0xff]
    %v525 = vld [vmem:[#allocation2 + $0xac0] sm:$0xff]
    %v526 = vld [vmem:[#allocation2 + $0xac8] sm:$0xff]
    %v527 = vld [vmem:[#allocation2 + $0xad0] sm:$0xff]
    %v528 = vld [vmem:[#allocation2 + $0xad8] sm:$0xff]
    %v529 = vld [vmem:[#allocation2 + $0xae0] sm:$0xff]
    %v530 = vld [vmem:[#allocation2 + $0xae8] sm:$0xff]
    %v531 = vld [vmem:[#allocation2 + $0xaf0] sm:$0xff]
    %v532 = vld [vmem:[#allocation2 + $0xaf8] sm:$0xff]
    %v533 = vld [vmem:[#allocation2 + $0xb00] sm:$0xff]
    %v534 = vld [vmem:[#allocation2 + $0xb08] sm:$0xff]
    %v535 = vld [vmem:[#allocation2 + $0xb10] sm:$0xff]
    %v536 = vld [vmem:[#allocation2 + $0xb18] sm:$0xff]
    %v537 = vld [vmem:[#allocation2 + $0xb20] sm:$0xff]
    %v538 = vld [vmem:[#allocation2 + $0xb28] sm:$0xff]
    %v539 = vld [vmem:[#allocation2 + $0xb30] sm:$0xff]
    %v540 = vld [vmem:[#allocation2 + $0xb38] sm:$0xff]
    %v541 = vld [vmem:[#allocation2 + $0xb40] sm:$0xff]
    %v542 = vld [vmem:[#allocation2 + $0xb48] sm:$0xff]
    %v543 = vld [vmem:[#allocation2 + $0xb50] sm:$0xff]
    %v544 = vld [vmem:[#allocation2 + $0xb58] sm:$0xff]
    %v545 = vld [vmem:[#allocation2 + $0xb60] sm:$0xff]
    %v546 = vld [vmem:[#allocation2 + $0xb68] sm:$0xff]
    %v547 = vld [vmem:[#allocation2 + $0xb70] sm:$0xff]
    %v548 = vld [vmem:[#allocation2 + $0xb78] sm:$0xff]
    %v549 = vld [vmem:[#allocation2 + $0xb80] sm:$0xff]
    %v550 = vld [vmem:[#allocation2 + $0xb88] sm:$0xff]
    %v551 = vld [vmem:[#allocation2 + $0xb90] sm:$0xff]
    %v552 = vld [vmem:[#allocation2 + $0xb98] sm:$0xff]
    %v553 = vld [vmem:[#allocation2 + $0xba0] sm:$0xff]
    %v554 = vld [vmem:[#allocation2 + $0xba8] sm:$0xff]
    %v555 = vld [vmem:[#allocation2 + $0xbb0] sm:$0xff]
    %v556 = vld [vmem:[#allocation2 + $0xbb8] sm:$0xff]
    %v557 = vld [vmem:[#allocation2 + $0xbc0] sm:$0xff]
    %v558 = vld [vmem:[#allocation2 + $0xbc8] sm:$0xff]
    %v559 = vld [vmem:[#allocation2 + $0xbd0] sm:$0xff]
    %v560 = vld [vmem:[#allocation2 + $0xbd8] sm:$0xff]
    %v561 = vld [vmem:[#allocation2 + $0xbe0] sm:$0xff]
    %v562 = vld [vmem:[#allocation2 + $0xbe8] sm:$0xff]
    %v563 = vld [vmem:[#allocation2 + $0xbf0] sm:$0xff]
    %v564 = vld [vmem:[#allocation2 + $0xbf8] sm:$0xff]
    %v565 = vld [vmem:[#allocation2 + $0xc00] sm:$0xff]
    %v566 = vld [vmem:[#allocation2 + $0xc08] sm:$0xff]
    %v567 = vld [vmem:[#allocation2 + $0xc10] sm:$0xff]
    %v568 = vld [vmem:[#allocation2 + $0xc18] sm:$0xff]
    %v569 = vld [vmem:[#allocation2 + $0xc20] sm:$0xff]
    %v570 = vld [vmem:[#allocation2 + $0xc28] sm:$0xff]
    %v571 = vld [vmem:[#allocation2 + $0xc30] sm:$0xff]
    %v572 = vld [vmem:[#allocation2 + $0xc38] sm:$0xff]
    %v573 = vld [vmem:[#allocation2 + $0xc40] sm:$0xff]
    %v574 = vld [vmem:[#allocation2 + $0xc48] sm:$0xff]
    %v575 = vld [vmem:[#allocation2 + $0xc50] sm:$0xff]
    %v576 = vld [vmem:[#allocation2 + $0xc58] sm:$0xff]
    %v577 = vld [vmem:[#allocation2 + $0xc60] sm:$0xff]
    %v578 = vld [vmem:[#allocation2 + $0xc68] sm:$0xff]
    %v579 = vld [vmem:[#allocation2 + $0xc70] sm:$0xff]
    %v580 = vld [vmem:[#allocation2 + $0xc78] sm:$0xff]
    %v581 = vld [vmem:[#allocation2 + $0xc80] sm:$0xff]
    %v582 = vld [vmem:[#allocation2 + $0xc88] sm:$0xff]
    %v583 = vld [vmem:[#allocation2 + $0xc90] sm:$0xff]
    %v584 = vld [vmem:[#allocation2 + $0xc98] sm:$0xff]
    %v585 = vld [vmem:[#allocation2 + $0xca0] sm:$0xff]
    %v586 = vld [vmem:[#allocation2 + $0xca8] sm:$0xff]
    %v587 = vld [vmem:[#allocation2 + $0xcb0] sm:$0xff]
    %v588 = vld [vmem:[#allocation2 + $0xcb8] sm:$0xff]
    %v589 = vld [vmem:[#allocation2 + $0xcc0] sm:$0xff]
    %v590 = vld [vmem:[#allocation2 + $0xcc8] sm:$0xff]
    %v591 = vld [vmem:[#allocation2 + $0xcd0] sm:$0xff]
    %v592 = vld [vmem:[#allocation2 + $0xcd8] sm:$0xff]
    %v593 = vld [vmem:[#allocation2 + $0xce0] sm:$0xff]
    %v594 = vld [vmem:[#allocation2 + $0xce8] sm:$0xff]
    %v595 = vld [vmem:[#allocation2 + $0xcf0] sm:$0xff]
    %v596 = vld [vmem:[#allocation2 + $0xcf8] sm:$0xff]
    %v597 = vld [vmem:[#allocation2 + $0xd00] sm:$0xff]
    %v598 = vld [vmem:[#allocation2 + $0xd08] sm:$0xff]
    %v599 = vld [vmem:[#allocation2 + $0xd10] sm:$0xff]
    %v600 = vld [vmem:[#allocation2 + $0xd18] sm:$0xff]
    %v601 = vld [vmem:[#allocation2 + $0xd20] sm:$0xff]
    %v602 = vld [vmem:[#allocation2 + $0xd28] sm:$0xff]
    %v603 = vld [vmem:[#allocation2 + $0xd30] sm:$0xff]
    %v604 = vld [vmem:[#allocation2 + $0xd38] sm:$0xff]
    %v605 = vld [vmem:[#allocation2 + $0xd40] sm:$0xff]
    %v606 = vld [vmem:[#allocation2 + $0xd48] sm:$0xff]
    %v607 = vld [vmem:[#allocation2 + $0xd50] sm:$0xff]
    %v608 = vld [vmem:[#allocation2 + $0xd58] sm:$0xff]
    %v609 = vld [vmem:[#allocation2 + $0xd60] sm:$0xff]
    %v610 = vld [vmem:[#allocation2 + $0xd68] sm:$0xff]
    %v611 = vld [vmem:[#allocation2 + $0xd70] sm:$0xff]
    %v612 = vld [vmem:[#allocation2 + $0xd78] sm:$0xff]
    %v613 = vld [vmem:[#allocation2 + $0xd80] sm:$0xff]
    %v614 = vld [vmem:[#allocation2 + $0xd88] sm:$0xff]
    %v615 = vld [vmem:[#allocation2 + $0xd90] sm:$0xff]
    %v616 = vld [vmem:[#allocation2 + $0xd98] sm:$0xff]
    %v617 = vld [vmem:[#allocation2 + $0xda0] sm:$0xff]
    %v618 = vld [vmem:[#allocation2 + $0xda8] sm:$0xff]
    %v619 = vld [vmem:[#allocation2 + $0xdb0] sm:$0xff]
    %v620 = vld [vmem:[#allocation2 + $0xdb8] sm:$0xff]
    %v621 = vld [vmem:[#allocation2 + $0xdc0] sm:$0xff]
    %v622 = vld [vmem:[#allocation2 + $0xdc8] sm:$0xff]
    %v623 = vld [vmem:[#allocation2 + $0xdd0] sm:$0xff]
    %v624 = vld [vmem:[#allocation2 + $0xdd8] sm:$0xff]
    %v625 = vld [vmem:[#allocation2 + $0xde0] sm:$0xff]
    %v626 = vld [vmem:[#allocation2 + $0xde8] sm:$0xff]
    %v627 = vld [vmem:[#allocation2 + $0xdf0] sm:$0xff]
    %v628 = vld [vmem:[#allocation2 + $0xdf8] sm:$0xff]
    %v629 = vld [vmem:[#allocation2 + $0xe00] sm:$0xff]
    %v630 = vld [vmem:[#allocation2 + $0xe08] sm:$0xff]
    %v631 = vld [vmem:[#allocation2 + $0xe10] sm:$0xff]
    %v632 = vld [vmem:[#allocation2 + $0xe18] sm:$0xff]
    %v633 = vld [vmem:[#allocation2 + $0xe20] sm:$0xff]
    %v634 = vld [vmem:[#allocation2 + $0xe28] sm:$0xff]
    %v635 = vld [vmem:[#allocation2 + $0xe30] sm:$0xff]
    %v636 = vld [vmem:[#allocation2 + $0xe38] sm:$0xff]
    %v637 = vld [vmem:[#allocation2 + $0xe40] sm:$0xff]
    %v638 = vld [vmem:[#allocation2 + $0xe48] sm:$0xff]
    %v639 = vld [vmem:[#allocation2 + $0xe50] sm:$0xff]
    %v640 = vld [vmem:[#allocation2 + $0xe58] sm:$0xff]
    %v641 = vld [vmem:[#allocation2 + $0xe60] sm:$0xff]
    %v642 = vld [vmem:[#allocation2 + $0xe68] sm:$0xff]
    %v643 = vld [vmem:[#allocation2 + $0xe70] sm:$0xff]
    %v644 = vld [vmem:[#allocation2 + $0xe78] sm:$0xff]
    %v645 = vld [vmem:[#allocation2 + $0xe80] sm:$0xff]
    %v646 = vld [vmem:[#allocation2 + $0xe88] sm:$0xff]
    %v647 = vld [vmem:[#allocation2 + $0xe90] sm:$0xff]
    %v648 = vld [vmem:[#allocation2 + $0xe98] sm:$0xff]
    %v649 = vld [vmem:[#allocation2 + $0xea0] sm:$0xff]
    %v650 = vld [vmem:[#allocation2 + $0xea8] sm:$0xff]
    %v651 = vld [vmem:[#allocation2 + $0xeb0] sm:$0xff]
    %v652 = vld [vmem:[#allocation2 + $0xeb8] sm:$0xff]
    %v653 = vld [vmem:[#allocation2 + $0xec0] sm:$0xff]
    %v654 = vld [vmem:[#allocation2 + $0xec8] sm:$0xff]
    %v655 = vld [vmem:[#allocation2 + $0xed0] sm:$0xff]
    %v656 = vld [vmem:[#allocation2 + $0xed8] sm:$0xff]
    %v657 = vld [vmem:[#allocation2 + $0xee0] sm:$0xff]
    %v658 = vld [vmem:[#allocation2 + $0xee8] sm:$0xff]
    %v659 = vld [vmem:[#allocation2 + $0xef0] sm:$0xff]
    %v660 = vld [vmem:[#allocation2 + $0xef8] sm:$0xff]
    %v661 = vld [vmem:[#allocation2 + $0xf00] sm:$0xff]
    %v662 = vld [vmem:[#allocation2 + $0xf08] sm:$0xff]
    %v663 = vld [vmem:[#allocation2 + $0xf10] sm:$0xff]
    %v664 = vld [vmem:[#allocation2 + $0xf18] sm:$0xff]
    %v665 = vld [vmem:[#allocation2 + $0xf20] sm:$0xff]
    %v666 = vld [vmem:[#allocation2 + $0xf28] sm:$0xff]
    %v667 = vld [vmem:[#allocation2 + $0xf30] sm:$0xff]
    %v668 = vld [vmem:[#allocation2 + $0xf38] sm:$0xff]
    %v669 = vld [vmem:[#allocation2 + $0xf40] sm:$0xff]
    %v670 = vld [vmem:[#allocation2 + $0xf48] sm:$0xff]
    %v671 = vld [vmem:[#allocation2 + $0xf50] sm:$0xff]
    %v672 = vld [vmem:[#allocation2 + $0xf58] sm:$0xff]
    %v673 = vld [vmem:[#allocation2 + $0xf60] sm:$0xff]
    %v674 = vld [vmem:[#allocation2 + $0xf68] sm:$0xff]
    %v675 = vld [vmem:[#allocation2 + $0xf70] sm:$0xff]
    %v676 = vld [vmem:[#allocation2 + $0xf78] sm:$0xff]
    %v677 = vld [vmem:[#allocation2 + $0xf80] sm:$0xff]
    %v678 = vld [vmem:[#allocation2 + $0xf88] sm:$0xff]
    %v679 = vld [vmem:[#allocation2 + $0xf90] sm:$0xff]
    %v680 = vld [vmem:[#allocation2 + $0xf98] sm:$0xff]
    %v681 = vld [vmem:[#allocation2 + $0xfa0] sm:$0xff]
    %v682 = vld [vmem:[#allocation2 + $0xfa8] sm:$0xff]
    %v683 = vld [vmem:[#allocation2 + $0xfb0] sm:$0xff]
    %v684 = vld [vmem:[#allocation2 + $0xfb8] sm:$0xff]
    %v685 = vld [vmem:[#allocation2 + $0xfc0] sm:$0xff]
    %v686 = vld [vmem:[#allocation2 + $0xfc8] sm:$0xff]
    %v687 = vld [vmem:[#allocation2 + $0xfd0] sm:$0xff]
    %v688 = vld [vmem:[#allocation2 + $0xfd8] sm:$0xff]
    %v689 = vld [vmem:[#allocation2 + $0xfe0] sm:$0xff]
    %v690 = vld [vmem:[#allocation2 + $0xfe8] sm:$0xff]
    %v691 = vld [vmem:[#allocation2 + $0xff0] sm:$0xff]
    %v692 = vld [vmem:[#allocation2 + $0xff8] sm:$0xff]
    %v693 = vld [vmem:[#allocation2 + $0x1000] sm:$0xff]
    %v694 = vld [vmem:[#allocation2 + $0x1008] sm:$0xff]
    %v695 = vld [vmem:[#allocation2 + $0x1010] sm:$0xff]
    %v696 = vld [vmem:[#allocation2 + $0x1018] sm:$0xff]
    %v697 = vld [vmem:[#allocation2 + $0x1020] sm:$0xff]
    %v698 = vld [vmem:[#allocation2 + $0x1028] sm:$0xff]
    %v699 = vld [vmem:[#allocation2 + $0x1030] sm:$0xff]
    %v700 = vld [vmem:[#allocation2 + $0x1038] sm:$0xff]
    %v701 = vld [vmem:[#allocation2 + $0x1040] sm:$0xff]
    %v702 = vld [vmem:[#allocation2 + $0x1048] sm:$0xff]
    %v703 = vld [vmem:[#allocation2 + $0x1050] sm:$0xff]
    %v704 = vld [vmem:[#allocation2 + $0x1058] sm:$0xff]
    %v705 = vld [vmem:[#allocation2 + $0x1060] sm:$0xff]
    %v706 = vld [vmem:[#allocation2 + $0x1068] sm:$0xff]
    %v707 = vld [vmem:[#allocation2 + $0x1070] sm:$0xff]
    %v708 = vld [vmem:[#allocation2 + $0x1078] sm:$0xff]
    %v709 = vld [vmem:[#allocation2 + $0x1080] sm:$0xff]
    %v710 = vld [vmem:[#allocation2 + $0x1088] sm:$0xff]
    %v711 = vld [vmem:[#allocation2 + $0x1090] sm:$0xff]
    %v712 = vld [vmem:[#allocation2 + $0x1098] sm:$0xff]
    %v713 = vld [vmem:[#allocation2 + $0x10a0] sm:$0xff]
    %v714 = vld [vmem:[#allocation2 + $0x10a8] sm:$0xff]
    %v715 = vld [vmem:[#allocation2 + $0x10b0] sm:$0xff]
    %v716 = vld [vmem:[#allocation2 + $0x10b8] sm:$0xff]
    %v717 = vld [vmem:[#allocation2 + $0x10c0] sm:$0xff]
    %v718 = vld [vmem:[#allocation2 + $0x10c8] sm:$0xff]
    %v719 = vld [vmem:[#allocation2 + $0x10d0] sm:$0xff]
    %v720 = vld [vmem:[#allocation2 + $0x10d8] sm:$0xff]
    %v721 = vld [vmem:[#allocation2 + $0x10e0] sm:$0xff]
    %v722 = vld [vmem:[#allocation2 + $0x10e8] sm:$0xff]
    %v723 = vld [vmem:[#allocation2 + $0x10f0] sm:$0xff]
    %v724 = vld [vmem:[#allocation2 + $0x10f8] sm:$0xff]
    %v725 = vld [vmem:[#allocation2 + $0x1100] sm:$0xff]
    %v726 = vld [vmem:[#allocation2 + $0x1108] sm:$0xff]
    %v727 = vld [vmem:[#allocation2 + $0x1110] sm:$0xff]
    %v728 = vld [vmem:[#allocation2 + $0x1118] sm:$0xff]
    %v729 = vld [vmem:[#allocation2 + $0x1120] sm:$0xff]
    %v730 = vld [vmem:[#allocation2 + $0x1128] sm:$0xff]
    %v731 = vld [vmem:[#allocation2 + $0x1130] sm:$0xff]
    %v732 = vld [vmem:[#allocation2 + $0x1138] sm:$0xff]
    %v733 = vld [vmem:[#allocation2 + $0x1140] sm:$0xff]
    %v734 = vld [vmem:[#allocation2 + $0x1148] sm:$0xff]
    %v735 = vld [vmem:[#allocation2 + $0x1150] sm:$0xff]
    %v736 = vld [vmem:[#allocation2 + $0x1158] sm:$0xff]
    %v737 = vld [vmem:[#allocation2 + $0x1160] sm:$0xff]
    %v738 = vld [vmem:[#allocation2 + $0x1168] sm:$0xff]
    %v739 = vld [vmem:[#allocation2 + $0x1170] sm:$0xff]
    %v740 = vld [vmem:[#allocation2 + $0x1178] sm:$0xff]
    %v741 = vld [vmem:[#allocation2 + $0x1180] sm:$0xff]
    %v742 = vld [vmem:[#allocation2 + $0x1188] sm:$0xff]
    %v743 = vld [vmem:[#allocation2 + $0x1190] sm:$0xff]
    %v744 = vld [vmem:[#allocation2 + $0x1198] sm:$0xff]
    %v745 = vld [vmem:[#allocation2 + $0x11a0] sm:$0xff]
    %v746 = vld [vmem:[#allocation2 + $0x11a8] sm:$0xff]
    %v747 = vld [vmem:[#allocation2 + $0x11b0] sm:$0xff]
    %v748 = vld [vmem:[#allocation2 + $0x11b8] sm:$0xff]
    %v749 = vld [vmem:[#allocation2 + $0x11c0] sm:$0xff]
    %v750 = vld [vmem:[#allocation2 + $0x11c8] sm:$0xff]
    %v751 = vld [vmem:[#allocation2 + $0x11d0] sm:$0xff]
    %v752 = vld [vmem:[#allocation2 + $0x11d8] sm:$0xff]
    %v753 = vld [vmem:[#allocation2 + $0x11e0] sm:$0xff]
    %v754 = vld [vmem:[#allocation2 + $0x11e8] sm:$0xff]
    %v755 = vld [vmem:[#allocation2 + $0x11f0] sm:$0xff]
    %v756 = vld [vmem:[#allocation2 + $0x11f8] sm:$0xff]
    %v757 = vld [vmem:[#allocation2 + $0x1200] sm:$0xff]
    %v758 = vld [vmem:[#allocation2 + $0x1208] sm:$0xff]
    %v759 = vld [vmem:[#allocation2 + $0x1210] sm:$0xff]
    %v760 = vld [vmem:[#allocation2 + $0x1218] sm:$0xff]
    %v761 = vld [vmem:[#allocation2 + $0x1220] sm:$0xff]
    %v762 = vld [vmem:[#allocation2 + $0x1228] sm:$0xff]
    %v763 = vld [vmem:[#allocation2 + $0x1230] sm:$0xff]
    %v764 = vld [vmem:[#allocation2 + $0x1238] sm:$0xff]
    %v765 = vld [vmem:[#allocation2 + $0x1240] sm:$0xff]
    %v766 = vld [vmem:[#allocation2 + $0x1248] sm:$0xff]
    %v767 = vld [vmem:[#allocation2 + $0x1250] sm:$0xff]
    %v768 = vld [vmem:[#allocation2 + $0x1258] sm:$0xff]
    %v769 = vld [vmem:[#allocation2 + $0x1260] sm:$0xff]
    %v770 = vld [vmem:[#allocation2 + $0x1268] sm:$0xff]
    %v771 = vld [vmem:[#allocation2 + $0x1270] sm:$0xff]
    %v772 = vld [vmem:[#allocation2 + $0x1278] sm:$0xff]
    %v773 = vld [vmem:[#allocation2 + $0x1280] sm:$0xff]
    %v774 = vld [vmem:[#allocation2 + $0x1288] sm:$0xff]
    %v775 = vld [vmem:[#allocation2 + $0x1290] sm:$0xff]
    %v776 = vld [vmem:[#allocation2 + $0x1298] sm:$0xff]
    %v777 = vld [vmem:[#allocation2 + $0x12a0] sm:$0xff]
    %v778 = vld [vmem:[#allocation2 + $0x12a8] sm:$0xff]
    %v779 = vld [vmem:[#allocation2 + $0x12b0] sm:$0xff]
    %v780 = vld [vmem:[#allocation2 + $0x12b8] sm:$0xff]
    %v781 = vld [vmem:[#allocation2 + $0x12c0] sm:$0xff]
    %v782 = vld [vmem:[#allocation2 + $0x12c8] sm:$0xff]
    %v783 = vld [vmem:[#allocation2 + $0x12d0] sm:$0xff]
    %v784 = vld [vmem:[#allocation2 + $0x12d8] sm:$0xff]
    %v785 = vld [vmem:[#allocation2 + $0x12e0] sm:$0xff]
    %v786 = vld [vmem:[#allocation2 + $0x12e8] sm:$0xff]
    %v787 = vld [vmem:[#allocation2 + $0x12f0] sm:$0xff]
    %v788 = vld [vmem:[#allocation2 + $0x12f8] sm:$0xff]
    %v789 = vld [vmem:[#allocation2 + $0x1300] sm:$0xff]
    %v790 = vld [vmem:[#allocation2 + $0x1308] sm:$0xff]
    %v791 = vld [vmem:[#allocation2 + $0x1310] sm:$0xff]
    %v792 = vld [vmem:[#allocation2 + $0x1318] sm:$0xff]
    %v793 = vld [vmem:[#allocation2 + $0x1320] sm:$0xff]
    %v794 = vld [vmem:[#allocation2 + $0x1328] sm:$0xff]
    %v795 = vld [vmem:[#allocation2 + $0x1330] sm:$0xff]
    %v796 = vld [vmem:[#allocation2 + $0x1338] sm:$0xff]
    %v797 = vld [vmem:[#allocation2 + $0x1340] sm:$0xff]
    %v798 = vld [vmem:[#allocation2 + $0x1348] sm:$0xff]
    %v799 = vld [vmem:[#allocation2 + $0x1350] sm:$0xff]
    %v800 = vld [vmem:[#allocation2 + $0x1358] sm:$0xff]
    %v801 = vld [vmem:[#allocation2 + $0x1360] sm:$0xff]
    %v802 = vld [vmem:[#allocation2 + $0x1368] sm:$0xff]
    %v803 = vld [vmem:[#allocation2 + $0x1370] sm:$0xff]
    %v804 = vld [vmem:[#allocation2 + $0x1378] sm:$0xff]
    %v805 = vld [vmem:[#allocation2 + $0x1380] sm:$0xff]
    %v806 = vld [vmem:[#allocation2 + $0x1388] sm:$0xff]
    %v807 = vld [vmem:[#allocation2 + $0x1390] sm:$0xff]
    %v808 = vld [vmem:[#allocation2 + $0x1398] sm:$0xff]
    %v809 = vld [vmem:[#allocation2 + $0x13a0] sm:$0xff]
    %v810 = vld [vmem:[#allocation2 + $0x13a8] sm:$0xff]
    %v811 = vld [vmem:[#allocation2 + $0x13b0] sm:$0xff]
    %v812 = vld [vmem:[#allocation2 + $0x13b8] sm:$0xff]
    %v813 = vld [vmem:[#allocation2 + $0x13c0] sm:$0xff]
    %v814 = vld [vmem:[#allocation2 + $0x13c8] sm:$0xff]
    %v815 = vld [vmem:[#allocation2 + $0x13d0] sm:$0xff]
    %v816 = vld [vmem:[#allocation2 + $0x13d8] sm:$0xff]
    %v817 = vld [vmem:[#allocation2 + $0x13e0] sm:$0xff]
    %v818 = vld [vmem:[#allocation2 + $0x13e8] sm:$0xff]
    %v819 = vld [vmem:[#allocation2 + $0x13f0] sm:$0xff]
    %v820 = vld [vmem:[#allocation2 + $0x13f8] sm:$0xff]
    %v821 = vld [vmem:[#allocation2 + $0x1400] sm:$0xff]
    %v822 = vld [vmem:[#allocation2 + $0x1408] sm:$0xff]
    %v823 = vld [vmem:[#allocation2 + $0x1410] sm:$0xff]
    %v824 = vld [vmem:[#allocation2 + $0x1418] sm:$0xff]
    %v825 = vld [vmem:[#allocation2 + $0x1420] sm:$0xff]
    %v826 = vld [vmem:[#allocation2 + $0x1428] sm:$0xff]
    %v827 = vld [vmem:[#allocation2 + $0x1430] sm:$0xff]
    %v828 = vld [vmem:[#allocation2 + $0x1438] sm:$0xff]
    %v829 = vld [vmem:[#allocation2 + $0x1440] sm:$0xff]
    %v830 = vld [vmem:[#allocation2 + $0x1448] sm:$0xff]
    %v831 = vld [vmem:[#allocation2 + $0x1450] sm:$0xff]
    %v832 = vld [vmem:[#allocation2 + $0x1458] sm:$0xff]
    %v833 = vld [vmem:[#allocation2 + $0x1460] sm:$0xff]
    %v834 = vld [vmem:[#allocation2 + $0x1468] sm:$0xff]
    %v835 = vld [vmem:[#allocation2 + $0x1470] sm:$0xff]
    %v836 = vld [vmem:[#allocation2 + $0x1478] sm:$0xff]
    %v837 = vld [vmem:[#allocation2 + $0x1480] sm:$0xff]
    %v838 = vld [vmem:[#allocation2 + $0x1488] sm:$0xff]
    %v839 = vld [vmem:[#allocation2 + $0x1490] sm:$0xff]
    %v840 = vld [vmem:[#allocation2 + $0x1498] sm:$0xff]
    %v841 = vld [vmem:[#allocation2 + $0x14a0] sm:$0xff]
    %v842 = vld [vmem:[#allocation2 + $0x14a8] sm:$0xff]
    %v843 = vld [vmem:[#allocation2 + $0x14b0] sm:$0xff]
    %v844 = vld [vmem:[#allocation2 + $0x14b8] sm:$0xff]
    %v845 = vld [vmem:[#allocation2 + $0x14c0] sm:$0xff]
    %v846 = vld [vmem:[#allocation2 + $0x14c8] sm:$0xff]
    %v847 = vld [vmem:[#allocation2 + $0x14d0] sm:$0xff]
    %v848 = vld [vmem:[#allocation2 + $0x14d8] sm:$0xff]
    %v849 = vld [vmem:[#allocation2 + $0x14e0] sm:$0xff]
    %v850 = vld [vmem:[#allocation2 + $0x14e8] sm:$0xff]
    %v851 = vld [vmem:[#allocation2 + $0x14f0] sm:$0xff]
    %v852 = vld [vmem:[#allocation2 + $0x14f8] sm:$0xff]
    %v853 = vld [vmem:[#allocation2 + $0x1500] sm:$0xff]
    %v854 = vld [vmem:[#allocation2 + $0x1508] sm:$0xff]
    %v855 = vld [vmem:[#allocation2 + $0x1510] sm:$0xff]
    %v856 = vld [vmem:[#allocation2 + $0x1518] sm:$0xff]
    %v857 = vld [vmem:[#allocation2 + $0x1520] sm:$0xff]
    %v858 = vld [vmem:[#allocation2 + $0x1528] sm:$0xff]
    %v859 = vld [vmem:[#allocation2 + $0x1530] sm:$0xff]
    %v860 = vld [vmem:[#allocation2 + $0x1538] sm:$0xff]
    %v861 = vld [vmem:[#allocation2 + $0x1540] sm:$0xff]
    %v862 = vld [vmem:[#allocation2 + $0x1548] sm:$0xff]
    %v863 = vld [vmem:[#allocation2 + $0x1550] sm:$0xff]
    %v864 = vld [vmem:[#allocation2 + $0x1558] sm:$0xff]
    %v865 = vld [vmem:[#allocation2 + $0x1560] sm:$0xff]
    %v866 = vld [vmem:[#allocation2 + $0x1568] sm:$0xff]
    %v867 = vld [vmem:[#allocation2 + $0x1570] sm:$0xff]
    %v868 = vld [vmem:[#allocation2 + $0x1578] sm:$0xff]
    %v869 = vld [vmem:[#allocation2 + $0x1580] sm:$0xff]
    %v870 = vld [vmem:[#allocation2 + $0x1588] sm:$0xff]
    %v871 = vld [vmem:[#allocation2 + $0x1590] sm:$0xff]
    %v872 = vld [vmem:[#allocation2 + $0x1598] sm:$0xff]
    %v873 = vld [vmem:[#allocation2 + $0x15a0] sm:$0xff]
    %v874 = vld [vmem:[#allocation2 + $0x15a8] sm:$0xff]
    %v875 = vld [vmem:[#allocation2 + $0x15b0] sm:$0xff]
    %v876 = vld [vmem:[#allocation2 + $0x15b8] sm:$0xff]
    %v877 = vld [vmem:[#allocation2 + $0x15c0] sm:$0xff]
    %v878 = vld [vmem:[#allocation2 + $0x15c8] sm:$0xff]
    %v879 = vld [vmem:[#allocation2 + $0x15d0] sm:$0xff]
    %v880 = vld [vmem:[#allocation2 + $0x15d8] sm:$0xff]
    %v881 = vld [vmem:[#allocation2 + $0x15e0] sm:$0xff]
    %v882 = vld [vmem:[#allocation2 + $0x15e8] sm:$0xff]
    %v883 = vld [vmem:[#allocation2 + $0x15f0] sm:$0xff]
    %v884 = vld [vmem:[#allocation2 + $0x15f8] sm:$0xff]
    %v885 = vld [vmem:[#allocation2 + $0x1600] sm:$0xff]
    %v886 = vld [vmem:[#allocation2 + $0x1608] sm:$0xff]
    %v887 = vld [vmem:[#allocation2 + $0x1610] sm:$0xff]
    %v888 = vld [vmem:[#allocation2 + $0x1618] sm:$0xff]
    %v889 = vld [vmem:[#allocation2 + $0x1620] sm:$0xff]
    %v890 = vld [vmem:[#allocation2 + $0x1628] sm:$0xff]
    %v891 = vld [vmem:[#allocation2 + $0x1630] sm:$0xff]
    %v892 = vld [vmem:[#allocation2 + $0x1638] sm:$0xff]
    %v893 = vld [vmem:[#allocation2 + $0x1640] sm:$0xff]
    %v894 = vld [vmem:[#allocation2 + $0x1648] sm:$0xff]
    %v895 = vld [vmem:[#allocation2 + $0x1650] sm:$0xff]
    %v896 = vld [vmem:[#allocation2 + $0x1658] sm:$0xff]
    %v897 = vld [vmem:[#allocation2 + $0x1660] sm:$0xff]
    %v898 = vld [vmem:[#allocation2 + $0x1668] sm:$0xff]
    %v899 = vld [vmem:[#allocation2 + $0x1670] sm:$0xff]
    %v900 = vld [vmem:[#allocation2 + $0x1678] sm:$0xff]
    %v901 = vld [vmem:[#allocation2 + $0x1680] sm:$0xff]
    %v902 = vld [vmem:[#allocation2 + $0x1688] sm:$0xff]
    %v903 = vld [vmem:[#allocation2 + $0x1690] sm:$0xff]
    %v904 = vld [vmem:[#allocation2 + $0x1698] sm:$0xff]
    %v905 = vld [vmem:[#allocation2 + $0x16a0] sm:$0xff]
    %v906 = vld [vmem:[#allocation2 + $0x16a8] sm:$0xff]
    %v907 = vld [vmem:[#allocation2 + $0x16b0] sm:$0xff]
    %v908 = vld [vmem:[#allocation2 + $0x16b8] sm:$0xff]
    %v909 = vld [vmem:[#allocation2 + $0x16c0] sm:$0xff]
    %v910 = vld [vmem:[#allocation2 + $0x16c8] sm:$0xff]
    %v911 = vld [vmem:[#allocation2 + $0x16d0] sm:$0xff]
    %v912 = vld [vmem:[#allocation2 + $0x16d8] sm:$0xff]
    %v913 = vld [vmem:[#allocation2 + $0x16e0] sm:$0xff]
    %v914 = vld [vmem:[#allocation2 + $0x16e8] sm:$0xff]
    %v915 = vld [vmem:[#allocation2 + $0x16f0] sm:$0xff]
    %v916 = vld [vmem:[#allocation2 + $0x16f8] sm:$0xff]
    %v917 = vld [vmem:[#allocation2 + $0x1700] sm:$0xff]
    %v918 = vld [vmem:[#allocation2 + $0x1708] sm:$0xff]
    %v919 = vld [vmem:[#allocation2 + $0x1710] sm:$0xff]
    %v920 = vld [vmem:[#allocation2 + $0x1718] sm:$0xff]
    %v921 = vld [vmem:[#allocation2 + $0x1720] sm:$0xff]
    %v922 = vld [vmem:[#allocation2 + $0x1728] sm:$0xff]
    %v923 = vld [vmem:[#allocation2 + $0x1730] sm:$0xff]
    %v924 = vld [vmem:[#allocation2 + $0x1738] sm:$0xff]
    %v925 = vld [vmem:[#allocation2 + $0x1740] sm:$0xff]
    %v926 = vld [vmem:[#allocation2 + $0x1748] sm:$0xff]
    %v927 = vld [vmem:[#allocation2 + $0x1750] sm:$0xff]
    %v928 = vld [vmem:[#allocation2 + $0x1758] sm:$0xff]
    %v929 = vld [vmem:[#allocation2 + $0x1760] sm:$0xff]
    %v930 = vld [vmem:[#allocation2 + $0x1768] sm:$0xff]
    %v931 = vld [vmem:[#allocation2 + $0x1770] sm:$0xff]
    %v932 = vld [vmem:[#allocation2 + $0x1778] sm:$0xff]
    %v933 = vld [vmem:[#allocation2 + $0x1780] sm:$0xff]
    %v934 = vld [vmem:[#allocation2 + $0x1788] sm:$0xff]
    %v935 = vld [vmem:[#allocation2 + $0x1790] sm:$0xff]
    %v936 = vld [vmem:[#allocation2 + $0x1798] sm:$0xff]
    %v937 = vld [vmem:[#allocation2 + $0x17a0] sm:$0xff]
    %v938 = vld [vmem:[#allocation2 + $0x17a8] sm:$0xff]
    %v939 = vld [vmem:[#allocation2 + $0x17b0] sm:$0xff]
    %v940 = vld [vmem:[#allocation2 + $0x17b8] sm:$0xff]
    %v941 = vld [vmem:[#allocation2 + $0x17c0] sm:$0xff]
    %v942 = vld [vmem:[#allocation2 + $0x17c8] sm:$0xff]
    %v943 = vld [vmem:[#allocation2 + $0x17d0] sm:$0xff]
    %v944 = vld [vmem:[#allocation2 + $0x17d8] sm:$0xff]
    %v945 = vld [vmem:[#allocation2 + $0x17e0] sm:$0xff]
    %v946 = vld [vmem:[#allocation2 + $0x17e8] sm:$0xff]
    %v947 = vld [vmem:[#allocation2 + $0x17f0] sm:$0xff]
    %v948 = vld [vmem:[#allocation2 + $0x17f8] sm:$0xff]
    %v949 = vld [vmem:[#allocation2 + $0x1800] sm:$0xff]
    %v950 = vld [vmem:[#allocation2 + $0x1808] sm:$0xff]
    %v951 = vld [vmem:[#allocation2 + $0x1810] sm:$0xff]
    %v952 = vld [vmem:[#allocation2 + $0x1818] sm:$0xff]
    %v953 = vld [vmem:[#allocation2 + $0x1820] sm:$0xff]
    %v954 = vld [vmem:[#allocation2 + $0x1828] sm:$0xff]
    %v955 = vld [vmem:[#allocation2 + $0x1830] sm:$0xff]
    %v956 = vld [vmem:[#allocation2 + $0x1838] sm:$0xff]
    %v957 = vld [vmem:[#allocation2 + $0x1840] sm:$0xff]
    %v958 = vld [vmem:[#allocation2 + $0x1848] sm:$0xff]
    %v959 = vld [vmem:[#allocation2 + $0x1850] sm:$0xff]
    %v960 = vld [vmem:[#allocation2 + $0x1858] sm:$0xff]
    %v961 = vld [vmem:[#allocation2 + $0x1860] sm:$0xff]
    %v962 = vld [vmem:[#allocation2 + $0x1868] sm:$0xff]
    %v963 = vld [vmem:[#allocation2 + $0x1870] sm:$0xff]
    %v964 = vld [vmem:[#allocation2 + $0x1878] sm:$0xff]
    %v965 = vld [vmem:[#allocation2 + $0x1880] sm:$0xff]
    %v966 = vld [vmem:[#allocation2 + $0x1888] sm:$0xff]
    %v967 = vld [vmem:[#allocation2 + $0x1890] sm:$0xff]
    %v968 = vld [vmem:[#allocation2 + $0x1898] sm:$0xff]
    %v969 = vld [vmem:[#allocation2 + $0x18a0] sm:$0xff]
    %v970 = vld [vmem:[#allocation2 + $0x18a8] sm:$0xff]
    %v971 = vld [vmem:[#allocation2 + $0x18b0] sm:$0xff]
    %v972 = vld [vmem:[#allocation2 + $0x18b8] sm:$0xff]
    %v973 = vld [vmem:[#allocation2 + $0x18c0] sm:$0xff]
    %v974 = vld [vmem:[#allocation2 + $0x18c8] sm:$0xff]
    %v975 = vld [vmem:[#allocation2 + $0x18d0] sm:$0xff]
    %v976 = vld [vmem:[#allocation2 + $0x18d8] sm:$0xff]
    %v977 = vld [vmem:[#allocation2 + $0x18e0] sm:$0xff]
    %v978 = vld [vmem:[#allocation2 + $0x18e8] sm:$0xff]
    %v979 = vld [vmem:[#allocation2 + $0x18f0] sm:$0xff]
    %v980 = vld [vmem:[#allocation2 + $0x18f8] sm:$0xff]
    %v981 = vld [vmem:[%s0] sm:$0xf]
    %v982 = vld [vmem:[%s0 + $0x4] sm:$0xf]
    %v983 = vld [vmem:[%s0 + $0x8] sm:$0xf]
    %v984 = vld [vmem:[%s0 + $0xc] sm:$0xf]
    %v985 = vld [vmem:[%s0 + $0x10] sm:$0xf]
    %v986 = vld [vmem:[%s0 + $0x14] sm:$0xf]
    %v987 = vld [vmem:[%s0 + $0x18] sm:$0xf]
    %v988 = vld [vmem:[%s0 + $0x1c] sm:$0xf]
    %v989 = vld [vmem:[%s0 + $0x20] sm:$0xf]
    %v990 = vld [vmem:[%s0 + $0x24] sm:$0xf]
    %v991 = vld [vmem:[%s0 + $0x28] sm:$0xf]
    %v992 = vld [vmem:[%s0 + $0x2c] sm:$0xf]
    %v993 = vld [vmem:[%s0 + $0x30] sm:$0xf]
    %v994 = vld [vmem:[%s0 + $0x34] sm:$0xf]
    %v995 = vld [vmem:[%s0 + $0x38] sm:$0xf]
    %v996 = vld [vmem:[%s0 + $0x3c] sm:$0xf]
    %v997 = vld [vmem:[%s0 + $0x40] sm:$0xf]
    %v998 = vld [vmem:[%s0 + $0x44] sm:$0xf]
    %v999 = vld [vmem:[%s0 + $0x48] sm:$0xf]
    %v1000 = vld [vmem:[%s0 + $0x4c] sm:$0xf]
    %v1001 = vld [vmem:[%s0 + $0x50] sm:$0xf]
    %v1002 = vld [vmem:[%s0 + $0x54] sm:$0xf]
    %v1003 = vld [vmem:[%s0 + $0x58] sm:$0xf]
    %v1004 = vld [vmem:[%s0 + $0x5c] sm:$0xf]
    %v1005 = vld [vmem:[%s0 + $0x60] sm:$0xf]
    %v1006 = vld [vmem:[%s0 + $0x64] sm:$0xf]
    %v1007 = vld [vmem:[%s0 + $0x68] sm:$0xf]
    %v1008 = vld [vmem:[%s0 + $0x6c] sm:$0xf]
    %v1009 = vld [vmem:[%s0 + $0x70] sm:$0xf]
    %v1010 = vld [vmem:[%s0 + $0x74] sm:$0xf]
    %v1011 = vld [vmem:[%s0 + $0x78] sm:$0xf]
    %v1012 = vld [vmem:[%s0 + $0x7c] sm:$0xf]
    %v1013 = vld [vmem:[%s0 + $0x80] sm:$0xf]
    %v1014 = vld [vmem:[%s0 + $0x84] sm:$0xf]
    %v1015 = vld [vmem:[%s0 + $0x88] sm:$0xf]
    %v1016 = vld [vmem:[%s0 + $0x8c] sm:$0xf]
    %v1017 = vld [vmem:[%s0 + $0x90] sm:$0xf]
    %v1018 = vld [vmem:[%s0 + $0x94] sm:$0xf]
    %v1019 = vld [vmem:[%s0 + $0x98] sm:$0xf]
    %v1020 = vld [vmem:[%s0 + $0x9c] sm:$0xf]
    %v1021 = vld [vmem:[%s0 + $0xa0] sm:$0xf]
    %v1022 = vld [vmem:[%s0 + $0xa4] sm:$0xf]
    %v1023 = vld [vmem:[%s0 + $0xa8] sm:$0xf]
    %v1024 = vld [vmem:[%s0 + $0xac] sm:$0xf]
    %v1025 = vld [vmem:[%s0 + $0xb0] sm:$0xf]
    %v1026 = vld [vmem:[%s0 + $0xb4] sm:$0xf]
    %v1027 = vld [vmem:[%s0 + $0xb8] sm:$0xf]
    %v1028 = vld [vmem:[%s0 + $0xbc] sm:$0xf]
    %v1029 = vld [vmem:[%s0 + $0xc0] sm:$0xf]
    %v1030 = vld [vmem:[%s0 + $0xc4] sm:$0xf]
    %v1031 = vld [vmem:[%s0 + $0xc8] sm:$0xf]
    %v1032 = vld [vmem:[%s0 + $0xcc] sm:$0xf]
    %v1033 = vld [vmem:[%s0 + $0xd0] sm:$0xf]
    %v1034 = vld [vmem:[%s0 + $0xd4] sm:$0xf]
    %v1035 = vld [vmem:[%s0 + $0xd8] sm:$0xf]
    %v1036 = vld [vmem:[%s0 + $0xdc] sm:$0xf]
    %v1037 = vld [vmem:[%s0 + $0xe0] sm:$0xf]
    %v1038 = vld [vmem:[%s0 + $0xe4] sm:$0xf]
    %v1039 = vld [vmem:[%s0 + $0xe8] sm:$0xf]
    %v1040 = vld [vmem:[%s0 + $0xec] sm:$0xf]
    %v1041 = vld [vmem:[%s0 + $0xf0] sm:$0xf]
    %v1042 = vld [vmem:[%s0 + $0xf4] sm:$0xf]
    %v1043 = vld [vmem:[%s0 + $0xf8] sm:$0xf]
    %v1044 = vld [vmem:[%s0 + $0xfc] sm:$0xf]
    %v1845 = vunpack.c.l.b16 %v181
    %v1846 = vunpack.c.h.b16 %v181
    %v1847 = vunpack.c.l.b16 %v182
    %v1848 = vunpack.c.h.b16 %v182
    %v1849 = vunpack.c.l.b16 %v183
    %v1850 = vunpack.c.h.b16 %v183
    %v1851 = vunpack.c.l.b16 %v184
    %v1852 = vunpack.c.h.b16 %v184
    %v1853 = vunpack.c.l.b16 %v185
    %v1854 = vunpack.c.h.b16 %v185
    %v1855 = vunpack.c.l.b16 %v186
    %v1856 = vunpack.c.h.b16 %v186
    %v1857 = vunpack.c.l.b16 %v187
    %v1858 = vunpack.c.h.b16 %v187
    %v1859 = vunpack.c.l.b16 %v188
    %v1860 = vunpack.c.h.b16 %v188
    %v1861 = vunpack.c.l.b16 %v189
    %v1862 = vunpack.c.h.b16 %v189
    %v1863 = vunpack.c.l.b16 %v190
    %v1864 = vunpack.c.h.b16 %v190
    %v1865 = vunpack.c.l.b16 %v191
    %v1866 = vunpack.c.h.b16 %v191
    %v1867 = vunpack.c.l.b16 %v192
    %v1868 = vunpack.c.h.b16 %v192
    %v1869 = vunpack.c.l.b16 %v193
    %v1870 = vunpack.c.h.b16 %v193
    %v1871 = vunpack.c.l.b16 %v194
    %v1872 = vunpack.c.h.b16 %v194
    %v1873 = vunpack.c.l.b16 %v195
    %v1874 = vunpack.c.h.b16 %v195
    %v1875 = vunpack.c.l.b16 %v196
    %v1876 = vunpack.c.h.b16 %v196
    %v1877 = vunpack.c.l.b16 %v197
    %v1878 = vunpack.c.h.b16 %v197
    %v1879 = vunpack.c.l.b16 %v198
    %v1880 = vunpack.c.h.b16 %v198
    %v1881 = vunpack.c.l.b16 %v199
    %v1882 = vunpack.c.h.b16 %v199
    %v1883 = vunpack.c.l.b16 %v200
    %v1884 = vunpack.c.h.b16 %v200
    %v1885 = vunpack.c.l.b16 %v201
    %v1886 = vunpack.c.h.b16 %v201
    %v1887 = vunpack.c.l.b16 %v202
    %v1888 = vunpack.c.h.b16 %v202
    %v1889 = vunpack.c.l.b16 %v203
    %v1890 = vunpack.c.h.b16 %v203
    %v1891 = vunpack.c.l.b16 %v204
    %v1892 = vunpack.c.h.b16 %v204
    %v1893 = vunpack.c.l.b16 %v205
    %v1894 = vunpack.c.h.b16 %v205
    %v1895 = vunpack.c.l.b16 %v206
    %v1896 = vunpack.c.h.b16 %v206
    %v1897 = vunpack.c.l.b16 %v207
    %v1898 = vunpack.c.h.b16 %v207
    %v1899 = vunpack.c.l.b16 %v208
    %v1900 = vunpack.c.h.b16 %v208
    %v1901 = vunpack.c.l.b16 %v209
    %v1902 = vunpack.c.h.b16 %v209
    %v1903 = vunpack.c.l.b16 %v210
    %v1904 = vunpack.c.h.b16 %v210
    %v1905 = vunpack.c.l.b16 %v211
    %v1906 = vunpack.c.h.b16 %v211
    %v1907 = vunpack.c.l.b16 %v212
    %v1908 = vunpack.c.h.b16 %v212
    %v1909 = vunpack.c.l.b16 %v213
    %v1910 = vunpack.c.h.b16 %v213
    %v1911 = vunpack.c.l.b16 %v214
    %v1912 = vunpack.c.h.b16 %v214
    %v1913 = vunpack.c.l.b16 %v215
    %v1914 = vunpack.c.h.b16 %v215
    %v1915 = vunpack.c.l.b16 %v216
    %v1916 = vunpack.c.h.b16 %v216
    %v1917 = vunpack.c.l.b16 %v217
    %v1918 = vunpack.c.h.b16 %v217
    %v1919 = vunpack.c.l.b16 %v218
    %v1920 = vunpack.c.h.b16 %v218
    %v1921 = vunpack.c.l.b16 %v219
    %v1922 = vunpack.c.h.b16 %v219
    %v1923 = vunpack.c.l.b16 %v220
    %v1924 = vunpack.c.h.b16 %v220
    %v1925 = vunpack.c.l.b16 %v221
    %v1926 = vunpack.c.h.b16 %v221
    %v1927 = vunpack.c.l.b16 %v222
    %v1928 = vunpack.c.h.b16 %v222
    %v1929 = vunpack.c.l.b16 %v223
    %v1930 = vunpack.c.h.b16 %v223
    %v1931 = vunpack.c.l.b16 %v224
    %v1932 = vunpack.c.h.b16 %v224
    %v1933 = vunpack.c.l.b16 %v225
    %v1934 = vunpack.c.h.b16 %v225
    %v1935 = vunpack.c.l.b16 %v226
    %v1936 = vunpack.c.h.b16 %v226
    %v1937 = vunpack.c.l.b16 %v227
    %v1938 = vunpack.c.h.b16 %v227
    %v1939 = vunpack.c.l.b16 %v228
    %v1940 = vunpack.c.h.b16 %v228
    %v1941 = vunpack.c.l.b16 %v229
    %v1942 = vunpack.c.h.b16 %v229
    %v1943 = vunpack.c.l.b16 %v230
    %v1944 = vunpack.c.h.b16 %v230
    %v1945 = vunpack.c.l.b16 %v231
    %v1946 = vunpack.c.h.b16 %v231
    %v1947 = vunpack.c.l.b16 %v232
    %v1948 = vunpack.c.h.b16 %v232
    %v1949 = vunpack.c.l.b16 %v233
    %v1950 = vunpack.c.h.b16 %v233
    %v1951 = vunpack.c.l.b16 %v234
    %v1952 = vunpack.c.h.b16 %v234
    %v1953 = vunpack.c.l.b16 %v235
    %v1954 = vunpack.c.h.b16 %v235
    %v1955 = vunpack.c.l.b16 %v236
    %v1956 = vunpack.c.h.b16 %v236
    %v1957 = vunpack.c.l.b16 %v237
    %v1958 = vunpack.c.h.b16 %v237
    %v1959 = vunpack.c.l.b16 %v238
    %v1960 = vunpack.c.h.b16 %v238
    %v1961 = vunpack.c.l.b16 %v239
    %v1962 = vunpack.c.h.b16 %v239
    %v1963 = vunpack.c.l.b16 %v240
    %v1964 = vunpack.c.h.b16 %v240
    %v1965 = vunpack.c.l.b16 %v241
    %v1966 = vunpack.c.h.b16 %v241
    %v1967 = vunpack.c.l.b16 %v242
    %v1968 = vunpack.c.h.b16 %v242
    %v1969 = vunpack.c.l.b16 %v243
    %v1970 = vunpack.c.h.b16 %v243
    %v1971 = vunpack.c.l.b16 %v244
    %v1972 = vunpack.c.h.b16 %v244
    %v1973 = vunpack.c.l.b16 %v245
    %v1974 = vunpack.c.h.b16 %v245
    %v1975 = vunpack.c.l.b16 %v246
    %v1976 = vunpack.c.h.b16 %v246
    %v1977 = vunpack.c.l.b16 %v247
    %v1978 = vunpack.c.h.b16 %v247
    %v1979 = vunpack.c.l.b16 %v248
    %v1980 = vunpack.c.h.b16 %v248
    %v1981 = vunpack.c.l.b16 %v249
    %v1982 = vunpack.c.h.b16 %v249
    %v1983 = vunpack.c.l.b16 %v250
    %v1984 = vunpack.c.h.b16 %v250
    %v1985 = vunpack.c.l.b16 %v251
    %v1986 = vunpack.c.h.b16 %v251
    %v1987 = vunpack.c.l.b16 %v252
    %v1988 = vunpack.c.h.b16 %v252
    %v1989 = vunpack.c.l.b16 %v253
    %v1990 = vunpack.c.h.b16 %v253
    %v1991 = vunpack.c.l.b16 %v254
    %v1992 = vunpack.c.h.b16 %v254
    %v1993 = vunpack.c.l.b16 %v255
    %v1994 = vunpack.c.h.b16 %v255
    %v1995 = vunpack.c.l.b16 %v256
    %v1996 = vunpack.c.h.b16 %v256
    %v1997 = vunpack.c.l.b16 %v257
    %v1998 = vunpack.c.h.b16 %v257
    %v1999 = vunpack.c.l.b16 %v258
    %v2000 = vunpack.c.h.b16 %v258
    %v2001 = vunpack.c.l.b16 %v259
    %v2002 = vunpack.c.h.b16 %v259
    %v2003 = vunpack.c.l.b16 %v260
    %v2004 = vunpack.c.h.b16 %v260
    %v2005 = vunpack.c.l.b16 %v261
    %v2006 = vunpack.c.h.b16 %v261
    %v2007 = vunpack.c.l.b16 %v262
    %v2008 = vunpack.c.h.b16 %v262
    %v2009 = vunpack.c.l.b16 %v263
    %v2010 = vunpack.c.h.b16 %v263
    %v2011 = vunpack.c.l.b16 %v264
    %v2012 = vunpack.c.h.b16 %v264
    %v2013 = vunpack.c.l.b16 %v265
    %v2014 = vunpack.c.h.b16 %v265
    %v2015 = vunpack.c.l.b16 %v266
    %v2016 = vunpack.c.h.b16 %v266
    %v2017 = vunpack.c.l.b16 %v267
    %v2018 = vunpack.c.h.b16 %v267
    %v2019 = vunpack.c.l.b16 %v268
    %v2020 = vunpack.c.h.b16 %v268
    %v2021 = vunpack.c.l.b16 %v269
    %v2022 = vunpack.c.h.b16 %v269
    %v2023 = vunpack.c.l.b16 %v270
    %v2024 = vunpack.c.h.b16 %v270
    %v2025 = vunpack.c.l.b16 %v271
    %v2026 = vunpack.c.h.b16 %v271
    %v2027 = vunpack.c.l.b16 %v272
    %v2028 = vunpack.c.h.b16 %v272
    %v2029 = vunpack.c.l.b16 %v273
    %v2030 = vunpack.c.h.b16 %v273
    %v2031 = vunpack.c.l.b16 %v274
    %v2032 = vunpack.c.h.b16 %v274
    %v2033 = vunpack.c.l.b16 %v275
    %v2034 = vunpack.c.h.b16 %v275
    %v2035 = vunpack.c.l.b16 %v276
    %v2036 = vunpack.c.h.b16 %v276
    %v2037 = vunpack.c.l.b16 %v277
    %v2038 = vunpack.c.h.b16 %v277
    %v2039 = vunpack.c.l.b16 %v278
    %v2040 = vunpack.c.h.b16 %v278
    %v2041 = vunpack.c.l.b16 %v279
    %v2042 = vunpack.c.h.b16 %v279
    %v2043 = vunpack.c.l.b16 %v280
    %v2044 = vunpack.c.h.b16 %v280
    %v2045 = vunpack.c.l.b16 %v281
    %v2046 = vunpack.c.h.b16 %v281
    %v2047 = vunpack.c.l.b16 %v282
    %v2048 = vunpack.c.h.b16 %v282
    %v2049 = vunpack.c.l.b16 %v283
    %v2050 = vunpack.c.h.b16 %v283
    %v2051 = vunpack.c.l.b16 %v284
    %v2052 = vunpack.c.h.b16 %v284
    %v2053 = vunpack.c.l.b16 %v285
    %v2054 = vunpack.c.h.b16 %v285
    %v2055 = vunpack.c.l.b16 %v286
    %v2056 = vunpack.c.h.b16 %v286
    %v2057 = vunpack.c.l.b16 %v287
    %v2058 = vunpack.c.h.b16 %v287
    %v2059 = vunpack.c.l.b16 %v288
    %v2060 = vunpack.c.h.b16 %v288
    %v2061 = vunpack.c.l.b16 %v289
    %v2062 = vunpack.c.h.b16 %v289
    %v2063 = vunpack.c.l.b16 %v290
    %v2064 = vunpack.c.h.b16 %v290
    %v2065 = vunpack.c.l.b16 %v291
    %v2066 = vunpack.c.h.b16 %v291
    %v2067 = vunpack.c.l.b16 %v292
    %v2068 = vunpack.c.h.b16 %v292
    %v2069 = vunpack.c.l.b16 %v293
    %v2070 = vunpack.c.h.b16 %v293
    %v2071 = vunpack.c.l.b16 %v294
    %v2072 = vunpack.c.h.b16 %v294
    %v2073 = vunpack.c.l.b16 %v295
    %v2074 = vunpack.c.h.b16 %v295
    %v2075 = vunpack.c.l.b16 %v296
    %v2076 = vunpack.c.h.b16 %v296
    %v2077 = vunpack.c.l.b16 %v297
    %v2078 = vunpack.c.h.b16 %v297
    %v2079 = vunpack.c.l.b16 %v298
    %v2080 = vunpack.c.h.b16 %v298
    %v2081 = vunpack.c.l.b16 %v299
    %v2082 = vunpack.c.h.b16 %v299
    %v2083 = vunpack.c.l.b16 %v300
    %v2084 = vunpack.c.h.b16 %v300
    %v2085 = vunpack.c.l.b16 %v301
    %v2086 = vunpack.c.h.b16 %v301
    %v2087 = vunpack.c.l.b16 %v302
    %v2088 = vunpack.c.h.b16 %v302
    %v2089 = vunpack.c.l.b16 %v303
    %v2090 = vunpack.c.h.b16 %v303
    %v2091 = vunpack.c.l.b16 %v304
    %v2092 = vunpack.c.h.b16 %v304
    %v2093 = vunpack.c.l.b16 %v305
    %v2094 = vunpack.c.h.b16 %v305
    %v2095 = vunpack.c.l.b16 %v306
    %v2096 = vunpack.c.h.b16 %v306
    %v2097 = vunpack.c.l.b16 %v307
    %v2098 = vunpack.c.h.b16 %v307
    %v2099 = vunpack.c.l.b16 %v308
    %v2100 = vunpack.c.h.b16 %v308
    %v2101 = vunpack.c.l.b16 %v309
    %v2102 = vunpack.c.h.b16 %v309
    %v2103 = vunpack.c.l.b16 %v310
    %v2104 = vunpack.c.h.b16 %v310
    %v2105 = vunpack.c.l.b16 %v311
    %v2106 = vunpack.c.h.b16 %v311
    %v2107 = vunpack.c.l.b16 %v312
    %v2108 = vunpack.c.h.b16 %v312
    %v2109 = vunpack.c.l.b16 %v313
    %v2110 = vunpack.c.h.b16 %v313
    %v2111 = vunpack.c.l.b16 %v314
    %v2112 = vunpack.c.h.b16 %v314
    %v2113 = vunpack.c.l.b16 %v315
    %v2114 = vunpack.c.h.b16 %v315
    %v2115 = vunpack.c.l.b16 %v316
    %v2116 = vunpack.c.h.b16 %v316
    %v2117 = vunpack.c.l.b16 %v317
    %v2118 = vunpack.c.h.b16 %v317
    %v2119 = vunpack.c.l.b16 %v318
    %v2120 = vunpack.c.h.b16 %v318
    %v2121 = vunpack.c.l.b16 %v319
    %v2122 = vunpack.c.h.b16 %v319
    %v2123 = vunpack.c.l.b16 %v320
    %v2124 = vunpack.c.h.b16 %v320
    %v2125 = vunpack.c.l.b16 %v321
    %v2126 = vunpack.c.h.b16 %v321
    %v2127 = vunpack.c.l.b16 %v322
    %v2128 = vunpack.c.h.b16 %v322
    %v2129 = vunpack.c.l.b16 %v323
    %v2130 = vunpack.c.h.b16 %v323
    %v2131 = vunpack.c.l.b16 %v324
    %v2132 = vunpack.c.h.b16 %v324
    %v2133 = vunpack.c.l.b16 %v325
    %v2134 = vunpack.c.h.b16 %v325
    %v2135 = vunpack.c.l.b16 %v326
    %v2136 = vunpack.c.h.b16 %v326
    %v2137 = vunpack.c.l.b16 %v327
    %v2138 = vunpack.c.h.b16 %v327
    %v2139 = vunpack.c.l.b16 %v328
    %v2140 = vunpack.c.h.b16 %v328
    %v2141 = vunpack.c.l.b16 %v329
    %v2142 = vunpack.c.h.b16 %v329
    %v2143 = vunpack.c.l.b16 %v330
    %v2144 = vunpack.c.h.b16 %v330
    %v2145 = vunpack.c.l.b16 %v331
    %v2146 = vunpack.c.h.b16 %v331
    %v2147 = vunpack.c.l.b16 %v332
    %v2148 = vunpack.c.h.b16 %v332
    %v2149 = vunpack.c.l.b16 %v333
    %v2150 = vunpack.c.h.b16 %v333
    %v2151 = vunpack.c.l.b16 %v334
    %v2152 = vunpack.c.h.b16 %v334
    %v2153 = vunpack.c.l.b16 %v335
    %v2154 = vunpack.c.h.b16 %v335
    %v2155 = vunpack.c.l.b16 %v336
    %v2156 = vunpack.c.h.b16 %v336
    %v2157 = vunpack.c.l.b16 %v337
    %v2158 = vunpack.c.h.b16 %v337
    %v2159 = vunpack.c.l.b16 %v338
    %v2160 = vunpack.c.h.b16 %v338
    %v2161 = vunpack.c.l.b16 %v339
    %v2162 = vunpack.c.h.b16 %v339
    %v2163 = vunpack.c.l.b16 %v340
    %v2164 = vunpack.c.h.b16 %v340
    %v2165 = vunpack.c.l.b16 %v341
    %v2166 = vunpack.c.h.b16 %v341
    %v2167 = vunpack.c.l.b16 %v342
    %v2168 = vunpack.c.h.b16 %v342
    %v2169 = vunpack.c.l.b16 %v343
    %v2170 = vunpack.c.h.b16 %v343
    %v2171 = vunpack.c.l.b16 %v344
    %v2172 = vunpack.c.h.b16 %v344
    %v2173 = vunpack.c.l.b16 %v345
    %v2174 = vunpack.c.h.b16 %v345
    %v2175 = vunpack.c.l.b16 %v346
    %v2176 = vunpack.c.h.b16 %v346
    %v2177 = vunpack.c.l.b16 %v347
    %v2178 = vunpack.c.h.b16 %v347
    %v2179 = vunpack.c.l.b16 %v348
    %v2180 = vunpack.c.h.b16 %v348
    %v2181 = vunpack.c.l.b16 %v349
    %v2182 = vunpack.c.h.b16 %v349
    %v2183 = vunpack.c.l.b16 %v350
    %v2184 = vunpack.c.h.b16 %v350
    %v2185 = vunpack.c.l.b16 %v351
    %v2186 = vunpack.c.h.b16 %v351
    %v2187 = vunpack.c.l.b16 %v352
    %v2188 = vunpack.c.h.b16 %v352
    %v2189 = vunpack.c.l.b16 %v353
    %v2190 = vunpack.c.h.b16 %v353
    %v2191 = vunpack.c.l.b16 %v354
    %v2192 = vunpack.c.h.b16 %v354
    %v2193 = vunpack.c.l.b16 %v355
    %v2194 = vunpack.c.h.b16 %v355
    %v2195 = vunpack.c.l.b16 %v356
    %v2196 = vunpack.c.h.b16 %v356
    %v2197 = vunpack.c.l.b16 %v357
    %v2198 = vunpack.c.h.b16 %v357
    %v2199 = vunpack.c.l.b16 %v358
    %v2200 = vunpack.c.h.b16 %v358
    %v2201 = vunpack.c.l.b16 %v359
    %v2202 = vunpack.c.h.b16 %v359
    %v2203 = vunpack.c.l.b16 %v360
    %v2204 = vunpack.c.h.b16 %v360
    %v2205 = vunpack.c.l.b16 %v361
    %v2206 = vunpack.c.h.b16 %v361
    %v2207 = vunpack.c.l.b16 %v362
    %v2208 = vunpack.c.h.b16 %v362
    %v2209 = vunpack.c.l.b16 %v363
    %v2210 = vunpack.c.h.b16 %v363
    %v2211 = vunpack.c.l.b16 %v364
    %v2212 = vunpack.c.h.b16 %v364
    %v2213 = vunpack.c.l.b16 %v365
    %v2214 = vunpack.c.h.b16 %v365
    %v2215 = vunpack.c.l.b16 %v366
    %v2216 = vunpack.c.h.b16 %v366
    %v2217 = vunpack.c.l.b16 %v367
    %v2218 = vunpack.c.h.b16 %v367
    %v2219 = vunpack.c.l.b16 %v368
    %v2220 = vunpack.c.h.b16 %v368
    %v2221 = vunpack.c.l.b16 %v369
    %v2222 = vunpack.c.h.b16 %v369
    %v2223 = vunpack.c.l.b16 %v370
    %v2224 = vunpack.c.h.b16 %v370
    %v2225 = vunpack.c.l.b16 %v371
    %v2226 = vunpack.c.h.b16 %v371
    %v2227 = vunpack.c.l.b16 %v372
    %v2228 = vunpack.c.h.b16 %v372
    %v2229 = vunpack.c.l.b16 %v373
    %v2230 = vunpack.c.h.b16 %v373
    %v2231 = vunpack.c.l.b16 %v374
    %v2232 = vunpack.c.h.b16 %v374
    %v2233 = vunpack.c.l.b16 %v375
    %v2234 = vunpack.c.h.b16 %v375
    %v2235 = vunpack.c.l.b16 %v376
    %v2236 = vunpack.c.h.b16 %v376
    %v2237 = vunpack.c.l.b16 %v377
    %v2238 = vunpack.c.h.b16 %v377
    %v2239 = vunpack.c.l.b16 %v378
    %v2240 = vunpack.c.h.b16 %v378
    %v2241 = vunpack.c.l.b16 %v379
    %v2242 = vunpack.c.h.b16 %v379
    %v2243 = vunpack.c.l.b16 %v380
    %v2244 = vunpack.c.h.b16 %v380
    %v2245 = vunpack.c.l.b16 %v381
    %v2246 = vunpack.c.h.b16 %v381
    %v2247 = vunpack.c.l.b16 %v382
    %v2248 = vunpack.c.h.b16 %v382
    %v2249 = vunpack.c.l.b16 %v383
    %v2250 = vunpack.c.h.b16 %v383
    %v2251 = vunpack.c.l.b16 %v384
    %v2252 = vunpack.c.h.b16 %v384
    %v2253 = vunpack.c.l.b16 %v385
    %v2254 = vunpack.c.h.b16 %v385
    %v2255 = vunpack.c.l.b16 %v386
    %v2256 = vunpack.c.h.b16 %v386
    %v2257 = vunpack.c.l.b16 %v387
    %v2258 = vunpack.c.h.b16 %v387
    %v2259 = vunpack.c.l.b16 %v388
    %v2260 = vunpack.c.h.b16 %v388
    %v2261 = vunpack.c.l.b16 %v389
    %v2262 = vunpack.c.h.b16 %v389
    %v2263 = vunpack.c.l.b16 %v390
    %v2264 = vunpack.c.h.b16 %v390
    %v2265 = vunpack.c.l.b16 %v391
    %v2266 = vunpack.c.h.b16 %v391
    %v2267 = vunpack.c.l.b16 %v392
    %v2268 = vunpack.c.h.b16 %v392
    %v2269 = vunpack.c.l.b16 %v393
    %v2270 = vunpack.c.h.b16 %v393
    %v2271 = vunpack.c.l.b16 %v394
    %v2272 = vunpack.c.h.b16 %v394
    %v2273 = vunpack.c.l.b16 %v395
    %v2274 = vunpack.c.h.b16 %v395
    %v2275 = vunpack.c.l.b16 %v396
    %v2276 = vunpack.c.h.b16 %v396
    %v2277 = vunpack.c.l.b16 %v397
    %v2278 = vunpack.c.h.b16 %v397
    %v2279 = vunpack.c.l.b16 %v398
    %v2280 = vunpack.c.h.b16 %v398
    %v2281 = vunpack.c.l.b16 %v399
    %v2282 = vunpack.c.h.b16 %v399
    %v2283 = vunpack.c.l.b16 %v400
    %v2284 = vunpack.c.h.b16 %v400
    %v2285 = vunpack.c.l.b16 %v401
    %v2286 = vunpack.c.h.b16 %v401
    %v2287 = vunpack.c.l.b16 %v402
    %v2288 = vunpack.c.h.b16 %v402
    %v2289 = vunpack.c.l.b16 %v403
    %v2290 = vunpack.c.h.b16 %v403
    %v2291 = vunpack.c.l.b16 %v404
    %v2292 = vunpack.c.h.b16 %v404
    %v2293 = vunpack.c.l.b16 %v405
    %v2294 = vunpack.c.h.b16 %v405
    %v2295 = vunpack.c.l.b16 %v406
    %v2296 = vunpack.c.h.b16 %v406
    %v2297 = vunpack.c.l.b16 %v407
    %v2298 = vunpack.c.h.b16 %v407
    %v2299 = vunpack.c.l.b16 %v408
    %v2300 = vunpack.c.h.b16 %v408
    %v2301 = vunpack.c.l.b16 %v409
    %v2302 = vunpack.c.h.b16 %v409
    %v2303 = vunpack.c.l.b16 %v410
    %v2304 = vunpack.c.h.b16 %v410
    %v2305 = vunpack.c.l.b16 %v411
    %v2306 = vunpack.c.h.b16 %v411
    %v2307 = vunpack.c.l.b16 %v412
    %v2308 = vunpack.c.h.b16 %v412
    %v2309 = vunpack.c.l.b16 %v413
    %v2310 = vunpack.c.h.b16 %v413
    %v2311 = vunpack.c.l.b16 %v414
    %v2312 = vunpack.c.h.b16 %v414
    %v2313 = vunpack.c.l.b16 %v415
    %v2314 = vunpack.c.h.b16 %v415
    %v2315 = vunpack.c.l.b16 %v416
    %v2316 = vunpack.c.h.b16 %v416
    %v2317 = vunpack.c.l.b16 %v417
    %v2318 = vunpack.c.h.b16 %v417
    %v2319 = vunpack.c.l.b16 %v418
    %v2320 = vunpack.c.h.b16 %v418
    %v2321 = vunpack.c.l.b16 %v419
    %v2322 = vunpack.c.h.b16 %v419
    %v2323 = vunpack.c.l.b16 %v420
    %v2324 = vunpack.c.h.b16 %v420
    %v2325 = vunpack.c.l.b16 %v421
    %v2326 = vunpack.c.h.b16 %v421
    %v2327 = vunpack.c.l.b16 %v422
    %v2328 = vunpack.c.h.b16 %v422
    %v2329 = vunpack.c.l.b16 %v423
    %v2330 = vunpack.c.h.b16 %v423
    %v2331 = vunpack.c.l.b16 %v424
    %v2332 = vunpack.c.h.b16 %v424
    %v2333 = vunpack.c.l.b16 %v425
    %v2334 = vunpack.c.h.b16 %v425
    %v2335 = vunpack.c.l.b16 %v426
    %v2336 = vunpack.c.h.b16 %v426
    %v2337 = vunpack.c.l.b16 %v427
    %v2338 = vunpack.c.h.b16 %v427
    %v2339 = vunpack.c.l.b16 %v428
    %v2340 = vunpack.c.h.b16 %v428
    %v2341 = vunpack.c.l.b16 %v429
    %v2342 = vunpack.c.h.b16 %v429
    %v2343 = vunpack.c.l.b16 %v430
    %v2344 = vunpack.c.h.b16 %v430
    %v2345 = vunpack.c.l.b16 %v431
    %v2346 = vunpack.c.h.b16 %v431
    %v2347 = vunpack.c.l.b16 %v432
    %v2348 = vunpack.c.h.b16 %v432
    %v2349 = vunpack.c.l.b16 %v433
    %v2350 = vunpack.c.h.b16 %v433
    %v2351 = vunpack.c.l.b16 %v434
    %v2352 = vunpack.c.h.b16 %v434
    %v2353 = vunpack.c.l.b16 %v435
    %v2354 = vunpack.c.h.b16 %v435
    %v2355 = vunpack.c.l.b16 %v436
    %v2356 = vunpack.c.h.b16 %v436
    %v2357 = vunpack.c.l.b16 %v437
    %v2358 = vunpack.c.h.b16 %v437
    %v2359 = vunpack.c.l.b16 %v438
    %v2360 = vunpack.c.h.b16 %v438
    %v2361 = vunpack.c.l.b16 %v439
    %v2362 = vunpack.c.h.b16 %v439
    %v2363 = vunpack.c.l.b16 %v440
    %v2364 = vunpack.c.h.b16 %v440
    %v2365 = vunpack.c.l.b16 %v441
    %v2366 = vunpack.c.h.b16 %v441
    %v2367 = vunpack.c.l.b16 %v442
    %v2368 = vunpack.c.h.b16 %v442
    %v2369 = vunpack.c.l.b16 %v443
    %v2370 = vunpack.c.h.b16 %v443
    %v2371 = vunpack.c.l.b16 %v444
    %v2372 = vunpack.c.h.b16 %v444
    %v2373 = vunpack.c.l.b16 %v445
    %v2374 = vunpack.c.h.b16 %v445
    %v2375 = vunpack.c.l.b16 %v446
    %v2376 = vunpack.c.h.b16 %v446
    %v2377 = vunpack.c.l.b16 %v447
    %v2378 = vunpack.c.h.b16 %v447
    %v2379 = vunpack.c.l.b16 %v448
    %v2380 = vunpack.c.h.b16 %v448
    %v2381 = vunpack.c.l.b16 %v449
    %v2382 = vunpack.c.h.b16 %v449
    %v2383 = vunpack.c.l.b16 %v450
    %v2384 = vunpack.c.h.b16 %v450
    %v2385 = vunpack.c.l.b16 %v451
    %v2386 = vunpack.c.h.b16 %v451
    %v2387 = vunpack.c.l.b16 %v452
    %v2388 = vunpack.c.h.b16 %v452
    %v2389 = vunpack.c.l.b16 %v453
    %v2390 = vunpack.c.h.b16 %v453
    %v2391 = vunpack.c.l.b16 %v454
    %v2392 = vunpack.c.h.b16 %v454
    %v2393 = vunpack.c.l.b16 %v455
    %v2394 = vunpack.c.h.b16 %v455
    %v2395 = vunpack.c.l.b16 %v456
    %v2396 = vunpack.c.h.b16 %v456
    %v2397 = vunpack.c.l.b16 %v457
    %v2398 = vunpack.c.h.b16 %v457
    %v2399 = vunpack.c.l.b16 %v458
    %v2400 = vunpack.c.h.b16 %v458
    %v2401 = vunpack.c.l.b16 %v459
    %v2402 = vunpack.c.h.b16 %v459
    %v2403 = vunpack.c.l.b16 %v460
    %v2404 = vunpack.c.h.b16 %v460
    %v2405 = vunpack.c.l.b16 %v461
    %v2406 = vunpack.c.h.b16 %v461
    %v2407 = vunpack.c.l.b16 %v462
    %v2408 = vunpack.c.h.b16 %v462
    %v2409 = vunpack.c.l.b16 %v463
    %v2410 = vunpack.c.h.b16 %v463
    %v2411 = vunpack.c.l.b16 %v464
    %v2412 = vunpack.c.h.b16 %v464
    %v2413 = vunpack.c.l.b16 %v465
    %v2414 = vunpack.c.h.b16 %v465
    %v2415 = vunpack.c.l.b16 %v466
    %v2416 = vunpack.c.h.b16 %v466
    %v2417 = vunpack.c.l.b16 %v467
    %v2418 = vunpack.c.h.b16 %v467
    %v2419 = vunpack.c.l.b16 %v468
    %v2420 = vunpack.c.h.b16 %v468
    %v2421 = vunpack.c.l.b16 %v469
    %v2422 = vunpack.c.h.b16 %v469
    %v2423 = vunpack.c.l.b16 %v470
    %v2424 = vunpack.c.h.b16 %v470
    %v2425 = vunpack.c.l.b16 %v471
    %v2426 = vunpack.c.h.b16 %v471
    %v2427 = vunpack.c.l.b16 %v472
    %v2428 = vunpack.c.h.b16 %v472
    %v2429 = vunpack.c.l.b16 %v473
    %v2430 = vunpack.c.h.b16 %v473
    %v2431 = vunpack.c.l.b16 %v474
    %v2432 = vunpack.c.h.b16 %v474
    %v2433 = vunpack.c.l.b16 %v475
    %v2434 = vunpack.c.h.b16 %v475
    %v2435 = vunpack.c.l.b16 %v476
    %v2436 = vunpack.c.h.b16 %v476
    %v2437 = vunpack.c.l.b16 %v477
    %v2438 = vunpack.c.h.b16 %v477
    %v2439 = vunpack.c.l.b16 %v478
    %v2440 = vunpack.c.h.b16 %v478
    %v2441 = vunpack.c.l.b16 %v479
    %v2442 = vunpack.c.h.b16 %v479
    %v2443 = vunpack.c.l.b16 %v480
    %v2444 = vunpack.c.h.b16 %v480
    %v2445 = vunpack.c.l.b16 %v481
    %v2446 = vunpack.c.h.b16 %v481
    %v2447 = vunpack.c.l.b16 %v482
    %v2448 = vunpack.c.h.b16 %v482
    %v2449 = vunpack.c.l.b16 %v483
    %v2450 = vunpack.c.h.b16 %v483
    %v2451 = vunpack.c.l.b16 %v484
    %v2452 = vunpack.c.h.b16 %v484
    %v2453 = vunpack.c.l.b16 %v485
    %v2454 = vunpack.c.h.b16 %v485
    %v2455 = vunpack.c.l.b16 %v486
    %v2456 = vunpack.c.h.b16 %v486
    %v2457 = vunpack.c.l.b16 %v487
    %v2458 = vunpack.c.h.b16 %v487
    %v2459 = vunpack.c.l.b16 %v488
    %v2460 = vunpack.c.h.b16 %v488
    %v2461 = vunpack.c.l.b16 %v489
    %v2462 = vunpack.c.h.b16 %v489
    %v2463 = vunpack.c.l.b16 %v490
    %v2464 = vunpack.c.h.b16 %v490
    %v2465 = vunpack.c.l.b16 %v491
    %v2466 = vunpack.c.h.b16 %v491
    %v2467 = vunpack.c.l.b16 %v492
    %v2468 = vunpack.c.h.b16 %v492
    %v2469 = vunpack.c.l.b16 %v493
    %v2470 = vunpack.c.h.b16 %v493
    %v2471 = vunpack.c.l.b16 %v494
    %v2472 = vunpack.c.h.b16 %v494
    %v2473 = vunpack.c.l.b16 %v495
    %v2474 = vunpack.c.h.b16 %v495
    %v2475 = vunpack.c.l.b16 %v496
    %v2476 = vunpack.c.h.b16 %v496
    %v2477 = vunpack.c.l.b16 %v497
    %v2478 = vunpack.c.h.b16 %v497
    %v2479 = vunpack.c.l.b16 %v498
    %v2480 = vunpack.c.h.b16 %v498
    %v2481 = vunpack.c.l.b16 %v499
    %v2482 = vunpack.c.h.b16 %v499
    %v2483 = vunpack.c.l.b16 %v500
    %v2484 = vunpack.c.h.b16 %v500
    %v2485 = vunpack.c.l.b16 %v501
    %v2486 = vunpack.c.h.b16 %v501
    %v2487 = vunpack.c.l.b16 %v502
    %v2488 = vunpack.c.h.b16 %v502
    %v2489 = vunpack.c.l.b16 %v503
    %v2490 = vunpack.c.h.b16 %v503
    %v2491 = vunpack.c.l.b16 %v504
    %v2492 = vunpack.c.h.b16 %v504
    %v2493 = vunpack.c.l.b16 %v505
    %v2494 = vunpack.c.h.b16 %v505
    %v2495 = vunpack.c.l.b16 %v506
    %v2496 = vunpack.c.h.b16 %v506
    %v2497 = vunpack.c.l.b16 %v507
    %v2498 = vunpack.c.h.b16 %v507
    %v2499 = vunpack.c.l.b16 %v508
    %v2500 = vunpack.c.h.b16 %v508
    %v2501 = vunpack.c.l.b16 %v509
    %v2502 = vunpack.c.h.b16 %v509
    %v2503 = vunpack.c.l.b16 %v510
    %v2504 = vunpack.c.h.b16 %v510
    %v2505 = vunpack.c.l.b16 %v511
    %v2506 = vunpack.c.h.b16 %v511
    %v2507 = vunpack.c.l.b16 %v512
    %v2508 = vunpack.c.h.b16 %v512
    %v2509 = vunpack.c.l.b16 %v513
    %v2510 = vunpack.c.h.b16 %v513
    %v2511 = vunpack.c.l.b16 %v514
    %v2512 = vunpack.c.h.b16 %v514
    %v2513 = vunpack.c.l.b16 %v515
    %v2514 = vunpack.c.h.b16 %v515
    %v2515 = vunpack.c.l.b16 %v516
    %v2516 = vunpack.c.h.b16 %v516
    %v2517 = vunpack.c.l.b16 %v517
    %v2518 = vunpack.c.h.b16 %v517
    %v2519 = vunpack.c.l.b16 %v518
    %v2520 = vunpack.c.h.b16 %v518
    %v2521 = vunpack.c.l.b16 %v519
    %v2522 = vunpack.c.h.b16 %v519
    %v2523 = vunpack.c.l.b16 %v520
    %v2524 = vunpack.c.h.b16 %v520
    %v2525 = vunpack.c.l.b16 %v521
    %v2526 = vunpack.c.h.b16 %v521
    %v2527 = vunpack.c.l.b16 %v522
    %v2528 = vunpack.c.h.b16 %v522
    %v2529 = vunpack.c.l.b16 %v523
    %v2530 = vunpack.c.h.b16 %v523
    %v2531 = vunpack.c.l.b16 %v524
    %v2532 = vunpack.c.h.b16 %v524
    %v2533 = vunpack.c.l.b16 %v525
    %v2534 = vunpack.c.h.b16 %v525
    %v2535 = vunpack.c.l.b16 %v526
    %v2536 = vunpack.c.h.b16 %v526
    %v2537 = vunpack.c.l.b16 %v527
    %v2538 = vunpack.c.h.b16 %v527
    %v2539 = vunpack.c.l.b16 %v528
    %v2540 = vunpack.c.h.b16 %v528
    %v2541 = vunpack.c.l.b16 %v529
    %v2542 = vunpack.c.h.b16 %v529
    %v2543 = vunpack.c.l.b16 %v530
    %v2544 = vunpack.c.h.b16 %v530
    %v2545 = vunpack.c.l.b16 %v531
    %v2546 = vunpack.c.h.b16 %v531
    %v2547 = vunpack.c.l.b16 %v532
    %v2548 = vunpack.c.h.b16 %v532
    %v2549 = vunpack.c.l.b16 %v533
    %v2550 = vunpack.c.h.b16 %v533
    %v2551 = vunpack.c.l.b16 %v534
    %v2552 = vunpack.c.h.b16 %v534
    %v2553 = vunpack.c.l.b16 %v535
    %v2554 = vunpack.c.h.b16 %v535
    %v2555 = vunpack.c.l.b16 %v536
    %v2556 = vunpack.c.h.b16 %v536
    %v2557 = vunpack.c.l.b16 %v537
    %v2558 = vunpack.c.h.b16 %v537
    %v2559 = vunpack.c.l.b16 %v538
    %v2560 = vunpack.c.h.b16 %v538
    %v2561 = vunpack.c.l.b16 %v539
    %v2562 = vunpack.c.h.b16 %v539
    %v2563 = vunpack.c.l.b16 %v540
    %v2564 = vunpack.c.h.b16 %v540
    %v2565 = vunpack.c.l.b16 %v541
    %v2566 = vunpack.c.h.b16 %v541
    %v2567 = vunpack.c.l.b16 %v542
    %v2568 = vunpack.c.h.b16 %v542
    %v2569 = vunpack.c.l.b16 %v543
    %v2570 = vunpack.c.h.b16 %v543
    %v2571 = vunpack.c.l.b16 %v544
    %v2572 = vunpack.c.h.b16 %v544
    %v2573 = vunpack.c.l.b16 %v545
    %v2574 = vunpack.c.h.b16 %v545
    %v2575 = vunpack.c.l.b16 %v546
    %v2576 = vunpack.c.h.b16 %v546
    %v2577 = vunpack.c.l.b16 %v547
    %v2578 = vunpack.c.h.b16 %v547
    %v2579 = vunpack.c.l.b16 %v548
    %v2580 = vunpack.c.h.b16 %v548
    %v2581 = vunpack.c.l.b16 %v549
    %v2582 = vunpack.c.h.b16 %v549
    %v2583 = vunpack.c.l.b16 %v550
    %v2584 = vunpack.c.h.b16 %v550
    %v2585 = vunpack.c.l.b16 %v551
    %v2586 = vunpack.c.h.b16 %v551
    %v2587 = vunpack.c.l.b16 %v552
    %v2588 = vunpack.c.h.b16 %v552
    %v2589 = vunpack.c.l.b16 %v553
    %v2590 = vunpack.c.h.b16 %v553
    %v2591 = vunpack.c.l.b16 %v554
    %v2592 = vunpack.c.h.b16 %v554
    %v2593 = vunpack.c.l.b16 %v555
    %v2594 = vunpack.c.h.b16 %v555
    %v2595 = vunpack.c.l.b16 %v556
    %v2596 = vunpack.c.h.b16 %v556
    %v2597 = vunpack.c.l.b16 %v557
    %v2598 = vunpack.c.h.b16 %v557
    %v2599 = vunpack.c.l.b16 %v558
    %v2600 = vunpack.c.h.b16 %v558
    %v2601 = vunpack.c.l.b16 %v559
    %v2602 = vunpack.c.h.b16 %v559
    %v2603 = vunpack.c.l.b16 %v560
    %v2604 = vunpack.c.h.b16 %v560
    %v2605 = vunpack.c.l.b16 %v561
    %v2606 = vunpack.c.h.b16 %v561
    %v2607 = vunpack.c.l.b16 %v562
    %v2608 = vunpack.c.h.b16 %v562
    %v2609 = vunpack.c.l.b16 %v563
    %v2610 = vunpack.c.h.b16 %v563
    %v2611 = vunpack.c.l.b16 %v564
    %v2612 = vunpack.c.h.b16 %v564
    %v2613 = vunpack.c.l.b16 %v565
    %v2614 = vunpack.c.h.b16 %v565
    %v2615 = vunpack.c.l.b16 %v566
    %v2616 = vunpack.c.h.b16 %v566
    %v2617 = vunpack.c.l.b16 %v567
    %v2618 = vunpack.c.h.b16 %v567
    %v2619 = vunpack.c.l.b16 %v568
    %v2620 = vunpack.c.h.b16 %v568
    %v2621 = vunpack.c.l.b16 %v569
    %v2622 = vunpack.c.h.b16 %v569
    %v2623 = vunpack.c.l.b16 %v570
    %v2624 = vunpack.c.h.b16 %v570
    %v2625 = vunpack.c.l.b16 %v571
    %v2626 = vunpack.c.h.b16 %v571
    %v2627 = vunpack.c.l.b16 %v572
    %v2628 = vunpack.c.h.b16 %v572
    %v2629 = vunpack.c.l.b16 %v573
    %v2630 = vunpack.c.h.b16 %v573
    %v2631 = vunpack.c.l.b16 %v574
    %v2632 = vunpack.c.h.b16 %v574
    %v2633 = vunpack.c.l.b16 %v575
    %v2634 = vunpack.c.h.b16 %v575
    %v2635 = vunpack.c.l.b16 %v576
    %v2636 = vunpack.c.h.b16 %v576
    %v2637 = vunpack.c.l.b16 %v577
    %v2638 = vunpack.c.h.b16 %v577
    %v2639 = vunpack.c.l.b16 %v578
    %v2640 = vunpack.c.h.b16 %v578
    %v2641 = vunpack.c.l.b16 %v579
    %v2642 = vunpack.c.h.b16 %v579
    %v2643 = vunpack.c.l.b16 %v580
    %v2644 = vunpack.c.h.b16 %v580
    %v2645 = vunpack.c.l.b16 %v581
    %v2646 = vunpack.c.h.b16 %v581
    %v2647 = vunpack.c.l.b16 %v582
    %v2648 = vunpack.c.h.b16 %v582
    %v2649 = vunpack.c.l.b16 %v583
    %v2650 = vunpack.c.h.b16 %v583
    %v2651 = vunpack.c.l.b16 %v584
    %v2652 = vunpack.c.h.b16 %v584
    %v2653 = vunpack.c.l.b16 %v585
    %v2654 = vunpack.c.h.b16 %v585
    %v2655 = vunpack.c.l.b16 %v586
    %v2656 = vunpack.c.h.b16 %v586
    %v2657 = vunpack.c.l.b16 %v587
    %v2658 = vunpack.c.h.b16 %v587
    %v2659 = vunpack.c.l.b16 %v588
    %v2660 = vunpack.c.h.b16 %v588
    %v2661 = vunpack.c.l.b16 %v589
    %v2662 = vunpack.c.h.b16 %v589
    %v2663 = vunpack.c.l.b16 %v590
    %v2664 = vunpack.c.h.b16 %v590
    %v2665 = vunpack.c.l.b16 %v591
    %v2666 = vunpack.c.h.b16 %v591
    %v2667 = vunpack.c.l.b16 %v592
    %v2668 = vunpack.c.h.b16 %v592
    %v2669 = vunpack.c.l.b16 %v593
    %v2670 = vunpack.c.h.b16 %v593
    %v2671 = vunpack.c.l.b16 %v594
    %v2672 = vunpack.c.h.b16 %v594
    %v2673 = vunpack.c.l.b16 %v595
    %v2674 = vunpack.c.h.b16 %v595
    %v2675 = vunpack.c.l.b16 %v596
    %v2676 = vunpack.c.h.b16 %v596
    %v2677 = vunpack.c.l.b16 %v597
    %v2678 = vunpack.c.h.b16 %v597
    %v2679 = vunpack.c.l.b16 %v598
    %v2680 = vunpack.c.h.b16 %v598
    %v2681 = vunpack.c.l.b16 %v599
    %v2682 = vunpack.c.h.b16 %v599
    %v2683 = vunpack.c.l.b16 %v600
    %v2684 = vunpack.c.h.b16 %v600
    %v2685 = vunpack.c.l.b16 %v601
    %v2686 = vunpack.c.h.b16 %v601
    %v2687 = vunpack.c.l.b16 %v602
    %v2688 = vunpack.c.h.b16 %v602
    %v2689 = vunpack.c.l.b16 %v603
    %v2690 = vunpack.c.h.b16 %v603
    %v2691 = vunpack.c.l.b16 %v604
    %v2692 = vunpack.c.h.b16 %v604
    %v2693 = vunpack.c.l.b16 %v605
    %v2694 = vunpack.c.h.b16 %v605
    %v2695 = vunpack.c.l.b16 %v606
    %v2696 = vunpack.c.h.b16 %v606
    %v2697 = vunpack.c.l.b16 %v607
    %v2698 = vunpack.c.h.b16 %v607
    %v2699 = vunpack.c.l.b16 %v608
    %v2700 = vunpack.c.h.b16 %v608
    %v2701 = vunpack.c.l.b16 %v609
    %v2702 = vunpack.c.h.b16 %v609
    %v2703 = vunpack.c.l.b16 %v610
    %v2704 = vunpack.c.h.b16 %v610
    %v2705 = vunpack.c.l.b16 %v611
    %v2706 = vunpack.c.h.b16 %v611
    %v2707 = vunpack.c.l.b16 %v612
    %v2708 = vunpack.c.h.b16 %v612
    %v2709 = vunpack.c.l.b16 %v613
    %v2710 = vunpack.c.h.b16 %v613
    %v2711 = vunpack.c.l.b16 %v614
    %v2712 = vunpack.c.h.b16 %v614
    %v2713 = vunpack.c.l.b16 %v615
    %v2714 = vunpack.c.h.b16 %v615
    %v2715 = vunpack.c.l.b16 %v616
    %v2716 = vunpack.c.h.b16 %v616
    %v2717 = vunpack.c.l.b16 %v617
    %v2718 = vunpack.c.h.b16 %v617
    %v2719 = vunpack.c.l.b16 %v618
    %v2720 = vunpack.c.h.b16 %v618
    %v2721 = vunpack.c.l.b16 %v619
    %v2722 = vunpack.c.h.b16 %v619
    %v2723 = vunpack.c.l.b16 %v620
    %v2724 = vunpack.c.h.b16 %v620
    %v2725 = vunpack.c.l.b16 %v621
    %v2726 = vunpack.c.h.b16 %v621
    %v2727 = vunpack.c.l.b16 %v622
    %v2728 = vunpack.c.h.b16 %v622
    %v2729 = vunpack.c.l.b16 %v623
    %v2730 = vunpack.c.h.b16 %v623
    %v2731 = vunpack.c.l.b16 %v624
    %v2732 = vunpack.c.h.b16 %v624
    %v2733 = vunpack.c.l.b16 %v625
    %v2734 = vunpack.c.h.b16 %v625
    %v2735 = vunpack.c.l.b16 %v626
    %v2736 = vunpack.c.h.b16 %v626
    %v2737 = vunpack.c.l.b16 %v627
    %v2738 = vunpack.c.h.b16 %v627
    %v2739 = vunpack.c.l.b16 %v628
    %v2740 = vunpack.c.h.b16 %v628
    %v2741 = vunpack.c.l.b16 %v629
    %v2742 = vunpack.c.h.b16 %v629
    %v2743 = vunpack.c.l.b16 %v630
    %v2744 = vunpack.c.h.b16 %v630
    %v2745 = vunpack.c.l.b16 %v631
    %v2746 = vunpack.c.h.b16 %v631
    %v2747 = vunpack.c.l.b16 %v632
    %v2748 = vunpack.c.h.b16 %v632
    %v2749 = vunpack.c.l.b16 %v633
    %v2750 = vunpack.c.h.b16 %v633
    %v2751 = vunpack.c.l.b16 %v634
    %v2752 = vunpack.c.h.b16 %v634
    %v2753 = vunpack.c.l.b16 %v635
    %v2754 = vunpack.c.h.b16 %v635
    %v2755 = vunpack.c.l.b16 %v636
    %v2756 = vunpack.c.h.b16 %v636
    %v2757 = vunpack.c.l.b16 %v637
    %v2758 = vunpack.c.h.b16 %v637
    %v2759 = vunpack.c.l.b16 %v638
    %v2760 = vunpack.c.h.b16 %v638
    %v2761 = vunpack.c.l.b16 %v639
    %v2762 = vunpack.c.h.b16 %v639
    %v2763 = vunpack.c.l.b16 %v640
    %v2764 = vunpack.c.h.b16 %v640
    %v2765 = vunpack.c.l.b16 %v641
    %v2766 = vunpack.c.h.b16 %v641
    %v2767 = vunpack.c.l.b16 %v642
    %v2768 = vunpack.c.h.b16 %v642
    %v2769 = vunpack.c.l.b16 %v643
    %v2770 = vunpack.c.h.b16 %v643
    %v2771 = vunpack.c.l.b16 %v644
    %v2772 = vunpack.c.h.b16 %v644
    %v2773 = vunpack.c.l.b16 %v645
    %v2774 = vunpack.c.h.b16 %v645
    %v2775 = vunpack.c.l.b16 %v646
    %v2776 = vunpack.c.h.b16 %v646
    %v2777 = vunpack.c.l.b16 %v647
    %v2778 = vunpack.c.h.b16 %v647
    %v2779 = vunpack.c.l.b16 %v648
    %v2780 = vunpack.c.h.b16 %v648
    %v2781 = vunpack.c.l.b16 %v649
    %v2782 = vunpack.c.h.b16 %v649
    %v2783 = vunpack.c.l.b16 %v650
    %v2784 = vunpack.c.h.b16 %v650
    %v2785 = vunpack.c.l.b16 %v651
    %v2786 = vunpack.c.h.b16 %v651
    %v2787 = vunpack.c.l.b16 %v652
    %v2788 = vunpack.c.h.b16 %v652
    %v2789 = vunpack.c.l.b16 %v653
    %v2790 = vunpack.c.h.b16 %v653
    %v2791 = vunpack.c.l.b16 %v654
    %v2792 = vunpack.c.h.b16 %v654
    %v2793 = vunpack.c.l.b16 %v655
    %v2794 = vunpack.c.h.b16 %v655
    %v2795 = vunpack.c.l.b16 %v656
    %v2796 = vunpack.c.h.b16 %v656
    %v2797 = vunpack.c.l.b16 %v657
    %v2798 = vunpack.c.h.b16 %v657
    %v2799 = vunpack.c.l.b16 %v658
    %v2800 = vunpack.c.h.b16 %v658
    %v2801 = vunpack.c.l.b16 %v659
    %v2802 = vunpack.c.h.b16 %v659
    %v2803 = vunpack.c.l.b16 %v660
    %v2804 = vunpack.c.h.b16 %v660
    %v2805 = vunpack.c.l.b16 %v661
    %v2806 = vunpack.c.h.b16 %v661
    %v2807 = vunpack.c.l.b16 %v662
    %v2808 = vunpack.c.h.b16 %v662
    %v2809 = vunpack.c.l.b16 %v663
    %v2810 = vunpack.c.h.b16 %v663
    %v2811 = vunpack.c.l.b16 %v664
    %v2812 = vunpack.c.h.b16 %v664
    %v2813 = vunpack.c.l.b16 %v665
    %v2814 = vunpack.c.h.b16 %v665
    %v2815 = vunpack.c.l.b16 %v666
    %v2816 = vunpack.c.h.b16 %v666
    %v2817 = vunpack.c.l.b16 %v667
    %v2818 = vunpack.c.h.b16 %v667
    %v2819 = vunpack.c.l.b16 %v668
    %v2820 = vunpack.c.h.b16 %v668
    %v2821 = vunpack.c.l.b16 %v669
    %v2822 = vunpack.c.h.b16 %v669
    %v2823 = vunpack.c.l.b16 %v670
    %v2824 = vunpack.c.h.b16 %v670
    %v2825 = vunpack.c.l.b16 %v671
    %v2826 = vunpack.c.h.b16 %v671
    %v2827 = vunpack.c.l.b16 %v672
    %v2828 = vunpack.c.h.b16 %v672
    %v2829 = vunpack.c.l.b16 %v673
    %v2830 = vunpack.c.h.b16 %v673
    %v2831 = vunpack.c.l.b16 %v674
    %v2832 = vunpack.c.h.b16 %v674
    %v2833 = vunpack.c.l.b16 %v675
    %v2834 = vunpack.c.h.b16 %v675
    %v2835 = vunpack.c.l.b16 %v676
    %v2836 = vunpack.c.h.b16 %v676
    %v2837 = vunpack.c.l.b16 %v677
    %v2838 = vunpack.c.h.b16 %v677
    %v2839 = vunpack.c.l.b16 %v678
    %v2840 = vunpack.c.h.b16 %v678
    %v2841 = vunpack.c.l.b16 %v679
    %v2842 = vunpack.c.h.b16 %v679
    %v2843 = vunpack.c.l.b16 %v680
    %v2844 = vunpack.c.h.b16 %v680
    %v2845 = vunpack.c.l.b16 %v681
    %v2846 = vunpack.c.h.b16 %v681
    %v2847 = vunpack.c.l.b16 %v682
    %v2848 = vunpack.c.h.b16 %v682
    %v2849 = vunpack.c.l.b16 %v683
    %v2850 = vunpack.c.h.b16 %v683
    %v2851 = vunpack.c.l.b16 %v684
    %v2852 = vunpack.c.h.b16 %v684
    %v2853 = vunpack.c.l.b16 %v685
    %v2854 = vunpack.c.h.b16 %v685
    %v2855 = vunpack.c.l.b16 %v686
    %v2856 = vunpack.c.h.b16 %v686
    %v2857 = vunpack.c.l.b16 %v687
    %v2858 = vunpack.c.h.b16 %v687
    %v2859 = vunpack.c.l.b16 %v688
    %v2860 = vunpack.c.h.b16 %v688
    %v2861 = vunpack.c.l.b16 %v689
    %v2862 = vunpack.c.h.b16 %v689
    %v2863 = vunpack.c.l.b16 %v690
    %v2864 = vunpack.c.h.b16 %v690
    %v2865 = vunpack.c.l.b16 %v691
    %v2866 = vunpack.c.h.b16 %v691
    %v2867 = vunpack.c.l.b16 %v692
    %v2868 = vunpack.c.h.b16 %v692
    %v2869 = vunpack.c.l.b16 %v693
    %v2870 = vunpack.c.h.b16 %v693
    %v2871 = vunpack.c.l.b16 %v694
    %v2872 = vunpack.c.h.b16 %v694
    %v2873 = vunpack.c.l.b16 %v695
    %v2874 = vunpack.c.h.b16 %v695
    %v2875 = vunpack.c.l.b16 %v696
    %v2876 = vunpack.c.h.b16 %v696
    %v2877 = vunpack.c.l.b16 %v697
    %v2878 = vunpack.c.h.b16 %v697
    %v2879 = vunpack.c.l.b16 %v698
    %v2880 = vunpack.c.h.b16 %v698
    %v2881 = vunpack.c.l.b16 %v699
    %v2882 = vunpack.c.h.b16 %v699
    %v2883 = vunpack.c.l.b16 %v700
    %v2884 = vunpack.c.h.b16 %v700
    %v2885 = vunpack.c.l.b16 %v701
    %v2886 = vunpack.c.h.b16 %v701
    %v2887 = vunpack.c.l.b16 %v702
    %v2888 = vunpack.c.h.b16 %v702
    %v2889 = vunpack.c.l.b16 %v703
    %v2890 = vunpack.c.h.b16 %v703
    %v2891 = vunpack.c.l.b16 %v704
    %v2892 = vunpack.c.h.b16 %v704
    %v2893 = vunpack.c.l.b16 %v705
    %v2894 = vunpack.c.h.b16 %v705
    %v2895 = vunpack.c.l.b16 %v706
    %v2896 = vunpack.c.h.b16 %v706
    %v2897 = vunpack.c.l.b16 %v707
    %v2898 = vunpack.c.h.b16 %v707
    %v2899 = vunpack.c.l.b16 %v708
    %v2900 = vunpack.c.h.b16 %v708
    %v2901 = vunpack.c.l.b16 %v709
    %v2902 = vunpack.c.h.b16 %v709
    %v2903 = vunpack.c.l.b16 %v710
    %v2904 = vunpack.c.h.b16 %v710
    %v2905 = vunpack.c.l.b16 %v711
    %v2906 = vunpack.c.h.b16 %v711
    %v2907 = vunpack.c.l.b16 %v712
    %v2908 = vunpack.c.h.b16 %v712
    %v2909 = vunpack.c.l.b16 %v713
    %v2910 = vunpack.c.h.b16 %v713
    %v2911 = vunpack.c.l.b16 %v714
    %v2912 = vunpack.c.h.b16 %v714
    %v2913 = vunpack.c.l.b16 %v715
    %v2914 = vunpack.c.h.b16 %v715
    %v2915 = vunpack.c.l.b16 %v716
    %v2916 = vunpack.c.h.b16 %v716
    %v2917 = vunpack.c.l.b16 %v717
    %v2918 = vunpack.c.h.b16 %v717
    %v2919 = vunpack.c.l.b16 %v718
    %v2920 = vunpack.c.h.b16 %v718
    %v2921 = vunpack.c.l.b16 %v719
    %v2922 = vunpack.c.h.b16 %v719
    %v2923 = vunpack.c.l.b16 %v720
    %v2924 = vunpack.c.h.b16 %v720
    %v2925 = vunpack.c.l.b16 %v721
    %v2926 = vunpack.c.h.b16 %v721
    %v2927 = vunpack.c.l.b16 %v722
    %v2928 = vunpack.c.h.b16 %v722
    %v2929 = vunpack.c.l.b16 %v723
    %v2930 = vunpack.c.h.b16 %v723
    %v2931 = vunpack.c.l.b16 %v724
    %v2932 = vunpack.c.h.b16 %v724
    %v2933 = vunpack.c.l.b16 %v725
    %v2934 = vunpack.c.h.b16 %v725
    %v2935 = vunpack.c.l.b16 %v726
    %v2936 = vunpack.c.h.b16 %v726
    %v2937 = vunpack.c.l.b16 %v727
    %v2938 = vunpack.c.h.b16 %v727
    %v2939 = vunpack.c.l.b16 %v728
    %v2940 = vunpack.c.h.b16 %v728
    %v2941 = vunpack.c.l.b16 %v729
    %v2942 = vunpack.c.h.b16 %v729
    %v2943 = vunpack.c.l.b16 %v730
    %v2944 = vunpack.c.h.b16 %v730
    %v2945 = vunpack.c.l.b16 %v731
    %v2946 = vunpack.c.h.b16 %v731
    %v2947 = vunpack.c.l.b16 %v732
    %v2948 = vunpack.c.h.b16 %v732
    %v2949 = vunpack.c.l.b16 %v733
    %v2950 = vunpack.c.h.b16 %v733
    %v2951 = vunpack.c.l.b16 %v734
    %v2952 = vunpack.c.h.b16 %v734
    %v2953 = vunpack.c.l.b16 %v735
    %v2954 = vunpack.c.h.b16 %v735
    %v2955 = vunpack.c.l.b16 %v736
    %v2956 = vunpack.c.h.b16 %v736
    %v2957 = vunpack.c.l.b16 %v737
    %v2958 = vunpack.c.h.b16 %v737
    %v2959 = vunpack.c.l.b16 %v738
    %v2960 = vunpack.c.h.b16 %v738
    %v2961 = vunpack.c.l.b16 %v739
    %v2962 = vunpack.c.h.b16 %v739
    %v2963 = vunpack.c.l.b16 %v740
    %v2964 = vunpack.c.h.b16 %v740
    %v2965 = vunpack.c.l.b16 %v741
    %v2966 = vunpack.c.h.b16 %v741
    %v2967 = vunpack.c.l.b16 %v742
    %v2968 = vunpack.c.h.b16 %v742
    %v2969 = vunpack.c.l.b16 %v743
    %v2970 = vunpack.c.h.b16 %v743
    %v2971 = vunpack.c.l.b16 %v744
    %v2972 = vunpack.c.h.b16 %v744
    %v2973 = vunpack.c.l.b16 %v745
    %v2974 = vunpack.c.h.b16 %v745
    %v2975 = vunpack.c.l.b16 %v746
    %v2976 = vunpack.c.h.b16 %v746
    %v2977 = vunpack.c.l.b16 %v747
    %v2978 = vunpack.c.h.b16 %v747
    %v2979 = vunpack.c.l.b16 %v748
    %v2980 = vunpack.c.h.b16 %v748
    %v2981 = vunpack.c.l.b16 %v749
    %v2982 = vunpack.c.h.b16 %v749
    %v2983 = vunpack.c.l.b16 %v750
    %v2984 = vunpack.c.h.b16 %v750
    %v2985 = vunpack.c.l.b16 %v751
    %v2986 = vunpack.c.h.b16 %v751
    %v2987 = vunpack.c.l.b16 %v752
    %v2988 = vunpack.c.h.b16 %v752
    %v2989 = vunpack.c.l.b16 %v753
    %v2990 = vunpack.c.h.b16 %v753
    %v2991 = vunpack.c.l.b16 %v754
    %v2992 = vunpack.c.h.b16 %v754
    %v2993 = vunpack.c.l.b16 %v755
    %v2994 = vunpack.c.h.b16 %v755
    %v2995 = vunpack.c.l.b16 %v756
    %v2996 = vunpack.c.h.b16 %v756
    %v2997 = vunpack.c.l.b16 %v757
    %v2998 = vunpack.c.h.b16 %v757
    %v2999 = vunpack.c.l.b16 %v758
    %v3000 = vunpack.c.h.b16 %v758
    %v3001 = vunpack.c.l.b16 %v759
    %v3002 = vunpack.c.h.b16 %v759
    %v3003 = vunpack.c.l.b16 %v760
    %v3004 = vunpack.c.h.b16 %v760
    %v3005 = vunpack.c.l.b16 %v761
    %v3006 = vunpack.c.h.b16 %v761
    %v3007 = vunpack.c.l.b16 %v762
    %v3008 = vunpack.c.h.b16 %v762
    %v3009 = vunpack.c.l.b16 %v763
    %v3010 = vunpack.c.h.b16 %v763
    %v3011 = vunpack.c.l.b16 %v764
    %v3012 = vunpack.c.h.b16 %v764
    %v3013 = vunpack.c.l.b16 %v765
    %v3014 = vunpack.c.h.b16 %v765
    %v3015 = vunpack.c.l.b16 %v766
    %v3016 = vunpack.c.h.b16 %v766
    %v3017 = vunpack.c.l.b16 %v767
    %v3018 = vunpack.c.h.b16 %v767
    %v3019 = vunpack.c.l.b16 %v768
    %v3020 = vunpack.c.h.b16 %v768
    %v3021 = vunpack.c.l.b16 %v769
    %v3022 = vunpack.c.h.b16 %v769
    %v3023 = vunpack.c.l.b16 %v770
    %v3024 = vunpack.c.h.b16 %v770
    %v3025 = vunpack.c.l.b16 %v771
    %v3026 = vunpack.c.h.b16 %v771
    %v3027 = vunpack.c.l.b16 %v772
    %v3028 = vunpack.c.h.b16 %v772
    %v3029 = vunpack.c.l.b16 %v773
    %v3030 = vunpack.c.h.b16 %v773
    %v3031 = vunpack.c.l.b16 %v774
    %v3032 = vunpack.c.h.b16 %v774
    %v3033 = vunpack.c.l.b16 %v775
    %v3034 = vunpack.c.h.b16 %v775
    %v3035 = vunpack.c.l.b16 %v776
    %v3036 = vunpack.c.h.b16 %v776
    %v3037 = vunpack.c.l.b16 %v777
    %v3038 = vunpack.c.h.b16 %v777
    %v3039 = vunpack.c.l.b16 %v778
    %v3040 = vunpack.c.h.b16 %v778
    %v3041 = vunpack.c.l.b16 %v779
    %v3042 = vunpack.c.h.b16 %v779
    %v3043 = vunpack.c.l.b16 %v780
    %v3044 = vunpack.c.h.b16 %v780
    %v3045 = vunpack.c.l.b16 %v781
    %v3046 = vunpack.c.h.b16 %v781
    %v3047 = vunpack.c.l.b16 %v782
    %v3048 = vunpack.c.h.b16 %v782
    %v3049 = vunpack.c.l.b16 %v783
    %v3050 = vunpack.c.h.b16 %v783
    %v3051 = vunpack.c.l.b16 %v784
    %v3052 = vunpack.c.h.b16 %v784
    %v3053 = vunpack.c.l.b16 %v785
    %v3054 = vunpack.c.h.b16 %v785
    %v3055 = vunpack.c.l.b16 %v786
    %v3056 = vunpack.c.h.b16 %v786
    %v3057 = vunpack.c.l.b16 %v787
    %v3058 = vunpack.c.h.b16 %v787
    %v3059 = vunpack.c.l.b16 %v788
    %v3060 = vunpack.c.h.b16 %v788
    %v3061 = vunpack.c.l.b16 %v789
    %v3062 = vunpack.c.h.b16 %v789
    %v3063 = vunpack.c.l.b16 %v790
    %v3064 = vunpack.c.h.b16 %v790
    %v3065 = vunpack.c.l.b16 %v791
    %v3066 = vunpack.c.h.b16 %v791
    %v3067 = vunpack.c.l.b16 %v792
    %v3068 = vunpack.c.h.b16 %v792
    %v3069 = vunpack.c.l.b16 %v793
    %v3070 = vunpack.c.h.b16 %v793
    %v3071 = vunpack.c.l.b16 %v794
    %v3072 = vunpack.c.h.b16 %v794
    %v3073 = vunpack.c.l.b16 %v795
    %v3074 = vunpack.c.h.b16 %v795
    %v3075 = vunpack.c.l.b16 %v796
    %v3076 = vunpack.c.h.b16 %v796
    %v3077 = vunpack.c.l.b16 %v797
    %v3078 = vunpack.c.h.b16 %v797
    %v3079 = vunpack.c.l.b16 %v798
    %v3080 = vunpack.c.h.b16 %v798
    %v3081 = vunpack.c.l.b16 %v799
    %v3082 = vunpack.c.h.b16 %v799
    %v3083 = vunpack.c.l.b16 %v800
    %v3084 = vunpack.c.h.b16 %v800
    %v3085 = vunpack.c.l.b16 %v801
    %v3086 = vunpack.c.h.b16 %v801
    %v3087 = vunpack.c.l.b16 %v802
    %v3088 = vunpack.c.h.b16 %v802
    %v3089 = vunpack.c.l.b16 %v803
    %v3090 = vunpack.c.h.b16 %v803
    %v3091 = vunpack.c.l.b16 %v804
    %v3092 = vunpack.c.h.b16 %v804
    %v3093 = vunpack.c.l.b16 %v805
    %v3094 = vunpack.c.h.b16 %v805
    %v3095 = vunpack.c.l.b16 %v806
    %v3096 = vunpack.c.h.b16 %v806
    %v3097 = vunpack.c.l.b16 %v807
    %v3098 = vunpack.c.h.b16 %v807
    %v3099 = vunpack.c.l.b16 %v808
    %v3100 = vunpack.c.h.b16 %v808
    %v3101 = vunpack.c.l.b16 %v809
    %v3102 = vunpack.c.h.b16 %v809
    %v3103 = vunpack.c.l.b16 %v810
    %v3104 = vunpack.c.h.b16 %v810
    %v3105 = vunpack.c.l.b16 %v811
    %v3106 = vunpack.c.h.b16 %v811
    %v3107 = vunpack.c.l.b16 %v812
    %v3108 = vunpack.c.h.b16 %v812
    %v3109 = vunpack.c.l.b16 %v813
    %v3110 = vunpack.c.h.b16 %v813
    %v3111 = vunpack.c.l.b16 %v814
    %v3112 = vunpack.c.h.b16 %v814
    %v3113 = vunpack.c.l.b16 %v815
    %v3114 = vunpack.c.h.b16 %v815
    %v3115 = vunpack.c.l.b16 %v816
    %v3116 = vunpack.c.h.b16 %v816
    %v3117 = vunpack.c.l.b16 %v817
    %v3118 = vunpack.c.h.b16 %v817
    %v3119 = vunpack.c.l.b16 %v818
    %v3120 = vunpack.c.h.b16 %v818
    %v3121 = vunpack.c.l.b16 %v819
    %v3122 = vunpack.c.h.b16 %v819
    %v3123 = vunpack.c.l.b16 %v820
    %v3124 = vunpack.c.h.b16 %v820
    %v3125 = vunpack.c.l.b16 %v821
    %v3126 = vunpack.c.h.b16 %v821
    %v3127 = vunpack.c.l.b16 %v822
    %v3128 = vunpack.c.h.b16 %v822
    %v3129 = vunpack.c.l.b16 %v823
    %v3130 = vunpack.c.h.b16 %v823
    %v3131 = vunpack.c.l.b16 %v824
    %v3132 = vunpack.c.h.b16 %v824
    %v3133 = vunpack.c.l.b16 %v825
    %v3134 = vunpack.c.h.b16 %v825
    %v3135 = vunpack.c.l.b16 %v826
    %v3136 = vunpack.c.h.b16 %v826
    %v3137 = vunpack.c.l.b16 %v827
    %v3138 = vunpack.c.h.b16 %v827
    %v3139 = vunpack.c.l.b16 %v828
    %v3140 = vunpack.c.h.b16 %v828
    %v3141 = vunpack.c.l.b16 %v829
    %v3142 = vunpack.c.h.b16 %v829
    %v3143 = vunpack.c.l.b16 %v830
    %v3144 = vunpack.c.h.b16 %v830
    %v3145 = vunpack.c.l.b16 %v831
    %v3146 = vunpack.c.h.b16 %v831
    %v3147 = vunpack.c.l.b16 %v832
    %v3148 = vunpack.c.h.b16 %v832
    %v3149 = vunpack.c.l.b16 %v833
    %v3150 = vunpack.c.h.b16 %v833
    %v3151 = vunpack.c.l.b16 %v834
    %v3152 = vunpack.c.h.b16 %v834
    %v3153 = vunpack.c.l.b16 %v835
    %v3154 = vunpack.c.h.b16 %v835
    %v3155 = vunpack.c.l.b16 %v836
    %v3156 = vunpack.c.h.b16 %v836
    %v3157 = vunpack.c.l.b16 %v837
    %v3158 = vunpack.c.h.b16 %v837
    %v3159 = vunpack.c.l.b16 %v838
    %v3160 = vunpack.c.h.b16 %v838
    %v3161 = vunpack.c.l.b16 %v839
    %v3162 = vunpack.c.h.b16 %v839
    %v3163 = vunpack.c.l.b16 %v840
    %v3164 = vunpack.c.h.b16 %v840
    %v3165 = vunpack.c.l.b16 %v841
    %v3166 = vunpack.c.h.b16 %v841
    %v3167 = vunpack.c.l.b16 %v842
    %v3168 = vunpack.c.h.b16 %v842
    %v3169 = vunpack.c.l.b16 %v843
    %v3170 = vunpack.c.h.b16 %v843
    %v3171 = vunpack.c.l.b16 %v844
    %v3172 = vunpack.c.h.b16 %v844
    %v3173 = vunpack.c.l.b16 %v845
    %v3174 = vunpack.c.h.b16 %v845
    %v3175 = vunpack.c.l.b16 %v846
    %v3176 = vunpack.c.h.b16 %v846
    %v3177 = vunpack.c.l.b16 %v847
    %v3178 = vunpack.c.h.b16 %v847
    %v3179 = vunpack.c.l.b16 %v848
    %v3180 = vunpack.c.h.b16 %v848
    %v3181 = vunpack.c.l.b16 %v849
    %v3182 = vunpack.c.h.b16 %v849
    %v3183 = vunpack.c.l.b16 %v850
    %v3184 = vunpack.c.h.b16 %v850
    %v3185 = vunpack.c.l.b16 %v851
    %v3186 = vunpack.c.h.b16 %v851
    %v3187 = vunpack.c.l.b16 %v852
    %v3188 = vunpack.c.h.b16 %v852
    %v3189 = vunpack.c.l.b16 %v853
    %v3190 = vunpack.c.h.b16 %v853
    %v3191 = vunpack.c.l.b16 %v854
    %v3192 = vunpack.c.h.b16 %v854
    %v3193 = vunpack.c.l.b16 %v855
    %v3194 = vunpack.c.h.b16 %v855
    %v3195 = vunpack.c.l.b16 %v856
    %v3196 = vunpack.c.h.b16 %v856
    %v3197 = vunpack.c.l.b16 %v857
    %v3198 = vunpack.c.h.b16 %v857
    %v3199 = vunpack.c.l.b16 %v858
    %v3200 = vunpack.c.h.b16 %v858
    %v3201 = vunpack.c.l.b16 %v859
    %v3202 = vunpack.c.h.b16 %v859
    %v3203 = vunpack.c.l.b16 %v860
    %v3204 = vunpack.c.h.b16 %v860
    %v3205 = vunpack.c.l.b16 %v861
    %v3206 = vunpack.c.h.b16 %v861
    %v3207 = vunpack.c.l.b16 %v862
    %v3208 = vunpack.c.h.b16 %v862
    %v3209 = vunpack.c.l.b16 %v863
    %v3210 = vunpack.c.h.b16 %v863
    %v3211 = vunpack.c.l.b16 %v864
    %v3212 = vunpack.c.h.b16 %v864
    %v3213 = vunpack.c.l.b16 %v865
    %v3214 = vunpack.c.h.b16 %v865
    %v3215 = vunpack.c.l.b16 %v866
    %v3216 = vunpack.c.h.b16 %v866
    %v3217 = vunpack.c.l.b16 %v867
    %v3218 = vunpack.c.h.b16 %v867
    %v3219 = vunpack.c.l.b16 %v868
    %v3220 = vunpack.c.h.b16 %v868
    %v3221 = vunpack.c.l.b16 %v869
    %v3222 = vunpack.c.h.b16 %v869
    %v3223 = vunpack.c.l.b16 %v870
    %v3224 = vunpack.c.h.b16 %v870
    %v3225 = vunpack.c.l.b16 %v871
    %v3226 = vunpack.c.h.b16 %v871
    %v3227 = vunpack.c.l.b16 %v872
    %v3228 = vunpack.c.h.b16 %v872
    %v3229 = vunpack.c.l.b16 %v873
    %v3230 = vunpack.c.h.b16 %v873
    %v3231 = vunpack.c.l.b16 %v874
    %v3232 = vunpack.c.h.b16 %v874
    %v3233 = vunpack.c.l.b16 %v875
    %v3234 = vunpack.c.h.b16 %v875
    %v3235 = vunpack.c.l.b16 %v876
    %v3236 = vunpack.c.h.b16 %v876
    %v3237 = vunpack.c.l.b16 %v877
    %v3238 = vunpack.c.h.b16 %v877
    %v3239 = vunpack.c.l.b16 %v878
    %v3240 = vunpack.c.h.b16 %v878
    %v3241 = vunpack.c.l.b16 %v879
    %v3242 = vunpack.c.h.b16 %v879
    %v3243 = vunpack.c.l.b16 %v880
    %v3244 = vunpack.c.h.b16 %v880
    %v3245 = vunpack.c.l.b16 %v881
    %v3246 = vunpack.c.h.b16 %v881
    %v3247 = vunpack.c.l.b16 %v882
    %v3248 = vunpack.c.h.b16 %v882
    %v3249 = vunpack.c.l.b16 %v883
    %v3250 = vunpack.c.h.b16 %v883
    %v3251 = vunpack.c.l.b16 %v884
    %v3252 = vunpack.c.h.b16 %v884
    %v3253 = vunpack.c.l.b16 %v885
    %v3254 = vunpack.c.h.b16 %v885
    %v3255 = vunpack.c.l.b16 %v886
    %v3256 = vunpack.c.h.b16 %v886
    %v3257 = vunpack.c.l.b16 %v887
    %v3258 = vunpack.c.h.b16 %v887
    %v3259 = vunpack.c.l.b16 %v888
    %v3260 = vunpack.c.h.b16 %v888
    %v3261 = vunpack.c.l.b16 %v889
    %v3262 = vunpack.c.h.b16 %v889
    %v3263 = vunpack.c.l.b16 %v890
    %v3264 = vunpack.c.h.b16 %v890
    %v3265 = vunpack.c.l.b16 %v891
    %v3266 = vunpack.c.h.b16 %v891
    %v3267 = vunpack.c.l.b16 %v892
    %v3268 = vunpack.c.h.b16 %v892
    %v3269 = vunpack.c.l.b16 %v893
    %v3270 = vunpack.c.h.b16 %v893
    %v3271 = vunpack.c.l.b16 %v894
    %v3272 = vunpack.c.h.b16 %v894
    %v3273 = vunpack.c.l.b16 %v895
    %v3274 = vunpack.c.h.b16 %v895
    %v3275 = vunpack.c.l.b16 %v896
    %v3276 = vunpack.c.h.b16 %v896
    %v3277 = vunpack.c.l.b16 %v897
    %v3278 = vunpack.c.h.b16 %v897
    %v3279 = vunpack.c.l.b16 %v898
    %v3280 = vunpack.c.h.b16 %v898
    %v3281 = vunpack.c.l.b16 %v899
    %v3282 = vunpack.c.h.b16 %v899
    %v3283 = vunpack.c.l.b16 %v900
    %v3284 = vunpack.c.h.b16 %v900
    %v3285 = vunpack.c.l.b16 %v901
    %v3286 = vunpack.c.h.b16 %v901
    %v3287 = vunpack.c.l.b16 %v902
    %v3288 = vunpack.c.h.b16 %v902
    %v3289 = vunpack.c.l.b16 %v903
    %v3290 = vunpack.c.h.b16 %v903
    %v3291 = vunpack.c.l.b16 %v904
    %v3292 = vunpack.c.h.b16 %v904
    %v3293 = vunpack.c.l.b16 %v905
    %v3294 = vunpack.c.h.b16 %v905
    %v3295 = vunpack.c.l.b16 %v906
    %v3296 = vunpack.c.h.b16 %v906
    %v3297 = vunpack.c.l.b16 %v907
    %v3298 = vunpack.c.h.b16 %v907
    %v3299 = vunpack.c.l.b16 %v908
    %v3300 = vunpack.c.h.b16 %v908
    %v3301 = vunpack.c.l.b16 %v909
    %v3302 = vunpack.c.h.b16 %v909
    %v3303 = vunpack.c.l.b16 %v910
    %v3304 = vunpack.c.h.b16 %v910
    %v3305 = vunpack.c.l.b16 %v911
    %v3306 = vunpack.c.h.b16 %v911
    %v3307 = vunpack.c.l.b16 %v912
    %v3308 = vunpack.c.h.b16 %v912
    %v3309 = vunpack.c.l.b16 %v913
    %v3310 = vunpack.c.h.b16 %v913
    %v3311 = vunpack.c.l.b16 %v914
    %v3312 = vunpack.c.h.b16 %v914
    %v3313 = vunpack.c.l.b16 %v915
    %v3314 = vunpack.c.h.b16 %v915
    %v3315 = vunpack.c.l.b16 %v916
    %v3316 = vunpack.c.h.b16 %v916
    %v3317 = vunpack.c.l.b16 %v917
    %v3318 = vunpack.c.h.b16 %v917
    %v3319 = vunpack.c.l.b16 %v918
    %v3320 = vunpack.c.h.b16 %v918
    %v3321 = vunpack.c.l.b16 %v919
    %v3322 = vunpack.c.h.b16 %v919
    %v3323 = vunpack.c.l.b16 %v920
    %v3324 = vunpack.c.h.b16 %v920
    %v3325 = vunpack.c.l.b16 %v921
    %v3326 = vunpack.c.h.b16 %v921
    %v3327 = vunpack.c.l.b16 %v922
    %v3328 = vunpack.c.h.b16 %v922
    %v3329 = vunpack.c.l.b16 %v923
    %v3330 = vunpack.c.h.b16 %v923
    %v3331 = vunpack.c.l.b16 %v924
    %v3332 = vunpack.c.h.b16 %v924
    %v3333 = vunpack.c.l.b16 %v925
    %v3334 = vunpack.c.h.b16 %v925
    %v3335 = vunpack.c.l.b16 %v926
    %v3336 = vunpack.c.h.b16 %v926
    %v3337 = vunpack.c.l.b16 %v927
    %v3338 = vunpack.c.h.b16 %v927
    %v3339 = vunpack.c.l.b16 %v928
    %v3340 = vunpack.c.h.b16 %v928
    %v3341 = vunpack.c.l.b16 %v929
    %v3342 = vunpack.c.h.b16 %v929
    %v3343 = vunpack.c.l.b16 %v930
    %v3344 = vunpack.c.h.b16 %v930
    %v3345 = vunpack.c.l.b16 %v931
    %v3346 = vunpack.c.h.b16 %v931
    %v3347 = vunpack.c.l.b16 %v932
    %v3348 = vunpack.c.h.b16 %v932
    %v3349 = vunpack.c.l.b16 %v933
    %v3350 = vunpack.c.h.b16 %v933
    %v3351 = vunpack.c.l.b16 %v934
    %v3352 = vunpack.c.h.b16 %v934
    %v3353 = vunpack.c.l.b16 %v935
    %v3354 = vunpack.c.h.b16 %v935
    %v3355 = vunpack.c.l.b16 %v936
    %v3356 = vunpack.c.h.b16 %v936
    %v3357 = vunpack.c.l.b16 %v937
    %v3358 = vunpack.c.h.b16 %v937
    %v3359 = vunpack.c.l.b16 %v938
    %v3360 = vunpack.c.h.b16 %v938
    %v3361 = vunpack.c.l.b16 %v939
    %v3362 = vunpack.c.h.b16 %v939
    %v3363 = vunpack.c.l.b16 %v940
    %v3364 = vunpack.c.h.b16 %v940
    %v3365 = vunpack.c.l.b16 %v941
    %v3366 = vunpack.c.h.b16 %v941
    %v3367 = vunpack.c.l.b16 %v942
    %v3368 = vunpack.c.h.b16 %v942
    %v3369 = vunpack.c.l.b16 %v943
    %v3370 = vunpack.c.h.b16 %v943
    %v3371 = vunpack.c.l.b16 %v944
    %v3372 = vunpack.c.h.b16 %v944
    %v3373 = vunpack.c.l.b16 %v945
    %v3374 = vunpack.c.h.b16 %v945
    %v3375 = vunpack.c.l.b16 %v946
    %v3376 = vunpack.c.h.b16 %v946
    %v3377 = vunpack.c.l.b16 %v947
    %v3378 = vunpack.c.h.b16 %v947
    %v3379 = vunpack.c.l.b16 %v948
    %v3380 = vunpack.c.h.b16 %v948
    %v3381 = vunpack.c.l.b16 %v949
    %v3382 = vunpack.c.h.b16 %v949
    %v3383 = vunpack.c.l.b16 %v950
    %v3384 = vunpack.c.h.b16 %v950
    %v3385 = vunpack.c.l.b16 %v951
    %v3386 = vunpack.c.h.b16 %v951
    %v3387 = vunpack.c.l.b16 %v952
    %v3388 = vunpack.c.h.b16 %v952
    %v3389 = vunpack.c.l.b16 %v953
    %v3390 = vunpack.c.h.b16 %v953
    %v3391 = vunpack.c.l.b16 %v954
    %v3392 = vunpack.c.h.b16 %v954
    %v3393 = vunpack.c.l.b16 %v955
    %v3394 = vunpack.c.h.b16 %v955
    %v3395 = vunpack.c.l.b16 %v956
    %v3396 = vunpack.c.h.b16 %v956
    %v3397 = vunpack.c.l.b16 %v957
    %v3398 = vunpack.c.h.b16 %v957
    %v3399 = vunpack.c.l.b16 %v958
    %v3400 = vunpack.c.h.b16 %v958
    %v3401 = vunpack.c.l.b16 %v959
    %v3402 = vunpack.c.h.b16 %v959
    %v3403 = vunpack.c.l.b16 %v960
    %v3404 = vunpack.c.h.b16 %v960
    %v3405 = vunpack.c.l.b16 %v961
    %v3406 = vunpack.c.h.b16 %v961
    %v3407 = vunpack.c.l.b16 %v962
    %v3408 = vunpack.c.h.b16 %v962
    %v3409 = vunpack.c.l.b16 %v963
    %v3410 = vunpack.c.h.b16 %v963
    %v3411 = vunpack.c.l.b16 %v964
    %v3412 = vunpack.c.h.b16 %v964
    %v3413 = vunpack.c.l.b16 %v965
    %v3414 = vunpack.c.h.b16 %v965
    %v3415 = vunpack.c.l.b16 %v966
    %v3416 = vunpack.c.h.b16 %v966
    %v3417 = vunpack.c.l.b16 %v967
    %v3418 = vunpack.c.h.b16 %v967
    %v3419 = vunpack.c.l.b16 %v968
    %v3420 = vunpack.c.h.b16 %v968
    %v3421 = vunpack.c.l.b16 %v969
    %v3422 = vunpack.c.h.b16 %v969
    %v3423 = vunpack.c.l.b16 %v970
    %v3424 = vunpack.c.h.b16 %v970
    %v3425 = vunpack.c.l.b16 %v971
    %v3426 = vunpack.c.h.b16 %v971
    %v3427 = vunpack.c.l.b16 %v972
    %v3428 = vunpack.c.h.b16 %v972
    %v3429 = vunpack.c.l.b16 %v973
    %v3430 = vunpack.c.h.b16 %v973
    %v3431 = vunpack.c.l.b16 %v974
    %v3432 = vunpack.c.h.b16 %v974
    %v3433 = vunpack.c.l.b16 %v975
    %v3434 = vunpack.c.h.b16 %v975
    %v3435 = vunpack.c.l.b16 %v976
    %v3436 = vunpack.c.h.b16 %v976
    %v3437 = vunpack.c.l.b16 %v977
    %v3438 = vunpack.c.h.b16 %v977
    %v3439 = vunpack.c.l.b16 %v978
    %v3440 = vunpack.c.h.b16 %v978
    %v3441 = vunpack.c.l.b16 %v979
    %v3442 = vunpack.c.h.b16 %v979
    %v3443 = vunpack.c.l.b16 %v980
    %v3444 = vunpack.c.h.b16 %v980
    %v3445 = vpack.c.b16 %v1849, %v1845
    %v3446 = vpack.c.b16 %v1850, %v1846
    %v3447 = vpack.c.b16 %v1851, %v1847
    %v3448 = vpack.c.b16 %v1852, %v1848
    %v3449 = vpack.c.b16 %v1857, %v1853
    %v3450 = vpack.c.b16 %v1858, %v1854
    %v3451 = vpack.c.b16 %v1859, %v1855
    %v3452 = vpack.c.b16 %v1860, %v1856
    %v3453 = vpack.c.b16 %v1865, %v1861
    %v3454 = vpack.c.b16 %v1866, %v1862
    %v3455 = vpack.c.b16 %v1867, %v1863
    %v3456 = vpack.c.b16 %v1868, %v1864
    %v3457 = vpack.c.b16 %v1873, %v1869
    %v3458 = vpack.c.b16 %v1874, %v1870
    %v3459 = vpack.c.b16 %v1875, %v1871
    %v3460 = vpack.c.b16 %v1876, %v1872
    %v3461 = vpack.c.b16 %v1881, %v1877
    %v3462 = vpack.c.b16 %v1882, %v1878
    %v3463 = vpack.c.b16 %v1883, %v1879
    %v3464 = vpack.c.b16 %v1884, %v1880
    %v3465 = vpack.c.b16 %v1889, %v1885
    %v3466 = vpack.c.b16 %v1890, %v1886
    %v3467 = vpack.c.b16 %v1891, %v1887
    %v3468 = vpack.c.b16 %v1892, %v1888
    %v3469 = vpack.c.b16 %v1897, %v1893
    %v3470 = vpack.c.b16 %v1898, %v1894
    %v3471 = vpack.c.b16 %v1899, %v1895
    %v3472 = vpack.c.b16 %v1900, %v1896
    %v3473 = vpack.c.b16 %v1905, %v1901
    %v3474 = vpack.c.b16 %v1906, %v1902
    %v3475 = vpack.c.b16 %v1907, %v1903
    %v3476 = vpack.c.b16 %v1908, %v1904
    %v3477 = vpack.c.b16 %v1913, %v1909
    %v3478 = vpack.c.b16 %v1914, %v1910
    %v3479 = vpack.c.b16 %v1915, %v1911
    %v3480 = vpack.c.b16 %v1916, %v1912
    %v3481 = vpack.c.b16 %v1921, %v1917
    %v3482 = vpack.c.b16 %v1922, %v1918
    %v3483 = vpack.c.b16 %v1923, %v1919
    %v3484 = vpack.c.b16 %v1924, %v1920
    %v3485 = vpack.c.b16 %v1929, %v1925
    %v3486 = vpack.c.b16 %v1930, %v1926
    %v3487 = vpack.c.b16 %v1931, %v1927
    %v3488 = vpack.c.b16 %v1932, %v1928
    %v3489 = vpack.c.b16 %v1937, %v1933
    %v3490 = vpack.c.b16 %v1938, %v1934
    %v3491 = vpack.c.b16 %v1939, %v1935
    %v3492 = vpack.c.b16 %v1940, %v1936
    %v3493 = vpack.c.b16 %v1945, %v1941
    %v3494 = vpack.c.b16 %v1946, %v1942
    %v3495 = vpack.c.b16 %v1947, %v1943
    %v3496 = vpack.c.b16 %v1948, %v1944
    %v3497 = vpack.c.b16 %v1953, %v1949
    %v3498 = vpack.c.b16 %v1954, %v1950
    %v3499 = vpack.c.b16 %v1955, %v1951
    %v3500 = vpack.c.b16 %v1956, %v1952
    %v3501 = vpack.c.b16 %v1961, %v1957
    %v3502 = vpack.c.b16 %v1962, %v1958
    %v3503 = vpack.c.b16 %v1963, %v1959
    %v3504 = vpack.c.b16 %v1964, %v1960
    %v3505 = vpack.c.b16 %v1969, %v1965
    %v3506 = vpack.c.b16 %v1970, %v1966
    %v3507 = vpack.c.b16 %v1971, %v1967
    %v3508 = vpack.c.b16 %v1972, %v1968
    %v3509 = vpack.c.b16 %v1977, %v1973
    %v3510 = vpack.c.b16 %v1978, %v1974
    %v3511 = vpack.c.b16 %v1979, %v1975
    %v3512 = vpack.c.b16 %v1980, %v1976
    %v3513 = vpack.c.b16 %v1985, %v1981
    %v3514 = vpack.c.b16 %v1986, %v1982
    %v3515 = vpack.c.b16 %v1987, %v1983
    %v3516 = vpack.c.b16 %v1988, %v1984
    %v3517 = vpack.c.b16 %v1993, %v1989
    %v3518 = vpack.c.b16 %v1994, %v1990
    %v3519 = vpack.c.b16 %v1995, %v1991
    %v3520 = vpack.c.b16 %v1996, %v1992
    %v3521 = vpack.c.b16 %v2001, %v1997
    %v3522 = vpack.c.b16 %v2002, %v1998
    %v3523 = vpack.c.b16 %v2003, %v1999
    %v3524 = vpack.c.b16 %v2004, %v2000
    %v3525 = vpack.c.b16 %v2009, %v2005
    %v3526 = vpack.c.b16 %v2010, %v2006
    %v3527 = vpack.c.b16 %v2011, %v2007
    %v3528 = vpack.c.b16 %v2012, %v2008
    %v3529 = vpack.c.b16 %v2017, %v2013
    %v3530 = vpack.c.b16 %v2018, %v2014
    %v3531 = vpack.c.b16 %v2019, %v2015
    %v3532 = vpack.c.b16 %v2020, %v2016
    %v3533 = vpack.c.b16 %v2025, %v2021
    %v3534 = vpack.c.b16 %v2026, %v2022
    %v3535 = vpack.c.b16 %v2027, %v2023
    %v3536 = vpack.c.b16 %v2028, %v2024
    %v3537 = vpack.c.b16 %v2033, %v2029
    %v3538 = vpack.c.b16 %v2034, %v2030
    %v3539 = vpack.c.b16 %v2035, %v2031
    %v3540 = vpack.c.b16 %v2036, %v2032
    %v3541 = vpack.c.b16 %v2041, %v2037
    %v3542 = vpack.c.b16 %v2042, %v2038
    %v3543 = vpack.c.b16 %v2043, %v2039
    %v3544 = vpack.c.b16 %v2044, %v2040
    %v3545 = vpack.c.b16 %v2049, %v2045
    %v3546 = vpack.c.b16 %v2050, %v2046
    %v3547 = vpack.c.b16 %v2051, %v2047
    %v3548 = vpack.c.b16 %v2052, %v2048
    %v3549 = vpack.c.b16 %v2057, %v2053
    %v3550 = vpack.c.b16 %v2058, %v2054
    %v3551 = vpack.c.b16 %v2059, %v2055
    %v3552 = vpack.c.b16 %v2060, %v2056
    %v3553 = vpack.c.b16 %v2065, %v2061
    %v3554 = vpack.c.b16 %v2066, %v2062
    %v3555 = vpack.c.b16 %v2067, %v2063
    %v3556 = vpack.c.b16 %v2068, %v2064
    %v3557 = vpack.c.b16 %v2073, %v2069
    %v3558 = vpack.c.b16 %v2074, %v2070
    %v3559 = vpack.c.b16 %v2075, %v2071
    %v3560 = vpack.c.b16 %v2076, %v2072
    %v3561 = vpack.c.b16 %v2081, %v2077
    %v3562 = vpack.c.b16 %v2082, %v2078
    %v3563 = vpack.c.b16 %v2083, %v2079
    %v3564 = vpack.c.b16 %v2084, %v2080
    %v3565 = vpack.c.b16 %v2089, %v2085
    %v3566 = vpack.c.b16 %v2090, %v2086
    %v3567 = vpack.c.b16 %v2091, %v2087
    %v3568 = vpack.c.b16 %v2092, %v2088
    %v3569 = vpack.c.b16 %v2097, %v2093
    %v3570 = vpack.c.b16 %v2098, %v2094
    %v3571 = vpack.c.b16 %v2099, %v2095
    %v3572 = vpack.c.b16 %v2100, %v2096
    %v3573 = vpack.c.b16 %v2105, %v2101
    %v3574 = vpack.c.b16 %v2106, %v2102
    %v3575 = vpack.c.b16 %v2107, %v2103
    %v3576 = vpack.c.b16 %v2108, %v2104
    %v3577 = vpack.c.b16 %v2113, %v2109
    %v3578 = vpack.c.b16 %v2114, %v2110
    %v3579 = vpack.c.b16 %v2115, %v2111
    %v3580 = vpack.c.b16 %v2116, %v2112
    %v3581 = vpack.c.b16 %v2121, %v2117
    %v3582 = vpack.c.b16 %v2122, %v2118
    %v3583 = vpack.c.b16 %v2123, %v2119
    %v3584 = vpack.c.b16 %v2124, %v2120
    %v3585 = vpack.c.b16 %v2129, %v2125
    %v3586 = vpack.c.b16 %v2130, %v2126
    %v3587 = vpack.c.b16 %v2131, %v2127
    %v3588 = vpack.c.b16 %v2132, %v2128
    %v3589 = vpack.c.b16 %v2137, %v2133
    %v3590 = vpack.c.b16 %v2138, %v2134
    %v3591 = vpack.c.b16 %v2139, %v2135
    %v3592 = vpack.c.b16 %v2140, %v2136
    %v3593 = vpack.c.b16 %v2145, %v2141
    %v3594 = vpack.c.b16 %v2146, %v2142
    %v3595 = vpack.c.b16 %v2147, %v2143
    %v3596 = vpack.c.b16 %v2148, %v2144
    %v3597 = vpack.c.b16 %v2153, %v2149
    %v3598 = vpack.c.b16 %v2154, %v2150
    %v3599 = vpack.c.b16 %v2155, %v2151
    %v3600 = vpack.c.b16 %v2156, %v2152
    %v3601 = vpack.c.b16 %v2161, %v2157
    %v3602 = vpack.c.b16 %v2162, %v2158
    %v3603 = vpack.c.b16 %v2163, %v2159
    %v3604 = vpack.c.b16 %v2164, %v2160
    %v3605 = vpack.c.b16 %v2169, %v2165
    %v3606 = vpack.c.b16 %v2170, %v2166
    %v3607 = vpack.c.b16 %v2171, %v2167
    %v3608 = vpack.c.b16 %v2172, %v2168
    %v3609 = vpack.c.b16 %v2177, %v2173
    %v3610 = vpack.c.b16 %v2178, %v2174
    %v3611 = vpack.c.b16 %v2179, %v2175
    %v3612 = vpack.c.b16 %v2180, %v2176
    %v3613 = vpack.c.b16 %v2185, %v2181
    %v3614 = vpack.c.b16 %v2186, %v2182
    %v3615 = vpack.c.b16 %v2187, %v2183
    %v3616 = vpack.c.b16 %v2188, %v2184
    %v3617 = vpack.c.b16 %v2193, %v2189
    %v3618 = vpack.c.b16 %v2194, %v2190
    %v3619 = vpack.c.b16 %v2195, %v2191
    %v3620 = vpack.c.b16 %v2196, %v2192
    %v3621 = vpack.c.b16 %v2201, %v2197
    %v3622 = vpack.c.b16 %v2202, %v2198
    %v3623 = vpack.c.b16 %v2203, %v2199
    %v3624 = vpack.c.b16 %v2204, %v2200
    %v3625 = vpack.c.b16 %v2209, %v2205
    %v3626 = vpack.c.b16 %v2210, %v2206
    %v3627 = vpack.c.b16 %v2211, %v2207
    %v3628 = vpack.c.b16 %v2212, %v2208
    %v3629 = vpack.c.b16 %v2217, %v2213
    %v3630 = vpack.c.b16 %v2218, %v2214
    %v3631 = vpack.c.b16 %v2219, %v2215
    %v3632 = vpack.c.b16 %v2220, %v2216
    %v3633 = vpack.c.b16 %v2225, %v2221
    %v3634 = vpack.c.b16 %v2226, %v2222
    %v3635 = vpack.c.b16 %v2227, %v2223
    %v3636 = vpack.c.b16 %v2228, %v2224
    %v3637 = vpack.c.b16 %v2233, %v2229
    %v3638 = vpack.c.b16 %v2234, %v2230
    %v3639 = vpack.c.b16 %v2235, %v2231
    %v3640 = vpack.c.b16 %v2236, %v2232
    %v3641 = vpack.c.b16 %v2241, %v2237
    %v3642 = vpack.c.b16 %v2242, %v2238
    %v3643 = vpack.c.b16 %v2243, %v2239
    %v3644 = vpack.c.b16 %v2244, %v2240
    %v3645 = vpack.c.b16 %v2249, %v2245
    %v3646 = vpack.c.b16 %v2250, %v2246
    %v3647 = vpack.c.b16 %v2251, %v2247
    %v3648 = vpack.c.b16 %v2252, %v2248
    %v3649 = vpack.c.b16 %v2257, %v2253
    %v3650 = vpack.c.b16 %v2258, %v2254
    %v3651 = vpack.c.b16 %v2259, %v2255
    %v3652 = vpack.c.b16 %v2260, %v2256
    %v3653 = vpack.c.b16 %v2265, %v2261
    %v3654 = vpack.c.b16 %v2266, %v2262
    %v3655 = vpack.c.b16 %v2267, %v2263
    %v3656 = vpack.c.b16 %v2268, %v2264
    %v3657 = vpack.c.b16 %v2273, %v2269
    %v3658 = vpack.c.b16 %v2274, %v2270
    %v3659 = vpack.c.b16 %v2275, %v2271
    %v3660 = vpack.c.b16 %v2276, %v2272
    %v3661 = vpack.c.b16 %v2281, %v2277
    %v3662 = vpack.c.b16 %v2282, %v2278
    %v3663 = vpack.c.b16 %v2283, %v2279
    %v3664 = vpack.c.b16 %v2284, %v2280
    %v3665 = vpack.c.b16 %v2289, %v2285
    %v3666 = vpack.c.b16 %v2290, %v2286
    %v3667 = vpack.c.b16 %v2291, %v2287
    %v3668 = vpack.c.b16 %v2292, %v2288
    %v3669 = vpack.c.b16 %v2297, %v2293
    %v3670 = vpack.c.b16 %v2298, %v2294
    %v3671 = vpack.c.b16 %v2299, %v2295
    %v3672 = vpack.c.b16 %v2300, %v2296
    %v3673 = vpack.c.b16 %v2305, %v2301
    %v3674 = vpack.c.b16 %v2306, %v2302
    %v3675 = vpack.c.b16 %v2307, %v2303
    %v3676 = vpack.c.b16 %v2308, %v2304
    %v3677 = vpack.c.b16 %v2313, %v2309
    %v3678 = vpack.c.b16 %v2314, %v2310
    %v3679 = vpack.c.b16 %v2315, %v2311
    %v3680 = vpack.c.b16 %v2316, %v2312
    %v3681 = vpack.c.b16 %v2321, %v2317
    %v3682 = vpack.c.b16 %v2322, %v2318
    %v3683 = vpack.c.b16 %v2323, %v2319
    %v3684 = vpack.c.b16 %v2324, %v2320
    %v3685 = vpack.c.b16 %v2329, %v2325
    %v3686 = vpack.c.b16 %v2330, %v2326
    %v3687 = vpack.c.b16 %v2331, %v2327
    %v3688 = vpack.c.b16 %v2332, %v2328
    %v3689 = vpack.c.b16 %v2337, %v2333
    %v3690 = vpack.c.b16 %v2338, %v2334
    %v3691 = vpack.c.b16 %v2339, %v2335
    %v3692 = vpack.c.b16 %v2340, %v2336
    %v3693 = vpack.c.b16 %v2345, %v2341
    %v3694 = vpack.c.b16 %v2346, %v2342
    %v3695 = vpack.c.b16 %v2347, %v2343
    %v3696 = vpack.c.b16 %v2348, %v2344
    %v3697 = vpack.c.b16 %v2353, %v2349
    %v3698 = vpack.c.b16 %v2354, %v2350
    %v3699 = vpack.c.b16 %v2355, %v2351
    %v3700 = vpack.c.b16 %v2356, %v2352
    %v3701 = vpack.c.b16 %v2361, %v2357
    %v3702 = vpack.c.b16 %v2362, %v2358
    %v3703 = vpack.c.b16 %v2363, %v2359
    %v3704 = vpack.c.b16 %v2364, %v2360
    %v3705 = vpack.c.b16 %v2369, %v2365
    %v3706 = vpack.c.b16 %v2370, %v2366
    %v3707 = vpack.c.b16 %v2371, %v2367
    %v3708 = vpack.c.b16 %v2372, %v2368
    %v3709 = vpack.c.b16 %v2377, %v2373
    %v3710 = vpack.c.b16 %v2378, %v2374
    %v3711 = vpack.c.b16 %v2379, %v2375
    %v3712 = vpack.c.b16 %v2380, %v2376
    %v3713 = vpack.c.b16 %v2385, %v2381
    %v3714 = vpack.c.b16 %v2386, %v2382
    %v3715 = vpack.c.b16 %v2387, %v2383
    %v3716 = vpack.c.b16 %v2388, %v2384
    %v3717 = vpack.c.b16 %v2393, %v2389
    %v3718 = vpack.c.b16 %v2394, %v2390
    %v3719 = vpack.c.b16 %v2395, %v2391
    %v3720 = vpack.c.b16 %v2396, %v2392
    %v3721 = vpack.c.b16 %v2401, %v2397
    %v3722 = vpack.c.b16 %v2402, %v2398
    %v3723 = vpack.c.b16 %v2403, %v2399
    %v3724 = vpack.c.b16 %v2404, %v2400
    %v3725 = vpack.c.b16 %v2409, %v2405
    %v3726 = vpack.c.b16 %v2410, %v2406
    %v3727 = vpack.c.b16 %v2411, %v2407
    %v3728 = vpack.c.b16 %v2412, %v2408
    %v3729 = vpack.c.b16 %v2417, %v2413
    %v3730 = vpack.c.b16 %v2418, %v2414
    %v3731 = vpack.c.b16 %v2419, %v2415
    %v3732 = vpack.c.b16 %v2420, %v2416
    %v3733 = vpack.c.b16 %v2425, %v2421
    %v3734 = vpack.c.b16 %v2426, %v2422
    %v3735 = vpack.c.b16 %v2427, %v2423
    %v3736 = vpack.c.b16 %v2428, %v2424
    %v3737 = vpack.c.b16 %v2433, %v2429
    %v3738 = vpack.c.b16 %v2434, %v2430
    %v3739 = vpack.c.b16 %v2435, %v2431
    %v3740 = vpack.c.b16 %v2436, %v2432
    %v3741 = vpack.c.b16 %v2441, %v2437
    %v3742 = vpack.c.b16 %v2442, %v2438
    %v3743 = vpack.c.b16 %v2443, %v2439
    %v3744 = vpack.c.b16 %v2444, %v2440
    %v3745 = vpack.c.b16 %v2449, %v2445
    %v3746 = vpack.c.b16 %v2450, %v2446
    %v3747 = vpack.c.b16 %v2451, %v2447
    %v3748 = vpack.c.b16 %v2452, %v2448
    %v3749 = vpack.c.b16 %v2457, %v2453
    %v3750 = vpack.c.b16 %v2458, %v2454
    %v3751 = vpack.c.b16 %v2459, %v2455
    %v3752 = vpack.c.b16 %v2460, %v2456
    %v3753 = vpack.c.b16 %v2465, %v2461
    %v3754 = vpack.c.b16 %v2466, %v2462
    %v3755 = vpack.c.b16 %v2467, %v2463
    %v3756 = vpack.c.b16 %v2468, %v2464
    %v3757 = vpack.c.b16 %v2473, %v2469
    %v3758 = vpack.c.b16 %v2474, %v2470
    %v3759 = vpack.c.b16 %v2475, %v2471
    %v3760 = vpack.c.b16 %v2476, %v2472
    %v3761 = vpack.c.b16 %v2481, %v2477
    %v3762 = vpack.c.b16 %v2482, %v2478
    %v3763 = vpack.c.b16 %v2483, %v2479
    %v3764 = vpack.c.b16 %v2484, %v2480
    %v3765 = vpack.c.b16 %v2489, %v2485
    %v3766 = vpack.c.b16 %v2490, %v2486
    %v3767 = vpack.c.b16 %v2491, %v2487
    %v3768 = vpack.c.b16 %v2492, %v2488
    %v3769 = vpack.c.b16 %v2497, %v2493
    %v3770 = vpack.c.b16 %v2498, %v2494
    %v3771 = vpack.c.b16 %v2499, %v2495
    %v3772 = vpack.c.b16 %v2500, %v2496
    %v3773 = vpack.c.b16 %v2505, %v2501
    %v3774 = vpack.c.b16 %v2506, %v2502
    %v3775 = vpack.c.b16 %v2507, %v2503
    %v3776 = vpack.c.b16 %v2508, %v2504
    %v3777 = vpack.c.b16 %v2513, %v2509
    %v3778 = vpack.c.b16 %v2514, %v2510
    %v3779 = vpack.c.b16 %v2515, %v2511
    %v3780 = vpack.c.b16 %v2516, %v2512
    %v3781 = vpack.c.b16 %v2521, %v2517
    %v3782 = vpack.c.b16 %v2522, %v2518
    %v3783 = vpack.c.b16 %v2523, %v2519
    %v3784 = vpack.c.b16 %v2524, %v2520
    %v3785 = vpack.c.b16 %v2529, %v2525
    %v3786 = vpack.c.b16 %v2530, %v2526
    %v3787 = vpack.c.b16 %v2531, %v2527
    %v3788 = vpack.c.b16 %v2532, %v2528
    %v3789 = vpack.c.b16 %v2537, %v2533
    %v3790 = vpack.c.b16 %v2538, %v2534
    %v3791 = vpack.c.b16 %v2539, %v2535
    %v3792 = vpack.c.b16 %v2540, %v2536
    %v3793 = vpack.c.b16 %v2545, %v2541
    %v3794 = vpack.c.b16 %v2546, %v2542
    %v3795 = vpack.c.b16 %v2547, %v2543
    %v3796 = vpack.c.b16 %v2548, %v2544
    %v3797 = vpack.c.b16 %v2553, %v2549
    %v3798 = vpack.c.b16 %v2554, %v2550
    %v3799 = vpack.c.b16 %v2555, %v2551
    %v3800 = vpack.c.b16 %v2556, %v2552
    %v3801 = vpack.c.b16 %v2561, %v2557
    %v3802 = vpack.c.b16 %v2562, %v2558
    %v3803 = vpack.c.b16 %v2563, %v2559
    %v3804 = vpack.c.b16 %v2564, %v2560
    %v3805 = vpack.c.b16 %v2569, %v2565
    %v3806 = vpack.c.b16 %v2570, %v2566
    %v3807 = vpack.c.b16 %v2571, %v2567
    %v3808 = vpack.c.b16 %v2572, %v2568
    %v3809 = vpack.c.b16 %v2577, %v2573
    %v3810 = vpack.c.b16 %v2578, %v2574
    %v3811 = vpack.c.b16 %v2579, %v2575
    %v3812 = vpack.c.b16 %v2580, %v2576
    %v3813 = vpack.c.b16 %v2585, %v2581
    %v3814 = vpack.c.b16 %v2586, %v2582
    %v3815 = vpack.c.b16 %v2587, %v2583
    %v3816 = vpack.c.b16 %v2588, %v2584
    %v3817 = vpack.c.b16 %v2593, %v2589
    %v3818 = vpack.c.b16 %v2594, %v2590
    %v3819 = vpack.c.b16 %v2595, %v2591
    %v3820 = vpack.c.b16 %v2596, %v2592
    %v3821 = vpack.c.b16 %v2601, %v2597
    %v3822 = vpack.c.b16 %v2602, %v2598
    %v3823 = vpack.c.b16 %v2603, %v2599
    %v3824 = vpack.c.b16 %v2604, %v2600
    %v3825 = vpack.c.b16 %v2609, %v2605
    %v3826 = vpack.c.b16 %v2610, %v2606
    %v3827 = vpack.c.b16 %v2611, %v2607
    %v3828 = vpack.c.b16 %v2612, %v2608
    %v3829 = vpack.c.b16 %v2617, %v2613
    %v3830 = vpack.c.b16 %v2618, %v2614
    %v3831 = vpack.c.b16 %v2619, %v2615
    %v3832 = vpack.c.b16 %v2620, %v2616
    %v3833 = vpack.c.b16 %v2625, %v2621
    %v3834 = vpack.c.b16 %v2626, %v2622
    %v3835 = vpack.c.b16 %v2627, %v2623
    %v3836 = vpack.c.b16 %v2628, %v2624
    %v3837 = vpack.c.b16 %v2633, %v2629
    %v3838 = vpack.c.b16 %v2634, %v2630
    %v3839 = vpack.c.b16 %v2635, %v2631
    %v3840 = vpack.c.b16 %v2636, %v2632
    %v3841 = vpack.c.b16 %v2641, %v2637
    %v3842 = vpack.c.b16 %v2642, %v2638
    %v3843 = vpack.c.b16 %v2643, %v2639
    %v3844 = vpack.c.b16 %v2644, %v2640
    %v3845 = vpack.c.b16 %v2649, %v2645
    %v3846 = vpack.c.b16 %v2650, %v2646
    %v3847 = vpack.c.b16 %v2651, %v2647
    %v3848 = vpack.c.b16 %v2652, %v2648
    %v3849 = vpack.c.b16 %v2657, %v2653
    %v3850 = vpack.c.b16 %v2658, %v2654
    %v3851 = vpack.c.b16 %v2659, %v2655
    %v3852 = vpack.c.b16 %v2660, %v2656
    %v3853 = vpack.c.b16 %v2665, %v2661
    %v3854 = vpack.c.b16 %v2666, %v2662
    %v3855 = vpack.c.b16 %v2667, %v2663
    %v3856 = vpack.c.b16 %v2668, %v2664
    %v3857 = vpack.c.b16 %v2673, %v2669
    %v3858 = vpack.c.b16 %v2674, %v2670
    %v3859 = vpack.c.b16 %v2675, %v2671
    %v3860 = vpack.c.b16 %v2676, %v2672
    %v3861 = vpack.c.b16 %v2681, %v2677
    %v3862 = vpack.c.b16 %v2682, %v2678
    %v3863 = vpack.c.b16 %v2683, %v2679
    %v3864 = vpack.c.b16 %v2684, %v2680
    %v3865 = vpack.c.b16 %v2689, %v2685
    %v3866 = vpack.c.b16 %v2690, %v2686
    %v3867 = vpack.c.b16 %v2691, %v2687
    %v3868 = vpack.c.b16 %v2692, %v2688
    %v3869 = vpack.c.b16 %v2697, %v2693
    %v3870 = vpack.c.b16 %v2698, %v2694
    %v3871 = vpack.c.b16 %v2699, %v2695
    %v3872 = vpack.c.b16 %v2700, %v2696
    %v3873 = vpack.c.b16 %v2705, %v2701
    %v3874 = vpack.c.b16 %v2706, %v2702
    %v3875 = vpack.c.b16 %v2707, %v2703
    %v3876 = vpack.c.b16 %v2708, %v2704
    %v3877 = vpack.c.b16 %v2713, %v2709
    %v3878 = vpack.c.b16 %v2714, %v2710
    %v3879 = vpack.c.b16 %v2715, %v2711
    %v3880 = vpack.c.b16 %v2716, %v2712
    %v3881 = vpack.c.b16 %v2721, %v2717
    %v3882 = vpack.c.b16 %v2722, %v2718
    %v3883 = vpack.c.b16 %v2723, %v2719
    %v3884 = vpack.c.b16 %v2724, %v2720
    %v3885 = vpack.c.b16 %v2729, %v2725
    %v3886 = vpack.c.b16 %v2730, %v2726
    %v3887 = vpack.c.b16 %v2731, %v2727
    %v3888 = vpack.c.b16 %v2732, %v2728
    %v3889 = vpack.c.b16 %v2737, %v2733
    %v3890 = vpack.c.b16 %v2738, %v2734
    %v3891 = vpack.c.b16 %v2739, %v2735
    %v3892 = vpack.c.b16 %v2740, %v2736
    %v3893 = vpack.c.b16 %v2745, %v2741
    %v3894 = vpack.c.b16 %v2746, %v2742
    %v3895 = vpack.c.b16 %v2747, %v2743
    %v3896 = vpack.c.b16 %v2748, %v2744
    %v3897 = vpack.c.b16 %v2753, %v2749
    %v3898 = vpack.c.b16 %v2754, %v2750
    %v3899 = vpack.c.b16 %v2755, %v2751
    %v3900 = vpack.c.b16 %v2756, %v2752
    %v3901 = vpack.c.b16 %v2761, %v2757
    %v3902 = vpack.c.b16 %v2762, %v2758
    %v3903 = vpack.c.b16 %v2763, %v2759
    %v3904 = vpack.c.b16 %v2764, %v2760
    %v3905 = vpack.c.b16 %v2769, %v2765
    %v3906 = vpack.c.b16 %v2770, %v2766
    %v3907 = vpack.c.b16 %v2771, %v2767
    %v3908 = vpack.c.b16 %v2772, %v2768
    %v3909 = vpack.c.b16 %v2777, %v2773
    %v3910 = vpack.c.b16 %v2778, %v2774
    %v3911 = vpack.c.b16 %v2779, %v2775
    %v3912 = vpack.c.b16 %v2780, %v2776
    %v3913 = vpack.c.b16 %v2785, %v2781
    %v3914 = vpack.c.b16 %v2786, %v2782
    %v3915 = vpack.c.b16 %v2787, %v2783
    %v3916 = vpack.c.b16 %v2788, %v2784
    %v3917 = vpack.c.b16 %v2793, %v2789
    %v3918 = vpack.c.b16 %v2794, %v2790
    %v3919 = vpack.c.b16 %v2795, %v2791
    %v3920 = vpack.c.b16 %v2796, %v2792
    %v3921 = vpack.c.b16 %v2801, %v2797
    %v3922 = vpack.c.b16 %v2802, %v2798
    %v3923 = vpack.c.b16 %v2803, %v2799
    %v3924 = vpack.c.b16 %v2804, %v2800
    %v3925 = vpack.c.b16 %v2809, %v2805
    %v3926 = vpack.c.b16 %v2810, %v2806
    %v3927 = vpack.c.b16 %v2811, %v2807
    %v3928 = vpack.c.b16 %v2812, %v2808
    %v3929 = vpack.c.b16 %v2817, %v2813
    %v3930 = vpack.c.b16 %v2818, %v2814
    %v3931 = vpack.c.b16 %v2819, %v2815
    %v3932 = vpack.c.b16 %v2820, %v2816
    %v3933 = vpack.c.b16 %v2825, %v2821
    %v3934 = vpack.c.b16 %v2826, %v2822
    %v3935 = vpack.c.b16 %v2827, %v2823
    %v3936 = vpack.c.b16 %v2828, %v2824
    %v3937 = vpack.c.b16 %v2833, %v2829
    %v3938 = vpack.c.b16 %v2834, %v2830
    %v3939 = vpack.c.b16 %v2835, %v2831
    %v3940 = vpack.c.b16 %v2836, %v2832
    %v3941 = vpack.c.b16 %v2841, %v2837
    %v3942 = vpack.c.b16 %v2842, %v2838
    %v3943 = vpack.c.b16 %v2843, %v2839
    %v3944 = vpack.c.b16 %v2844, %v2840
    %v3945 = vpack.c.b16 %v2849, %v2845
    %v3946 = vpack.c.b16 %v2850, %v2846
    %v3947 = vpack.c.b16 %v2851, %v2847
    %v3948 = vpack.c.b16 %v2852, %v2848
    %v3949 = vpack.c.b16 %v2857, %v2853
    %v3950 = vpack.c.b16 %v2858, %v2854
    %v3951 = vpack.c.b16 %v2859, %v2855
    %v3952 = vpack.c.b16 %v2860, %v2856
    %v3953 = vpack.c.b16 %v2865, %v2861
    %v3954 = vpack.c.b16 %v2866, %v2862
    %v3955 = vpack.c.b16 %v2867, %v2863
    %v3956 = vpack.c.b16 %v2868, %v2864
    %v3957 = vpack.c.b16 %v2873, %v2869
    %v3958 = vpack.c.b16 %v2874, %v2870
    %v3959 = vpack.c.b16 %v2875, %v2871
    %v3960 = vpack.c.b16 %v2876, %v2872
    %v3961 = vpack.c.b16 %v2881, %v2877
    %v3962 = vpack.c.b16 %v2882, %v2878
    %v3963 = vpack.c.b16 %v2883, %v2879
    %v3964 = vpack.c.b16 %v2884, %v2880
    %v3965 = vpack.c.b16 %v2889, %v2885
    %v3966 = vpack.c.b16 %v2890, %v2886
    %v3967 = vpack.c.b16 %v2891, %v2887
    %v3968 = vpack.c.b16 %v2892, %v2888
    %v3969 = vpack.c.b16 %v2897, %v2893
    %v3970 = vpack.c.b16 %v2898, %v2894
    %v3971 = vpack.c.b16 %v2899, %v2895
    %v3972 = vpack.c.b16 %v2900, %v2896
    %v3973 = vpack.c.b16 %v2905, %v2901
    %v3974 = vpack.c.b16 %v2906, %v2902
    %v3975 = vpack.c.b16 %v2907, %v2903
    %v3976 = vpack.c.b16 %v2908, %v2904
    %v3977 = vpack.c.b16 %v2913, %v2909
    %v3978 = vpack.c.b16 %v2914, %v2910
    %v3979 = vpack.c.b16 %v2915, %v2911
    %v3980 = vpack.c.b16 %v2916, %v2912
    %v3981 = vpack.c.b16 %v2921, %v2917
    %v3982 = vpack.c.b16 %v2922, %v2918
    %v3983 = vpack.c.b16 %v2923, %v2919
    %v3984 = vpack.c.b16 %v2924, %v2920
    %v3985 = vpack.c.b16 %v2929, %v2925
    %v3986 = vpack.c.b16 %v2930, %v2926
    %v3987 = vpack.c.b16 %v2931, %v2927
    %v3988 = vpack.c.b16 %v2932, %v2928
    %v3989 = vpack.c.b16 %v2937, %v2933
    %v3990 = vpack.c.b16 %v2938, %v2934
    %v3991 = vpack.c.b16 %v2939, %v2935
    %v3992 = vpack.c.b16 %v2940, %v2936
    %v3993 = vpack.c.b16 %v2945, %v2941
    %v3994 = vpack.c.b16 %v2946, %v2942
    %v3995 = vpack.c.b16 %v2947, %v2943
    %v3996 = vpack.c.b16 %v2948, %v2944
    %v3997 = vpack.c.b16 %v2953, %v2949
    %v3998 = vpack.c.b16 %v2954, %v2950
    %v3999 = vpack.c.b16 %v2955, %v2951
    %v4000 = vpack.c.b16 %v2956, %v2952
    %v4001 = vpack.c.b16 %v2961, %v2957
    %v4002 = vpack.c.b16 %v2962, %v2958
    %v4003 = vpack.c.b16 %v2963, %v2959
    %v4004 = vpack.c.b16 %v2964, %v2960
    %v4005 = vpack.c.b16 %v2969, %v2965
    %v4006 = vpack.c.b16 %v2970, %v2966
    %v4007 = vpack.c.b16 %v2971, %v2967
    %v4008 = vpack.c.b16 %v2972, %v2968
    %v4009 = vpack.c.b16 %v2977, %v2973
    %v4010 = vpack.c.b16 %v2978, %v2974
    %v4011 = vpack.c.b16 %v2979, %v2975
    %v4012 = vpack.c.b16 %v2980, %v2976
    %v4013 = vpack.c.b16 %v2985, %v2981
    %v4014 = vpack.c.b16 %v2986, %v2982
    %v4015 = vpack.c.b16 %v2987, %v2983
    %v4016 = vpack.c.b16 %v2988, %v2984
    %v4017 = vpack.c.b16 %v2993, %v2989
    %v4018 = vpack.c.b16 %v2994, %v2990
    %v4019 = vpack.c.b16 %v2995, %v2991
    %v4020 = vpack.c.b16 %v2996, %v2992
    %v4021 = vpack.c.b16 %v3001, %v2997
    %v4022 = vpack.c.b16 %v3002, %v2998
    %v4023 = vpack.c.b16 %v3003, %v2999
    %v4024 = vpack.c.b16 %v3004, %v3000
    %v4025 = vpack.c.b16 %v3009, %v3005
    %v4026 = vpack.c.b16 %v3010, %v3006
    %v4027 = vpack.c.b16 %v3011, %v3007
    %v4028 = vpack.c.b16 %v3012, %v3008
    %v4029 = vpack.c.b16 %v3017, %v3013
    %v4030 = vpack.c.b16 %v3018, %v3014
    %v4031 = vpack.c.b16 %v3019, %v3015
    %v4032 = vpack.c.b16 %v3020, %v3016
    %v4033 = vpack.c.b16 %v3025, %v3021
    %v4034 = vpack.c.b16 %v3026, %v3022
    %v4035 = vpack.c.b16 %v3027, %v3023
    %v4036 = vpack.c.b16 %v3028, %v3024
    %v4037 = vpack.c.b16 %v3033, %v3029
    %v4038 = vpack.c.b16 %v3034, %v3030
    %v4039 = vpack.c.b16 %v3035, %v3031
    %v4040 = vpack.c.b16 %v3036, %v3032
    %v4041 = vpack.c.b16 %v3041, %v3037
    %v4042 = vpack.c.b16 %v3042, %v3038
    %v4043 = vpack.c.b16 %v3043, %v3039
    %v4044 = vpack.c.b16 %v3044, %v3040
    %v4045 = vpack.c.b16 %v3049, %v3045
    %v4046 = vpack.c.b16 %v3050, %v3046
    %v4047 = vpack.c.b16 %v3051, %v3047
    %v4048 = vpack.c.b16 %v3052, %v3048
    %v4049 = vpack.c.b16 %v3057, %v3053
    %v4050 = vpack.c.b16 %v3058, %v3054
    %v4051 = vpack.c.b16 %v3059, %v3055
    %v4052 = vpack.c.b16 %v3060, %v3056
    %v4053 = vpack.c.b16 %v3065, %v3061
    %v4054 = vpack.c.b16 %v3066, %v3062
    %v4055 = vpack.c.b16 %v3067, %v3063
    %v4056 = vpack.c.b16 %v3068, %v3064
    %v4057 = vpack.c.b16 %v3073, %v3069
    %v4058 = vpack.c.b16 %v3074, %v3070
    %v4059 = vpack.c.b16 %v3075, %v3071
    %v4060 = vpack.c.b16 %v3076, %v3072
    %v4061 = vpack.c.b16 %v3081, %v3077
    %v4062 = vpack.c.b16 %v3082, %v3078
    %v4063 = vpack.c.b16 %v3083, %v3079
    %v4064 = vpack.c.b16 %v3084, %v3080
    %v4065 = vpack.c.b16 %v3089, %v3085
    %v4066 = vpack.c.b16 %v3090, %v3086
    %v4067 = vpack.c.b16 %v3091, %v3087
    %v4068 = vpack.c.b16 %v3092, %v3088
    %v4069 = vpack.c.b16 %v3097, %v3093
    %v4070 = vpack.c.b16 %v3098, %v3094
    %v4071 = vpack.c.b16 %v3099, %v3095
    %v4072 = vpack.c.b16 %v3100, %v3096
    %v4073 = vpack.c.b16 %v3105, %v3101
    %v4074 = vpack.c.b16 %v3106, %v3102
    %v4075 = vpack.c.b16 %v3107, %v3103
    %v4076 = vpack.c.b16 %v3108, %v3104
    %v4077 = vpack.c.b16 %v3113, %v3109
    %v4078 = vpack.c.b16 %v3114, %v3110
    %v4079 = vpack.c.b16 %v3115, %v3111
    %v4080 = vpack.c.b16 %v3116, %v3112
    %v4081 = vpack.c.b16 %v3121, %v3117
    %v4082 = vpack.c.b16 %v3122, %v3118
    %v4083 = vpack.c.b16 %v3123, %v3119
    %v4084 = vpack.c.b16 %v3124, %v3120
    %v4085 = vpack.c.b16 %v3129, %v3125
    %v4086 = vpack.c.b16 %v3130, %v3126
    %v4087 = vpack.c.b16 %v3131, %v3127
    %v4088 = vpack.c.b16 %v3132, %v3128
    %v4089 = vpack.c.b16 %v3137, %v3133
    %v4090 = vpack.c.b16 %v3138, %v3134
    %v4091 = vpack.c.b16 %v3139, %v3135
    %v4092 = vpack.c.b16 %v3140, %v3136
    %v4093 = vpack.c.b16 %v3145, %v3141
    %v4094 = vpack.c.b16 %v3146, %v3142
    %v4095 = vpack.c.b16 %v3147, %v3143
    %v4096 = vpack.c.b16 %v3148, %v3144
    %v4097 = vpack.c.b16 %v3153, %v3149
    %v4098 = vpack.c.b16 %v3154, %v3150
    %v4099 = vpack.c.b16 %v3155, %v3151
    %v4100 = vpack.c.b16 %v3156, %v3152
    %v4101 = vpack.c.b16 %v3161, %v3157
    %v4102 = vpack.c.b16 %v3162, %v3158
    %v4103 = vpack.c.b16 %v3163, %v3159
    %v4104 = vpack.c.b16 %v3164, %v3160
    %v4105 = vpack.c.b16 %v3169, %v3165
    %v4106 = vpack.c.b16 %v3170, %v3166
    %v4107 = vpack.c.b16 %v3171, %v3167
    %v4108 = vpack.c.b16 %v3172, %v3168
    %v4109 = vpack.c.b16 %v3177, %v3173
    %v4110 = vpack.c.b16 %v3178, %v3174
    %v4111 = vpack.c.b16 %v3179, %v3175
    %v4112 = vpack.c.b16 %v3180, %v3176
    %v4113 = vpack.c.b16 %v3185, %v3181
    %v4114 = vpack.c.b16 %v3186, %v3182
    %v4115 = vpack.c.b16 %v3187, %v3183
    %v4116 = vpack.c.b16 %v3188, %v3184
    %v4117 = vpack.c.b16 %v3193, %v3189
    %v4118 = vpack.c.b16 %v3194, %v3190
    %v4119 = vpack.c.b16 %v3195, %v3191
    %v4120 = vpack.c.b16 %v3196, %v3192
    %v4121 = vpack.c.b16 %v3201, %v3197
    %v4122 = vpack.c.b16 %v3202, %v3198
    %v4123 = vpack.c.b16 %v3203, %v3199
    %v4124 = vpack.c.b16 %v3204, %v3200
    %v4125 = vpack.c.b16 %v3209, %v3205
    %v4126 = vpack.c.b16 %v3210, %v3206
    %v4127 = vpack.c.b16 %v3211, %v3207
    %v4128 = vpack.c.b16 %v3212, %v3208
    %v4129 = vpack.c.b16 %v3217, %v3213
    %v4130 = vpack.c.b16 %v3218, %v3214
    %v4131 = vpack.c.b16 %v3219, %v3215
    %v4132 = vpack.c.b16 %v3220, %v3216
    %v4133 = vpack.c.b16 %v3225, %v3221
    %v4134 = vpack.c.b16 %v3226, %v3222
    %v4135 = vpack.c.b16 %v3227, %v3223
    %v4136 = vpack.c.b16 %v3228, %v3224
    %v4137 = vpack.c.b16 %v3233, %v3229
    %v4138 = vpack.c.b16 %v3234, %v3230
    %v4139 = vpack.c.b16 %v3235, %v3231
    %v4140 = vpack.c.b16 %v3236, %v3232
    %v4141 = vpack.c.b16 %v3241, %v3237
    %v4142 = vpack.c.b16 %v3242, %v3238
    %v4143 = vpack.c.b16 %v3243, %v3239
    %v4144 = vpack.c.b16 %v3244, %v3240
    %v4145 = vpack.c.b16 %v3249, %v3245
    %v4146 = vpack.c.b16 %v3250, %v3246
    %v4147 = vpack.c.b16 %v3251, %v3247
    %v4148 = vpack.c.b16 %v3252, %v3248
    %v4149 = vpack.c.b16 %v3257, %v3253
    %v4150 = vpack.c.b16 %v3258, %v3254
    %v4151 = vpack.c.b16 %v3259, %v3255
    %v4152 = vpack.c.b16 %v3260, %v3256
    %v4153 = vpack.c.b16 %v3265, %v3261
    %v4154 = vpack.c.b16 %v3266, %v3262
    %v4155 = vpack.c.b16 %v3267, %v3263
    %v4156 = vpack.c.b16 %v3268, %v3264
    %v4157 = vpack.c.b16 %v3273, %v3269
    %v4158 = vpack.c.b16 %v3274, %v3270
    %v4159 = vpack.c.b16 %v3275, %v3271
    %v4160 = vpack.c.b16 %v3276, %v3272
    %v4161 = vpack.c.b16 %v3281, %v3277
    %v4162 = vpack.c.b16 %v3282, %v3278
    %v4163 = vpack.c.b16 %v3283, %v3279
    %v4164 = vpack.c.b16 %v3284, %v3280
    %v4165 = vpack.c.b16 %v3289, %v3285
    %v4166 = vpack.c.b16 %v3290, %v3286
    %v4167 = vpack.c.b16 %v3291, %v3287
    %v4168 = vpack.c.b16 %v3292, %v3288
    %v4169 = vpack.c.b16 %v3297, %v3293
    %v4170 = vpack.c.b16 %v3298, %v3294
    %v4171 = vpack.c.b16 %v3299, %v3295
    %v4172 = vpack.c.b16 %v3300, %v3296
    %v4173 = vpack.c.b16 %v3305, %v3301
    %v4174 = vpack.c.b16 %v3306, %v3302
    %v4175 = vpack.c.b16 %v3307, %v3303
    %v4176 = vpack.c.b16 %v3308, %v3304
    %v4177 = vpack.c.b16 %v3313, %v3309
    %v4178 = vpack.c.b16 %v3314, %v3310
    %v4179 = vpack.c.b16 %v3315, %v3311
    %v4180 = vpack.c.b16 %v3316, %v3312
    %v4181 = vpack.c.b16 %v3321, %v3317
    %v4182 = vpack.c.b16 %v3322, %v3318
    %v4183 = vpack.c.b16 %v3323, %v3319
    %v4184 = vpack.c.b16 %v3324, %v3320
    %v4185 = vpack.c.b16 %v3329, %v3325
    %v4186 = vpack.c.b16 %v3330, %v3326
    %v4187 = vpack.c.b16 %v3331, %v3327
    %v4188 = vpack.c.b16 %v3332, %v3328
    %v4189 = vpack.c.b16 %v3337, %v3333
    %v4190 = vpack.c.b16 %v3338, %v3334
    %v4191 = vpack.c.b16 %v3339, %v3335
    %v4192 = vpack.c.b16 %v3340, %v3336
    %v4193 = vpack.c.b16 %v3345, %v3341
    %v4194 = vpack.c.b16 %v3346, %v3342
    %v4195 = vpack.c.b16 %v3347, %v3343
    %v4196 = vpack.c.b16 %v3348, %v3344
    %v4197 = vpack.c.b16 %v3353, %v3349
    %v4198 = vpack.c.b16 %v3354, %v3350
    %v4199 = vpack.c.b16 %v3355, %v3351
    %v4200 = vpack.c.b16 %v3356, %v3352
    %v4201 = vpack.c.b16 %v3361, %v3357
    %v4202 = vpack.c.b16 %v3362, %v3358
    %v4203 = vpack.c.b16 %v3363, %v3359
    %v4204 = vpack.c.b16 %v3364, %v3360
    %v4205 = vpack.c.b16 %v3369, %v3365
    %v4206 = vpack.c.b16 %v3370, %v3366
    %v4207 = vpack.c.b16 %v3371, %v3367
    %v4208 = vpack.c.b16 %v3372, %v3368
    %v4209 = vpack.c.b16 %v3377, %v3373
    %v4210 = vpack.c.b16 %v3378, %v3374
    %v4211 = vpack.c.b16 %v3379, %v3375
    %v4212 = vpack.c.b16 %v3380, %v3376
    %v4213 = vpack.c.b16 %v3385, %v3381
    %v4214 = vpack.c.b16 %v3386, %v3382
    %v4215 = vpack.c.b16 %v3387, %v3383
    %v4216 = vpack.c.b16 %v3388, %v3384
    %v4217 = vpack.c.b16 %v3393, %v3389
    %v4218 = vpack.c.b16 %v3394, %v3390
    %v4219 = vpack.c.b16 %v3395, %v3391
    %v4220 = vpack.c.b16 %v3396, %v3392
    %v4221 = vpack.c.b16 %v3401, %v3397
    %v4222 = vpack.c.b16 %v3402, %v3398
    %v4223 = vpack.c.b16 %v3403, %v3399
    %v4224 = vpack.c.b16 %v3404, %v3400
    %v4225 = vpack.c.b16 %v3409, %v3405
    %v4226 = vpack.c.b16 %v3410, %v3406
    %v4227 = vpack.c.b16 %v3411, %v3407
    %v4228 = vpack.c.b16 %v3412, %v3408
    %v4229 = vpack.c.b16 %v3417, %v3413
    %v4230 = vpack.c.b16 %v3418, %v3414
    %v4231 = vpack.c.b16 %v3419, %v3415
    %v4232 = vpack.c.b16 %v3420, %v3416
    %v4233 = vpack.c.b16 %v3425, %v3421
    %v4234 = vpack.c.b16 %v3426, %v3422
    %v4235 = vpack.c.b16 %v3427, %v3423
    %v4236 = vpack.c.b16 %v3428, %v3424
    %v4237 = vpack.c.b16 %v3433, %v3429
    %v4238 = vpack.c.b16 %v3434, %v3430
    %v4239 = vpack.c.b16 %v3435, %v3431
    %v4240 = vpack.c.b16 %v3436, %v3432
    %v4241 = vpack.c.b16 %v3441, %v3437
    %v4242 = vpack.c.b16 %v3442, %v3438
    %v4243 = vpack.c.b16 %v3443, %v3439
    %v4244 = vpack.c.b16 %v3444, %v3440
    %v5109 = vunpack.c.l.b16 %v981
    %v5110 = vunpack.c.l.b16 %v982
    %v5111 = vunpack.c.l.b16 %v983
    %v5112 = vunpack.c.l.b16 %v984
    %v5113 = vunpack.c.l.b16 %v985
    %v5114 = vunpack.c.l.b16 %v986
    %v5115 = vunpack.c.l.b16 %v987
    %v5116 = vunpack.c.l.b16 %v988
    %v5117 = vunpack.c.l.b16 %v989
    %v5118 = vunpack.c.l.b16 %v990
    %v5119 = vunpack.c.l.b16 %v991
    %v5120 = vunpack.c.l.b16 %v992
    %v5121 = vunpack.c.l.b16 %v993
    %v5122 = vunpack.c.l.b16 %v994
    %v5123 = vunpack.c.l.b16 %v995
    %v5124 = vunpack.c.l.b16 %v996
    %v5125 = vunpack.c.l.b16 %v997
    %v5126 = vunpack.c.l.b16 %v998
    %v5127 = vunpack.c.l.b16 %v999
    %v5128 = vunpack.c.l.b16 %v1000
    %v5129 = vunpack.c.l.b16 %v1001
    %v5130 = vunpack.c.l.b16 %v1002
    %v5131 = vunpack.c.l.b16 %v1003
    %v5132 = vunpack.c.l.b16 %v1004
    %v5133 = vunpack.c.l.b16 %v1005
    %v5134 = vunpack.c.l.b16 %v1006
    %v5135 = vunpack.c.l.b16 %v1007
    %v5136 = vunpack.c.l.b16 %v1008
    %v5137 = vunpack.c.l.b16 %v1009
    %v5138 = vunpack.c.l.b16 %v1010
    %v5139 = vunpack.c.l.b16 %v1011
    %v5140 = vunpack.c.l.b16 %v1012
    %v5141 = vunpack.c.l.b16 %v1013
    %v5142 = vunpack.c.l.b16 %v1014
    %v5143 = vunpack.c.l.b16 %v1015
    %v5144 = vunpack.c.l.b16 %v1016
    %v5145 = vunpack.c.l.b16 %v1017
    %v5146 = vunpack.c.l.b16 %v1018
    %v5147 = vunpack.c.l.b16 %v1019
    %v5148 = vunpack.c.l.b16 %v1020
    %v5149 = vunpack.c.l.b16 %v1021
    %v5150 = vunpack.c.l.b16 %v1022
    %v5151 = vunpack.c.l.b16 %v1023
    %v5152 = vunpack.c.l.b16 %v1024
    %v5153 = vunpack.c.l.b16 %v1025
    %v5154 = vunpack.c.l.b16 %v1026
    %v5155 = vunpack.c.l.b16 %v1027
    %v5156 = vunpack.c.l.b16 %v1028
    %v5157 = vunpack.c.l.b16 %v1029
    %v5158 = vunpack.c.l.b16 %v1030
    %v5159 = vunpack.c.l.b16 %v1031
    %v5160 = vunpack.c.l.b16 %v1032
    %v5161 = vunpack.c.l.b16 %v1033
    %v5162 = vunpack.c.l.b16 %v1034
    %v5163 = vunpack.c.l.b16 %v1035
    %v5164 = vunpack.c.l.b16 %v1036
    %v5165 = vunpack.c.l.b16 %v1037
    %v5166 = vunpack.c.l.b16 %v1038
    %v5167 = vunpack.c.l.b16 %v1039
    %v5168 = vunpack.c.l.b16 %v1040
    %v5169 = vunpack.c.l.b16 %v1041
    %v5170 = vunpack.c.l.b16 %v1042
    %v5171 = vunpack.c.l.b16 %v1043
    %v5172 = vunpack.c.l.b16 %v1044
    %v5173 = vpack.c.b16 %v5110, %v5109
    %v5174 = vpack.c.b16 %v5112, %v5111
    %v5175 = vpack.c.b16 %v5114, %v5113
    %v5176 = vpack.c.b16 %v5116, %v5115
    %v5177 = vpack.c.b16 %v5118, %v5117
    %v5178 = vpack.c.b16 %v5120, %v5119
    %v5179 = vpack.c.b16 %v5122, %v5121
    %v5180 = vpack.c.b16 %v5124, %v5123
    %v5181 = vpack.c.b16 %v5126, %v5125
    %v5182 = vpack.c.b16 %v5128, %v5127
    %v5183 = vpack.c.b16 %v5130, %v5129
    %v5184 = vpack.c.b16 %v5132, %v5131
    %v5185 = vpack.c.b16 %v5134, %v5133
    %v5186 = vpack.c.b16 %v5136, %v5135
    %v5187 = vpack.c.b16 %v5138, %v5137
    %v5188 = vpack.c.b16 %v5140, %v5139
    %v5189 = vpack.c.b16 %v5142, %v5141
    %v5190 = vpack.c.b16 %v5144, %v5143
    %v5191 = vpack.c.b16 %v5146, %v5145
    %v5192 = vpack.c.b16 %v5148, %v5147
    %v5193 = vpack.c.b16 %v5150, %v5149
    %v5194 = vpack.c.b16 %v5152, %v5151
    %v5195 = vpack.c.b16 %v5154, %v5153
    %v5196 = vpack.c.b16 %v5156, %v5155
    %v5197 = vpack.c.b16 %v5158, %v5157
    %v5198 = vpack.c.b16 %v5160, %v5159
    %v5199 = vpack.c.b16 %v5162, %v5161
    %v5200 = vpack.c.b16 %v5164, %v5163
    %v5201 = vpack.c.b16 %v5166, %v5165
    %v5202 = vpack.c.b16 %v5168, %v5167
    %v5203 = vpack.c.b16 %v5170, %v5169
    %v5204 = vpack.c.b16 %v5172, %v5171
    %5237 = vmatpush.bf16.msra.mxu0 %v5180
    %5238 = vmatpush.bf16.msra.mxu0 %v5179
    %5239 = vmatpush.bf16.msra.mxu0 %v5178
    %5240 = vmatpush.bf16.msra.mxu0 %v5177
    %5241 = vmatpush.bf16.msra.mxu0 %v5176
    %5242 = vmatpush.bf16.msra.mxu0 %v5175
    %5243 = vmatpush.bf16.msra.mxu0 %v5174
    %5244 = vmatpush.bf16.msra.mxu0 %v5173
    %5245 = vmatmul.bf16.gmra.mxu0 %v3445
    %v5246 = vpop.f32.mrf.mxu0
    %v5247 = vadd.f32 0.0, %v5246
    %v5248 = vpop.f32.mrf.mxu0
    %v5249 = vadd.f32 0.0, %v5248
    %5250 = vmatmul.bf16.gmra.mxu0 %v3449
    %v5251 = vpop.f32.mrf.mxu0
    %v5252 = vadd.f32 0.0, %v5251
    %v5253 = vpop.f32.mrf.mxu0
    %v5254 = vadd.f32 0.0, %v5253
    %5255 = vmatmul.bf16.gmra.mxu0 %v3453
    %v5256 = vpop.f32.mrf.mxu0
    %v5257 = vadd.f32 0.0, %v5256
    %v5258 = vpop.f32.mrf.mxu0
    %v5259 = vadd.f32 0.0, %v5258
    %5260 = vmatmul.bf16.gmra.mxu0 %v3457
    %v5261 = vpop.f32.mrf.mxu0
    %v5262 = vadd.f32 0.0, %v5261
    %v5263 = vpop.f32.mrf.mxu0
    %v5264 = vadd.f32 0.0, %v5263
    %5265 = vmatmul.bf16.gmra.mxu0 %v3461
    %v5266 = vpop.f32.mrf.mxu0
    %v5267 = vadd.f32 0.0, %v5266
    %v5268 = vpop.f32.mrf.mxu0
    %v5269 = vadd.f32 0.0, %v5268
    %5270 = vmatmul.bf16.gmra.mxu0 %v3465
    %v5271 = vpop.f32.mrf.mxu0
    %v5272 = vadd.f32 0.0, %v5271
    %v5273 = vpop.f32.mrf.mxu0
    %v5274 = vadd.f32 0.0, %v5273
    %5275 = vmatmul.bf16.gmra.mxu0 %v3469
    %v5276 = vpop.f32.mrf.mxu0
    %v5277 = vadd.f32 0.0, %v5276
    %v5278 = vpop.f32.mrf.mxu0
    %v5279 = vadd.f32 0.0, %v5278
    %5280 = vmatmul.bf16.gmra.mxu0 %v3473
    %v5281 = vpop.f32.mrf.mxu0
    %v5282 = vadd.f32 0.0, %v5281
    %v5283 = vpop.f32.mrf.mxu0
    %v5284 = vadd.f32 0.0, %v5283
    %5285 = vmatmul.bf16.gmra.mxu0 %v3477
    %v5286 = vpop.f32.mrf.mxu0
    %v5287 = vadd.f32 0.0, %v5286
    %v5288 = vpop.f32.mrf.mxu0
    %v5289 = vadd.f32 0.0, %v5288
    %5290 = vmatmul.bf16.gmra.mxu0 %v3481
    %v5291 = vpop.f32.mrf.mxu0
    %v5292 = vadd.f32 0.0, %v5291
    %v5293 = vpop.f32.mrf.mxu0
    %v5294 = vadd.f32 0.0, %v5293
    %5295 = vmatmul.bf16.gmra.mxu0 %v3485
    %v5296 = vpop.f32.mrf.mxu0
    %v5297 = vadd.f32 0.0, %v5296
    %v5298 = vpop.f32.mrf.mxu0
    %v5299 = vadd.f32 0.0, %v5298
    %5300 = vmatmul.bf16.gmra.mxu0 %v3489
    %v5301 = vpop.f32.mrf.mxu0
    %v5302 = vadd.f32 0.0, %v5301
    %v5303 = vpop.f32.mrf.mxu0
    %v5304 = vadd.f32 0.0, %v5303
    %5305 = vmatmul.bf16.gmra.mxu0 %v3493
    %v5306 = vpop.f32.mrf.mxu0
    %v5307 = vadd.f32 0.0, %v5306
    %v5308 = vpop.f32.mrf.mxu0
    %v5309 = vadd.f32 0.0, %v5308
    %5310 = vmatmul.bf16.gmra.mxu0 %v3497
    %v5311 = vpop.f32.mrf.mxu0
    %v5312 = vadd.f32 0.0, %v5311
    %v5313 = vpop.f32.mrf.mxu0
    %v5314 = vadd.f32 0.0, %v5313
    %5315 = vmatmul.bf16.gmra.mxu0 %v3501
    %v5316 = vpop.f32.mrf.mxu0
    %v5317 = vadd.f32 0.0, %v5316
    %v5318 = vpop.f32.mrf.mxu0
    %v5319 = vadd.f32 0.0, %v5318
    %5320 = vmatmul.bf16.gmra.mxu0 %v3505
    %v5321 = vpop.f32.mrf.mxu0
    %v5322 = vadd.f32 0.0, %v5321
    %v5323 = vpop.f32.mrf.mxu0
    %v5324 = vadd.f32 0.0, %v5323
    %5325 = vmatmul.bf16.gmra.mxu0 %v3509
    %v5326 = vpop.f32.mrf.mxu0
    %v5327 = vadd.f32 0.0, %v5326
    %v5328 = vpop.f32.mrf.mxu0
    %v5329 = vadd.f32 0.0, %v5328
    %5330 = vmatmul.bf16.gmra.mxu0 %v3513
    %v5331 = vpop.f32.mrf.mxu0
    %v5332 = vadd.f32 0.0, %v5331
    %v5333 = vpop.f32.mrf.mxu0
    %v5334 = vadd.f32 0.0, %v5333
    %5335 = vmatmul.bf16.gmra.mxu0 %v3517
    %v5336 = vpop.f32.mrf.mxu0
    %v5337 = vadd.f32 0.0, %v5336
    %v5338 = vpop.f32.mrf.mxu0
    %v5339 = vadd.f32 0.0, %v5338
    %5340 = vmatmul.bf16.gmra.mxu0 %v3521
    %v5341 = vpop.f32.mrf.mxu0
    %v5342 = vadd.f32 0.0, %v5341
    %v5343 = vpop.f32.mrf.mxu0
    %v5344 = vadd.f32 0.0, %v5343
    %5345 = vmatmul.bf16.gmra.mxu0 %v3525
    %v5346 = vpop.f32.mrf.mxu0
    %v5347 = vadd.f32 0.0, %v5346
    %v5348 = vpop.f32.mrf.mxu0
    %v5349 = vadd.f32 0.0, %v5348
    %5350 = vmatmul.bf16.gmra.mxu0 %v3529
    %v5351 = vpop.f32.mrf.mxu0
    %v5352 = vadd.f32 0.0, %v5351
    %v5353 = vpop.f32.mrf.mxu0
    %v5354 = vadd.f32 0.0, %v5353
    %5355 = vmatmul.bf16.gmra.mxu0 %v3533
    %v5356 = vpop.f32.mrf.mxu0
    %v5357 = vadd.f32 0.0, %v5356
    %v5358 = vpop.f32.mrf.mxu0
    %v5359 = vadd.f32 0.0, %v5358
    %5360 = vmatmul.bf16.gmra.mxu0 %v3537
    %v5361 = vpop.f32.mrf.mxu0
    %v5362 = vadd.f32 0.0, %v5361
    %v5363 = vpop.f32.mrf.mxu0
    %v5364 = vadd.f32 0.0, %v5363
    %5365 = vmatmul.bf16.gmra.mxu0 %v3541
    %v5366 = vpop.f32.mrf.mxu0
    %v5367 = vadd.f32 0.0, %v5366
    %v5368 = vpop.f32.mrf.mxu0
    %v5369 = vadd.f32 0.0, %v5368
    %5370 = vmatmul.bf16.gmra.mxu0 %v3545
    %v5371 = vpop.f32.mrf.mxu0
    %v5372 = vadd.f32 0.0, %v5371
    %v5373 = vpop.f32.mrf.mxu0
    %v5374 = vadd.f32 0.0, %v5373
    %5375 = vmatmul.bf16.gmra.mxu0 %v3549
    %v5376 = vpop.f32.mrf.mxu0
    %v5377 = vadd.f32 0.0, %v5376
    %v5378 = vpop.f32.mrf.mxu0
    %v5379 = vadd.f32 0.0, %v5378
    %5380 = vmatmul.bf16.gmra.mxu0 %v3553
    %v5381 = vpop.f32.mrf.mxu0
    %v5382 = vadd.f32 0.0, %v5381
    %v5383 = vpop.f32.mrf.mxu0
    %v5384 = vadd.f32 0.0, %v5383
    %5385 = vmatmul.bf16.gmra.mxu0 %v3557
    %v5386 = vpop.f32.mrf.mxu0
    %v5387 = vadd.f32 0.0, %v5386
    %v5388 = vpop.f32.mrf.mxu0
    %v5389 = vadd.f32 0.0, %v5388
    %5390 = vmatmul.bf16.gmra.mxu0 %v3561
    %v5391 = vpop.f32.mrf.mxu0
    %v5392 = vadd.f32 0.0, %v5391
    %v5393 = vpop.f32.mrf.mxu0
    %v5394 = vadd.f32 0.0, %v5393
    %5395 = vmatmul.bf16.gmra.mxu0 %v3565
    %v5396 = vpop.f32.mrf.mxu0
    %v5397 = vadd.f32 0.0, %v5396
    %v5398 = vpop.f32.mrf.mxu0
    %v5399 = vadd.f32 0.0, %v5398
    %5400 = vmatmul.bf16.gmra.mxu0 %v3569
    %v5401 = vpop.f32.mrf.mxu0
    %v5402 = vadd.f32 0.0, %v5401
    %v5403 = vpop.f32.mrf.mxu0
    %v5404 = vadd.f32 0.0, %v5403
    %5405 = vmatmul.bf16.gmra.mxu0 %v3573
    %v5406 = vpop.f32.mrf.mxu0
    %v5407 = vadd.f32 0.0, %v5406
    %v5408 = vpop.f32.mrf.mxu0
    %v5409 = vadd.f32 0.0, %v5408
    %5410 = vmatmul.bf16.gmra.mxu0 %v3577
    %v5411 = vpop.f32.mrf.mxu0
    %v5412 = vadd.f32 0.0, %v5411
    %v5413 = vpop.f32.mrf.mxu0
    %v5414 = vadd.f32 0.0, %v5413
    %5415 = vmatmul.bf16.gmra.mxu0 %v3581
    %v5416 = vpop.f32.mrf.mxu0
    %v5417 = vadd.f32 0.0, %v5416
    %v5418 = vpop.f32.mrf.mxu0
    %v5419 = vadd.f32 0.0, %v5418
    %5420 = vmatmul.bf16.gmra.mxu0 %v3585
    %v5421 = vpop.f32.mrf.mxu0
    %v5422 = vadd.f32 0.0, %v5421
    %v5423 = vpop.f32.mrf.mxu0
    %v5424 = vadd.f32 0.0, %v5423
    %5425 = vmatmul.bf16.gmra.mxu0 %v3589
    %v5426 = vpop.f32.mrf.mxu0
    %v5427 = vadd.f32 0.0, %v5426
    %v5428 = vpop.f32.mrf.mxu0
    %v5429 = vadd.f32 0.0, %v5428
    %5430 = vmatmul.bf16.gmra.mxu0 %v3593
    %v5431 = vpop.f32.mrf.mxu0
    %v5432 = vadd.f32 0.0, %v5431
    %v5433 = vpop.f32.mrf.mxu0
    %v5434 = vadd.f32 0.0, %v5433
    %5435 = vmatmul.bf16.gmra.mxu0 %v3597
    %v5436 = vpop.f32.mrf.mxu0
    %v5437 = vadd.f32 0.0, %v5436
    %v5438 = vpop.f32.mrf.mxu0
    %v5439 = vadd.f32 0.0, %v5438
    %5440 = vmatmul.bf16.gmra.mxu0 %v3601
    %v5441 = vpop.f32.mrf.mxu0
    %v5442 = vadd.f32 0.0, %v5441
    %v5443 = vpop.f32.mrf.mxu0
    %v5444 = vadd.f32 0.0, %v5443
    %5445 = vmatmul.bf16.gmra.mxu0 %v3605
    %v5446 = vpop.f32.mrf.mxu0
    %v5447 = vadd.f32 0.0, %v5446
    %v5448 = vpop.f32.mrf.mxu0
    %v5449 = vadd.f32 0.0, %v5448
    %5450 = vmatmul.bf16.gmra.mxu0 %v3609
    %v5451 = vpop.f32.mrf.mxu0
    %v5452 = vadd.f32 0.0, %v5451
    %v5453 = vpop.f32.mrf.mxu0
    %v5454 = vadd.f32 0.0, %v5453
    %5455 = vmatmul.bf16.gmra.mxu0 %v3613
    %v5456 = vpop.f32.mrf.mxu0
    %v5457 = vadd.f32 0.0, %v5456
    %v5458 = vpop.f32.mrf.mxu0
    %v5459 = vadd.f32 0.0, %v5458
    %5460 = vmatmul.bf16.gmra.mxu0 %v3617
    %v5461 = vpop.f32.mrf.mxu0
    %v5462 = vadd.f32 0.0, %v5461
    %v5463 = vpop.f32.mrf.mxu0
    %v5464 = vadd.f32 0.0, %v5463
    %5465 = vmatmul.bf16.gmra.mxu0 %v3621
    %v5466 = vpop.f32.mrf.mxu0
    %v5467 = vadd.f32 0.0, %v5466
    %v5468 = vpop.f32.mrf.mxu0
    %v5469 = vadd.f32 0.0, %v5468
    %5470 = vmatmul.bf16.gmra.mxu0 %v3625
    %v5471 = vpop.f32.mrf.mxu0
    %v5472 = vadd.f32 0.0, %v5471
    %v5473 = vpop.f32.mrf.mxu0
    %v5474 = vadd.f32 0.0, %v5473
    %5475 = vmatmul.bf16.gmra.mxu0 %v3629
    %v5476 = vpop.f32.mrf.mxu0
    %v5477 = vadd.f32 0.0, %v5476
    %v5478 = vpop.f32.mrf.mxu0
    %v5479 = vadd.f32 0.0, %v5478
    %5480 = vmatmul.bf16.gmra.mxu0 %v3633
    %v5481 = vpop.f32.mrf.mxu0
    %v5482 = vadd.f32 0.0, %v5481
    %v5483 = vpop.f32.mrf.mxu0
    %v5484 = vadd.f32 0.0, %v5483
    %5485 = vmatmul.bf16.gmra.mxu0 %v3637
    %v5486 = vpop.f32.mrf.mxu0
    %v5487 = vadd.f32 0.0, %v5486
    %v5488 = vpop.f32.mrf.mxu0
    %v5489 = vadd.f32 0.0, %v5488
    %5490 = vmatmul.bf16.gmra.mxu0 %v3641
    %v5491 = vpop.f32.mrf.mxu0
    %v5492 = vadd.f32 0.0, %v5491
    %v5493 = vpop.f32.mrf.mxu0
    %v5494 = vadd.f32 0.0, %v5493
    %5495 = vmatmul.bf16.gmra.mxu0 %v3645
    %v5496 = vpop.f32.mrf.mxu0
    %v5497 = vadd.f32 0.0, %v5496
    %v5498 = vpop.f32.mrf.mxu0
    %v5499 = vadd.f32 0.0, %v5498
    %5500 = vmatmul.bf16.gmra.mxu0 %v3649
    %v5501 = vpop.f32.mrf.mxu0
    %v5502 = vadd.f32 0.0, %v5501
    %v5503 = vpop.f32.mrf.mxu0
    %v5504 = vadd.f32 0.0, %v5503
    %5505 = vmatmul.bf16.gmra.mxu0 %v3653
    %v5506 = vpop.f32.mrf.mxu0
    %v5507 = vadd.f32 0.0, %v5506
    %v5508 = vpop.f32.mrf.mxu0
    %v5509 = vadd.f32 0.0, %v5508
    %5510 = vmatmul.bf16.gmra.mxu0 %v3657
    %v5511 = vpop.f32.mrf.mxu0
    %v5512 = vadd.f32 0.0, %v5511
    %v5513 = vpop.f32.mrf.mxu0
    %v5514 = vadd.f32 0.0, %v5513
    %5515 = vmatmul.bf16.gmra.mxu0 %v3661
    %v5516 = vpop.f32.mrf.mxu0
    %v5517 = vadd.f32 0.0, %v5516
    %v5518 = vpop.f32.mrf.mxu0
    %v5519 = vadd.f32 0.0, %v5518
    %5520 = vmatmul.bf16.gmra.mxu0 %v3665
    %v5521 = vpop.f32.mrf.mxu0
    %v5522 = vadd.f32 0.0, %v5521
    %v5523 = vpop.f32.mrf.mxu0
    %v5524 = vadd.f32 0.0, %v5523
    %5525 = vmatmul.bf16.gmra.mxu0 %v3669
    %v5526 = vpop.f32.mrf.mxu0
    %v5527 = vadd.f32 0.0, %v5526
    %v5528 = vpop.f32.mrf.mxu0
    %v5529 = vadd.f32 0.0, %v5528
    %5530 = vmatmul.bf16.gmra.mxu0 %v3673
    %v5531 = vpop.f32.mrf.mxu0
    %v5532 = vadd.f32 0.0, %v5531
    %v5533 = vpop.f32.mrf.mxu0
    %v5534 = vadd.f32 0.0, %v5533
    %5535 = vmatmul.bf16.gmra.mxu0 %v3677
    %v5536 = vpop.f32.mrf.mxu0
    %v5537 = vadd.f32 0.0, %v5536
    %v5538 = vpop.f32.mrf.mxu0
    %v5539 = vadd.f32 0.0, %v5538
    %5540 = vmatmul.bf16.gmra.mxu0 %v3681
    %v5541 = vpop.f32.mrf.mxu0
    %v5542 = vadd.f32 0.0, %v5541
    %v5543 = vpop.f32.mrf.mxu0
    %v5544 = vadd.f32 0.0, %v5543
    %5545 = vmatmul.bf16.gmra.mxu0 %v3685
    %v5546 = vpop.f32.mrf.mxu0
    %v5547 = vadd.f32 0.0, %v5546
    %v5548 = vpop.f32.mrf.mxu0
    %v5549 = vadd.f32 0.0, %v5548
    %5550 = vmatmul.bf16.gmra.mxu0 %v3689
    %v5551 = vpop.f32.mrf.mxu0
    %v5552 = vadd.f32 0.0, %v5551
    %v5553 = vpop.f32.mrf.mxu0
    %v5554 = vadd.f32 0.0, %v5553
    %5555 = vmatmul.bf16.gmra.mxu0 %v3693
    %v5556 = vpop.f32.mrf.mxu0
    %v5557 = vadd.f32 0.0, %v5556
    %v5558 = vpop.f32.mrf.mxu0
    %v5559 = vadd.f32 0.0, %v5558
    %5560 = vmatmul.bf16.gmra.mxu0 %v3697
    %v5561 = vpop.f32.mrf.mxu0
    %v5562 = vadd.f32 0.0, %v5561
    %v5563 = vpop.f32.mrf.mxu0
    %v5564 = vadd.f32 0.0, %v5563
    %5565 = vmatmul.bf16.gmra.mxu0 %v3701
    %v5566 = vpop.f32.mrf.mxu0
    %v5567 = vadd.f32 0.0, %v5566
    %v5568 = vpop.f32.mrf.mxu0
    %v5569 = vadd.f32 0.0, %v5568
    %5570 = vmatmul.bf16.gmra.mxu0 %v3705
    %v5571 = vpop.f32.mrf.mxu0
    %v5572 = vadd.f32 0.0, %v5571
    %v5573 = vpop.f32.mrf.mxu0
    %v5574 = vadd.f32 0.0, %v5573
    %5575 = vmatmul.bf16.gmra.mxu0 %v3709
    %v5576 = vpop.f32.mrf.mxu0
    %v5577 = vadd.f32 0.0, %v5576
    %v5578 = vpop.f32.mrf.mxu0
    %v5579 = vadd.f32 0.0, %v5578
    %5580 = vmatmul.bf16.gmra.mxu0 %v3713
    %v5581 = vpop.f32.mrf.mxu0
    %v5582 = vadd.f32 0.0, %v5581
    %v5583 = vpop.f32.mrf.mxu0
    %v5584 = vadd.f32 0.0, %v5583
    %5585 = vmatmul.bf16.gmra.mxu0 %v3717
    %v5586 = vpop.f32.mrf.mxu0
    %v5587 = vadd.f32 0.0, %v5586
    %v5588 = vpop.f32.mrf.mxu0
    %v5589 = vadd.f32 0.0, %v5588
    %5590 = vmatmul.bf16.gmra.mxu0 %v3721
    %v5591 = vpop.f32.mrf.mxu0
    %v5592 = vadd.f32 0.0, %v5591
    %v5593 = vpop.f32.mrf.mxu0
    %v5594 = vadd.f32 0.0, %v5593
    %5595 = vmatmul.bf16.gmra.mxu0 %v3725
    %v5596 = vpop.f32.mrf.mxu0
    %v5597 = vadd.f32 0.0, %v5596
    %v5598 = vpop.f32.mrf.mxu0
    %v5599 = vadd.f32 0.0, %v5598
    %5600 = vmatmul.bf16.gmra.mxu0 %v3729
    %v5601 = vpop.f32.mrf.mxu0
    %v5602 = vadd.f32 0.0, %v5601
    %v5603 = vpop.f32.mrf.mxu0
    %v5604 = vadd.f32 0.0, %v5603
    %5605 = vmatmul.bf16.gmra.mxu0 %v3733
    %v5606 = vpop.f32.mrf.mxu0
    %v5607 = vadd.f32 0.0, %v5606
    %v5608 = vpop.f32.mrf.mxu0
    %v5609 = vadd.f32 0.0, %v5608
    %5610 = vmatmul.bf16.gmra.mxu0 %v3737
    %v5611 = vpop.f32.mrf.mxu0
    %v5612 = vadd.f32 0.0, %v5611
    %v5613 = vpop.f32.mrf.mxu0
    %v5614 = vadd.f32 0.0, %v5613
    %5615 = vmatmul.bf16.gmra.mxu0 %v3741
    %v5616 = vpop.f32.mrf.mxu0
    %v5617 = vadd.f32 0.0, %v5616
    %v5618 = vpop.f32.mrf.mxu0
    %v5619 = vadd.f32 0.0, %v5618
    %5620 = vmatmul.bf16.gmra.mxu0 %v3745
    %v5621 = vpop.f32.mrf.mxu0
    %v5622 = vadd.f32 0.0, %v5621
    %v5623 = vpop.f32.mrf.mxu0
    %v5624 = vadd.f32 0.0, %v5623
    %5625 = vmatmul.bf16.gmra.mxu0 %v3749
    %v5626 = vpop.f32.mrf.mxu0
    %v5627 = vadd.f32 0.0, %v5626
    %v5628 = vpop.f32.mrf.mxu0
    %v5629 = vadd.f32 0.0, %v5628
    %5630 = vmatmul.bf16.gmra.mxu0 %v3753
    %v5631 = vpop.f32.mrf.mxu0
    %v5632 = vadd.f32 0.0, %v5631
    %v5633 = vpop.f32.mrf.mxu0
    %v5634 = vadd.f32 0.0, %v5633
    %5635 = vmatmul.bf16.gmra.mxu0 %v3757
    %v5636 = vpop.f32.mrf.mxu0
    %v5637 = vadd.f32 0.0, %v5636
    %v5638 = vpop.f32.mrf.mxu0
    %v5639 = vadd.f32 0.0, %v5638
    %5640 = vmatmul.bf16.gmra.mxu0 %v3761
    %v5641 = vpop.f32.mrf.mxu0
    %v5642 = vadd.f32 0.0, %v5641
    %v5643 = vpop.f32.mrf.mxu0
    %v5644 = vadd.f32 0.0, %v5643
    %5645 = vmatmul.bf16.gmra.mxu0 %v3765
    %v5646 = vpop.f32.mrf.mxu0
    %v5647 = vadd.f32 0.0, %v5646
    %v5648 = vpop.f32.mrf.mxu0
    %v5649 = vadd.f32 0.0, %v5648
    %5650 = vmatmul.bf16.gmra.mxu0 %v3769
    %v5651 = vpop.f32.mrf.mxu0
    %v5652 = vadd.f32 0.0, %v5651
    %v5653 = vpop.f32.mrf.mxu0
    %v5654 = vadd.f32 0.0, %v5653
    %5655 = vmatmul.bf16.gmra.mxu0 %v3773
    %v5656 = vpop.f32.mrf.mxu0
    %v5657 = vadd.f32 0.0, %v5656
    %v5658 = vpop.f32.mrf.mxu0
    %v5659 = vadd.f32 0.0, %v5658
    %5660 = vmatmul.bf16.gmra.mxu0 %v3777
    %v5661 = vpop.f32.mrf.mxu0
    %v5662 = vadd.f32 0.0, %v5661
    %v5663 = vpop.f32.mrf.mxu0
    %v5664 = vadd.f32 0.0, %v5663
    %5665 = vmatmul.bf16.gmra.mxu0 %v3781
    %v5666 = vpop.f32.mrf.mxu0
    %v5667 = vadd.f32 0.0, %v5666
    %v5668 = vpop.f32.mrf.mxu0
    %v5669 = vadd.f32 0.0, %v5668
    %5670 = vmatmul.bf16.gmra.mxu0 %v3785
    %v5671 = vpop.f32.mrf.mxu0
    %v5672 = vadd.f32 0.0, %v5671
    %v5673 = vpop.f32.mrf.mxu0
    %v5674 = vadd.f32 0.0, %v5673
    %5675 = vmatmul.bf16.gmra.mxu0 %v3789
    %v5676 = vpop.f32.mrf.mxu0
    %v5677 = vadd.f32 0.0, %v5676
    %v5678 = vpop.f32.mrf.mxu0
    %v5679 = vadd.f32 0.0, %v5678
    %5680 = vmatmul.bf16.gmra.mxu0 %v3793
    %v5681 = vpop.f32.mrf.mxu0
    %v5682 = vadd.f32 0.0, %v5681
    %v5683 = vpop.f32.mrf.mxu0
    %v5684 = vadd.f32 0.0, %v5683
    %5685 = vmatmul.bf16.gmra.mxu0 %v3797
    %v5686 = vpop.f32.mrf.mxu0
    %v5687 = vadd.f32 0.0, %v5686
    %v5688 = vpop.f32.mrf.mxu0
    %v5689 = vadd.f32 0.0, %v5688
    %5690 = vmatmul.bf16.gmra.mxu0 %v3801
    %v5691 = vpop.f32.mrf.mxu0
    %v5692 = vadd.f32 0.0, %v5691
    %v5693 = vpop.f32.mrf.mxu0
    %v5694 = vadd.f32 0.0, %v5693
    %5695 = vmatmul.bf16.gmra.mxu0 %v3805
    %v5696 = vpop.f32.mrf.mxu0
    %v5697 = vadd.f32 0.0, %v5696
    %v5698 = vpop.f32.mrf.mxu0
    %v5699 = vadd.f32 0.0, %v5698
    %5700 = vmatmul.bf16.gmra.mxu0 %v3809
    %v5701 = vpop.f32.mrf.mxu0
    %v5702 = vadd.f32 0.0, %v5701
    %v5703 = vpop.f32.mrf.mxu0
    %v5704 = vadd.f32 0.0, %v5703
    %5705 = vmatmul.bf16.gmra.mxu0 %v3813
    %v5706 = vpop.f32.mrf.mxu0
    %v5707 = vadd.f32 0.0, %v5706
    %v5708 = vpop.f32.mrf.mxu0
    %v5709 = vadd.f32 0.0, %v5708
    %5710 = vmatmul.bf16.gmra.mxu0 %v3817
    %v5711 = vpop.f32.mrf.mxu0
    %v5712 = vadd.f32 0.0, %v5711
    %v5713 = vpop.f32.mrf.mxu0
    %v5714 = vadd.f32 0.0, %v5713
    %5715 = vmatmul.bf16.gmra.mxu0 %v3821
    %v5716 = vpop.f32.mrf.mxu0
    %v5717 = vadd.f32 0.0, %v5716
    %v5718 = vpop.f32.mrf.mxu0
    %v5719 = vadd.f32 0.0, %v5718
    %5720 = vmatmul.bf16.gmra.mxu0 %v3825
    %v5721 = vpop.f32.mrf.mxu0
    %v5722 = vadd.f32 0.0, %v5721
    %v5723 = vpop.f32.mrf.mxu0
    %v5724 = vadd.f32 0.0, %v5723
    %5725 = vmatmul.bf16.gmra.mxu0 %v3829
    %v5726 = vpop.f32.mrf.mxu0
    %v5727 = vadd.f32 0.0, %v5726
    %v5728 = vpop.f32.mrf.mxu0
    %v5729 = vadd.f32 0.0, %v5728
    %5730 = vmatmul.bf16.gmra.mxu0 %v3833
    %v5731 = vpop.f32.mrf.mxu0
    %v5732 = vadd.f32 0.0, %v5731
    %v5733 = vpop.f32.mrf.mxu0
    %v5734 = vadd.f32 0.0, %v5733
    %5735 = vmatmul.bf16.gmra.mxu0 %v3837
    %v5736 = vpop.f32.mrf.mxu0
    %v5737 = vadd.f32 0.0, %v5736
    %v5738 = vpop.f32.mrf.mxu0
    %v5739 = vadd.f32 0.0, %v5738
    %5740 = vmatmul.bf16.gmra.mxu0 %v3841
    %v5741 = vpop.f32.mrf.mxu0
    %v5742 = vadd.f32 0.0, %v5741
    %v5743 = vpop.f32.mrf.mxu0
    %v5744 = vadd.f32 0.0, %v5743
    %5745 = vmatmul.bf16.gmra.mxu0 %v3845
    %v5746 = vpop.f32.mrf.mxu0
    %v5747 = vadd.f32 0.0, %v5746
    %v5748 = vpop.f32.mrf.mxu0
    %v5749 = vadd.f32 0.0, %v5748
    %5750 = vmatmul.bf16.gmra.mxu0 %v3849
    %v5751 = vpop.f32.mrf.mxu0
    %v5752 = vadd.f32 0.0, %v5751
    %v5753 = vpop.f32.mrf.mxu0
    %v5754 = vadd.f32 0.0, %v5753
    %5755 = vmatmul.bf16.gmra.mxu0 %v3853
    %v5756 = vpop.f32.mrf.mxu0
    %v5757 = vadd.f32 0.0, %v5756
    %v5758 = vpop.f32.mrf.mxu0
    %v5759 = vadd.f32 0.0, %v5758
    %5760 = vmatmul.bf16.gmra.mxu0 %v3857
    %v5761 = vpop.f32.mrf.mxu0
    %v5762 = vadd.f32 0.0, %v5761
    %v5763 = vpop.f32.mrf.mxu0
    %v5764 = vadd.f32 0.0, %v5763
    %5765 = vmatmul.bf16.gmra.mxu0 %v3861
    %v5766 = vpop.f32.mrf.mxu0
    %v5767 = vadd.f32 0.0, %v5766
    %v5768 = vpop.f32.mrf.mxu0
    %v5769 = vadd.f32 0.0, %v5768
    %5770 = vmatmul.bf16.gmra.mxu0 %v3865
    %v5771 = vpop.f32.mrf.mxu0
    %v5772 = vadd.f32 0.0, %v5771
    %v5773 = vpop.f32.mrf.mxu0
    %v5774 = vadd.f32 0.0, %v5773
    %5775 = vmatmul.bf16.gmra.mxu0 %v3869
    %v5776 = vpop.f32.mrf.mxu0
    %v5777 = vadd.f32 0.0, %v5776
    %v5778 = vpop.f32.mrf.mxu0
    %v5779 = vadd.f32 0.0, %v5778
    %5780 = vmatmul.bf16.gmra.mxu0 %v3873
    %v5781 = vpop.f32.mrf.mxu0
    %v5782 = vadd.f32 0.0, %v5781
    %v5783 = vpop.f32.mrf.mxu0
    %v5784 = vadd.f32 0.0, %v5783
    %5785 = vmatmul.bf16.gmra.mxu0 %v3877
    %v5786 = vpop.f32.mrf.mxu0
    %v5787 = vadd.f32 0.0, %v5786
    %v5788 = vpop.f32.mrf.mxu0
    %v5789 = vadd.f32 0.0, %v5788
    %5790 = vmatmul.bf16.gmra.mxu0 %v3881
    %v5791 = vpop.f32.mrf.mxu0
    %v5792 = vadd.f32 0.0, %v5791
    %v5793 = vpop.f32.mrf.mxu0
    %v5794 = vadd.f32 0.0, %v5793
    %5795 = vmatmul.bf16.gmra.mxu0 %v3885
    %v5796 = vpop.f32.mrf.mxu0
    %v5797 = vadd.f32 0.0, %v5796
    %v5798 = vpop.f32.mrf.mxu0
    %v5799 = vadd.f32 0.0, %v5798
    %5800 = vmatmul.bf16.gmra.mxu0 %v3889
    %v5801 = vpop.f32.mrf.mxu0
    %v5802 = vadd.f32 0.0, %v5801
    %v5803 = vpop.f32.mrf.mxu0
    %v5804 = vadd.f32 0.0, %v5803
    %5805 = vmatmul.bf16.gmra.mxu0 %v3893
    %v5806 = vpop.f32.mrf.mxu0
    %v5807 = vadd.f32 0.0, %v5806
    %v5808 = vpop.f32.mrf.mxu0
    %v5809 = vadd.f32 0.0, %v5808
    %5810 = vmatmul.bf16.gmra.mxu0 %v3897
    %v5811 = vpop.f32.mrf.mxu0
    %v5812 = vadd.f32 0.0, %v5811
    %v5813 = vpop.f32.mrf.mxu0
    %v5814 = vadd.f32 0.0, %v5813
    %5815 = vmatmul.bf16.gmra.mxu0 %v3901
    %v5816 = vpop.f32.mrf.mxu0
    %v5817 = vadd.f32 0.0, %v5816
    %v5818 = vpop.f32.mrf.mxu0
    %v5819 = vadd.f32 0.0, %v5818
    %5820 = vmatmul.bf16.gmra.mxu0 %v3905
    %v5821 = vpop.f32.mrf.mxu0
    %v5822 = vadd.f32 0.0, %v5821
    %v5823 = vpop.f32.mrf.mxu0
    %v5824 = vadd.f32 0.0, %v5823
    %5825 = vmatmul.bf16.gmra.mxu0 %v3909
    %v5826 = vpop.f32.mrf.mxu0
    %v5827 = vadd.f32 0.0, %v5826
    %v5828 = vpop.f32.mrf.mxu0
    %v5829 = vadd.f32 0.0, %v5828
    %5830 = vmatmul.bf16.gmra.mxu0 %v3913
    %v5831 = vpop.f32.mrf.mxu0
    %v5832 = vadd.f32 0.0, %v5831
    %v5833 = vpop.f32.mrf.mxu0
    %v5834 = vadd.f32 0.0, %v5833
    %5835 = vmatmul.bf16.gmra.mxu0 %v3917
    %v5836 = vpop.f32.mrf.mxu0
    %v5837 = vadd.f32 0.0, %v5836
    %v5838 = vpop.f32.mrf.mxu0
    %v5839 = vadd.f32 0.0, %v5838
    %5840 = vmatmul.bf16.gmra.mxu0 %v3921
    %v5841 = vpop.f32.mrf.mxu0
    %v5842 = vadd.f32 0.0, %v5841
    %v5843 = vpop.f32.mrf.mxu0
    %v5844 = vadd.f32 0.0, %v5843
    %5845 = vmatmul.bf16.gmra.mxu0 %v3925
    %v5846 = vpop.f32.mrf.mxu0
    %v5847 = vadd.f32 0.0, %v5846
    %v5848 = vpop.f32.mrf.mxu0
    %v5849 = vadd.f32 0.0, %v5848
    %5850 = vmatmul.bf16.gmra.mxu0 %v3929
    %v5851 = vpop.f32.mrf.mxu0
    %v5852 = vadd.f32 0.0, %v5851
    %v5853 = vpop.f32.mrf.mxu0
    %v5854 = vadd.f32 0.0, %v5853
    %5855 = vmatmul.bf16.gmra.mxu0 %v3933
    %v5856 = vpop.f32.mrf.mxu0
    %v5857 = vadd.f32 0.0, %v5856
    %v5858 = vpop.f32.mrf.mxu0
    %v5859 = vadd.f32 0.0, %v5858
    %5860 = vmatmul.bf16.gmra.mxu0 %v3937
    %v5861 = vpop.f32.mrf.mxu0
    %v5862 = vadd.f32 0.0, %v5861
    %v5863 = vpop.f32.mrf.mxu0
    %v5864 = vadd.f32 0.0, %v5863
    %5865 = vmatmul.bf16.gmra.mxu0 %v3941
    %v5866 = vpop.f32.mrf.mxu0
    %v5867 = vadd.f32 0.0, %v5866
    %v5868 = vpop.f32.mrf.mxu0
    %v5869 = vadd.f32 0.0, %v5868
    %5870 = vmatmul.bf16.gmra.mxu0 %v3945
    %v5871 = vpop.f32.mrf.mxu0
    %v5872 = vadd.f32 0.0, %v5871
    %v5873 = vpop.f32.mrf.mxu0
    %v5874 = vadd.f32 0.0, %v5873
    %5875 = vmatmul.bf16.gmra.mxu0 %v3949
    %v5876 = vpop.f32.mrf.mxu0
    %v5877 = vadd.f32 0.0, %v5876
    %v5878 = vpop.f32.mrf.mxu0
    %v5879 = vadd.f32 0.0, %v5878
    %5880 = vmatmul.bf16.gmra.mxu0 %v3953
    %v5881 = vpop.f32.mrf.mxu0
    %v5882 = vadd.f32 0.0, %v5881
    %v5883 = vpop.f32.mrf.mxu0
    %v5884 = vadd.f32 0.0, %v5883
    %5885 = vmatmul.bf16.gmra.mxu0 %v3957
    %v5886 = vpop.f32.mrf.mxu0
    %v5887 = vadd.f32 0.0, %v5886
    %v5888 = vpop.f32.mrf.mxu0
    %v5889 = vadd.f32 0.0, %v5888
    %5890 = vmatmul.bf16.gmra.mxu0 %v3961
    %v5891 = vpop.f32.mrf.mxu0
    %v5892 = vadd.f32 0.0, %v5891
    %v5893 = vpop.f32.mrf.mxu0
    %v5894 = vadd.f32 0.0, %v5893
    %5895 = vmatmul.bf16.gmra.mxu0 %v3965
    %v5896 = vpop.f32.mrf.mxu0
    %v5897 = vadd.f32 0.0, %v5896
    %v5898 = vpop.f32.mrf.mxu0
    %v5899 = vadd.f32 0.0, %v5898
    %5900 = vmatmul.bf16.gmra.mxu0 %v3969
    %v5901 = vpop.f32.mrf.mxu0
    %v5902 = vadd.f32 0.0, %v5901
    %v5903 = vpop.f32.mrf.mxu0
    %v5904 = vadd.f32 0.0, %v5903
    %5905 = vmatmul.bf16.gmra.mxu0 %v3973
    %v5906 = vpop.f32.mrf.mxu0
    %v5907 = vadd.f32 0.0, %v5906
    %v5908 = vpop.f32.mrf.mxu0
    %v5909 = vadd.f32 0.0, %v5908
    %5910 = vmatmul.bf16.gmra.mxu0 %v3977
    %v5911 = vpop.f32.mrf.mxu0
    %v5912 = vadd.f32 0.0, %v5911
    %v5913 = vpop.f32.mrf.mxu0
    %v5914 = vadd.f32 0.0, %v5913
    %5915 = vmatmul.bf16.gmra.mxu0 %v3981
    %v5916 = vpop.f32.mrf.mxu0
    %v5917 = vadd.f32 0.0, %v5916
    %v5918 = vpop.f32.mrf.mxu0
    %v5919 = vadd.f32 0.0, %v5918
    %5920 = vmatmul.bf16.gmra.mxu0 %v3985
    %v5921 = vpop.f32.mrf.mxu0
    %v5922 = vadd.f32 0.0, %v5921
    %v5923 = vpop.f32.mrf.mxu0
    %v5924 = vadd.f32 0.0, %v5923
    %5925 = vmatmul.bf16.gmra.mxu0 %v3989
    %v5926 = vpop.f32.mrf.mxu0
    %v5927 = vadd.f32 0.0, %v5926
    %v5928 = vpop.f32.mrf.mxu0
    %v5929 = vadd.f32 0.0, %v5928
    %5930 = vmatmul.bf16.gmra.mxu0 %v3993
    %v5931 = vpop.f32.mrf.mxu0
    %v5932 = vadd.f32 0.0, %v5931
    %v5933 = vpop.f32.mrf.mxu0
    %v5934 = vadd.f32 0.0, %v5933
    %5935 = vmatmul.bf16.gmra.mxu0 %v3997
    %v5936 = vpop.f32.mrf.mxu0
    %v5937 = vadd.f32 0.0, %v5936
    %v5938 = vpop.f32.mrf.mxu0
    %v5939 = vadd.f32 0.0, %v5938
    %5940 = vmatmul.bf16.gmra.mxu0 %v4001
    %v5941 = vpop.f32.mrf.mxu0
    %v5942 = vadd.f32 0.0, %v5941
    %v5943 = vpop.f32.mrf.mxu0
    %v5944 = vadd.f32 0.0, %v5943
    %5945 = vmatmul.bf16.gmra.mxu0 %v4005
    %v5946 = vpop.f32.mrf.mxu0
    %v5947 = vadd.f32 0.0, %v5946
    %v5948 = vpop.f32.mrf.mxu0
    %v5949 = vadd.f32 0.0, %v5948
    %5950 = vmatmul.bf16.gmra.mxu0 %v4009
    %v5951 = vpop.f32.mrf.mxu0
    %v5952 = vadd.f32 0.0, %v5951
    %v5953 = vpop.f32.mrf.mxu0
    %v5954 = vadd.f32 0.0, %v5953
    %5955 = vmatmul.bf16.gmra.mxu0 %v4013
    %v5956 = vpop.f32.mrf.mxu0
    %v5957 = vadd.f32 0.0, %v5956
    %v5958 = vpop.f32.mrf.mxu0
    %v5959 = vadd.f32 0.0, %v5958
    %5960 = vmatmul.bf16.gmra.mxu0 %v4017
    %v5961 = vpop.f32.mrf.mxu0
    %v5962 = vadd.f32 0.0, %v5961
    %v5963 = vpop.f32.mrf.mxu0
    %v5964 = vadd.f32 0.0, %v5963
    %5965 = vmatmul.bf16.gmra.mxu0 %v4021
    %v5966 = vpop.f32.mrf.mxu0
    %v5967 = vadd.f32 0.0, %v5966
    %v5968 = vpop.f32.mrf.mxu0
    %v5969 = vadd.f32 0.0, %v5968
    %5970 = vmatmul.bf16.gmra.mxu0 %v4025
    %v5971 = vpop.f32.mrf.mxu0
    %v5972 = vadd.f32 0.0, %v5971
    %v5973 = vpop.f32.mrf.mxu0
    %v5974 = vadd.f32 0.0, %v5973
    %5975 = vmatmul.bf16.gmra.mxu0 %v4029
    %v5976 = vpop.f32.mrf.mxu0
    %v5977 = vadd.f32 0.0, %v5976
    %v5978 = vpop.f32.mrf.mxu0
    %v5979 = vadd.f32 0.0, %v5978
    %5980 = vmatmul.bf16.gmra.mxu0 %v4033
    %v5981 = vpop.f32.mrf.mxu0
    %v5982 = vadd.f32 0.0, %v5981
    %v5983 = vpop.f32.mrf.mxu0
    %v5984 = vadd.f32 0.0, %v5983
    %5985 = vmatmul.bf16.gmra.mxu0 %v4037
    %v5986 = vpop.f32.mrf.mxu0
    %v5987 = vadd.f32 0.0, %v5986
    %v5988 = vpop.f32.mrf.mxu0
    %v5989 = vadd.f32 0.0, %v5988
    %5990 = vmatmul.bf16.gmra.mxu0 %v4041
    %v5991 = vpop.f32.mrf.mxu0
    %v5992 = vadd.f32 0.0, %v5991
    %v5993 = vpop.f32.mrf.mxu0
    %v5994 = vadd.f32 0.0, %v5993
    %5995 = vmatmul.bf16.gmra.mxu0 %v4045
    %v5996 = vpop.f32.mrf.mxu0
    %v5997 = vadd.f32 0.0, %v5996
    %v5998 = vpop.f32.mrf.mxu0
    %v5999 = vadd.f32 0.0, %v5998
    %6000 = vmatmul.bf16.gmra.mxu0 %v4049
    %v6001 = vpop.f32.mrf.mxu0
    %v6002 = vadd.f32 0.0, %v6001
    %v6003 = vpop.f32.mrf.mxu0
    %v6004 = vadd.f32 0.0, %v6003
    %6005 = vmatmul.bf16.gmra.mxu0 %v4053
    %v6006 = vpop.f32.mrf.mxu0
    %v6007 = vadd.f32 0.0, %v6006
    %v6008 = vpop.f32.mrf.mxu0
    %v6009 = vadd.f32 0.0, %v6008
    %6010 = vmatmul.bf16.gmra.mxu0 %v4057
    %v6011 = vpop.f32.mrf.mxu0
    %v6012 = vadd.f32 0.0, %v6011
    %v6013 = vpop.f32.mrf.mxu0
    %v6014 = vadd.f32 0.0, %v6013
    %6015 = vmatmul.bf16.gmra.mxu0 %v4061
    %v6016 = vpop.f32.mrf.mxu0
    %v6017 = vadd.f32 0.0, %v6016
    %v6018 = vpop.f32.mrf.mxu0
    %v6019 = vadd.f32 0.0, %v6018
    %6020 = vmatmul.bf16.gmra.mxu0 %v4065
    %v6021 = vpop.f32.mrf.mxu0
    %v6022 = vadd.f32 0.0, %v6021
    %v6023 = vpop.f32.mrf.mxu0
    %v6024 = vadd.f32 0.0, %v6023
    %6025 = vmatmul.bf16.gmra.mxu0 %v4069
    %v6026 = vpop.f32.mrf.mxu0
    %v6027 = vadd.f32 0.0, %v6026
    %v6028 = vpop.f32.mrf.mxu0
    %v6029 = vadd.f32 0.0, %v6028
    %6030 = vmatmul.bf16.gmra.mxu0 %v4073
    %v6031 = vpop.f32.mrf.mxu0
    %v6032 = vadd.f32 0.0, %v6031
    %v6033 = vpop.f32.mrf.mxu0
    %v6034 = vadd.f32 0.0, %v6033
    %6035 = vmatmul.bf16.gmra.mxu0 %v4077
    %v6036 = vpop.f32.mrf.mxu0
    %v6037 = vadd.f32 0.0, %v6036
    %v6038 = vpop.f32.mrf.mxu0
    %v6039 = vadd.f32 0.0, %v6038
    %6040 = vmatmul.bf16.gmra.mxu0 %v4081
    %v6041 = vpop.f32.mrf.mxu0
    %v6042 = vadd.f32 0.0, %v6041
    %v6043 = vpop.f32.mrf.mxu0
    %v6044 = vadd.f32 0.0, %v6043
    %6045 = vmatmul.bf16.gmra.mxu0 %v4085
    %v6046 = vpop.f32.mrf.mxu0
    %v6047 = vadd.f32 0.0, %v6046
    %v6048 = vpop.f32.mrf.mxu0
    %v6049 = vadd.f32 0.0, %v6048
    %6050 = vmatmul.bf16.gmra.mxu0 %v4089
    %v6051 = vpop.f32.mrf.mxu0
    %v6052 = vadd.f32 0.0, %v6051
    %v6053 = vpop.f32.mrf.mxu0
    %v6054 = vadd.f32 0.0, %v6053
    %6055 = vmatmul.bf16.gmra.mxu0 %v4093
    %v6056 = vpop.f32.mrf.mxu0
    %v6057 = vadd.f32 0.0, %v6056
    %v6058 = vpop.f32.mrf.mxu0
    %v6059 = vadd.f32 0.0, %v6058
    %6060 = vmatmul.bf16.gmra.mxu0 %v4097
    %v6061 = vpop.f32.mrf.mxu0
    %v6062 = vadd.f32 0.0, %v6061
    %v6063 = vpop.f32.mrf.mxu0
    %v6064 = vadd.f32 0.0, %v6063
    %6065 = vmatmul.bf16.gmra.mxu0 %v4101
    %v6066 = vpop.f32.mrf.mxu0
    %v6067 = vadd.f32 0.0, %v6066
    %v6068 = vpop.f32.mrf.mxu0
    %v6069 = vadd.f32 0.0, %v6068
    %6070 = vmatmul.bf16.gmra.mxu0 %v4105
    %v6071 = vpop.f32.mrf.mxu0
    %v6072 = vadd.f32 0.0, %v6071
    %v6073 = vpop.f32.mrf.mxu0
    %v6074 = vadd.f32 0.0, %v6073
    %6075 = vmatmul.bf16.gmra.mxu0 %v4109
    %v6076 = vpop.f32.mrf.mxu0
    %v6077 = vadd.f32 0.0, %v6076
    %v6078 = vpop.f32.mrf.mxu0
    %v6079 = vadd.f32 0.0, %v6078
    %6080 = vmatmul.bf16.gmra.mxu0 %v4113
    %v6081 = vpop.f32.mrf.mxu0
    %v6082 = vadd.f32 0.0, %v6081
    %v6083 = vpop.f32.mrf.mxu0
    %v6084 = vadd.f32 0.0, %v6083
    %6085 = vmatmul.bf16.gmra.mxu0 %v4117
    %v6086 = vpop.f32.mrf.mxu0
    %v6087 = vadd.f32 0.0, %v6086
    %v6088 = vpop.f32.mrf.mxu0
    %v6089 = vadd.f32 0.0, %v6088
    %6090 = vmatmul.bf16.gmra.mxu0 %v4121
    %v6091 = vpop.f32.mrf.mxu0
    %v6092 = vadd.f32 0.0, %v6091
    %v6093 = vpop.f32.mrf.mxu0
    %v6094 = vadd.f32 0.0, %v6093
    %6095 = vmatmul.bf16.gmra.mxu0 %v4125
    %v6096 = vpop.f32.mrf.mxu0
    %v6097 = vadd.f32 0.0, %v6096
    %v6098 = vpop.f32.mrf.mxu0
    %v6099 = vadd.f32 0.0, %v6098
    %6100 = vmatmul.bf16.gmra.mxu0 %v4129
    %v6101 = vpop.f32.mrf.mxu0
    %v6102 = vadd.f32 0.0, %v6101
    %v6103 = vpop.f32.mrf.mxu0
    %v6104 = vadd.f32 0.0, %v6103
    %6105 = vmatmul.bf16.gmra.mxu0 %v4133
    %v6106 = vpop.f32.mrf.mxu0
    %v6107 = vadd.f32 0.0, %v6106
    %v6108 = vpop.f32.mrf.mxu0
    %v6109 = vadd.f32 0.0, %v6108
    %6110 = vmatmul.bf16.gmra.mxu0 %v4137
    %v6111 = vpop.f32.mrf.mxu0
    %v6112 = vadd.f32 0.0, %v6111
    %v6113 = vpop.f32.mrf.mxu0
    %v6114 = vadd.f32 0.0, %v6113
    %6115 = vmatmul.bf16.gmra.mxu0 %v4141
    %v6116 = vpop.f32.mrf.mxu0
    %v6117 = vadd.f32 0.0, %v6116
    %v6118 = vpop.f32.mrf.mxu0
    %v6119 = vadd.f32 0.0, %v6118
    %6120 = vmatmul.bf16.gmra.mxu0 %v4145
    %v6121 = vpop.f32.mrf.mxu0
    %v6122 = vadd.f32 0.0, %v6121
    %v6123 = vpop.f32.mrf.mxu0
    %v6124 = vadd.f32 0.0, %v6123
    %6125 = vmatmul.bf16.gmra.mxu0 %v4149
    %v6126 = vpop.f32.mrf.mxu0
    %v6127 = vadd.f32 0.0, %v6126
    %v6128 = vpop.f32.mrf.mxu0
    %v6129 = vadd.f32 0.0, %v6128
    %6130 = vmatmul.bf16.gmra.mxu0 %v4153
    %v6131 = vpop.f32.mrf.mxu0
    %v6132 = vadd.f32 0.0, %v6131
    %v6133 = vpop.f32.mrf.mxu0
    %v6134 = vadd.f32 0.0, %v6133
    %6135 = vmatmul.bf16.gmra.mxu0 %v4157
    %v6136 = vpop.f32.mrf.mxu0
    %v6137 = vadd.f32 0.0, %v6136
    %v6138 = vpop.f32.mrf.mxu0
    %v6139 = vadd.f32 0.0, %v6138
    %6140 = vmatmul.bf16.gmra.mxu0 %v4161
    %v6141 = vpop.f32.mrf.mxu0
    %v6142 = vadd.f32 0.0, %v6141
    %v6143 = vpop.f32.mrf.mxu0
    %v6144 = vadd.f32 0.0, %v6143
    %6145 = vmatmul.bf16.gmra.mxu0 %v4165
    %v6146 = vpop.f32.mrf.mxu0
    %v6147 = vadd.f32 0.0, %v6146
    %v6148 = vpop.f32.mrf.mxu0
    %v6149 = vadd.f32 0.0, %v6148
    %6150 = vmatmul.bf16.gmra.mxu0 %v4169
    %v6151 = vpop.f32.mrf.mxu0
    %v6152 = vadd.f32 0.0, %v6151
    %v6153 = vpop.f32.mrf.mxu0
    %v6154 = vadd.f32 0.0, %v6153
    %6155 = vmatmul.bf16.gmra.mxu0 %v4173
    %v6156 = vpop.f32.mrf.mxu0
    %v6157 = vadd.f32 0.0, %v6156
    %v6158 = vpop.f32.mrf.mxu0
    %v6159 = vadd.f32 0.0, %v6158
    %6160 = vmatmul.bf16.gmra.mxu0 %v4177
    %v6161 = vpop.f32.mrf.mxu0
    %v6162 = vadd.f32 0.0, %v6161
    %v6163 = vpop.f32.mrf.mxu0
    %v6164 = vadd.f32 0.0, %v6163
    %6165 = vmatmul.bf16.gmra.mxu0 %v4181
    %v6166 = vpop.f32.mrf.mxu0
    %v6167 = vadd.f32 0.0, %v6166
    %v6168 = vpop.f32.mrf.mxu0
    %v6169 = vadd.f32 0.0, %v6168
    %6170 = vmatmul.bf16.gmra.mxu0 %v4185
    %v6171 = vpop.f32.mrf.mxu0
    %v6172 = vadd.f32 0.0, %v6171
    %v6173 = vpop.f32.mrf.mxu0
    %v6174 = vadd.f32 0.0, %v6173
    %6175 = vmatmul.bf16.gmra.mxu0 %v4189
    %v6176 = vpop.f32.mrf.mxu0
    %v6177 = vadd.f32 0.0, %v6176
    %v6178 = vpop.f32.mrf.mxu0
    %v6179 = vadd.f32 0.0, %v6178
    %6180 = vmatmul.bf16.gmra.mxu0 %v4193
    %v6181 = vpop.f32.mrf.mxu0
    %v6182 = vadd.f32 0.0, %v6181
    %v6183 = vpop.f32.mrf.mxu0
    %v6184 = vadd.f32 0.0, %v6183
    %6185 = vmatmul.bf16.gmra.mxu0 %v4197
    %v6186 = vpop.f32.mrf.mxu0
    %v6187 = vadd.f32 0.0, %v6186
    %v6188 = vpop.f32.mrf.mxu0
    %v6189 = vadd.f32 0.0, %v6188
    %6190 = vmatmul.bf16.gmra.mxu0 %v4201
    %v6191 = vpop.f32.mrf.mxu0
    %v6192 = vadd.f32 0.0, %v6191
    %v6193 = vpop.f32.mrf.mxu0
    %v6194 = vadd.f32 0.0, %v6193
    %6195 = vmatmul.bf16.gmra.mxu0 %v4205
    %v6196 = vpop.f32.mrf.mxu0
    %v6197 = vadd.f32 0.0, %v6196
    %v6198 = vpop.f32.mrf.mxu0
    %v6199 = vadd.f32 0.0, %v6198
    %6200 = vmatmul.bf16.gmra.mxu0 %v4209
    %v6201 = vpop.f32.mrf.mxu0
    %v6202 = vadd.f32 0.0, %v6201
    %v6203 = vpop.f32.mrf.mxu0
    %v6204 = vadd.f32 0.0, %v6203
    %6205 = vmatmul.bf16.gmra.mxu0 %v4213
    %v6206 = vpop.f32.mrf.mxu0
    %v6207 = vadd.f32 0.0, %v6206
    %v6208 = vpop.f32.mrf.mxu0
    %v6209 = vadd.f32 0.0, %v6208
    %6210 = vmatmul.bf16.gmra.mxu0 %v4217
    %v6211 = vpop.f32.mrf.mxu0
    %v6212 = vadd.f32 0.0, %v6211
    %v6213 = vpop.f32.mrf.mxu0
    %v6214 = vadd.f32 0.0, %v6213
    %6215 = vmatmul.bf16.gmra.mxu0 %v4221
    %v6216 = vpop.f32.mrf.mxu0
    %v6217 = vadd.f32 0.0, %v6216
    %v6218 = vpop.f32.mrf.mxu0
    %v6219 = vadd.f32 0.0, %v6218
    %6220 = vmatmul.bf16.gmra.mxu0 %v4225
    %v6221 = vpop.f32.mrf.mxu0
    %v6222 = vadd.f32 0.0, %v6221
    %v6223 = vpop.f32.mrf.mxu0
    %v6224 = vadd.f32 0.0, %v6223
    %6225 = vmatmul.bf16.gmra.mxu0 %v4229
    %v6226 = vpop.f32.mrf.mxu0
    %v6227 = vadd.f32 0.0, %v6226
    %v6228 = vpop.f32.mrf.mxu0
    %v6229 = vadd.f32 0.0, %v6228
    %6230 = vmatmul.bf16.gmra.mxu0 %v4233
    %v6231 = vpop.f32.mrf.mxu0
    %v6232 = vadd.f32 0.0, %v6231
    %v6233 = vpop.f32.mrf.mxu0
    %v6234 = vadd.f32 0.0, %v6233
    %6235 = vmatmul.bf16.gmra.mxu0 %v4237
    %v6236 = vpop.f32.mrf.mxu0
    %v6237 = vadd.f32 0.0, %v6236
    %v6238 = vpop.f32.mrf.mxu0
    %v6239 = vadd.f32 0.0, %v6238
    %6240 = vmatmul.bf16.gmra.mxu0 %v4241
    %v6241 = vpop.f32.mrf.mxu0
    %v6242 = vadd.f32 0.0, %v6241
    %v6243 = vpop.f32.mrf.mxu0
    %v6244 = vadd.f32 0.0, %v6243
    %6245 = vdwg.mxu0
    %6246 = vmatpush.bf16.msra.mxu0 %v5188
    %6247 = vmatpush.bf16.msra.mxu0 %v5187
    %6248 = vmatpush.bf16.msra.mxu0 %v5186
    %6249 = vmatpush.bf16.msra.mxu0 %v5185
    %6250 = vmatpush.bf16.msra.mxu0 %v5184
    %6251 = vmatpush.bf16.msra.mxu0 %v5183
    %6252 = vmatpush.bf16.msra.mxu0 %v5182
    %6253 = vmatpush.bf16.msra.mxu0 %v5181
    %6254 = vmatmul.bf16.gmra.mxu0 %v3446
    %v6255 = vpop.f32.mrf.mxu0
    %v6256 = vadd.f32 %v5247, %v6255
    %v6257 = vpop.f32.mrf.mxu0
    %v6258 = vadd.f32 %v5249, %v6257
    %6259 = vmatmul.bf16.gmra.mxu0 %v3450
    %v6260 = vpop.f32.mrf.mxu0
    %v6261 = vadd.f32 %v5252, %v6260
    %v6262 = vpop.f32.mrf.mxu0
    %v6263 = vadd.f32 %v5254, %v6262
    %6264 = vmatmul.bf16.gmra.mxu0 %v3454
    %v6265 = vpop.f32.mrf.mxu0
    %v6266 = vadd.f32 %v5257, %v6265
    %v6267 = vpop.f32.mrf.mxu0
    %v6268 = vadd.f32 %v5259, %v6267
    %6269 = vmatmul.bf16.gmra.mxu0 %v3458
    %v6270 = vpop.f32.mrf.mxu0
    %v6271 = vadd.f32 %v5262, %v6270
    %v6272 = vpop.f32.mrf.mxu0
    %v6273 = vadd.f32 %v5264, %v6272
    %6274 = vmatmul.bf16.gmra.mxu0 %v3462
    %v6275 = vpop.f32.mrf.mxu0
    %v6276 = vadd.f32 %v5267, %v6275
    %v6277 = vpop.f32.mrf.mxu0
    %v6278 = vadd.f32 %v5269, %v6277
    %6279 = vmatmul.bf16.gmra.mxu0 %v3466
    %v6280 = vpop.f32.mrf.mxu0
    %v6281 = vadd.f32 %v5272, %v6280
    %v6282 = vpop.f32.mrf.mxu0
    %v6283 = vadd.f32 %v5274, %v6282
    %6284 = vmatmul.bf16.gmra.mxu0 %v3470
    %v6285 = vpop.f32.mrf.mxu0
    %v6286 = vadd.f32 %v5277, %v6285
    %v6287 = vpop.f32.mrf.mxu0
    %v6288 = vadd.f32 %v5279, %v6287
    %6289 = vmatmul.bf16.gmra.mxu0 %v3474
    %v6290 = vpop.f32.mrf.mxu0
    %v6291 = vadd.f32 %v5282, %v6290
    %v6292 = vpop.f32.mrf.mxu0
    %v6293 = vadd.f32 %v5284, %v6292
    %6294 = vmatmul.bf16.gmra.mxu0 %v3478
    %v6295 = vpop.f32.mrf.mxu0
    %v6296 = vadd.f32 %v5287, %v6295
    %v6297 = vpop.f32.mrf.mxu0
    %v6298 = vadd.f32 %v5289, %v6297
    %6299 = vmatmul.bf16.gmra.mxu0 %v3482
    %v6300 = vpop.f32.mrf.mxu0
    %v6301 = vadd.f32 %v5292, %v6300
    %v6302 = vpop.f32.mrf.mxu0
    %v6303 = vadd.f32 %v5294, %v6302
    %6304 = vmatmul.bf16.gmra.mxu0 %v3486
    %v6305 = vpop.f32.mrf.mxu0
    %v6306 = vadd.f32 %v5297, %v6305
    %v6307 = vpop.f32.mrf.mxu0
    %v6308 = vadd.f32 %v5299, %v6307
    %6309 = vmatmul.bf16.gmra.mxu0 %v3490
    %v6310 = vpop.f32.mrf.mxu0
    %v6311 = vadd.f32 %v5302, %v6310
    %v6312 = vpop.f32.mrf.mxu0
    %v6313 = vadd.f32 %v5304, %v6312
    %6314 = vmatmul.bf16.gmra.mxu0 %v3494
    %v6315 = vpop.f32.mrf.mxu0
    %v6316 = vadd.f32 %v5307, %v6315
    %v6317 = vpop.f32.mrf.mxu0
    %v6318 = vadd.f32 %v5309, %v6317
    %6319 = vmatmul.bf16.gmra.mxu0 %v3498
    %v6320 = vpop.f32.mrf.mxu0
    %v6321 = vadd.f32 %v5312, %v6320
    %v6322 = vpop.f32.mrf.mxu0
    %v6323 = vadd.f32 %v5314, %v6322
    %6324 = vmatmul.bf16.gmra.mxu0 %v3502
    %v6325 = vpop.f32.mrf.mxu0
    %v6326 = vadd.f32 %v5317, %v6325
    %v6327 = vpop.f32.mrf.mxu0
    %v6328 = vadd.f32 %v5319, %v6327
    %6329 = vmatmul.bf16.gmra.mxu0 %v3506
    %v6330 = vpop.f32.mrf.mxu0
    %v6331 = vadd.f32 %v5322, %v6330
    %v6332 = vpop.f32.mrf.mxu0
    %v6333 = vadd.f32 %v5324, %v6332
    %6334 = vmatmul.bf16.gmra.mxu0 %v3510
    %v6335 = vpop.f32.mrf.mxu0
    %v6336 = vadd.f32 %v5327, %v6335
    %v6337 = vpop.f32.mrf.mxu0
    %v6338 = vadd.f32 %v5329, %v6337
    %6339 = vmatmul.bf16.gmra.mxu0 %v3514
    %v6340 = vpop.f32.mrf.mxu0
    %v6341 = vadd.f32 %v5332, %v6340
    %v6342 = vpop.f32.mrf.mxu0
    %v6343 = vadd.f32 %v5334, %v6342
    %6344 = vmatmul.bf16.gmra.mxu0 %v3518
    %v6345 = vpop.f32.mrf.mxu0
    %v6346 = vadd.f32 %v5337, %v6345
    %v6347 = vpop.f32.mrf.mxu0
    %v6348 = vadd.f32 %v5339, %v6347
    %6349 = vmatmul.bf16.gmra.mxu0 %v3522
    %v6350 = vpop.f32.mrf.mxu0
    %v6351 = vadd.f32 %v5342, %v6350
    %v6352 = vpop.f32.mrf.mxu0
    %v6353 = vadd.f32 %v5344, %v6352
    %6354 = vmatmul.bf16.gmra.mxu0 %v3526
    %v6355 = vpop.f32.mrf.mxu0
    %v6356 = vadd.f32 %v5347, %v6355
    %v6357 = vpop.f32.mrf.mxu0
    %v6358 = vadd.f32 %v5349, %v6357
    %6359 = vmatmul.bf16.gmra.mxu0 %v3530
    %v6360 = vpop.f32.mrf.mxu0
    %v6361 = vadd.f32 %v5352, %v6360
    %v6362 = vpop.f32.mrf.mxu0
    %v6363 = vadd.f32 %v5354, %v6362
    %6364 = vmatmul.bf16.gmra.mxu0 %v3534
    %v6365 = vpop.f32.mrf.mxu0
    %v6366 = vadd.f32 %v5357, %v6365
    %v6367 = vpop.f32.mrf.mxu0
    %v6368 = vadd.f32 %v5359, %v6367
    %6369 = vmatmul.bf16.gmra.mxu0 %v3538
    %v6370 = vpop.f32.mrf.mxu0
    %v6371 = vadd.f32 %v5362, %v6370
    %v6372 = vpop.f32.mrf.mxu0
    %v6373 = vadd.f32 %v5364, %v6372
    %6374 = vmatmul.bf16.gmra.mxu0 %v3542
    %v6375 = vpop.f32.mrf.mxu0
    %v6376 = vadd.f32 %v5367, %v6375
    %v6377 = vpop.f32.mrf.mxu0
    %v6378 = vadd.f32 %v5369, %v6377
    %6379 = vmatmul.bf16.gmra.mxu0 %v3546
    %v6380 = vpop.f32.mrf.mxu0
    %v6381 = vadd.f32 %v5372, %v6380
    %v6382 = vpop.f32.mrf.mxu0
    %v6383 = vadd.f32 %v5374, %v6382
    %6384 = vmatmul.bf16.gmra.mxu0 %v3550
    %v6385 = vpop.f32.mrf.mxu0
    %v6386 = vadd.f32 %v5377, %v6385
    %v6387 = vpop.f32.mrf.mxu0
    %v6388 = vadd.f32 %v5379, %v6387
    %6389 = vmatmul.bf16.gmra.mxu0 %v3554
    %v6390 = vpop.f32.mrf.mxu0
    %v6391 = vadd.f32 %v5382, %v6390
    %v6392 = vpop.f32.mrf.mxu0
    %v6393 = vadd.f32 %v5384, %v6392
    %6394 = vmatmul.bf16.gmra.mxu0 %v3558
    %v6395 = vpop.f32.mrf.mxu0
    %v6396 = vadd.f32 %v5387, %v6395
    %v6397 = vpop.f32.mrf.mxu0
    %v6398 = vadd.f32 %v5389, %v6397
    %6399 = vmatmul.bf16.gmra.mxu0 %v3562
    %v6400 = vpop.f32.mrf.mxu0
    %v6401 = vadd.f32 %v5392, %v6400
    %v6402 = vpop.f32.mrf.mxu0
    %v6403 = vadd.f32 %v5394, %v6402
    %6404 = vmatmul.bf16.gmra.mxu0 %v3566
    %v6405 = vpop.f32.mrf.mxu0
    %v6406 = vadd.f32 %v5397, %v6405
    %v6407 = vpop.f32.mrf.mxu0
    %v6408 = vadd.f32 %v5399, %v6407
    %6409 = vmatmul.bf16.gmra.mxu0 %v3570
    %v6410 = vpop.f32.mrf.mxu0
    %v6411 = vadd.f32 %v5402, %v6410
    %v6412 = vpop.f32.mrf.mxu0
    %v6413 = vadd.f32 %v5404, %v6412
    %6414 = vmatmul.bf16.gmra.mxu0 %v3574
    %v6415 = vpop.f32.mrf.mxu0
    %v6416 = vadd.f32 %v5407, %v6415
    %v6417 = vpop.f32.mrf.mxu0
    %v6418 = vadd.f32 %v5409, %v6417
    %6419 = vmatmul.bf16.gmra.mxu0 %v3578
    %v6420 = vpop.f32.mrf.mxu0
    %v6421 = vadd.f32 %v5412, %v6420
    %v6422 = vpop.f32.mrf.mxu0
    %v6423 = vadd.f32 %v5414, %v6422
    %6424 = vmatmul.bf16.gmra.mxu0 %v3582
    %v6425 = vpop.f32.mrf.mxu0
    %v6426 = vadd.f32 %v5417, %v6425
    %v6427 = vpop.f32.mrf.mxu0
    %v6428 = vadd.f32 %v5419, %v6427
    %6429 = vmatmul.bf16.gmra.mxu0 %v3586
    %v6430 = vpop.f32.mrf.mxu0
    %v6431 = vadd.f32 %v5422, %v6430
    %v6432 = vpop.f32.mrf.mxu0
    %v6433 = vadd.f32 %v5424, %v6432
    %6434 = vmatmul.bf16.gmra.mxu0 %v3590
    %v6435 = vpop.f32.mrf.mxu0
    %v6436 = vadd.f32 %v5427, %v6435
    %v6437 = vpop.f32.mrf.mxu0
    %v6438 = vadd.f32 %v5429, %v6437
    %6439 = vmatmul.bf16.gmra.mxu0 %v3594
    %v6440 = vpop.f32.mrf.mxu0
    %v6441 = vadd.f32 %v5432, %v6440
    %v6442 = vpop.f32.mrf.mxu0
    %v6443 = vadd.f32 %v5434, %v6442
    %6444 = vmatmul.bf16.gmra.mxu0 %v3598
    %v6445 = vpop.f32.mrf.mxu0
    %v6446 = vadd.f32 %v5437, %v6445
    %v6447 = vpop.f32.mrf.mxu0
    %v6448 = vadd.f32 %v5439, %v6447
    %6449 = vmatmul.bf16.gmra.mxu0 %v3602
    %v6450 = vpop.f32.mrf.mxu0
    %v6451 = vadd.f32 %v5442, %v6450
    %v6452 = vpop.f32.mrf.mxu0
    %v6453 = vadd.f32 %v5444, %v6452
    %6454 = vmatmul.bf16.gmra.mxu0 %v3606
    %v6455 = vpop.f32.mrf.mxu0
    %v6456 = vadd.f32 %v5447, %v6455
    %v6457 = vpop.f32.mrf.mxu0
    %v6458 = vadd.f32 %v5449, %v6457
    %6459 = vmatmul.bf16.gmra.mxu0 %v3610
    %v6460 = vpop.f32.mrf.mxu0
    %v6461 = vadd.f32 %v5452, %v6460
    %v6462 = vpop.f32.mrf.mxu0
    %v6463 = vadd.f32 %v5454, %v6462
    %6464 = vmatmul.bf16.gmra.mxu0 %v3614
    %v6465 = vpop.f32.mrf.mxu0
    %v6466 = vadd.f32 %v5457, %v6465
    %v6467 = vpop.f32.mrf.mxu0
    %v6468 = vadd.f32 %v5459, %v6467
    %6469 = vmatmul.bf16.gmra.mxu0 %v3618
    %v6470 = vpop.f32.mrf.mxu0
    %v6471 = vadd.f32 %v5462, %v6470
    %v6472 = vpop.f32.mrf.mxu0
    %v6473 = vadd.f32 %v5464, %v6472
    %6474 = vmatmul.bf16.gmra.mxu0 %v3622
    %v6475 = vpop.f32.mrf.mxu0
    %v6476 = vadd.f32 %v5467, %v6475
    %v6477 = vpop.f32.mrf.mxu0
    %v6478 = vadd.f32 %v5469, %v6477
    %6479 = vmatmul.bf16.gmra.mxu0 %v3626
    %v6480 = vpop.f32.mrf.mxu0
    %v6481 = vadd.f32 %v5472, %v6480
    %v6482 = vpop.f32.mrf.mxu0
    %v6483 = vadd.f32 %v5474, %v6482
    %6484 = vmatmul.bf16.gmra.mxu0 %v3630
    %v6485 = vpop.f32.mrf.mxu0
    %v6486 = vadd.f32 %v5477, %v6485
    %v6487 = vpop.f32.mrf.mxu0
    %v6488 = vadd.f32 %v5479, %v6487
    %6489 = vmatmul.bf16.gmra.mxu0 %v3634
    %v6490 = vpop.f32.mrf.mxu0
    %v6491 = vadd.f32 %v5482, %v6490
    %v6492 = vpop.f32.mrf.mxu0
    %v6493 = vadd.f32 %v5484, %v6492
    %6494 = vmatmul.bf16.gmra.mxu0 %v3638
    %v6495 = vpop.f32.mrf.mxu0
    %v6496 = vadd.f32 %v5487, %v6495
    %v6497 = vpop.f32.mrf.mxu0
    %v6498 = vadd.f32 %v5489, %v6497
    %6499 = vmatmul.bf16.gmra.mxu0 %v3642
    %v6500 = vpop.f32.mrf.mxu0
    %v6501 = vadd.f32 %v5492, %v6500
    %v6502 = vpop.f32.mrf.mxu0
    %v6503 = vadd.f32 %v5494, %v6502
    %6504 = vmatmul.bf16.gmra.mxu0 %v3646
    %v6505 = vpop.f32.mrf.mxu0
    %v6506 = vadd.f32 %v5497, %v6505
    %v6507 = vpop.f32.mrf.mxu0
    %v6508 = vadd.f32 %v5499, %v6507
    %6509 = vmatmul.bf16.gmra.mxu0 %v3650
    %v6510 = vpop.f32.mrf.mxu0
    %v6511 = vadd.f32 %v5502, %v6510
    %v6512 = vpop.f32.mrf.mxu0
    %v6513 = vadd.f32 %v5504, %v6512
    %6514 = vmatmul.bf16.gmra.mxu0 %v3654
    %v6515 = vpop.f32.mrf.mxu0
    %v6516 = vadd.f32 %v5507, %v6515
    %v6517 = vpop.f32.mrf.mxu0
    %v6518 = vadd.f32 %v5509, %v6517
    %6519 = vmatmul.bf16.gmra.mxu0 %v3658
    %v6520 = vpop.f32.mrf.mxu0
    %v6521 = vadd.f32 %v5512, %v6520
    %v6522 = vpop.f32.mrf.mxu0
    %v6523 = vadd.f32 %v5514, %v6522
    %6524 = vmatmul.bf16.gmra.mxu0 %v3662
    %v6525 = vpop.f32.mrf.mxu0
    %v6526 = vadd.f32 %v5517, %v6525
    %v6527 = vpop.f32.mrf.mxu0
    %v6528 = vadd.f32 %v5519, %v6527
    %6529 = vmatmul.bf16.gmra.mxu0 %v3666
    %v6530 = vpop.f32.mrf.mxu0
    %v6531 = vadd.f32 %v5522, %v6530
    %v6532 = vpop.f32.mrf.mxu0
    %v6533 = vadd.f32 %v5524, %v6532
    %6534 = vmatmul.bf16.gmra.mxu0 %v3670
    %v6535 = vpop.f32.mrf.mxu0
    %v6536 = vadd.f32 %v5527, %v6535
    %v6537 = vpop.f32.mrf.mxu0
    %v6538 = vadd.f32 %v5529, %v6537
    %6539 = vmatmul.bf16.gmra.mxu0 %v3674
    %v6540 = vpop.f32.mrf.mxu0
    %v6541 = vadd.f32 %v5532, %v6540
    %v6542 = vpop.f32.mrf.mxu0
    %v6543 = vadd.f32 %v5534, %v6542
    %6544 = vmatmul.bf16.gmra.mxu0 %v3678
    %v6545 = vpop.f32.mrf.mxu0
    %v6546 = vadd.f32 %v5537, %v6545
    %v6547 = vpop.f32.mrf.mxu0
    %v6548 = vadd.f32 %v5539, %v6547
    %6549 = vmatmul.bf16.gmra.mxu0 %v3682
    %v6550 = vpop.f32.mrf.mxu0
    %v6551 = vadd.f32 %v5542, %v6550
    %v6552 = vpop.f32.mrf.mxu0
    %v6553 = vadd.f32 %v5544, %v6552
    %6554 = vmatmul.bf16.gmra.mxu0 %v3686
    %v6555 = vpop.f32.mrf.mxu0
    %v6556 = vadd.f32 %v5547, %v6555
    %v6557 = vpop.f32.mrf.mxu0
    %v6558 = vadd.f32 %v5549, %v6557
    %6559 = vmatmul.bf16.gmra.mxu0 %v3690
    %v6560 = vpop.f32.mrf.mxu0
    %v6561 = vadd.f32 %v5552, %v6560
    %v6562 = vpop.f32.mrf.mxu0
    %v6563 = vadd.f32 %v5554, %v6562
    %6564 = vmatmul.bf16.gmra.mxu0 %v3694
    %v6565 = vpop.f32.mrf.mxu0
    %v6566 = vadd.f32 %v5557, %v6565
    %v6567 = vpop.f32.mrf.mxu0
    %v6568 = vadd.f32 %v5559, %v6567
    %6569 = vmatmul.bf16.gmra.mxu0 %v3698
    %v6570 = vpop.f32.mrf.mxu0
    %v6571 = vadd.f32 %v5562, %v6570
    %v6572 = vpop.f32.mrf.mxu0
    %v6573 = vadd.f32 %v5564, %v6572
    %6574 = vmatmul.bf16.gmra.mxu0 %v3702
    %v6575 = vpop.f32.mrf.mxu0
    %v6576 = vadd.f32 %v5567, %v6575
    %v6577 = vpop.f32.mrf.mxu0
    %v6578 = vadd.f32 %v5569, %v6577
    %6579 = vmatmul.bf16.gmra.mxu0 %v3706
    %v6580 = vpop.f32.mrf.mxu0
    %v6581 = vadd.f32 %v5572, %v6580
    %v6582 = vpop.f32.mrf.mxu0
    %v6583 = vadd.f32 %v5574, %v6582
    %6584 = vmatmul.bf16.gmra.mxu0 %v3710
    %v6585 = vpop.f32.mrf.mxu0
    %v6586 = vadd.f32 %v5577, %v6585
    %v6587 = vpop.f32.mrf.mxu0
    %v6588 = vadd.f32 %v5579, %v6587
    %6589 = vmatmul.bf16.gmra.mxu0 %v3714
    %v6590 = vpop.f32.mrf.mxu0
    %v6591 = vadd.f32 %v5582, %v6590
    %v6592 = vpop.f32.mrf.mxu0
    %v6593 = vadd.f32 %v5584, %v6592
    %6594 = vmatmul.bf16.gmra.mxu0 %v3718
    %v6595 = vpop.f32.mrf.mxu0
    %v6596 = vadd.f32 %v5587, %v6595
    %v6597 = vpop.f32.mrf.mxu0
    %v6598 = vadd.f32 %v5589, %v6597
    %6599 = vmatmul.bf16.gmra.mxu0 %v3722
    %v6600 = vpop.f32.mrf.mxu0
    %v6601 = vadd.f32 %v5592, %v6600
    %v6602 = vpop.f32.mrf.mxu0
    %v6603 = vadd.f32 %v5594, %v6602
    %6604 = vmatmul.bf16.gmra.mxu0 %v3726
    %v6605 = vpop.f32.mrf.mxu0
    %v6606 = vadd.f32 %v5597, %v6605
    %v6607 = vpop.f32.mrf.mxu0
    %v6608 = vadd.f32 %v5599, %v6607
    %6609 = vmatmul.bf16.gmra.mxu0 %v3730
    %v6610 = vpop.f32.mrf.mxu0
    %v6611 = vadd.f32 %v5602, %v6610
    %v6612 = vpop.f32.mrf.mxu0
    %v6613 = vadd.f32 %v5604, %v6612
    %6614 = vmatmul.bf16.gmra.mxu0 %v3734
    %v6615 = vpop.f32.mrf.mxu0
    %v6616 = vadd.f32 %v5607, %v6615
    %v6617 = vpop.f32.mrf.mxu0
    %v6618 = vadd.f32 %v5609, %v6617
    %6619 = vmatmul.bf16.gmra.mxu0 %v3738
    %v6620 = vpop.f32.mrf.mxu0
    %v6621 = vadd.f32 %v5612, %v6620
    %v6622 = vpop.f32.mrf.mxu0
    %v6623 = vadd.f32 %v5614, %v6622
    %6624 = vmatmul.bf16.gmra.mxu0 %v3742
    %v6625 = vpop.f32.mrf.mxu0
    %v6626 = vadd.f32 %v5617, %v6625
    %v6627 = vpop.f32.mrf.mxu0
    %v6628 = vadd.f32 %v5619, %v6627
    %6629 = vmatmul.bf16.gmra.mxu0 %v3746
    %v6630 = vpop.f32.mrf.mxu0
    %v6631 = vadd.f32 %v5622, %v6630
    %v6632 = vpop.f32.mrf.mxu0
    %v6633 = vadd.f32 %v5624, %v6632
    %6634 = vmatmul.bf16.gmra.mxu0 %v3750
    %v6635 = vpop.f32.mrf.mxu0
    %v6636 = vadd.f32 %v5627, %v6635
    %v6637 = vpop.f32.mrf.mxu0
    %v6638 = vadd.f32 %v5629, %v6637
    %6639 = vmatmul.bf16.gmra.mxu0 %v3754
    %v6640 = vpop.f32.mrf.mxu0
    %v6641 = vadd.f32 %v5632, %v6640
    %v6642 = vpop.f32.mrf.mxu0
    %v6643 = vadd.f32 %v5634, %v6642
    %6644 = vmatmul.bf16.gmra.mxu0 %v3758
    %v6645 = vpop.f32.mrf.mxu0
    %v6646 = vadd.f32 %v5637, %v6645
    %v6647 = vpop.f32.mrf.mxu0
    %v6648 = vadd.f32 %v5639, %v6647
    %6649 = vmatmul.bf16.gmra.mxu0 %v3762
    %v6650 = vpop.f32.mrf.mxu0
    %v6651 = vadd.f32 %v5642, %v6650
    %v6652 = vpop.f32.mrf.mxu0
    %v6653 = vadd.f32 %v5644, %v6652
    %6654 = vmatmul.bf16.gmra.mxu0 %v3766
    %v6655 = vpop.f32.mrf.mxu0
    %v6656 = vadd.f32 %v5647, %v6655
    %v6657 = vpop.f32.mrf.mxu0
    %v6658 = vadd.f32 %v5649, %v6657
    %6659 = vmatmul.bf16.gmra.mxu0 %v3770
    %v6660 = vpop.f32.mrf.mxu0
    %v6661 = vadd.f32 %v5652, %v6660
    %v6662 = vpop.f32.mrf.mxu0
    %v6663 = vadd.f32 %v5654, %v6662
    %6664 = vmatmul.bf16.gmra.mxu0 %v3774
    %v6665 = vpop.f32.mrf.mxu0
    %v6666 = vadd.f32 %v5657, %v6665
    %v6667 = vpop.f32.mrf.mxu0
    %v6668 = vadd.f32 %v5659, %v6667
    %6669 = vmatmul.bf16.gmra.mxu0 %v3778
    %v6670 = vpop.f32.mrf.mxu0
    %v6671 = vadd.f32 %v5662, %v6670
    %v6672 = vpop.f32.mrf.mxu0
    %v6673 = vadd.f32 %v5664, %v6672
    %6674 = vmatmul.bf16.gmra.mxu0 %v3782
    %v6675 = vpop.f32.mrf.mxu0
    %v6676 = vadd.f32 %v5667, %v6675
    %v6677 = vpop.f32.mrf.mxu0
    %v6678 = vadd.f32 %v5669, %v6677
    %6679 = vmatmul.bf16.gmra.mxu0 %v3786
    %v6680 = vpop.f32.mrf.mxu0
    %v6681 = vadd.f32 %v5672, %v6680
    %v6682 = vpop.f32.mrf.mxu0
    %v6683 = vadd.f32 %v5674, %v6682
    %6684 = vmatmul.bf16.gmra.mxu0 %v3790
    %v6685 = vpop.f32.mrf.mxu0
    %v6686 = vadd.f32 %v5677, %v6685
    %v6687 = vpop.f32.mrf.mxu0
    %v6688 = vadd.f32 %v5679, %v6687
    %6689 = vmatmul.bf16.gmra.mxu0 %v3794
    %v6690 = vpop.f32.mrf.mxu0
    %v6691 = vadd.f32 %v5682, %v6690
    %v6692 = vpop.f32.mrf.mxu0
    %v6693 = vadd.f32 %v5684, %v6692
    %6694 = vmatmul.bf16.gmra.mxu0 %v3798
    %v6695 = vpop.f32.mrf.mxu0
    %v6696 = vadd.f32 %v5687, %v6695
    %v6697 = vpop.f32.mrf.mxu0
    %v6698 = vadd.f32 %v5689, %v6697
    %6699 = vmatmul.bf16.gmra.mxu0 %v3802
    %v6700 = vpop.f32.mrf.mxu0
    %v6701 = vadd.f32 %v5692, %v6700
    %v6702 = vpop.f32.mrf.mxu0
    %v6703 = vadd.f32 %v5694, %v6702
    %6704 = vmatmul.bf16.gmra.mxu0 %v3806
    %v6705 = vpop.f32.mrf.mxu0
    %v6706 = vadd.f32 %v5697, %v6705
    %v6707 = vpop.f32.mrf.mxu0
    %v6708 = vadd.f32 %v5699, %v6707
    %6709 = vmatmul.bf16.gmra.mxu0 %v3810
    %v6710 = vpop.f32.mrf.mxu0
    %v6711 = vadd.f32 %v5702, %v6710
    %v6712 = vpop.f32.mrf.mxu0
    %v6713 = vadd.f32 %v5704, %v6712
    %6714 = vmatmul.bf16.gmra.mxu0 %v3814
    %v6715 = vpop.f32.mrf.mxu0
    %v6716 = vadd.f32 %v5707, %v6715
    %v6717 = vpop.f32.mrf.mxu0
    %v6718 = vadd.f32 %v5709, %v6717
    %6719 = vmatmul.bf16.gmra.mxu0 %v3818
    %v6720 = vpop.f32.mrf.mxu0
    %v6721 = vadd.f32 %v5712, %v6720
    %v6722 = vpop.f32.mrf.mxu0
    %v6723 = vadd.f32 %v5714, %v6722
    %6724 = vmatmul.bf16.gmra.mxu0 %v3822
    %v6725 = vpop.f32.mrf.mxu0
    %v6726 = vadd.f32 %v5717, %v6725
    %v6727 = vpop.f32.mrf.mxu0
    %v6728 = vadd.f32 %v5719, %v6727
    %6729 = vmatmul.bf16.gmra.mxu0 %v3826
    %v6730 = vpop.f32.mrf.mxu0
    %v6731 = vadd.f32 %v5722, %v6730
    %v6732 = vpop.f32.mrf.mxu0
    %v6733 = vadd.f32 %v5724, %v6732
    %6734 = vmatmul.bf16.gmra.mxu0 %v3830
    %v6735 = vpop.f32.mrf.mxu0
    %v6736 = vadd.f32 %v5727, %v6735
    %v6737 = vpop.f32.mrf.mxu0
    %v6738 = vadd.f32 %v5729, %v6737
    %6739 = vmatmul.bf16.gmra.mxu0 %v3834
    %v6740 = vpop.f32.mrf.mxu0
    %v6741 = vadd.f32 %v5732, %v6740
    %v6742 = vpop.f32.mrf.mxu0
    %v6743 = vadd.f32 %v5734, %v6742
    %6744 = vmatmul.bf16.gmra.mxu0 %v3838
    %v6745 = vpop.f32.mrf.mxu0
    %v6746 = vadd.f32 %v5737, %v6745
    %v6747 = vpop.f32.mrf.mxu0
    %v6748 = vadd.f32 %v5739, %v6747
    %6749 = vmatmul.bf16.gmra.mxu0 %v3842
    %v6750 = vpop.f32.mrf.mxu0
    %v6751 = vadd.f32 %v5742, %v6750
    %v6752 = vpop.f32.mrf.mxu0
    %v6753 = vadd.f32 %v5744, %v6752
    %6754 = vmatmul.bf16.gmra.mxu0 %v3846
    %v6755 = vpop.f32.mrf.mxu0
    %v6756 = vadd.f32 %v5747, %v6755
    %v6757 = vpop.f32.mrf.mxu0
    %v6758 = vadd.f32 %v5749, %v6757
    %6759 = vmatmul.bf16.gmra.mxu0 %v3850
    %v6760 = vpop.f32.mrf.mxu0
    %v6761 = vadd.f32 %v5752, %v6760
    %v6762 = vpop.f32.mrf.mxu0
    %v6763 = vadd.f32 %v5754, %v6762
    %6764 = vmatmul.bf16.gmra.mxu0 %v3854
    %v6765 = vpop.f32.mrf.mxu0
    %v6766 = vadd.f32 %v5757, %v6765
    %v6767 = vpop.f32.mrf.mxu0
    %v6768 = vadd.f32 %v5759, %v6767
    %6769 = vmatmul.bf16.gmra.mxu0 %v3858
    %v6770 = vpop.f32.mrf.mxu0
    %v6771 = vadd.f32 %v5762, %v6770
    %v6772 = vpop.f32.mrf.mxu0
    %v6773 = vadd.f32 %v5764, %v6772
    %6774 = vmatmul.bf16.gmra.mxu0 %v3862
    %v6775 = vpop.f32.mrf.mxu0
    %v6776 = vadd.f32 %v5767, %v6775
    %v6777 = vpop.f32.mrf.mxu0
    %v6778 = vadd.f32 %v5769, %v6777
    %6779 = vmatmul.bf16.gmra.mxu0 %v3866
    %v6780 = vpop.f32.mrf.mxu0
    %v6781 = vadd.f32 %v5772, %v6780
    %v6782 = vpop.f32.mrf.mxu0
    %v6783 = vadd.f32 %v5774, %v6782
    %6784 = vmatmul.bf16.gmra.mxu0 %v3870
    %v6785 = vpop.f32.mrf.mxu0
    %v6786 = vadd.f32 %v5777, %v6785
    %v6787 = vpop.f32.mrf.mxu0
    %v6788 = vadd.f32 %v5779, %v6787
    %6789 = vmatmul.bf16.gmra.mxu0 %v3874
    %v6790 = vpop.f32.mrf.mxu0
    %v6791 = vadd.f32 %v5782, %v6790
    %v6792 = vpop.f32.mrf.mxu0
    %v6793 = vadd.f32 %v5784, %v6792
    %6794 = vmatmul.bf16.gmra.mxu0 %v3878
    %v6795 = vpop.f32.mrf.mxu0
    %v6796 = vadd.f32 %v5787, %v6795
    %v6797 = vpop.f32.mrf.mxu0
    %v6798 = vadd.f32 %v5789, %v6797
    %6799 = vmatmul.bf16.gmra.mxu0 %v3882
    %v6800 = vpop.f32.mrf.mxu0
    %v6801 = vadd.f32 %v5792, %v6800
    %v6802 = vpop.f32.mrf.mxu0
    %v6803 = vadd.f32 %v5794, %v6802
    %6804 = vmatmul.bf16.gmra.mxu0 %v3886
    %v6805 = vpop.f32.mrf.mxu0
    %v6806 = vadd.f32 %v5797, %v6805
    %v6807 = vpop.f32.mrf.mxu0
    %v6808 = vadd.f32 %v5799, %v6807
    %6809 = vmatmul.bf16.gmra.mxu0 %v3890
    %v6810 = vpop.f32.mrf.mxu0
    %v6811 = vadd.f32 %v5802, %v6810
    %v6812 = vpop.f32.mrf.mxu0
    %v6813 = vadd.f32 %v5804, %v6812
    %6814 = vmatmul.bf16.gmra.mxu0 %v3894
    %v6815 = vpop.f32.mrf.mxu0
    %v6816 = vadd.f32 %v5807, %v6815
    %v6817 = vpop.f32.mrf.mxu0
    %v6818 = vadd.f32 %v5809, %v6817
    %6819 = vmatmul.bf16.gmra.mxu0 %v3898
    %v6820 = vpop.f32.mrf.mxu0
    %v6821 = vadd.f32 %v5812, %v6820
    %v6822 = vpop.f32.mrf.mxu0
    %v6823 = vadd.f32 %v5814, %v6822
    %6824 = vmatmul.bf16.gmra.mxu0 %v3902
    %v6825 = vpop.f32.mrf.mxu0
    %v6826 = vadd.f32 %v5817, %v6825
    %v6827 = vpop.f32.mrf.mxu0
    %v6828 = vadd.f32 %v5819, %v6827
    %6829 = vmatmul.bf16.gmra.mxu0 %v3906
    %v6830 = vpop.f32.mrf.mxu0
    %v6831 = vadd.f32 %v5822, %v6830
    %v6832 = vpop.f32.mrf.mxu0
    %v6833 = vadd.f32 %v5824, %v6832
    %6834 = vmatmul.bf16.gmra.mxu0 %v3910
    %v6835 = vpop.f32.mrf.mxu0
    %v6836 = vadd.f32 %v5827, %v6835
    %v6837 = vpop.f32.mrf.mxu0
    %v6838 = vadd.f32 %v5829, %v6837
    %6839 = vmatmul.bf16.gmra.mxu0 %v3914
    %v6840 = vpop.f32.mrf.mxu0
    %v6841 = vadd.f32 %v5832, %v6840
    %v6842 = vpop.f32.mrf.mxu0
    %v6843 = vadd.f32 %v5834, %v6842
    %6844 = vmatmul.bf16.gmra.mxu0 %v3918
    %v6845 = vpop.f32.mrf.mxu0
    %v6846 = vadd.f32 %v5837, %v6845
    %v6847 = vpop.f32.mrf.mxu0
    %v6848 = vadd.f32 %v5839, %v6847
    %6849 = vmatmul.bf16.gmra.mxu0 %v3922
    %v6850 = vpop.f32.mrf.mxu0
    %v6851 = vadd.f32 %v5842, %v6850
    %v6852 = vpop.f32.mrf.mxu0
    %v6853 = vadd.f32 %v5844, %v6852
    %6854 = vmatmul.bf16.gmra.mxu0 %v3926
    %v6855 = vpop.f32.mrf.mxu0
    %v6856 = vadd.f32 %v5847, %v6855
    %v6857 = vpop.f32.mrf.mxu0
    %v6858 = vadd.f32 %v5849, %v6857
    %6859 = vmatmul.bf16.gmra.mxu0 %v3930
    %v6860 = vpop.f32.mrf.mxu0
    %v6861 = vadd.f32 %v5852, %v6860
    %v6862 = vpop.f32.mrf.mxu0
    %v6863 = vadd.f32 %v5854, %v6862
    %6864 = vmatmul.bf16.gmra.mxu0 %v3934
    %v6865 = vpop.f32.mrf.mxu0
    %v6866 = vadd.f32 %v5857, %v6865
    %v6867 = vpop.f32.mrf.mxu0
    %v6868 = vadd.f32 %v5859, %v6867
    %6869 = vmatmul.bf16.gmra.mxu0 %v3938
    %v6870 = vpop.f32.mrf.mxu0
    %v6871 = vadd.f32 %v5862, %v6870
    %v6872 = vpop.f32.mrf.mxu0
    %v6873 = vadd.f32 %v5864, %v6872
    %6874 = vmatmul.bf16.gmra.mxu0 %v3942
    %v6875 = vpop.f32.mrf.mxu0
    %v6876 = vadd.f32 %v5867, %v6875
    %v6877 = vpop.f32.mrf.mxu0
    %v6878 = vadd.f32 %v5869, %v6877
    %6879 = vmatmul.bf16.gmra.mxu0 %v3946
    %v6880 = vpop.f32.mrf.mxu0
    %v6881 = vadd.f32 %v5872, %v6880
    %v6882 = vpop.f32.mrf.mxu0
    %v6883 = vadd.f32 %v5874, %v6882
    %6884 = vmatmul.bf16.gmra.mxu0 %v3950
    %v6885 = vpop.f32.mrf.mxu0
    %v6886 = vadd.f32 %v5877, %v6885
    %v6887 = vpop.f32.mrf.mxu0
    %v6888 = vadd.f32 %v5879, %v6887
    %6889 = vmatmul.bf16.gmra.mxu0 %v3954
    %v6890 = vpop.f32.mrf.mxu0
    %v6891 = vadd.f32 %v5882, %v6890
    %v6892 = vpop.f32.mrf.mxu0
    %v6893 = vadd.f32 %v5884, %v6892
    %6894 = vmatmul.bf16.gmra.mxu0 %v3958
    %v6895 = vpop.f32.mrf.mxu0
    %v6896 = vadd.f32 %v5887, %v6895
    %v6897 = vpop.f32.mrf.mxu0
    %v6898 = vadd.f32 %v5889, %v6897
    %6899 = vmatmul.bf16.gmra.mxu0 %v3962
    %v6900 = vpop.f32.mrf.mxu0
    %v6901 = vadd.f32 %v5892, %v6900
    %v6902 = vpop.f32.mrf.mxu0
    %v6903 = vadd.f32 %v5894, %v6902
    %6904 = vmatmul.bf16.gmra.mxu0 %v3966
    %v6905 = vpop.f32.mrf.mxu0
    %v6906 = vadd.f32 %v5897, %v6905
    %v6907 = vpop.f32.mrf.mxu0
    %v6908 = vadd.f32 %v5899, %v6907
    %6909 = vmatmul.bf16.gmra.mxu0 %v3970
    %v6910 = vpop.f32.mrf.mxu0
    %v6911 = vadd.f32 %v5902, %v6910
    %v6912 = vpop.f32.mrf.mxu0
    %v6913 = vadd.f32 %v5904, %v6912
    %6914 = vmatmul.bf16.gmra.mxu0 %v3974
    %v6915 = vpop.f32.mrf.mxu0
    %v6916 = vadd.f32 %v5907, %v6915
    %v6917 = vpop.f32.mrf.mxu0
    %v6918 = vadd.f32 %v5909, %v6917
    %6919 = vmatmul.bf16.gmra.mxu0 %v3978
    %v6920 = vpop.f32.mrf.mxu0
    %v6921 = vadd.f32 %v5912, %v6920
    %v6922 = vpop.f32.mrf.mxu0
    %v6923 = vadd.f32 %v5914, %v6922
    %6924 = vmatmul.bf16.gmra.mxu0 %v3982
    %v6925 = vpop.f32.mrf.mxu0
    %v6926 = vadd.f32 %v5917, %v6925
    %v6927 = vpop.f32.mrf.mxu0
    %v6928 = vadd.f32 %v5919, %v6927
    %6929 = vmatmul.bf16.gmra.mxu0 %v3986
    %v6930 = vpop.f32.mrf.mxu0
    %v6931 = vadd.f32 %v5922, %v6930
    %v6932 = vpop.f32.mrf.mxu0
    %v6933 = vadd.f32 %v5924, %v6932
    %6934 = vmatmul.bf16.gmra.mxu0 %v3990
    %v6935 = vpop.f32.mrf.mxu0
    %v6936 = vadd.f32 %v5927, %v6935
    %v6937 = vpop.f32.mrf.mxu0
    %v6938 = vadd.f32 %v5929, %v6937
    %6939 = vmatmul.bf16.gmra.mxu0 %v3994
    %v6940 = vpop.f32.mrf.mxu0
    %v6941 = vadd.f32 %v5932, %v6940
    %v6942 = vpop.f32.mrf.mxu0
    %v6943 = vadd.f32 %v5934, %v6942
    %6944 = vmatmul.bf16.gmra.mxu0 %v3998
    %v6945 = vpop.f32.mrf.mxu0
    %v6946 = vadd.f32 %v5937, %v6945
    %v6947 = vpop.f32.mrf.mxu0
    %v6948 = vadd.f32 %v5939, %v6947
    %6949 = vmatmul.bf16.gmra.mxu0 %v4002
    %v6950 = vpop.f32.mrf.mxu0
    %v6951 = vadd.f32 %v5942, %v6950
    %v6952 = vpop.f32.mrf.mxu0
    %v6953 = vadd.f32 %v5944, %v6952
    %6954 = vmatmul.bf16.gmra.mxu0 %v4006
    %v6955 = vpop.f32.mrf.mxu0
    %v6956 = vadd.f32 %v5947, %v6955
    %v6957 = vpop.f32.mrf.mxu0
    %v6958 = vadd.f32 %v5949, %v6957
    %6959 = vmatmul.bf16.gmra.mxu0 %v4010
    %v6960 = vpop.f32.mrf.mxu0
    %v6961 = vadd.f32 %v5952, %v6960
    %v6962 = vpop.f32.mrf.mxu0
    %v6963 = vadd.f32 %v5954, %v6962
    %6964 = vmatmul.bf16.gmra.mxu0 %v4014
    %v6965 = vpop.f32.mrf.mxu0
    %v6966 = vadd.f32 %v5957, %v6965
    %v6967 = vpop.f32.mrf.mxu0
    %v6968 = vadd.f32 %v5959, %v6967
    %6969 = vmatmul.bf16.gmra.mxu0 %v4018
    %v6970 = vpop.f32.mrf.mxu0
    %v6971 = vadd.f32 %v5962, %v6970
    %v6972 = vpop.f32.mrf.mxu0
    %v6973 = vadd.f32 %v5964, %v6972
    %6974 = vmatmul.bf16.gmra.mxu0 %v4022
    %v6975 = vpop.f32.mrf.mxu0
    %v6976 = vadd.f32 %v5967, %v6975
    %v6977 = vpop.f32.mrf.mxu0
    %v6978 = vadd.f32 %v5969, %v6977
    %6979 = vmatmul.bf16.gmra.mxu0 %v4026
    %v6980 = vpop.f32.mrf.mxu0
    %v6981 = vadd.f32 %v5972, %v6980
    %v6982 = vpop.f32.mrf.mxu0
    %v6983 = vadd.f32 %v5974, %v6982
    %6984 = vmatmul.bf16.gmra.mxu0 %v4030
    %v6985 = vpop.f32.mrf.mxu0
    %v6986 = vadd.f32 %v5977, %v6985
    %v6987 = vpop.f32.mrf.mxu0
    %v6988 = vadd.f32 %v5979, %v6987
    %6989 = vmatmul.bf16.gmra.mxu0 %v4034
    %v6990 = vpop.f32.mrf.mxu0
    %v6991 = vadd.f32 %v5982, %v6990
    %v6992 = vpop.f32.mrf.mxu0
    %v6993 = vadd.f32 %v5984, %v6992
    %6994 = vmatmul.bf16.gmra.mxu0 %v4038
    %v6995 = vpop.f32.mrf.mxu0
    %v6996 = vadd.f32 %v5987, %v6995
    %v6997 = vpop.f32.mrf.mxu0
    %v6998 = vadd.f32 %v5989, %v6997
    %6999 = vmatmul.bf16.gmra.mxu0 %v4042
    %v7000 = vpop.f32.mrf.mxu0
    %v7001 = vadd.f32 %v5992, %v7000
    %v7002 = vpop.f32.mrf.mxu0
    %v7003 = vadd.f32 %v5994, %v7002
    %7004 = vmatmul.bf16.gmra.mxu0 %v4046
    %v7005 = vpop.f32.mrf.mxu0
    %v7006 = vadd.f32 %v5997, %v7005
    %v7007 = vpop.f32.mrf.mxu0
    %v7008 = vadd.f32 %v5999, %v7007
    %7009 = vmatmul.bf16.gmra.mxu0 %v4050
    %v7010 = vpop.f32.mrf.mxu0
    %v7011 = vadd.f32 %v6002, %v7010
    %v7012 = vpop.f32.mrf.mxu0
    %v7013 = vadd.f32 %v6004, %v7012
    %7014 = vmatmul.bf16.gmra.mxu0 %v4054
    %v7015 = vpop.f32.mrf.mxu0
    %v7016 = vadd.f32 %v6007, %v7015
    %v7017 = vpop.f32.mrf.mxu0
    %v7018 = vadd.f32 %v6009, %v7017
    %7019 = vmatmul.bf16.gmra.mxu0 %v4058
    %v7020 = vpop.f32.mrf.mxu0
    %v7021 = vadd.f32 %v6012, %v7020
    %v7022 = vpop.f32.mrf.mxu0
    %v7023 = vadd.f32 %v6014, %v7022
    %7024 = vmatmul.bf16.gmra.mxu0 %v4062
    %v7025 = vpop.f32.mrf.mxu0
    %v7026 = vadd.f32 %v6017, %v7025
    %v7027 = vpop.f32.mrf.mxu0
    %v7028 = vadd.f32 %v6019, %v7027
    %7029 = vmatmul.bf16.gmra.mxu0 %v4066
    %v7030 = vpop.f32.mrf.mxu0
    %v7031 = vadd.f32 %v6022, %v7030
    %v7032 = vpop.f32.mrf.mxu0
    %v7033 = vadd.f32 %v6024, %v7032
    %7034 = vmatmul.bf16.gmra.mxu0 %v4070
    %v7035 = vpop.f32.mrf.mxu0
    %v7036 = vadd.f32 %v6027, %v7035
    %v7037 = vpop.f32.mrf.mxu0
    %v7038 = vadd.f32 %v6029, %v7037
    %7039 = vmatmul.bf16.gmra.mxu0 %v4074
    %v7040 = vpop.f32.mrf.mxu0
    %v7041 = vadd.f32 %v6032, %v7040
    %v7042 = vpop.f32.mrf.mxu0
    %v7043 = vadd.f32 %v6034, %v7042
    %7044 = vmatmul.bf16.gmra.mxu0 %v4078
    %v7045 = vpop.f32.mrf.mxu0
    %v7046 = vadd.f32 %v6037, %v7045
    %v7047 = vpop.f32.mrf.mxu0
    %v7048 = vadd.f32 %v6039, %v7047
    %7049 = vmatmul.bf16.gmra.mxu0 %v4082
    %v7050 = vpop.f32.mrf.mxu0
    %v7051 = vadd.f32 %v6042, %v7050
    %v7052 = vpop.f32.mrf.mxu0
    %v7053 = vadd.f32 %v6044, %v7052
    %7054 = vmatmul.bf16.gmra.mxu0 %v4086
    %v7055 = vpop.f32.mrf.mxu0
    %v7056 = vadd.f32 %v6047, %v7055
    %v7057 = vpop.f32.mrf.mxu0
    %v7058 = vadd.f32 %v6049, %v7057
    %7059 = vmatmul.bf16.gmra.mxu0 %v4090
    %v7060 = vpop.f32.mrf.mxu0
    %v7061 = vadd.f32 %v6052, %v7060
    %v7062 = vpop.f32.mrf.mxu0
    %v7063 = vadd.f32 %v6054, %v7062
    %7064 = vmatmul.bf16.gmra.mxu0 %v4094
    %v7065 = vpop.f32.mrf.mxu0
    %v7066 = vadd.f32 %v6057, %v7065
    %v7067 = vpop.f32.mrf.mxu0
    %v7068 = vadd.f32 %v6059, %v7067
    %7069 = vmatmul.bf16.gmra.mxu0 %v4098
    %v7070 = vpop.f32.mrf.mxu0
    %v7071 = vadd.f32 %v6062, %v7070
    %v7072 = vpop.f32.mrf.mxu0
    %v7073 = vadd.f32 %v6064, %v7072
    %7074 = vmatmul.bf16.gmra.mxu0 %v4102
    %v7075 = vpop.f32.mrf.mxu0
    %v7076 = vadd.f32 %v6067, %v7075
    %v7077 = vpop.f32.mrf.mxu0
    %v7078 = vadd.f32 %v6069, %v7077
    %7079 = vmatmul.bf16.gmra.mxu0 %v4106
    %v7080 = vpop.f32.mrf.mxu0
    %v7081 = vadd.f32 %v6072, %v7080
    %v7082 = vpop.f32.mrf.mxu0
    %v7083 = vadd.f32 %v6074, %v7082
    %7084 = vmatmul.bf16.gmra.mxu0 %v4110
    %v7085 = vpop.f32.mrf.mxu0
    %v7086 = vadd.f32 %v6077, %v7085
    %v7087 = vpop.f32.mrf.mxu0
    %v7088 = vadd.f32 %v6079, %v7087
    %7089 = vmatmul.bf16.gmra.mxu0 %v4114
    %v7090 = vpop.f32.mrf.mxu0
    %v7091 = vadd.f32 %v6082, %v7090
    %v7092 = vpop.f32.mrf.mxu0
    %v7093 = vadd.f32 %v6084, %v7092
    %7094 = vmatmul.bf16.gmra.mxu0 %v4118
    %v7095 = vpop.f32.mrf.mxu0
    %v7096 = vadd.f32 %v6087, %v7095
    %v7097 = vpop.f32.mrf.mxu0
    %v7098 = vadd.f32 %v6089, %v7097
    %7099 = vmatmul.bf16.gmra.mxu0 %v4122
    %v7100 = vpop.f32.mrf.mxu0
    %v7101 = vadd.f32 %v6092, %v7100
    %v7102 = vpop.f32.mrf.mxu0
    %v7103 = vadd.f32 %v6094, %v7102
    %7104 = vmatmul.bf16.gmra.mxu0 %v4126
    %v7105 = vpop.f32.mrf.mxu0
    %v7106 = vadd.f32 %v6097, %v7105
    %v7107 = vpop.f32.mrf.mxu0
    %v7108 = vadd.f32 %v6099, %v7107
    %7109 = vmatmul.bf16.gmra.mxu0 %v4130
    %v7110 = vpop.f32.mrf.mxu0
    %v7111 = vadd.f32 %v6102, %v7110
    %v7112 = vpop.f32.mrf.mxu0
    %v7113 = vadd.f32 %v6104, %v7112
    %7114 = vmatmul.bf16.gmra.mxu0 %v4134
    %v7115 = vpop.f32.mrf.mxu0
    %v7116 = vadd.f32 %v6107, %v7115
    %v7117 = vpop.f32.mrf.mxu0
    %v7118 = vadd.f32 %v6109, %v7117
    %7119 = vmatmul.bf16.gmra.mxu0 %v4138
    %v7120 = vpop.f32.mrf.mxu0
    %v7121 = vadd.f32 %v6112, %v7120
    %v7122 = vpop.f32.mrf.mxu0
    %v7123 = vadd.f32 %v6114, %v7122
    %7124 = vmatmul.bf16.gmra.mxu0 %v4142
    %v7125 = vpop.f32.mrf.mxu0
    %v7126 = vadd.f32 %v6117, %v7125
    %v7127 = vpop.f32.mrf.mxu0
    %v7128 = vadd.f32 %v6119, %v7127
    %7129 = vmatmul.bf16.gmra.mxu0 %v4146
    %v7130 = vpop.f32.mrf.mxu0
    %v7131 = vadd.f32 %v6122, %v7130
    %v7132 = vpop.f32.mrf.mxu0
    %v7133 = vadd.f32 %v6124, %v7132
    %7134 = vmatmul.bf16.gmra.mxu0 %v4150
    %v7135 = vpop.f32.mrf.mxu0
    %v7136 = vadd.f32 %v6127, %v7135
    %v7137 = vpop.f32.mrf.mxu0
    %v7138 = vadd.f32 %v6129, %v7137
    %7139 = vmatmul.bf16.gmra.mxu0 %v4154
    %v7140 = vpop.f32.mrf.mxu0
    %v7141 = vadd.f32 %v6132, %v7140
    %v7142 = vpop.f32.mrf.mxu0
    %v7143 = vadd.f32 %v6134, %v7142
    %7144 = vmatmul.bf16.gmra.mxu0 %v4158
    %v7145 = vpop.f32.mrf.mxu0
    %v7146 = vadd.f32 %v6137, %v7145
    %v7147 = vpop.f32.mrf.mxu0
    %v7148 = vadd.f32 %v6139, %v7147
    %7149 = vmatmul.bf16.gmra.mxu0 %v4162
    %v7150 = vpop.f32.mrf.mxu0
    %v7151 = vadd.f32 %v6142, %v7150
    %v7152 = vpop.f32.mrf.mxu0
    %v7153 = vadd.f32 %v6144, %v7152
    %7154 = vmatmul.bf16.gmra.mxu0 %v4166
    %v7155 = vpop.f32.mrf.mxu0
    %v7156 = vadd.f32 %v6147, %v7155
    %v7157 = vpop.f32.mrf.mxu0
    %v7158 = vadd.f32 %v6149, %v7157
    %7159 = vmatmul.bf16.gmra.mxu0 %v4170
    %v7160 = vpop.f32.mrf.mxu0
    %v7161 = vadd.f32 %v6152, %v7160
    %v7162 = vpop.f32.mrf.mxu0
    %v7163 = vadd.f32 %v6154, %v7162
    %7164 = vmatmul.bf16.gmra.mxu0 %v4174
    %v7165 = vpop.f32.mrf.mxu0
    %v7166 = vadd.f32 %v6157, %v7165
    %v7167 = vpop.f32.mrf.mxu0
    %v7168 = vadd.f32 %v6159, %v7167
    %7169 = vmatmul.bf16.gmra.mxu0 %v4178
    %v7170 = vpop.f32.mrf.mxu0
    %v7171 = vadd.f32 %v6162, %v7170
    %v7172 = vpop.f32.mrf.mxu0
    %v7173 = vadd.f32 %v6164, %v7172
    %7174 = vmatmul.bf16.gmra.mxu0 %v4182
    %v7175 = vpop.f32.mrf.mxu0
    %v7176 = vadd.f32 %v6167, %v7175
    %v7177 = vpop.f32.mrf.mxu0
    %v7178 = vadd.f32 %v6169, %v7177
    %7179 = vmatmul.bf16.gmra.mxu0 %v4186
    %v7180 = vpop.f32.mrf.mxu0
    %v7181 = vadd.f32 %v6172, %v7180
    %v7182 = vpop.f32.mrf.mxu0
    %v7183 = vadd.f32 %v6174, %v7182
    %7184 = vmatmul.bf16.gmra.mxu0 %v4190
    %v7185 = vpop.f32.mrf.mxu0
    %v7186 = vadd.f32 %v6177, %v7185
    %v7187 = vpop.f32.mrf.mxu0
    %v7188 = vadd.f32 %v6179, %v7187
    %7189 = vmatmul.bf16.gmra.mxu0 %v4194
    %v7190 = vpop.f32.mrf.mxu0
    %v7191 = vadd.f32 %v6182, %v7190
    %v7192 = vpop.f32.mrf.mxu0
    %v7193 = vadd.f32 %v6184, %v7192
    %7194 = vmatmul.bf16.gmra.mxu0 %v4198
    %v7195 = vpop.f32.mrf.mxu0
    %v7196 = vadd.f32 %v6187, %v7195
    %v7197 = vpop.f32.mrf.mxu0
    %v7198 = vadd.f32 %v6189, %v7197
    %7199 = vmatmul.bf16.gmra.mxu0 %v4202
    %v7200 = vpop.f32.mrf.mxu0
    %v7201 = vadd.f32 %v6192, %v7200
    %v7202 = vpop.f32.mrf.mxu0
    %v7203 = vadd.f32 %v6194, %v7202
    %7204 = vmatmul.bf16.gmra.mxu0 %v4206
    %v7205 = vpop.f32.mrf.mxu0
    %v7206 = vadd.f32 %v6197, %v7205
    %v7207 = vpop.f32.mrf.mxu0
    %v7208 = vadd.f32 %v6199, %v7207
    %7209 = vmatmul.bf16.gmra.mxu0 %v4210
    %v7210 = vpop.f32.mrf.mxu0
    %v7211 = vadd.f32 %v6202, %v7210
    %v7212 = vpop.f32.mrf.mxu0
    %v7213 = vadd.f32 %v6204, %v7212
    %7214 = vmatmul.bf16.gmra.mxu0 %v4214
    %v7215 = vpop.f32.mrf.mxu0
    %v7216 = vadd.f32 %v6207, %v7215
    %v7217 = vpop.f32.mrf.mxu0
    %v7218 = vadd.f32 %v6209, %v7217
    %7219 = vmatmul.bf16.gmra.mxu0 %v4218
    %v7220 = vpop.f32.mrf.mxu0
    %v7221 = vadd.f32 %v6212, %v7220
    %v7222 = vpop.f32.mrf.mxu0
    %v7223 = vadd.f32 %v6214, %v7222
    %7224 = vmatmul.bf16.gmra.mxu0 %v4222
    %v7225 = vpop.f32.mrf.mxu0
    %v7226 = vadd.f32 %v6217, %v7225
    %v7227 = vpop.f32.mrf.mxu0
    %v7228 = vadd.f32 %v6219, %v7227
    %7229 = vmatmul.bf16.gmra.mxu0 %v4226
    %v7230 = vpop.f32.mrf.mxu0
    %v7231 = vadd.f32 %v6222, %v7230
    %v7232 = vpop.f32.mrf.mxu0
    %v7233 = vadd.f32 %v6224, %v7232
    %7234 = vmatmul.bf16.gmra.mxu0 %v4230
    %v7235 = vpop.f32.mrf.mxu0
    %v7236 = vadd.f32 %v6227, %v7235
    %v7237 = vpop.f32.mrf.mxu0
    %v7238 = vadd.f32 %v6229, %v7237
    %7239 = vmatmul.bf16.gmra.mxu0 %v4234
    %v7240 = vpop.f32.mrf.mxu0
    %v7241 = vadd.f32 %v6232, %v7240
    %v7242 = vpop.f32.mrf.mxu0
    %v7243 = vadd.f32 %v6234, %v7242
    %7244 = vmatmul.bf16.gmra.mxu0 %v4238
    %v7245 = vpop.f32.mrf.mxu0
    %v7246 = vadd.f32 %v6237, %v7245
    %v7247 = vpop.f32.mrf.mxu0
    %v7248 = vadd.f32 %v6239, %v7247
    %7249 = vmatmul.bf16.gmra.mxu0 %v4242
    %v7250 = vpop.f32.mrf.mxu0
    %v7251 = vadd.f32 %v6242, %v7250
    %v7252 = vpop.f32.mrf.mxu0
    %v7253 = vadd.f32 %v6244, %v7252
    %7254 = vdwg.mxu0
    %7255 = vmatpush.bf16.msra.mxu0 %v5196
    %7256 = vmatpush.bf16.msra.mxu0 %v5195
    %7257 = vmatpush.bf16.msra.mxu0 %v5194
    %7258 = vmatpush.bf16.msra.mxu0 %v5193
    %7259 = vmatpush.bf16.msra.mxu0 %v5192
    %7260 = vmatpush.bf16.msra.mxu0 %v5191
    %7261 = vmatpush.bf16.msra.mxu0 %v5190
    %7262 = vmatpush.bf16.msra.mxu0 %v5189
    %7263 = vmatmul.bf16.gmra.mxu0 %v3447
    %v7264 = vpop.f32.mrf.mxu0
    %v7265 = vadd.f32 %v6256, %v7264
    %v7266 = vpop.f32.mrf.mxu0
    %v7267 = vadd.f32 %v6258, %v7266
    %7268 = vmatmul.bf16.gmra.mxu0 %v3451
    %v7269 = vpop.f32.mrf.mxu0
    %v7270 = vadd.f32 %v6261, %v7269
    %v7271 = vpop.f32.mrf.mxu0
    %v7272 = vadd.f32 %v6263, %v7271
    %7273 = vmatmul.bf16.gmra.mxu0 %v3455
    %v7274 = vpop.f32.mrf.mxu0
    %v7275 = vadd.f32 %v6266, %v7274
    %v7276 = vpop.f32.mrf.mxu0
    %v7277 = vadd.f32 %v6268, %v7276
    %7278 = vmatmul.bf16.gmra.mxu0 %v3459
    %v7279 = vpop.f32.mrf.mxu0
    %v7280 = vadd.f32 %v6271, %v7279
    %v7281 = vpop.f32.mrf.mxu0
    %v7282 = vadd.f32 %v6273, %v7281
    %7283 = vmatmul.bf16.gmra.mxu0 %v3463
    %v7284 = vpop.f32.mrf.mxu0
    %v7285 = vadd.f32 %v6276, %v7284
    %v7286 = vpop.f32.mrf.mxu0
    %v7287 = vadd.f32 %v6278, %v7286
    %7288 = vmatmul.bf16.gmra.mxu0 %v3467
    %v7289 = vpop.f32.mrf.mxu0
    %v7290 = vadd.f32 %v6281, %v7289
    %v7291 = vpop.f32.mrf.mxu0
    %v7292 = vadd.f32 %v6283, %v7291
    %7293 = vmatmul.bf16.gmra.mxu0 %v3471
    %v7294 = vpop.f32.mrf.mxu0
    %v7295 = vadd.f32 %v6286, %v7294
    %v7296 = vpop.f32.mrf.mxu0
    %v7297 = vadd.f32 %v6288, %v7296
    %7298 = vmatmul.bf16.gmra.mxu0 %v3475
    %v7299 = vpop.f32.mrf.mxu0
    %v7300 = vadd.f32 %v6291, %v7299
    %v7301 = vpop.f32.mrf.mxu0
    %v7302 = vadd.f32 %v6293, %v7301
    %7303 = vmatmul.bf16.gmra.mxu0 %v3479
    %v7304 = vpop.f32.mrf.mxu0
    %v7305 = vadd.f32 %v6296, %v7304
    %v7306 = vpop.f32.mrf.mxu0
    %v7307 = vadd.f32 %v6298, %v7306
    %7308 = vmatmul.bf16.gmra.mxu0 %v3483
    %v7309 = vpop.f32.mrf.mxu0
    %v7310 = vadd.f32 %v6301, %v7309
    %v7311 = vpop.f32.mrf.mxu0
    %v7312 = vadd.f32 %v6303, %v7311
    %7313 = vmatmul.bf16.gmra.mxu0 %v3487
    %v7314 = vpop.f32.mrf.mxu0
    %v7315 = vadd.f32 %v6306, %v7314
    %v7316 = vpop.f32.mrf.mxu0
    %v7317 = vadd.f32 %v6308, %v7316
    %7318 = vmatmul.bf16.gmra.mxu0 %v3491
    %v7319 = vpop.f32.mrf.mxu0
    %v7320 = vadd.f32 %v6311, %v7319
    %v7321 = vpop.f32.mrf.mxu0
    %v7322 = vadd.f32 %v6313, %v7321
    %7323 = vmatmul.bf16.gmra.mxu0 %v3495
    %v7324 = vpop.f32.mrf.mxu0
    %v7325 = vadd.f32 %v6316, %v7324
    %v7326 = vpop.f32.mrf.mxu0
    %v7327 = vadd.f32 %v6318, %v7326
    %7328 = vmatmul.bf16.gmra.mxu0 %v3499
    %v7329 = vpop.f32.mrf.mxu0
    %v7330 = vadd.f32 %v6321, %v7329
    %v7331 = vpop.f32.mrf.mxu0
    %v7332 = vadd.f32 %v6323, %v7331
    %7333 = vmatmul.bf16.gmra.mxu0 %v3503
    %v7334 = vpop.f32.mrf.mxu0
    %v7335 = vadd.f32 %v6326, %v7334
    %v7336 = vpop.f32.mrf.mxu0
    %v7337 = vadd.f32 %v6328, %v7336
    %7338 = vmatmul.bf16.gmra.mxu0 %v3507
    %v7339 = vpop.f32.mrf.mxu0
    %v7340 = vadd.f32 %v6331, %v7339
    %v7341 = vpop.f32.mrf.mxu0
    %v7342 = vadd.f32 %v6333, %v7341
    %7343 = vmatmul.bf16.gmra.mxu0 %v3511
    %v7344 = vpop.f32.mrf.mxu0
    %v7345 = vadd.f32 %v6336, %v7344
    %v7346 = vpop.f32.mrf.mxu0
    %v7347 = vadd.f32 %v6338, %v7346
    %7348 = vmatmul.bf16.gmra.mxu0 %v3515
    %v7349 = vpop.f32.mrf.mxu0
    %v7350 = vadd.f32 %v6341, %v7349
    %v7351 = vpop.f32.mrf.mxu0
    %v7352 = vadd.f32 %v6343, %v7351
    %7353 = vmatmul.bf16.gmra.mxu0 %v3519
    %v7354 = vpop.f32.mrf.mxu0
    %v7355 = vadd.f32 %v6346, %v7354
    %v7356 = vpop.f32.mrf.mxu0
    %v7357 = vadd.f32 %v6348, %v7356
    %7358 = vmatmul.bf16.gmra.mxu0 %v3523
    %v7359 = vpop.f32.mrf.mxu0
    %v7360 = vadd.f32 %v6351, %v7359
    %v7361 = vpop.f32.mrf.mxu0
    %v7362 = vadd.f32 %v6353, %v7361
    %7363 = vmatmul.bf16.gmra.mxu0 %v3527
    %v7364 = vpop.f32.mrf.mxu0
    %v7365 = vadd.f32 %v6356, %v7364
    %v7366 = vpop.f32.mrf.mxu0
    %v7367 = vadd.f32 %v6358, %v7366
    %7368 = vmatmul.bf16.gmra.mxu0 %v3531
    %v7369 = vpop.f32.mrf.mxu0
    %v7370 = vadd.f32 %v6361, %v7369
    %v7371 = vpop.f32.mrf.mxu0
    %v7372 = vadd.f32 %v6363, %v7371
    %7373 = vmatmul.bf16.gmra.mxu0 %v3535
    %v7374 = vpop.f32.mrf.mxu0
    %v7375 = vadd.f32 %v6366, %v7374
    %v7376 = vpop.f32.mrf.mxu0
    %v7377 = vadd.f32 %v6368, %v7376
    %7378 = vmatmul.bf16.gmra.mxu0 %v3539
    %v7379 = vpop.f32.mrf.mxu0
    %v7380 = vadd.f32 %v6371, %v7379
    %v7381 = vpop.f32.mrf.mxu0
    %v7382 = vadd.f32 %v6373, %v7381
    %7383 = vmatmul.bf16.gmra.mxu0 %v3543
    %v7384 = vpop.f32.mrf.mxu0
    %v7385 = vadd.f32 %v6376, %v7384
    %v7386 = vpop.f32.mrf.mxu0
    %v7387 = vadd.f32 %v6378, %v7386
    %7388 = vmatmul.bf16.gmra.mxu0 %v3547
    %v7389 = vpop.f32.mrf.mxu0
    %v7390 = vadd.f32 %v6381, %v7389
    %v7391 = vpop.f32.mrf.mxu0
    %v7392 = vadd.f32 %v6383, %v7391
    %7393 = vmatmul.bf16.gmra.mxu0 %v3551
    %v7394 = vpop.f32.mrf.mxu0
    %v7395 = vadd.f32 %v6386, %v7394
    %v7396 = vpop.f32.mrf.mxu0
    %v7397 = vadd.f32 %v6388, %v7396
    %7398 = vmatmul.bf16.gmra.mxu0 %v3555
    %v7399 = vpop.f32.mrf.mxu0
    %v7400 = vadd.f32 %v6391, %v7399
    %v7401 = vpop.f32.mrf.mxu0
    %v7402 = vadd.f32 %v6393, %v7401
    %7403 = vmatmul.bf16.gmra.mxu0 %v3559
    %v7404 = vpop.f32.mrf.mxu0
    %v7405 = vadd.f32 %v6396, %v7404
    %v7406 = vpop.f32.mrf.mxu0
    %v7407 = vadd.f32 %v6398, %v7406
    %7408 = vmatmul.bf16.gmra.mxu0 %v3563
    %v7409 = vpop.f32.mrf.mxu0
    %v7410 = vadd.f32 %v6401, %v7409
    %v7411 = vpop.f32.mrf.mxu0
    %v7412 = vadd.f32 %v6403, %v7411
    %7413 = vmatmul.bf16.gmra.mxu0 %v3567
    %v7414 = vpop.f32.mrf.mxu0
    %v7415 = vadd.f32 %v6406, %v7414
    %v7416 = vpop.f32.mrf.mxu0
    %v7417 = vadd.f32 %v6408, %v7416
    %7418 = vmatmul.bf16.gmra.mxu0 %v3571
    %v7419 = vpop.f32.mrf.mxu0
    %v7420 = vadd.f32 %v6411, %v7419
    %v7421 = vpop.f32.mrf.mxu0
    %v7422 = vadd.f32 %v6413, %v7421
    %7423 = vmatmul.bf16.gmra.mxu0 %v3575
    %v7424 = vpop.f32.mrf.mxu0
    %v7425 = vadd.f32 %v6416, %v7424
    %v7426 = vpop.f32.mrf.mxu0
    %v7427 = vadd.f32 %v6418, %v7426
    %7428 = vmatmul.bf16.gmra.mxu0 %v3579
    %v7429 = vpop.f32.mrf.mxu0
    %v7430 = vadd.f32 %v6421, %v7429
    %v7431 = vpop.f32.mrf.mxu0
    %v7432 = vadd.f32 %v6423, %v7431
    %7433 = vmatmul.bf16.gmra.mxu0 %v3583
    %v7434 = vpop.f32.mrf.mxu0
    %v7435 = vadd.f32 %v6426, %v7434
    %v7436 = vpop.f32.mrf.mxu0
    %v7437 = vadd.f32 %v6428, %v7436
    %7438 = vmatmul.bf16.gmra.mxu0 %v3587
    %v7439 = vpop.f32.mrf.mxu0
    %v7440 = vadd.f32 %v6431, %v7439
    %v7441 = vpop.f32.mrf.mxu0
    %v7442 = vadd.f32 %v6433, %v7441
    %7443 = vmatmul.bf16.gmra.mxu0 %v3591
    %v7444 = vpop.f32.mrf.mxu0
    %v7445 = vadd.f32 %v6436, %v7444
    %v7446 = vpop.f32.mrf.mxu0
    %v7447 = vadd.f32 %v6438, %v7446
    %7448 = vmatmul.bf16.gmra.mxu0 %v3595
    %v7449 = vpop.f32.mrf.mxu0
    %v7450 = vadd.f32 %v6441, %v7449
    %v7451 = vpop.f32.mrf.mxu0
    %v7452 = vadd.f32 %v6443, %v7451
    %7453 = vmatmul.bf16.gmra.mxu0 %v3599
    %v7454 = vpop.f32.mrf.mxu0
    %v7455 = vadd.f32 %v6446, %v7454
    %v7456 = vpop.f32.mrf.mxu0
    %v7457 = vadd.f32 %v6448, %v7456
    %7458 = vmatmul.bf16.gmra.mxu0 %v3603
    %v7459 = vpop.f32.mrf.mxu0
    %v7460 = vadd.f32 %v6451, %v7459
    %v7461 = vpop.f32.mrf.mxu0
    %v7462 = vadd.f32 %v6453, %v7461
    %7463 = vmatmul.bf16.gmra.mxu0 %v3607
    %v7464 = vpop.f32.mrf.mxu0
    %v7465 = vadd.f32 %v6456, %v7464
    %v7466 = vpop.f32.mrf.mxu0
    %v7467 = vadd.f32 %v6458, %v7466
    %7468 = vmatmul.bf16.gmra.mxu0 %v3611
    %v7469 = vpop.f32.mrf.mxu0
    %v7470 = vadd.f32 %v6461, %v7469
    %v7471 = vpop.f32.mrf.mxu0
    %v7472 = vadd.f32 %v6463, %v7471
    %7473 = vmatmul.bf16.gmra.mxu0 %v3615
    %v7474 = vpop.f32.mrf.mxu0
    %v7475 = vadd.f32 %v6466, %v7474
    %v7476 = vpop.f32.mrf.mxu0
    %v7477 = vadd.f32 %v6468, %v7476
    %7478 = vmatmul.bf16.gmra.mxu0 %v3619
    %v7479 = vpop.f32.mrf.mxu0
    %v7480 = vadd.f32 %v6471, %v7479
    %v7481 = vpop.f32.mrf.mxu0
    %v7482 = vadd.f32 %v6473, %v7481
    %7483 = vmatmul.bf16.gmra.mxu0 %v3623
    %v7484 = vpop.f32.mrf.mxu0
    %v7485 = vadd.f32 %v6476, %v7484
    %v7486 = vpop.f32.mrf.mxu0
    %v7487 = vadd.f32 %v6478, %v7486
    %7488 = vmatmul.bf16.gmra.mxu0 %v3627
    %v7489 = vpop.f32.mrf.mxu0
    %v7490 = vadd.f32 %v6481, %v7489
    %v7491 = vpop.f32.mrf.mxu0
    %v7492 = vadd.f32 %v6483, %v7491
    %7493 = vmatmul.bf16.gmra.mxu0 %v3631
    %v7494 = vpop.f32.mrf.mxu0
    %v7495 = vadd.f32 %v6486, %v7494
    %v7496 = vpop.f32.mrf.mxu0
    %v7497 = vadd.f32 %v6488, %v7496
    %7498 = vmatmul.bf16.gmra.mxu0 %v3635
    %v7499 = vpop.f32.mrf.mxu0
    %v7500 = vadd.f32 %v6491, %v7499
    %v7501 = vpop.f32.mrf.mxu0
    %v7502 = vadd.f32 %v6493, %v7501
    %7503 = vmatmul.bf16.gmra.mxu0 %v3639
    %v7504 = vpop.f32.mrf.mxu0
    %v7505 = vadd.f32 %v6496, %v7504
    %v7506 = vpop.f32.mrf.mxu0
    %v7507 = vadd.f32 %v6498, %v7506
    %7508 = vmatmul.bf16.gmra.mxu0 %v3643
    %v7509 = vpop.f32.mrf.mxu0
    %v7510 = vadd.f32 %v6501, %v7509
    %v7511 = vpop.f32.mrf.mxu0
    %v7512 = vadd.f32 %v6503, %v7511
    %7513 = vmatmul.bf16.gmra.mxu0 %v3647
    %v7514 = vpop.f32.mrf.mxu0
    %v7515 = vadd.f32 %v6506, %v7514
    %v7516 = vpop.f32.mrf.mxu0
    %v7517 = vadd.f32 %v6508, %v7516
    %7518 = vmatmul.bf16.gmra.mxu0 %v3651
    %v7519 = vpop.f32.mrf.mxu0
    %v7520 = vadd.f32 %v6511, %v7519
    %v7521 = vpop.f32.mrf.mxu0
    %v7522 = vadd.f32 %v6513, %v7521
    %7523 = vmatmul.bf16.gmra.mxu0 %v3655
    %v7524 = vpop.f32.mrf.mxu0
    %v7525 = vadd.f32 %v6516, %v7524
    %v7526 = vpop.f32.mrf.mxu0
    %v7527 = vadd.f32 %v6518, %v7526
    %7528 = vmatmul.bf16.gmra.mxu0 %v3659
    %v7529 = vpop.f32.mrf.mxu0
    %v7530 = vadd.f32 %v6521, %v7529
    %v7531 = vpop.f32.mrf.mxu0
    %v7532 = vadd.f32 %v6523, %v7531
    %7533 = vmatmul.bf16.gmra.mxu0 %v3663
    %v7534 = vpop.f32.mrf.mxu0
    %v7535 = vadd.f32 %v6526, %v7534
    %v7536 = vpop.f32.mrf.mxu0
    %v7537 = vadd.f32 %v6528, %v7536
    %7538 = vmatmul.bf16.gmra.mxu0 %v3667
    %v7539 = vpop.f32.mrf.mxu0
    %v7540 = vadd.f32 %v6531, %v7539
    %v7541 = vpop.f32.mrf.mxu0
    %v7542 = vadd.f32 %v6533, %v7541
    %7543 = vmatmul.bf16.gmra.mxu0 %v3671
    %v7544 = vpop.f32.mrf.mxu0
    %v7545 = vadd.f32 %v6536, %v7544
    %v7546 = vpop.f32.mrf.mxu0
    %v7547 = vadd.f32 %v6538, %v7546
    %7548 = vmatmul.bf16.gmra.mxu0 %v3675
    %v7549 = vpop.f32.mrf.mxu0
    %v7550 = vadd.f32 %v6541, %v7549
    %v7551 = vpop.f32.mrf.mxu0
    %v7552 = vadd.f32 %v6543, %v7551
    %7553 = vmatmul.bf16.gmra.mxu0 %v3679
    %v7554 = vpop.f32.mrf.mxu0
    %v7555 = vadd.f32 %v6546, %v7554
    %v7556 = vpop.f32.mrf.mxu0
    %v7557 = vadd.f32 %v6548, %v7556
    %7558 = vmatmul.bf16.gmra.mxu0 %v3683
    %v7559 = vpop.f32.mrf.mxu0
    %v7560 = vadd.f32 %v6551, %v7559
    %v7561 = vpop.f32.mrf.mxu0
    %v7562 = vadd.f32 %v6553, %v7561
    %7563 = vmatmul.bf16.gmra.mxu0 %v3687
    %v7564 = vpop.f32.mrf.mxu0
    %v7565 = vadd.f32 %v6556, %v7564
    %v7566 = vpop.f32.mrf.mxu0
    %v7567 = vadd.f32 %v6558, %v7566
    %7568 = vmatmul.bf16.gmra.mxu0 %v3691
    %v7569 = vpop.f32.mrf.mxu0
    %v7570 = vadd.f32 %v6561, %v7569
    %v7571 = vpop.f32.mrf.mxu0
    %v7572 = vadd.f32 %v6563, %v7571
    %7573 = vmatmul.bf16.gmra.mxu0 %v3695
    %v7574 = vpop.f32.mrf.mxu0
    %v7575 = vadd.f32 %v6566, %v7574
    %v7576 = vpop.f32.mrf.mxu0
    %v7577 = vadd.f32 %v6568, %v7576
    %7578 = vmatmul.bf16.gmra.mxu0 %v3699
    %v7579 = vpop.f32.mrf.mxu0
    %v7580 = vadd.f32 %v6571, %v7579
    %v7581 = vpop.f32.mrf.mxu0
    %v7582 = vadd.f32 %v6573, %v7581
    %7583 = vmatmul.bf16.gmra.mxu0 %v3703
    %v7584 = vpop.f32.mrf.mxu0
    %v7585 = vadd.f32 %v6576, %v7584
    %v7586 = vpop.f32.mrf.mxu0
    %v7587 = vadd.f32 %v6578, %v7586
    %7588 = vmatmul.bf16.gmra.mxu0 %v3707
    %v7589 = vpop.f32.mrf.mxu0
    %v7590 = vadd.f32 %v6581, %v7589
    %v7591 = vpop.f32.mrf.mxu0
    %v7592 = vadd.f32 %v6583, %v7591
    %7593 = vmatmul.bf16.gmra.mxu0 %v3711
    %v7594 = vpop.f32.mrf.mxu0
    %v7595 = vadd.f32 %v6586, %v7594
    %v7596 = vpop.f32.mrf.mxu0
    %v7597 = vadd.f32 %v6588, %v7596
    %7598 = vmatmul.bf16.gmra.mxu0 %v3715
    %v7599 = vpop.f32.mrf.mxu0
    %v7600 = vadd.f32 %v6591, %v7599
    %v7601 = vpop.f32.mrf.mxu0
    %v7602 = vadd.f32 %v6593, %v7601
    %7603 = vmatmul.bf16.gmra.mxu0 %v3719
    %v7604 = vpop.f32.mrf.mxu0
    %v7605 = vadd.f32 %v6596, %v7604
    %v7606 = vpop.f32.mrf.mxu0
    %v7607 = vadd.f32 %v6598, %v7606
    %7608 = vmatmul.bf16.gmra.mxu0 %v3723
    %v7609 = vpop.f32.mrf.mxu0
    %v7610 = vadd.f32 %v6601, %v7609
    %v7611 = vpop.f32.mrf.mxu0
    %v7612 = vadd.f32 %v6603, %v7611
    %7613 = vmatmul.bf16.gmra.mxu0 %v3727
    %v7614 = vpop.f32.mrf.mxu0
    %v7615 = vadd.f32 %v6606, %v7614
    %v7616 = vpop.f32.mrf.mxu0
    %v7617 = vadd.f32 %v6608, %v7616
    %7618 = vmatmul.bf16.gmra.mxu0 %v3731
    %v7619 = vpop.f32.mrf.mxu0
    %v7620 = vadd.f32 %v6611, %v7619
    %v7621 = vpop.f32.mrf.mxu0
    %v7622 = vadd.f32 %v6613, %v7621
    %7623 = vmatmul.bf16.gmra.mxu0 %v3735
    %v7624 = vpop.f32.mrf.mxu0
    %v7625 = vadd.f32 %v6616, %v7624
    %v7626 = vpop.f32.mrf.mxu0
    %v7627 = vadd.f32 %v6618, %v7626
    %7628 = vmatmul.bf16.gmra.mxu0 %v3739
    %v7629 = vpop.f32.mrf.mxu0
    %v7630 = vadd.f32 %v6621, %v7629
    %v7631 = vpop.f32.mrf.mxu0
    %v7632 = vadd.f32 %v6623, %v7631
    %7633 = vmatmul.bf16.gmra.mxu0 %v3743
    %v7634 = vpop.f32.mrf.mxu0
    %v7635 = vadd.f32 %v6626, %v7634
    %v7636 = vpop.f32.mrf.mxu0
    %v7637 = vadd.f32 %v6628, %v7636
    %7638 = vmatmul.bf16.gmra.mxu0 %v3747
    %v7639 = vpop.f32.mrf.mxu0
    %v7640 = vadd.f32 %v6631, %v7639
    %v7641 = vpop.f32.mrf.mxu0
    %v7642 = vadd.f32 %v6633, %v7641
    %7643 = vmatmul.bf16.gmra.mxu0 %v3751
    %v7644 = vpop.f32.mrf.mxu0
    %v7645 = vadd.f32 %v6636, %v7644
    %v7646 = vpop.f32.mrf.mxu0
    %v7647 = vadd.f32 %v6638, %v7646
    %7648 = vmatmul.bf16.gmra.mxu0 %v3755
    %v7649 = vpop.f32.mrf.mxu0
    %v7650 = vadd.f32 %v6641, %v7649
    %v7651 = vpop.f32.mrf.mxu0
    %v7652 = vadd.f32 %v6643, %v7651
    %7653 = vmatmul.bf16.gmra.mxu0 %v3759
    %v7654 = vpop.f32.mrf.mxu0
    %v7655 = vadd.f32 %v6646, %v7654
    %v7656 = vpop.f32.mrf.mxu0
    %v7657 = vadd.f32 %v6648, %v7656
    %7658 = vmatmul.bf16.gmra.mxu0 %v3763
    %v7659 = vpop.f32.mrf.mxu0
    %v7660 = vadd.f32 %v6651, %v7659
    %v7661 = vpop.f32.mrf.mxu0
    %v7662 = vadd.f32 %v6653, %v7661
    %7663 = vmatmul.bf16.gmra.mxu0 %v3767
    %v7664 = vpop.f32.mrf.mxu0
    %v7665 = vadd.f32 %v6656, %v7664
    %v7666 = vpop.f32.mrf.mxu0
    %v7667 = vadd.f32 %v6658, %v7666
    %7668 = vmatmul.bf16.gmra.mxu0 %v3771
    %v7669 = vpop.f32.mrf.mxu0
    %v7670 = vadd.f32 %v6661, %v7669
    %v7671 = vpop.f32.mrf.mxu0
    %v7672 = vadd.f32 %v6663, %v7671
    %7673 = vmatmul.bf16.gmra.mxu0 %v3775
    %v7674 = vpop.f32.mrf.mxu0
    %v7675 = vadd.f32 %v6666, %v7674
    %v7676 = vpop.f32.mrf.mxu0
    %v7677 = vadd.f32 %v6668, %v7676
    %7678 = vmatmul.bf16.gmra.mxu0 %v3779
    %v7679 = vpop.f32.mrf.mxu0
    %v7680 = vadd.f32 %v6671, %v7679
    %v7681 = vpop.f32.mrf.mxu0
    %v7682 = vadd.f32 %v6673, %v7681
    %7683 = vmatmul.bf16.gmra.mxu0 %v3783
    %v7684 = vpop.f32.mrf.mxu0
    %v7685 = vadd.f32 %v6676, %v7684
    %v7686 = vpop.f32.mrf.mxu0
    %v7687 = vadd.f32 %v6678, %v7686
    %7688 = vmatmul.bf16.gmra.mxu0 %v3787
    %v7689 = vpop.f32.mrf.mxu0
    %v7690 = vadd.f32 %v6681, %v7689
    %v7691 = vpop.f32.mrf.mxu0
    %v7692 = vadd.f32 %v6683, %v7691
    %7693 = vmatmul.bf16.gmra.mxu0 %v3791
    %v7694 = vpop.f32.mrf.mxu0
    %v7695 = vadd.f32 %v6686, %v7694
    %v7696 = vpop.f32.mrf.mxu0
    %v7697 = vadd.f32 %v6688, %v7696
    %7698 = vmatmul.bf16.gmra.mxu0 %v3795
    %v7699 = vpop.f32.mrf.mxu0
    %v7700 = vadd.f32 %v6691, %v7699
    %v7701 = vpop.f32.mrf.mxu0
    %v7702 = vadd.f32 %v6693, %v7701
    %7703 = vmatmul.bf16.gmra.mxu0 %v3799
    %v7704 = vpop.f32.mrf.mxu0
    %v7705 = vadd.f32 %v6696, %v7704
    %v7706 = vpop.f32.mrf.mxu0
    %v7707 = vadd.f32 %v6698, %v7706
    %7708 = vmatmul.bf16.gmra.mxu0 %v3803
    %v7709 = vpop.f32.mrf.mxu0
    %v7710 = vadd.f32 %v6701, %v7709
    %v7711 = vpop.f32.mrf.mxu0
    %v7712 = vadd.f32 %v6703, %v7711
    %7713 = vmatmul.bf16.gmra.mxu0 %v3807
    %v7714 = vpop.f32.mrf.mxu0
    %v7715 = vadd.f32 %v6706, %v7714
    %v7716 = vpop.f32.mrf.mxu0
    %v7717 = vadd.f32 %v6708, %v7716
    %7718 = vmatmul.bf16.gmra.mxu0 %v3811
    %v7719 = vpop.f32.mrf.mxu0
    %v7720 = vadd.f32 %v6711, %v7719
    %v7721 = vpop.f32.mrf.mxu0
    %v7722 = vadd.f32 %v6713, %v7721
    %7723 = vmatmul.bf16.gmra.mxu0 %v3815
    %v7724 = vpop.f32.mrf.mxu0
    %v7725 = vadd.f32 %v6716, %v7724
    %v7726 = vpop.f32.mrf.mxu0
    %v7727 = vadd.f32 %v6718, %v7726
    %7728 = vmatmul.bf16.gmra.mxu0 %v3819
    %v7729 = vpop.f32.mrf.mxu0
    %v7730 = vadd.f32 %v6721, %v7729
    %v7731 = vpop.f32.mrf.mxu0
    %v7732 = vadd.f32 %v6723, %v7731
    %7733 = vmatmul.bf16.gmra.mxu0 %v3823
    %v7734 = vpop.f32.mrf.mxu0
    %v7735 = vadd.f32 %v6726, %v7734
    %v7736 = vpop.f32.mrf.mxu0
    %v7737 = vadd.f32 %v6728, %v7736
    %7738 = vmatmul.bf16.gmra.mxu0 %v3827
    %v7739 = vpop.f32.mrf.mxu0
    %v7740 = vadd.f32 %v6731, %v7739
    %v7741 = vpop.f32.mrf.mxu0
    %v7742 = vadd.f32 %v6733, %v7741
    %7743 = vmatmul.bf16.gmra.mxu0 %v3831
    %v7744 = vpop.f32.mrf.mxu0
    %v7745 = vadd.f32 %v6736, %v7744
    %v7746 = vpop.f32.mrf.mxu0
    %v7747 = vadd.f32 %v6738, %v7746
    %7748 = vmatmul.bf16.gmra.mxu0 %v3835
    %v7749 = vpop.f32.mrf.mxu0
    %v7750 = vadd.f32 %v6741, %v7749
    %v7751 = vpop.f32.mrf.mxu0
    %v7752 = vadd.f32 %v6743, %v7751
    %7753 = vmatmul.bf16.gmra.mxu0 %v3839
    %v7754 = vpop.f32.mrf.mxu0
    %v7755 = vadd.f32 %v6746, %v7754
    %v7756 = vpop.f32.mrf.mxu0
    %v7757 = vadd.f32 %v6748, %v7756
    %7758 = vmatmul.bf16.gmra.mxu0 %v3843
    %v7759 = vpop.f32.mrf.mxu0
    %v7760 = vadd.f32 %v6751, %v7759
    %v7761 = vpop.f32.mrf.mxu0
    %v7762 = vadd.f32 %v6753, %v7761
    %7763 = vmatmul.bf16.gmra.mxu0 %v3847
    %v7764 = vpop.f32.mrf.mxu0
    %v7765 = vadd.f32 %v6756, %v7764
    %v7766 = vpop.f32.mrf.mxu0
    %v7767 = vadd.f32 %v6758, %v7766
    %7768 = vmatmul.bf16.gmra.mxu0 %v3851
    %v7769 = vpop.f32.mrf.mxu0
    %v7770 = vadd.f32 %v6761, %v7769
    %v7771 = vpop.f32.mrf.mxu0
    %v7772 = vadd.f32 %v6763, %v7771
    %7773 = vmatmul.bf16.gmra.mxu0 %v3855
    %v7774 = vpop.f32.mrf.mxu0
    %v7775 = vadd.f32 %v6766, %v7774
    %v7776 = vpop.f32.mrf.mxu0
    %v7777 = vadd.f32 %v6768, %v7776
    %7778 = vmatmul.bf16.gmra.mxu0 %v3859
    %v7779 = vpop.f32.mrf.mxu0
    %v7780 = vadd.f32 %v6771, %v7779
    %v7781 = vpop.f32.mrf.mxu0
    %v7782 = vadd.f32 %v6773, %v7781
    %7783 = vmatmul.bf16.gmra.mxu0 %v3863
    %v7784 = vpop.f32.mrf.mxu0
    %v7785 = vadd.f32 %v6776, %v7784
    %v7786 = vpop.f32.mrf.mxu0
    %v7787 = vadd.f32 %v6778, %v7786
    %7788 = vmatmul.bf16.gmra.mxu0 %v3867
    %v7789 = vpop.f32.mrf.mxu0
    %v7790 = vadd.f32 %v6781, %v7789
    %v7791 = vpop.f32.mrf.mxu0
    %v7792 = vadd.f32 %v6783, %v7791
    %7793 = vmatmul.bf16.gmra.mxu0 %v3871
    %v7794 = vpop.f32.mrf.mxu0
    %v7795 = vadd.f32 %v6786, %v7794
    %v7796 = vpop.f32.mrf.mxu0
    %v7797 = vadd.f32 %v6788, %v7796
    %7798 = vmatmul.bf16.gmra.mxu0 %v3875
    %v7799 = vpop.f32.mrf.mxu0
    %v7800 = vadd.f32 %v6791, %v7799
    %v7801 = vpop.f32.mrf.mxu0
    %v7802 = vadd.f32 %v6793, %v7801
    %7803 = vmatmul.bf16.gmra.mxu0 %v3879
    %v7804 = vpop.f32.mrf.mxu0
    %v7805 = vadd.f32 %v6796, %v7804
    %v7806 = vpop.f32.mrf.mxu0
    %v7807 = vadd.f32 %v6798, %v7806
    %7808 = vmatmul.bf16.gmra.mxu0 %v3883
    %v7809 = vpop.f32.mrf.mxu0
    %v7810 = vadd.f32 %v6801, %v7809
    %v7811 = vpop.f32.mrf.mxu0
    %v7812 = vadd.f32 %v6803, %v7811
    %7813 = vmatmul.bf16.gmra.mxu0 %v3887
    %v7814 = vpop.f32.mrf.mxu0
    %v7815 = vadd.f32 %v6806, %v7814
    %v7816 = vpop.f32.mrf.mxu0
    %v7817 = vadd.f32 %v6808, %v7816
    %7818 = vmatmul.bf16.gmra.mxu0 %v3891
    %v7819 = vpop.f32.mrf.mxu0
    %v7820 = vadd.f32 %v6811, %v7819
    %v7821 = vpop.f32.mrf.mxu0
    %v7822 = vadd.f32 %v6813, %v7821
    %7823 = vmatmul.bf16.gmra.mxu0 %v3895
    %v7824 = vpop.f32.mrf.mxu0
    %v7825 = vadd.f32 %v6816, %v7824
    %v7826 = vpop.f32.mrf.mxu0
    %v7827 = vadd.f32 %v6818, %v7826
    %7828 = vmatmul.bf16.gmra.mxu0 %v3899
    %v7829 = vpop.f32.mrf.mxu0
    %v7830 = vadd.f32 %v6821, %v7829
    %v7831 = vpop.f32.mrf.mxu0
    %v7832 = vadd.f32 %v6823, %v7831
    %7833 = vmatmul.bf16.gmra.mxu0 %v3903
    %v7834 = vpop.f32.mrf.mxu0
    %v7835 = vadd.f32 %v6826, %v7834
    %v7836 = vpop.f32.mrf.mxu0
    %v7837 = vadd.f32 %v6828, %v7836
    %7838 = vmatmul.bf16.gmra.mxu0 %v3907
    %v7839 = vpop.f32.mrf.mxu0
    %v7840 = vadd.f32 %v6831, %v7839
    %v7841 = vpop.f32.mrf.mxu0
    %v7842 = vadd.f32 %v6833, %v7841
    %7843 = vmatmul.bf16.gmra.mxu0 %v3911
    %v7844 = vpop.f32.mrf.mxu0
    %v7845 = vadd.f32 %v6836, %v7844
    %v7846 = vpop.f32.mrf.mxu0
    %v7847 = vadd.f32 %v6838, %v7846
    %7848 = vmatmul.bf16.gmra.mxu0 %v3915
    %v7849 = vpop.f32.mrf.mxu0
    %v7850 = vadd.f32 %v6841, %v7849
    %v7851 = vpop.f32.mrf.mxu0
    %v7852 = vadd.f32 %v6843, %v7851
    %7853 = vmatmul.bf16.gmra.mxu0 %v3919
    %v7854 = vpop.f32.mrf.mxu0
    %v7855 = vadd.f32 %v6846, %v7854
    %v7856 = vpop.f32.mrf.mxu0
    %v7857 = vadd.f32 %v6848, %v7856
    %7858 = vmatmul.bf16.gmra.mxu0 %v3923
    %v7859 = vpop.f32.mrf.mxu0
    %v7860 = vadd.f32 %v6851, %v7859
    %v7861 = vpop.f32.mrf.mxu0
    %v7862 = vadd.f32 %v6853, %v7861
    %7863 = vmatmul.bf16.gmra.mxu0 %v3927
    %v7864 = vpop.f32.mrf.mxu0
    %v7865 = vadd.f32 %v6856, %v7864
    %v7866 = vpop.f32.mrf.mxu0
    %v7867 = vadd.f32 %v6858, %v7866
    %7868 = vmatmul.bf16.gmra.mxu0 %v3931
    %v7869 = vpop.f32.mrf.mxu0
    %v7870 = vadd.f32 %v6861, %v7869
    %v7871 = vpop.f32.mrf.mxu0
    %v7872 = vadd.f32 %v6863, %v7871
    %7873 = vmatmul.bf16.gmra.mxu0 %v3935
    %v7874 = vpop.f32.mrf.mxu0
    %v7875 = vadd.f32 %v6866, %v7874
    %v7876 = vpop.f32.mrf.mxu0
    %v7877 = vadd.f32 %v6868, %v7876
    %7878 = vmatmul.bf16.gmra.mxu0 %v3939
    %v7879 = vpop.f32.mrf.mxu0
    %v7880 = vadd.f32 %v6871, %v7879
    %v7881 = vpop.f32.mrf.mxu0
    %v7882 = vadd.f32 %v6873, %v7881
    %7883 = vmatmul.bf16.gmra.mxu0 %v3943
    %v7884 = vpop.f32.mrf.mxu0
    %v7885 = vadd.f32 %v6876, %v7884
    %v7886 = vpop.f32.mrf.mxu0
    %v7887 = vadd.f32 %v6878, %v7886
    %7888 = vmatmul.bf16.gmra.mxu0 %v3947
    %v7889 = vpop.f32.mrf.mxu0
    %v7890 = vadd.f32 %v6881, %v7889
    %v7891 = vpop.f32.mrf.mxu0
    %v7892 = vadd.f32 %v6883, %v7891
    %7893 = vmatmul.bf16.gmra.mxu0 %v3951
    %v7894 = vpop.f32.mrf.mxu0
    %v7895 = vadd.f32 %v6886, %v7894
    %v7896 = vpop.f32.mrf.mxu0
    %v7897 = vadd.f32 %v6888, %v7896
    %7898 = vmatmul.bf16.gmra.mxu0 %v3955
    %v7899 = vpop.f32.mrf.mxu0
    %v7900 = vadd.f32 %v6891, %v7899
    %v7901 = vpop.f32.mrf.mxu0
    %v7902 = vadd.f32 %v6893, %v7901
    %7903 = vmatmul.bf16.gmra.mxu0 %v3959
    %v7904 = vpop.f32.mrf.mxu0
    %v7905 = vadd.f32 %v6896, %v7904
    %v7906 = vpop.f32.mrf.mxu0
    %v7907 = vadd.f32 %v6898, %v7906
    %7908 = vmatmul.bf16.gmra.mxu0 %v3963
    %v7909 = vpop.f32.mrf.mxu0
    %v7910 = vadd.f32 %v6901, %v7909
    %v7911 = vpop.f32.mrf.mxu0
    %v7912 = vadd.f32 %v6903, %v7911
    %7913 = vmatmul.bf16.gmra.mxu0 %v3967
    %v7914 = vpop.f32.mrf.mxu0
    %v7915 = vadd.f32 %v6906, %v7914
    %v7916 = vpop.f32.mrf.mxu0
    %v7917 = vadd.f32 %v6908, %v7916
    %7918 = vmatmul.bf16.gmra.mxu0 %v3971
    %v7919 = vpop.f32.mrf.mxu0
    %v7920 = vadd.f32 %v6911, %v7919
    %v7921 = vpop.f32.mrf.mxu0
    %v7922 = vadd.f32 %v6913, %v7921
    %7923 = vmatmul.bf16.gmra.mxu0 %v3975
    %v7924 = vpop.f32.mrf.mxu0
    %v7925 = vadd.f32 %v6916, %v7924
    %v7926 = vpop.f32.mrf.mxu0
    %v7927 = vadd.f32 %v6918, %v7926
    %7928 = vmatmul.bf16.gmra.mxu0 %v3979
    %v7929 = vpop.f32.mrf.mxu0
    %v7930 = vadd.f32 %v6921, %v7929
    %v7931 = vpop.f32.mrf.mxu0
    %v7932 = vadd.f32 %v6923, %v7931
    %7933 = vmatmul.bf16.gmra.mxu0 %v3983
    %v7934 = vpop.f32.mrf.mxu0
    %v7935 = vadd.f32 %v6926, %v7934
    %v7936 = vpop.f32.mrf.mxu0
    %v7937 = vadd.f32 %v6928, %v7936
    %7938 = vmatmul.bf16.gmra.mxu0 %v3987
    %v7939 = vpop.f32.mrf.mxu0
    %v7940 = vadd.f32 %v6931, %v7939
    %v7941 = vpop.f32.mrf.mxu0
    %v7942 = vadd.f32 %v6933, %v7941
    %7943 = vmatmul.bf16.gmra.mxu0 %v3991
    %v7944 = vpop.f32.mrf.mxu0
    %v7945 = vadd.f32 %v6936, %v7944
    %v7946 = vpop.f32.mrf.mxu0
    %v7947 = vadd.f32 %v6938, %v7946
    %7948 = vmatmul.bf16.gmra.mxu0 %v3995
    %v7949 = vpop.f32.mrf.mxu0
    %v7950 = vadd.f32 %v6941, %v7949
    %v7951 = vpop.f32.mrf.mxu0
    %v7952 = vadd.f32 %v6943, %v7951
    %7953 = vmatmul.bf16.gmra.mxu0 %v3999
    %v7954 = vpop.f32.mrf.mxu0
    %v7955 = vadd.f32 %v6946, %v7954
    %v7956 = vpop.f32.mrf.mxu0
    %v7957 = vadd.f32 %v6948, %v7956
    %7958 = vmatmul.bf16.gmra.mxu0 %v4003
    %v7959 = vpop.f32.mrf.mxu0
    %v7960 = vadd.f32 %v6951, %v7959
    %v7961 = vpop.f32.mrf.mxu0
    %v7962 = vadd.f32 %v6953, %v7961
    %7963 = vmatmul.bf16.gmra.mxu0 %v4007
    %v7964 = vpop.f32.mrf.mxu0
    %v7965 = vadd.f32 %v6956, %v7964
    %v7966 = vpop.f32.mrf.mxu0
    %v7967 = vadd.f32 %v6958, %v7966
    %7968 = vmatmul.bf16.gmra.mxu0 %v4011
    %v7969 = vpop.f32.mrf.mxu0
    %v7970 = vadd.f32 %v6961, %v7969
    %v7971 = vpop.f32.mrf.mxu0
    %v7972 = vadd.f32 %v6963, %v7971
    %7973 = vmatmul.bf16.gmra.mxu0 %v4015
    %v7974 = vpop.f32.mrf.mxu0
    %v7975 = vadd.f32 %v6966, %v7974
    %v7976 = vpop.f32.mrf.mxu0
    %v7977 = vadd.f32 %v6968, %v7976
    %7978 = vmatmul.bf16.gmra.mxu0 %v4019
    %v7979 = vpop.f32.mrf.mxu0
    %v7980 = vadd.f32 %v6971, %v7979
    %v7981 = vpop.f32.mrf.mxu0
    %v7982 = vadd.f32 %v6973, %v7981
    %7983 = vmatmul.bf16.gmra.mxu0 %v4023
    %v7984 = vpop.f32.mrf.mxu0
    %v7985 = vadd.f32 %v6976, %v7984
    %v7986 = vpop.f32.mrf.mxu0
    %v7987 = vadd.f32 %v6978, %v7986
    %7988 = vmatmul.bf16.gmra.mxu0 %v4027
    %v7989 = vpop.f32.mrf.mxu0
    %v7990 = vadd.f32 %v6981, %v7989
    %v7991 = vpop.f32.mrf.mxu0
    %v7992 = vadd.f32 %v6983, %v7991
    %7993 = vmatmul.bf16.gmra.mxu0 %v4031
    %v7994 = vpop.f32.mrf.mxu0
    %v7995 = vadd.f32 %v6986, %v7994
    %v7996 = vpop.f32.mrf.mxu0
    %v7997 = vadd.f32 %v6988, %v7996
    %7998 = vmatmul.bf16.gmra.mxu0 %v4035
    %v7999 = vpop.f32.mrf.mxu0
    %v8000 = vadd.f32 %v6991, %v7999
    %v8001 = vpop.f32.mrf.mxu0
    %v8002 = vadd.f32 %v6993, %v8001
    %8003 = vmatmul.bf16.gmra.mxu0 %v4039
    %v8004 = vpop.f32.mrf.mxu0
    %v8005 = vadd.f32 %v6996, %v8004
    %v8006 = vpop.f32.mrf.mxu0
    %v8007 = vadd.f32 %v6998, %v8006
    %8008 = vmatmul.bf16.gmra.mxu0 %v4043
    %v8009 = vpop.f32.mrf.mxu0
    %v8010 = vadd.f32 %v7001, %v8009
    %v8011 = vpop.f32.mrf.mxu0
    %v8012 = vadd.f32 %v7003, %v8011
    %8013 = vmatmul.bf16.gmra.mxu0 %v4047
    %v8014 = vpop.f32.mrf.mxu0
    %v8015 = vadd.f32 %v7006, %v8014
    %v8016 = vpop.f32.mrf.mxu0
    %v8017 = vadd.f32 %v7008, %v8016
    %8018 = vmatmul.bf16.gmra.mxu0 %v4051
    %v8019 = vpop.f32.mrf.mxu0
    %v8020 = vadd.f32 %v7011, %v8019
    %v8021 = vpop.f32.mrf.mxu0
    %v8022 = vadd.f32 %v7013, %v8021
    %8023 = vmatmul.bf16.gmra.mxu0 %v4055
    %v8024 = vpop.f32.mrf.mxu0
    %v8025 = vadd.f32 %v7016, %v8024
    %v8026 = vpop.f32.mrf.mxu0
    %v8027 = vadd.f32 %v7018, %v8026
    %8028 = vmatmul.bf16.gmra.mxu0 %v4059
    %v8029 = vpop.f32.mrf.mxu0
    %v8030 = vadd.f32 %v7021, %v8029
    %v8031 = vpop.f32.mrf.mxu0
    %v8032 = vadd.f32 %v7023, %v8031
    %8033 = vmatmul.bf16.gmra.mxu0 %v4063
    %v8034 = vpop.f32.mrf.mxu0
    %v8035 = vadd.f32 %v7026, %v8034
    %v8036 = vpop.f32.mrf.mxu0
    %v8037 = vadd.f32 %v7028, %v8036
    %8038 = vmatmul.bf16.gmra.mxu0 %v4067
    %v8039 = vpop.f32.mrf.mxu0
    %v8040 = vadd.f32 %v7031, %v8039
    %v8041 = vpop.f32.mrf.mxu0
    %v8042 = vadd.f32 %v7033, %v8041
    %8043 = vmatmul.bf16.gmra.mxu0 %v4071
    %v8044 = vpop.f32.mrf.mxu0
    %v8045 = vadd.f32 %v7036, %v8044
    %v8046 = vpop.f32.mrf.mxu0
    %v8047 = vadd.f32 %v7038, %v8046
    %8048 = vmatmul.bf16.gmra.mxu0 %v4075
    %v8049 = vpop.f32.mrf.mxu0
    %v8050 = vadd.f32 %v7041, %v8049
    %v8051 = vpop.f32.mrf.mxu0
    %v8052 = vadd.f32 %v7043, %v8051
    %8053 = vmatmul.bf16.gmra.mxu0 %v4079
    %v8054 = vpop.f32.mrf.mxu0
    %v8055 = vadd.f32 %v7046, %v8054
    %v8056 = vpop.f32.mrf.mxu0
    %v8057 = vadd.f32 %v7048, %v8056
    %8058 = vmatmul.bf16.gmra.mxu0 %v4083
    %v8059 = vpop.f32.mrf.mxu0
    %v8060 = vadd.f32 %v7051, %v8059
    %v8061 = vpop.f32.mrf.mxu0
    %v8062 = vadd.f32 %v7053, %v8061
    %8063 = vmatmul.bf16.gmra.mxu0 %v4087
    %v8064 = vpop.f32.mrf.mxu0
    %v8065 = vadd.f32 %v7056, %v8064
    %v8066 = vpop.f32.mrf.mxu0
    %v8067 = vadd.f32 %v7058, %v8066
    %8068 = vmatmul.bf16.gmra.mxu0 %v4091
    %v8069 = vpop.f32.mrf.mxu0
    %v8070 = vadd.f32 %v7061, %v8069
    %v8071 = vpop.f32.mrf.mxu0
    %v8072 = vadd.f32 %v7063, %v8071
    %8073 = vmatmul.bf16.gmra.mxu0 %v4095
    %v8074 = vpop.f32.mrf.mxu0
    %v8075 = vadd.f32 %v7066, %v8074
    %v8076 = vpop.f32.mrf.mxu0
    %v8077 = vadd.f32 %v7068, %v8076
    %8078 = vmatmul.bf16.gmra.mxu0 %v4099
    %v8079 = vpop.f32.mrf.mxu0
    %v8080 = vadd.f32 %v7071, %v8079
    %v8081 = vpop.f32.mrf.mxu0
    %v8082 = vadd.f32 %v7073, %v8081
    %8083 = vmatmul.bf16.gmra.mxu0 %v4103
    %v8084 = vpop.f32.mrf.mxu0
    %v8085 = vadd.f32 %v7076, %v8084
    %v8086 = vpop.f32.mrf.mxu0
    %v8087 = vadd.f32 %v7078, %v8086
    %8088 = vmatmul.bf16.gmra.mxu0 %v4107
    %v8089 = vpop.f32.mrf.mxu0
    %v8090 = vadd.f32 %v7081, %v8089
    %v8091 = vpop.f32.mrf.mxu0
    %v8092 = vadd.f32 %v7083, %v8091
    %8093 = vmatmul.bf16.gmra.mxu0 %v4111
    %v8094 = vpop.f32.mrf.mxu0
    %v8095 = vadd.f32 %v7086, %v8094
    %v8096 = vpop.f32.mrf.mxu0
    %v8097 = vadd.f32 %v7088, %v8096
    %8098 = vmatmul.bf16.gmra.mxu0 %v4115
    %v8099 = vpop.f32.mrf.mxu0
    %v8100 = vadd.f32 %v7091, %v8099
    %v8101 = vpop.f32.mrf.mxu0
    %v8102 = vadd.f32 %v7093, %v8101
    %8103 = vmatmul.bf16.gmra.mxu0 %v4119
    %v8104 = vpop.f32.mrf.mxu0
    %v8105 = vadd.f32 %v7096, %v8104
    %v8106 = vpop.f32.mrf.mxu0
    %v8107 = vadd.f32 %v7098, %v8106
    %8108 = vmatmul.bf16.gmra.mxu0 %v4123
    %v8109 = vpop.f32.mrf.mxu0
    %v8110 = vadd.f32 %v7101, %v8109
    %v8111 = vpop.f32.mrf.mxu0
    %v8112 = vadd.f32 %v7103, %v8111
    %8113 = vmatmul.bf16.gmra.mxu0 %v4127
    %v8114 = vpop.f32.mrf.mxu0
    %v8115 = vadd.f32 %v7106, %v8114
    %v8116 = vpop.f32.mrf.mxu0
    %v8117 = vadd.f32 %v7108, %v8116
    %8118 = vmatmul.bf16.gmra.mxu0 %v4131
    %v8119 = vpop.f32.mrf.mxu0
    %v8120 = vadd.f32 %v7111, %v8119
    %v8121 = vpop.f32.mrf.mxu0
    %v8122 = vadd.f32 %v7113, %v8121
    %8123 = vmatmul.bf16.gmra.mxu0 %v4135
    %v8124 = vpop.f32.mrf.mxu0
    %v8125 = vadd.f32 %v7116, %v8124
    %v8126 = vpop.f32.mrf.mxu0
    %v8127 = vadd.f32 %v7118, %v8126
    %8128 = vmatmul.bf16.gmra.mxu0 %v4139
    %v8129 = vpop.f32.mrf.mxu0
    %v8130 = vadd.f32 %v7121, %v8129
    %v8131 = vpop.f32.mrf.mxu0
    %v8132 = vadd.f32 %v7123, %v8131
    %8133 = vmatmul.bf16.gmra.mxu0 %v4143
    %v8134 = vpop.f32.mrf.mxu0
    %v8135 = vadd.f32 %v7126, %v8134
    %v8136 = vpop.f32.mrf.mxu0
    %v8137 = vadd.f32 %v7128, %v8136
    %8138 = vmatmul.bf16.gmra.mxu0 %v4147
    %v8139 = vpop.f32.mrf.mxu0
    %v8140 = vadd.f32 %v7131, %v8139
    %v8141 = vpop.f32.mrf.mxu0
    %v8142 = vadd.f32 %v7133, %v8141
    %8143 = vmatmul.bf16.gmra.mxu0 %v4151
    %v8144 = vpop.f32.mrf.mxu0
    %v8145 = vadd.f32 %v7136, %v8144
    %v8146 = vpop.f32.mrf.mxu0
    %v8147 = vadd.f32 %v7138, %v8146
    %8148 = vmatmul.bf16.gmra.mxu0 %v4155
    %v8149 = vpop.f32.mrf.mxu0
    %v8150 = vadd.f32 %v7141, %v8149
    %v8151 = vpop.f32.mrf.mxu0
    %v8152 = vadd.f32 %v7143, %v8151
    %8153 = vmatmul.bf16.gmra.mxu0 %v4159
    %v8154 = vpop.f32.mrf.mxu0
    %v8155 = vadd.f32 %v7146, %v8154
    %v8156 = vpop.f32.mrf.mxu0
    %v8157 = vadd.f32 %v7148, %v8156
    %8158 = vmatmul.bf16.gmra.mxu0 %v4163
    %v8159 = vpop.f32.mrf.mxu0
    %v8160 = vadd.f32 %v7151, %v8159
    %v8161 = vpop.f32.mrf.mxu0
    %v8162 = vadd.f32 %v7153, %v8161
    %8163 = vmatmul.bf16.gmra.mxu0 %v4167
    %v8164 = vpop.f32.mrf.mxu0
    %v8165 = vadd.f32 %v7156, %v8164
    %v8166 = vpop.f32.mrf.mxu0
    %v8167 = vadd.f32 %v7158, %v8166
    %8168 = vmatmul.bf16.gmra.mxu0 %v4171
    %v8169 = vpop.f32.mrf.mxu0
    %v8170 = vadd.f32 %v7161, %v8169
    %v8171 = vpop.f32.mrf.mxu0
    %v8172 = vadd.f32 %v7163, %v8171
    %8173 = vmatmul.bf16.gmra.mxu0 %v4175
    %v8174 = vpop.f32.mrf.mxu0
    %v8175 = vadd.f32 %v7166, %v8174
    %v8176 = vpop.f32.mrf.mxu0
    %v8177 = vadd.f32 %v7168, %v8176
    %8178 = vmatmul.bf16.gmra.mxu0 %v4179
    %v8179 = vpop.f32.mrf.mxu0
    %v8180 = vadd.f32 %v7171, %v8179
    %v8181 = vpop.f32.mrf.mxu0
    %v8182 = vadd.f32 %v7173, %v8181
    %8183 = vmatmul.bf16.gmra.mxu0 %v4183
    %v8184 = vpop.f32.mrf.mxu0
    %v8185 = vadd.f32 %v7176, %v8184
    %v8186 = vpop.f32.mrf.mxu0
    %v8187 = vadd.f32 %v7178, %v8186
    %8188 = vmatmul.bf16.gmra.mxu0 %v4187
    %v8189 = vpop.f32.mrf.mxu0
    %v8190 = vadd.f32 %v7181, %v8189
    %v8191 = vpop.f32.mrf.mxu0
    %v8192 = vadd.f32 %v7183, %v8191
    %8193 = vmatmul.bf16.gmra.mxu0 %v4191
    %v8194 = vpop.f32.mrf.mxu0
    %v8195 = vadd.f32 %v7186, %v8194
    %v8196 = vpop.f32.mrf.mxu0
    %v8197 = vadd.f32 %v7188, %v8196
    %8198 = vmatmul.bf16.gmra.mxu0 %v4195
    %v8199 = vpop.f32.mrf.mxu0
    %v8200 = vadd.f32 %v7191, %v8199
    %v8201 = vpop.f32.mrf.mxu0
    %v8202 = vadd.f32 %v7193, %v8201
    %8203 = vmatmul.bf16.gmra.mxu0 %v4199
    %v8204 = vpop.f32.mrf.mxu0
    %v8205 = vadd.f32 %v7196, %v8204
    %v8206 = vpop.f32.mrf.mxu0
    %v8207 = vadd.f32 %v7198, %v8206
    %8208 = vmatmul.bf16.gmra.mxu0 %v4203
    %v8209 = vpop.f32.mrf.mxu0
    %v8210 = vadd.f32 %v7201, %v8209
    %v8211 = vpop.f32.mrf.mxu0
    %v8212 = vadd.f32 %v7203, %v8211
    %8213 = vmatmul.bf16.gmra.mxu0 %v4207
    %v8214 = vpop.f32.mrf.mxu0
    %v8215 = vadd.f32 %v7206, %v8214
    %v8216 = vpop.f32.mrf.mxu0
    %v8217 = vadd.f32 %v7208, %v8216
    %8218 = vmatmul.bf16.gmra.mxu0 %v4211
    %v8219 = vpop.f32.mrf.mxu0
    %v8220 = vadd.f32 %v7211, %v8219
    %v8221 = vpop.f32.mrf.mxu0
    %v8222 = vadd.f32 %v7213, %v8221
    %8223 = vmatmul.bf16.gmra.mxu0 %v4215
    %v8224 = vpop.f32.mrf.mxu0
    %v8225 = vadd.f32 %v7216, %v8224
    %v8226 = vpop.f32.mrf.mxu0
    %v8227 = vadd.f32 %v7218, %v8226
    %8228 = vmatmul.bf16.gmra.mxu0 %v4219
    %v8229 = vpop.f32.mrf.mxu0
    %v8230 = vadd.f32 %v7221, %v8229
    %v8231 = vpop.f32.mrf.mxu0
    %v8232 = vadd.f32 %v7223, %v8231
    %8233 = vmatmul.bf16.gmra.mxu0 %v4223
    %v8234 = vpop.f32.mrf.mxu0
    %v8235 = vadd.f32 %v7226, %v8234
    %v8236 = vpop.f32.mrf.mxu0
    %v8237 = vadd.f32 %v7228, %v8236
    %8238 = vmatmul.bf16.gmra.mxu0 %v4227
    %v8239 = vpop.f32.mrf.mxu0
    %v8240 = vadd.f32 %v7231, %v8239
    %v8241 = vpop.f32.mrf.mxu0
    %v8242 = vadd.f32 %v7233, %v8241
    %8243 = vmatmul.bf16.gmra.mxu0 %v4231
    %v8244 = vpop.f32.mrf.mxu0
    %v8245 = vadd.f32 %v7236, %v8244
    %v8246 = vpop.f32.mrf.mxu0
    %v8247 = vadd.f32 %v7238, %v8246
    %8248 = vmatmul.bf16.gmra.mxu0 %v4235
    %v8249 = vpop.f32.mrf.mxu0
    %v8250 = vadd.f32 %v7241, %v8249
    %v8251 = vpop.f32.mrf.mxu0
    %v8252 = vadd.f32 %v7243, %v8251
    %8253 = vmatmul.bf16.gmra.mxu0 %v4239
    %v8254 = vpop.f32.mrf.mxu0
    %v8255 = vadd.f32 %v7246, %v8254
    %v8256 = vpop.f32.mrf.mxu0
    %v8257 = vadd.f32 %v7248, %v8256
    %8258 = vmatmul.bf16.gmra.mxu0 %v4243
    %v8259 = vpop.f32.mrf.mxu0
    %v8260 = vadd.f32 %v7251, %v8259
    %v8261 = vpop.f32.mrf.mxu0
    %v8262 = vadd.f32 %v7253, %v8261
    %8263 = vdwg.mxu0
    %8264 = vmatpush.bf16.msra.mxu0 %v5204
    %8265 = vmatpush.bf16.msra.mxu0 %v5203
    %8266 = vmatpush.bf16.msra.mxu0 %v5202
    %8267 = vmatpush.bf16.msra.mxu0 %v5201
    %8268 = vmatpush.bf16.msra.mxu0 %v5200
    %8269 = vmatpush.bf16.msra.mxu0 %v5199
    %8270 = vmatpush.bf16.msra.mxu0 %v5198
    %8271 = vmatpush.bf16.msra.mxu0 %v5197
    %8272 = vmatmul.bf16.gmra.mxu0 %v3448
    %v8273 = vpop.f32.mrf.mxu0
    %v8274 = vadd.f32 %v7265, %v8273
    %v8275 = vpop.f32.mrf.mxu0
    %v8276 = vadd.f32 %v7267, %v8275
    %8277 = vmatmul.bf16.gmra.mxu0 %v3452
    %v8278 = vpop.f32.mrf.mxu0
    %v8279 = vadd.f32 %v7270, %v8278
    %v8280 = vpop.f32.mrf.mxu0
    %v8281 = vadd.f32 %v7272, %v8280
    %8282 = vmatmul.bf16.gmra.mxu0 %v3456
    %v8283 = vpop.f32.mrf.mxu0
    %v8284 = vadd.f32 %v7275, %v8283
    %v8285 = vpop.f32.mrf.mxu0
    %v8286 = vadd.f32 %v7277, %v8285
    %8287 = vmatmul.bf16.gmra.mxu0 %v3460
    %v8288 = vpop.f32.mrf.mxu0
    %v8289 = vadd.f32 %v7280, %v8288
    %v8290 = vpop.f32.mrf.mxu0
    %v8291 = vadd.f32 %v7282, %v8290
    %8292 = vmatmul.bf16.gmra.mxu0 %v3464
    %v8293 = vpop.f32.mrf.mxu0
    %v8294 = vadd.f32 %v7285, %v8293
    %v8295 = vpop.f32.mrf.mxu0
    %v8296 = vadd.f32 %v7287, %v8295
    %8297 = vmatmul.bf16.gmra.mxu0 %v3468
    %v8298 = vpop.f32.mrf.mxu0
    %v8299 = vadd.f32 %v7290, %v8298
    %v8300 = vpop.f32.mrf.mxu0
    %v8301 = vadd.f32 %v7292, %v8300
    %8302 = vmatmul.bf16.gmra.mxu0 %v3472
    %v8303 = vpop.f32.mrf.mxu0
    %v8304 = vadd.f32 %v7295, %v8303
    %v8305 = vpop.f32.mrf.mxu0
    %v8306 = vadd.f32 %v7297, %v8305
    %8307 = vmatmul.bf16.gmra.mxu0 %v3476
    %v8308 = vpop.f32.mrf.mxu0
    %v8309 = vadd.f32 %v7300, %v8308
    %v8310 = vpop.f32.mrf.mxu0
    %v8311 = vadd.f32 %v7302, %v8310
    %8312 = vmatmul.bf16.gmra.mxu0 %v3480
    %v8313 = vpop.f32.mrf.mxu0
    %v8314 = vadd.f32 %v7305, %v8313
    %v8315 = vpop.f32.mrf.mxu0
    %v8316 = vadd.f32 %v7307, %v8315
    %8317 = vmatmul.bf16.gmra.mxu0 %v3484
    %v8318 = vpop.f32.mrf.mxu0
    %v8319 = vadd.f32 %v7310, %v8318
    %v8320 = vpop.f32.mrf.mxu0
    %v8321 = vadd.f32 %v7312, %v8320
    %8322 = vmatmul.bf16.gmra.mxu0 %v3488
    %v8323 = vpop.f32.mrf.mxu0
    %v8324 = vadd.f32 %v7315, %v8323
    %v8325 = vpop.f32.mrf.mxu0
    %v8326 = vadd.f32 %v7317, %v8325
    %8327 = vmatmul.bf16.gmra.mxu0 %v3492
    %v8328 = vpop.f32.mrf.mxu0
    %v8329 = vadd.f32 %v7320, %v8328
    %v8330 = vpop.f32.mrf.mxu0
    %v8331 = vadd.f32 %v7322, %v8330
    %8332 = vmatmul.bf16.gmra.mxu0 %v3496
    %v8333 = vpop.f32.mrf.mxu0
    %v8334 = vadd.f32 %v7325, %v8333
    %v8335 = vpop.f32.mrf.mxu0
    %v8336 = vadd.f32 %v7327, %v8335
    %8337 = vmatmul.bf16.gmra.mxu0 %v3500
    %v8338 = vpop.f32.mrf.mxu0
    %v8339 = vadd.f32 %v7330, %v8338
    %v8340 = vpop.f32.mrf.mxu0
    %v8341 = vadd.f32 %v7332, %v8340
    %8342 = vmatmul.bf16.gmra.mxu0 %v3504
    %v8343 = vpop.f32.mrf.mxu0
    %v8344 = vadd.f32 %v7335, %v8343
    %v8345 = vpop.f32.mrf.mxu0
    %v8346 = vadd.f32 %v7337, %v8345
    %8347 = vmatmul.bf16.gmra.mxu0 %v3508
    %v8348 = vpop.f32.mrf.mxu0
    %v8349 = vadd.f32 %v7340, %v8348
    %v8350 = vpop.f32.mrf.mxu0
    %v8351 = vadd.f32 %v7342, %v8350
    %8352 = vmatmul.bf16.gmra.mxu0 %v3512
    %v8353 = vpop.f32.mrf.mxu0
    %v8354 = vadd.f32 %v7345, %v8353
    %v8355 = vpop.f32.mrf.mxu0
    %v8356 = vadd.f32 %v7347, %v8355
    %8357 = vmatmul.bf16.gmra.mxu0 %v3516
    %v8358 = vpop.f32.mrf.mxu0
    %v8359 = vadd.f32 %v7350, %v8358
    %v8360 = vpop.f32.mrf.mxu0
    %v8361 = vadd.f32 %v7352, %v8360
    %8362 = vmatmul.bf16.gmra.mxu0 %v3520
    %v8363 = vpop.f32.mrf.mxu0
    %v8364 = vadd.f32 %v7355, %v8363
    %v8365 = vpop.f32.mrf.mxu0
    %v8366 = vadd.f32 %v7357, %v8365
    %8367 = vmatmul.bf16.gmra.mxu0 %v3524
    %v8368 = vpop.f32.mrf.mxu0
    %v8369 = vadd.f32 %v7360, %v8368
    %v8370 = vpop.f32.mrf.mxu0
    %v8371 = vadd.f32 %v7362, %v8370
    %8372 = vmatmul.bf16.gmra.mxu0 %v3528
    %v8373 = vpop.f32.mrf.mxu0
    %v8374 = vadd.f32 %v7365, %v8373
    %v8375 = vpop.f32.mrf.mxu0
    %v8376 = vadd.f32 %v7367, %v8375
    %8377 = vmatmul.bf16.gmra.mxu0 %v3532
    %v8378 = vpop.f32.mrf.mxu0
    %v8379 = vadd.f32 %v7370, %v8378
    %v8380 = vpop.f32.mrf.mxu0
    %v8381 = vadd.f32 %v7372, %v8380
    %8382 = vmatmul.bf16.gmra.mxu0 %v3536
    %v8383 = vpop.f32.mrf.mxu0
    %v8384 = vadd.f32 %v7375, %v8383
    %v8385 = vpop.f32.mrf.mxu0
    %v8386 = vadd.f32 %v7377, %v8385
    %8387 = vmatmul.bf16.gmra.mxu0 %v3540
    %v8388 = vpop.f32.mrf.mxu0
    %v8389 = vadd.f32 %v7380, %v8388
    %v8390 = vpop.f32.mrf.mxu0
    %v8391 = vadd.f32 %v7382, %v8390
    %8392 = vmatmul.bf16.gmra.mxu0 %v3544
    %v8393 = vpop.f32.mrf.mxu0
    %v8394 = vadd.f32 %v7385, %v8393
    %v8395 = vpop.f32.mrf.mxu0
    %v8396 = vadd.f32 %v7387, %v8395
    %8397 = vmatmul.bf16.gmra.mxu0 %v3548
    %v8398 = vpop.f32.mrf.mxu0
    %v8399 = vadd.f32 %v7390, %v8398
    %v8400 = vpop.f32.mrf.mxu0
    %v8401 = vadd.f32 %v7392, %v8400
    %8402 = vmatmul.bf16.gmra.mxu0 %v3552
    %v8403 = vpop.f32.mrf.mxu0
    %v8404 = vadd.f32 %v7395, %v8403
    %v8405 = vpop.f32.mrf.mxu0
    %v8406 = vadd.f32 %v7397, %v8405
    %8407 = vmatmul.bf16.gmra.mxu0 %v3556
    %v8408 = vpop.f32.mrf.mxu0
    %v8409 = vadd.f32 %v7400, %v8408
    %v8410 = vpop.f32.mrf.mxu0
    %v8411 = vadd.f32 %v7402, %v8410
    %8412 = vmatmul.bf16.gmra.mxu0 %v3560
    %v8413 = vpop.f32.mrf.mxu0
    %v8414 = vadd.f32 %v7405, %v8413
    %v8415 = vpop.f32.mrf.mxu0
    %v8416 = vadd.f32 %v7407, %v8415
    %8417 = vmatmul.bf16.gmra.mxu0 %v3564
    %v8418 = vpop.f32.mrf.mxu0
    %v8419 = vadd.f32 %v7410, %v8418
    %v8420 = vpop.f32.mrf.mxu0
    %v8421 = vadd.f32 %v7412, %v8420
    %8422 = vmatmul.bf16.gmra.mxu0 %v3568
    %v8423 = vpop.f32.mrf.mxu0
    %v8424 = vadd.f32 %v7415, %v8423
    %v8425 = vpop.f32.mrf.mxu0
    %v8426 = vadd.f32 %v7417, %v8425
    %8427 = vmatmul.bf16.gmra.mxu0 %v3572
    %v8428 = vpop.f32.mrf.mxu0
    %v8429 = vadd.f32 %v7420, %v8428
    %v8430 = vpop.f32.mrf.mxu0
    %v8431 = vadd.f32 %v7422, %v8430
    %8432 = vmatmul.bf16.gmra.mxu0 %v3576
    %v8433 = vpop.f32.mrf.mxu0
    %v8434 = vadd.f32 %v7425, %v8433
    %v8435 = vpop.f32.mrf.mxu0
    %v8436 = vadd.f32 %v7427, %v8435
    %8437 = vmatmul.bf16.gmra.mxu0 %v3580
    %v8438 = vpop.f32.mrf.mxu0
    %v8439 = vadd.f32 %v7430, %v8438
    %v8440 = vpop.f32.mrf.mxu0
    %v8441 = vadd.f32 %v7432, %v8440
    %8442 = vmatmul.bf16.gmra.mxu0 %v3584
    %v8443 = vpop.f32.mrf.mxu0
    %v8444 = vadd.f32 %v7435, %v8443
    %v8445 = vpop.f32.mrf.mxu0
    %v8446 = vadd.f32 %v7437, %v8445
    %8447 = vmatmul.bf16.gmra.mxu0 %v3588
    %v8448 = vpop.f32.mrf.mxu0
    %v8449 = vadd.f32 %v7440, %v8448
    %v8450 = vpop.f32.mrf.mxu0
    %v8451 = vadd.f32 %v7442, %v8450
    %8452 = vmatmul.bf16.gmra.mxu0 %v3592
    %v8453 = vpop.f32.mrf.mxu0
    %v8454 = vadd.f32 %v7445, %v8453
    %v8455 = vpop.f32.mrf.mxu0
    %v8456 = vadd.f32 %v7447, %v8455
    %8457 = vmatmul.bf16.gmra.mxu0 %v3596
    %v8458 = vpop.f32.mrf.mxu0
    %v8459 = vadd.f32 %v7450, %v8458
    %v8460 = vpop.f32.mrf.mxu0
    %v8461 = vadd.f32 %v7452, %v8460
    %8462 = vmatmul.bf16.gmra.mxu0 %v3600
    %v8463 = vpop.f32.mrf.mxu0
    %v8464 = vadd.f32 %v7455, %v8463
    %v8465 = vpop.f32.mrf.mxu0
    %v8466 = vadd.f32 %v7457, %v8465
    %8467 = vmatmul.bf16.gmra.mxu0 %v3604
    %v8468 = vpop.f32.mrf.mxu0
    %v8469 = vadd.f32 %v7460, %v8468
    %v8470 = vpop.f32.mrf.mxu0
    %v8471 = vadd.f32 %v7462, %v8470
    %8472 = vmatmul.bf16.gmra.mxu0 %v3608
    %v8473 = vpop.f32.mrf.mxu0
    %v8474 = vadd.f32 %v7465, %v8473
    %v8475 = vpop.f32.mrf.mxu0
    %v8476 = vadd.f32 %v7467, %v8475
    %8477 = vmatmul.bf16.gmra.mxu0 %v3612
    %v8478 = vpop.f32.mrf.mxu0
    %v8479 = vadd.f32 %v7470, %v8478
    %v8480 = vpop.f32.mrf.mxu0
    %v8481 = vadd.f32 %v7472, %v8480
    %8482 = vmatmul.bf16.gmra.mxu0 %v3616
    %v8483 = vpop.f32.mrf.mxu0
    %v8484 = vadd.f32 %v7475, %v8483
    %v8485 = vpop.f32.mrf.mxu0
    %v8486 = vadd.f32 %v7477, %v8485
    %8487 = vmatmul.bf16.gmra.mxu0 %v3620
    %v8488 = vpop.f32.mrf.mxu0
    %v8489 = vadd.f32 %v7480, %v8488
    %v8490 = vpop.f32.mrf.mxu0
    %v8491 = vadd.f32 %v7482, %v8490
    %8492 = vmatmul.bf16.gmra.mxu0 %v3624
    %v8493 = vpop.f32.mrf.mxu0
    %v8494 = vadd.f32 %v7485, %v8493
    %v8495 = vpop.f32.mrf.mxu0
    %v8496 = vadd.f32 %v7487, %v8495
    %8497 = vmatmul.bf16.gmra.mxu0 %v3628
    %v8498 = vpop.f32.mrf.mxu0
    %v8499 = vadd.f32 %v7490, %v8498
    %v8500 = vpop.f32.mrf.mxu0
    %v8501 = vadd.f32 %v7492, %v8500
    %8502 = vmatmul.bf16.gmra.mxu0 %v3632
    %v8503 = vpop.f32.mrf.mxu0
    %v8504 = vadd.f32 %v7495, %v8503
    %v8505 = vpop.f32.mrf.mxu0
    %v8506 = vadd.f32 %v7497, %v8505
    %8507 = vmatmul.bf16.gmra.mxu0 %v3636
    %v8508 = vpop.f32.mrf.mxu0
    %v8509 = vadd.f32 %v7500, %v8508
    %v8510 = vpop.f32.mrf.mxu0
    %v8511 = vadd.f32 %v7502, %v8510
    %8512 = vmatmul.bf16.gmra.mxu0 %v3640
    %v8513 = vpop.f32.mrf.mxu0
    %v8514 = vadd.f32 %v7505, %v8513
    %v8515 = vpop.f32.mrf.mxu0
    %v8516 = vadd.f32 %v7507, %v8515
    %8517 = vmatmul.bf16.gmra.mxu0 %v3644
    %v8518 = vpop.f32.mrf.mxu0
    %v8519 = vadd.f32 %v7510, %v8518
    %v8520 = vpop.f32.mrf.mxu0
    %v8521 = vadd.f32 %v7512, %v8520
    %8522 = vmatmul.bf16.gmra.mxu0 %v3648
    %v8523 = vpop.f32.mrf.mxu0
    %v8524 = vadd.f32 %v7515, %v8523
    %v8525 = vpop.f32.mrf.mxu0
    %v8526 = vadd.f32 %v7517, %v8525
    %8527 = vmatmul.bf16.gmra.mxu0 %v3652
    %v8528 = vpop.f32.mrf.mxu0
    %v8529 = vadd.f32 %v7520, %v8528
    %v8530 = vpop.f32.mrf.mxu0
    %v8531 = vadd.f32 %v7522, %v8530
    %8532 = vmatmul.bf16.gmra.mxu0 %v3656
    %v8533 = vpop.f32.mrf.mxu0
    %v8534 = vadd.f32 %v7525, %v8533
    %v8535 = vpop.f32.mrf.mxu0
    %v8536 = vadd.f32 %v7527, %v8535
    %8537 = vmatmul.bf16.gmra.mxu0 %v3660
    %v8538 = vpop.f32.mrf.mxu0
    %v8539 = vadd.f32 %v7530, %v8538
    %v8540 = vpop.f32.mrf.mxu0
    %v8541 = vadd.f32 %v7532, %v8540
    %8542 = vmatmul.bf16.gmra.mxu0 %v3664
    %v8543 = vpop.f32.mrf.mxu0
    %v8544 = vadd.f32 %v7535, %v8543
    %v8545 = vpop.f32.mrf.mxu0
    %v8546 = vadd.f32 %v7537, %v8545
    %8547 = vmatmul.bf16.gmra.mxu0 %v3668
    %v8548 = vpop.f32.mrf.mxu0
    %v8549 = vadd.f32 %v7540, %v8548
    %v8550 = vpop.f32.mrf.mxu0
    %v8551 = vadd.f32 %v7542, %v8550
    %8552 = vmatmul.bf16.gmra.mxu0 %v3672
    %v8553 = vpop.f32.mrf.mxu0
    %v8554 = vadd.f32 %v7545, %v8553
    %v8555 = vpop.f32.mrf.mxu0
    %v8556 = vadd.f32 %v7547, %v8555
    %8557 = vmatmul.bf16.gmra.mxu0 %v3676
    %v8558 = vpop.f32.mrf.mxu0
    %v8559 = vadd.f32 %v7550, %v8558
    %v8560 = vpop.f32.mrf.mxu0
    %v8561 = vadd.f32 %v7552, %v8560
    %8562 = vmatmul.bf16.gmra.mxu0 %v3680
    %v8563 = vpop.f32.mrf.mxu0
    %v8564 = vadd.f32 %v7555, %v8563
    %v8565 = vpop.f32.mrf.mxu0
    %v8566 = vadd.f32 %v7557, %v8565
    %8567 = vmatmul.bf16.gmra.mxu0 %v3684
    %v8568 = vpop.f32.mrf.mxu0
    %v8569 = vadd.f32 %v7560, %v8568
    %v8570 = vpop.f32.mrf.mxu0
    %v8571 = vadd.f32 %v7562, %v8570
    %8572 = vmatmul.bf16.gmra.mxu0 %v3688
    %v8573 = vpop.f32.mrf.mxu0
    %v8574 = vadd.f32 %v7565, %v8573
    %v8575 = vpop.f32.mrf.mxu0
    %v8576 = vadd.f32 %v7567, %v8575
    %8577 = vmatmul.bf16.gmra.mxu0 %v3692
    %v8578 = vpop.f32.mrf.mxu0
    %v8579 = vadd.f32 %v7570, %v8578
    %v8580 = vpop.f32.mrf.mxu0
    %v8581 = vadd.f32 %v7572, %v8580
    %8582 = vmatmul.bf16.gmra.mxu0 %v3696
    %v8583 = vpop.f32.mrf.mxu0
    %v8584 = vadd.f32 %v7575, %v8583
    %v8585 = vpop.f32.mrf.mxu0
    %v8586 = vadd.f32 %v7577, %v8585
    %8587 = vmatmul.bf16.gmra.mxu0 %v3700
    %v8588 = vpop.f32.mrf.mxu0
    %v8589 = vadd.f32 %v7580, %v8588
    %v8590 = vpop.f32.mrf.mxu0
    %v8591 = vadd.f32 %v7582, %v8590
    %8592 = vmatmul.bf16.gmra.mxu0 %v3704
    %v8593 = vpop.f32.mrf.mxu0
    %v8594 = vadd.f32 %v7585, %v8593
    %v8595 = vpop.f32.mrf.mxu0
    %v8596 = vadd.f32 %v7587, %v8595
    %8597 = vmatmul.bf16.gmra.mxu0 %v3708
    %v8598 = vpop.f32.mrf.mxu0
    %v8599 = vadd.f32 %v7590, %v8598
    %v8600 = vpop.f32.mrf.mxu0
    %v8601 = vadd.f32 %v7592, %v8600
    %8602 = vmatmul.bf16.gmra.mxu0 %v3712
    %v8603 = vpop.f32.mrf.mxu0
    %v8604 = vadd.f32 %v7595, %v8603
    %v8605 = vpop.f32.mrf.mxu0
    %v8606 = vadd.f32 %v7597, %v8605
    %8607 = vmatmul.bf16.gmra.mxu0 %v3716
    %v8608 = vpop.f32.mrf.mxu0
    %v8609 = vadd.f32 %v7600, %v8608
    %v8610 = vpop.f32.mrf.mxu0
    %v8611 = vadd.f32 %v7602, %v8610
    %8612 = vmatmul.bf16.gmra.mxu0 %v3720
    %v8613 = vpop.f32.mrf.mxu0
    %v8614 = vadd.f32 %v7605, %v8613
    %v8615 = vpop.f32.mrf.mxu0
    %v8616 = vadd.f32 %v7607, %v8615
    %8617 = vmatmul.bf16.gmra.mxu0 %v3724
    %v8618 = vpop.f32.mrf.mxu0
    %v8619 = vadd.f32 %v7610, %v8618
    %v8620 = vpop.f32.mrf.mxu0
    %v8621 = vadd.f32 %v7612, %v8620
    %8622 = vmatmul.bf16.gmra.mxu0 %v3728
    %v8623 = vpop.f32.mrf.mxu0
    %v8624 = vadd.f32 %v7615, %v8623
    %v8625 = vpop.f32.mrf.mxu0
    %v8626 = vadd.f32 %v7617, %v8625
    %8627 = vmatmul.bf16.gmra.mxu0 %v3732
    %v8628 = vpop.f32.mrf.mxu0
    %v8629 = vadd.f32 %v7620, %v8628
    %v8630 = vpop.f32.mrf.mxu0
    %v8631 = vadd.f32 %v7622, %v8630
    %8632 = vmatmul.bf16.gmra.mxu0 %v3736
    %v8633 = vpop.f32.mrf.mxu0
    %v8634 = vadd.f32 %v7625, %v8633
    %v8635 = vpop.f32.mrf.mxu0
    %v8636 = vadd.f32 %v7627, %v8635
    %8637 = vmatmul.bf16.gmra.mxu0 %v3740
    %v8638 = vpop.f32.mrf.mxu0
    %v8639 = vadd.f32 %v7630, %v8638
    %v8640 = vpop.f32.mrf.mxu0
    %v8641 = vadd.f32 %v7632, %v8640
    %8642 = vmatmul.bf16.gmra.mxu0 %v3744
    %v8643 = vpop.f32.mrf.mxu0
    %v8644 = vadd.f32 %v7635, %v8643
    %v8645 = vpop.f32.mrf.mxu0
    %v8646 = vadd.f32 %v7637, %v8645
    %8647 = vmatmul.bf16.gmra.mxu0 %v3748
    %v8648 = vpop.f32.mrf.mxu0
    %v8649 = vadd.f32 %v7640, %v8648
    %v8650 = vpop.f32.mrf.mxu0
    %v8651 = vadd.f32 %v7642, %v8650
    %8652 = vmatmul.bf16.gmra.mxu0 %v3752
    %v8653 = vpop.f32.mrf.mxu0
    %v8654 = vadd.f32 %v7645, %v8653
    %v8655 = vpop.f32.mrf.mxu0
    %v8656 = vadd.f32 %v7647, %v8655
    %8657 = vmatmul.bf16.gmra.mxu0 %v3756
    %v8658 = vpop.f32.mrf.mxu0
    %v8659 = vadd.f32 %v7650, %v8658
    %v8660 = vpop.f32.mrf.mxu0
    %v8661 = vadd.f32 %v7652, %v8660
    %8662 = vmatmul.bf16.gmra.mxu0 %v3760
    %v8663 = vpop.f32.mrf.mxu0
    %v8664 = vadd.f32 %v7655, %v8663
    %v8665 = vpop.f32.mrf.mxu0
    %v8666 = vadd.f32 %v7657, %v8665
    %8667 = vmatmul.bf16.gmra.mxu0 %v3764
    %v8668 = vpop.f32.mrf.mxu0
    %v8669 = vadd.f32 %v7660, %v8668
    %v8670 = vpop.f32.mrf.mxu0
    %v8671 = vadd.f32 %v7662, %v8670
    %8672 = vmatmul.bf16.gmra.mxu0 %v3768
    %v8673 = vpop.f32.mrf.mxu0
    %v8674 = vadd.f32 %v7665, %v8673
    %v8675 = vpop.f32.mrf.mxu0
    %v8676 = vadd.f32 %v7667, %v8675
    %8677 = vmatmul.bf16.gmra.mxu0 %v3772
    %v8678 = vpop.f32.mrf.mxu0
    %v8679 = vadd.f32 %v7670, %v8678
    %v8680 = vpop.f32.mrf.mxu0
    %v8681 = vadd.f32 %v7672, %v8680
    %8682 = vmatmul.bf16.gmra.mxu0 %v3776
    %v8683 = vpop.f32.mrf.mxu0
    %v8684 = vadd.f32 %v7675, %v8683
    %v8685 = vpop.f32.mrf.mxu0
    %v8686 = vadd.f32 %v7677, %v8685
    %8687 = vmatmul.bf16.gmra.mxu0 %v3780
    %v8688 = vpop.f32.mrf.mxu0
    %v8689 = vadd.f32 %v7680, %v8688
    %v8690 = vpop.f32.mrf.mxu0
    %v8691 = vadd.f32 %v7682, %v8690
    %8692 = vmatmul.bf16.gmra.mxu0 %v3784
    %v8693 = vpop.f32.mrf.mxu0
    %v8694 = vadd.f32 %v7685, %v8693
    %v8695 = vpop.f32.mrf.mxu0
    %v8696 = vadd.f32 %v7687, %v8695
    %8697 = vmatmul.bf16.gmra.mxu0 %v3788
    %v8698 = vpop.f32.mrf.mxu0
    %v8699 = vadd.f32 %v7690, %v8698
    %v8700 = vpop.f32.mrf.mxu0
    %v8701 = vadd.f32 %v7692, %v8700
    %8702 = vmatmul.bf16.gmra.mxu0 %v3792
    %v8703 = vpop.f32.mrf.mxu0
    %v8704 = vadd.f32 %v7695, %v8703
    %v8705 = vpop.f32.mrf.mxu0
    %v8706 = vadd.f32 %v7697, %v8705
    %8707 = vmatmul.bf16.gmra.mxu0 %v3796
    %v8708 = vpop.f32.mrf.mxu0
    %v8709 = vadd.f32 %v7700, %v8708
    %v8710 = vpop.f32.mrf.mxu0
    %v8711 = vadd.f32 %v7702, %v8710
    %8712 = vmatmul.bf16.gmra.mxu0 %v3800
    %v8713 = vpop.f32.mrf.mxu0
    %v8714 = vadd.f32 %v7705, %v8713
    %v8715 = vpop.f32.mrf.mxu0
    %v8716 = vadd.f32 %v7707, %v8715
    %8717 = vmatmul.bf16.gmra.mxu0 %v3804
    %v8718 = vpop.f32.mrf.mxu0
    %v8719 = vadd.f32 %v7710, %v8718
    %v8720 = vpop.f32.mrf.mxu0
    %v8721 = vadd.f32 %v7712, %v8720
    %8722 = vmatmul.bf16.gmra.mxu0 %v3808
    %v8723 = vpop.f32.mrf.mxu0
    %v8724 = vadd.f32 %v7715, %v8723
    %v8725 = vpop.f32.mrf.mxu0
    %v8726 = vadd.f32 %v7717, %v8725
    %8727 = vmatmul.bf16.gmra.mxu0 %v3812
    %v8728 = vpop.f32.mrf.mxu0
    %v8729 = vadd.f32 %v7720, %v8728
    %v8730 = vpop.f32.mrf.mxu0
    %v8731 = vadd.f32 %v7722, %v8730
    %8732 = vmatmul.bf16.gmra.mxu0 %v3816
    %v8733 = vpop.f32.mrf.mxu0
    %v8734 = vadd.f32 %v7725, %v8733
    %v8735 = vpop.f32.mrf.mxu0
    %v8736 = vadd.f32 %v7727, %v8735
    %8737 = vmatmul.bf16.gmra.mxu0 %v3820
    %v8738 = vpop.f32.mrf.mxu0
    %v8739 = vadd.f32 %v7730, %v8738
    %v8740 = vpop.f32.mrf.mxu0
    %v8741 = vadd.f32 %v7732, %v8740
    %8742 = vmatmul.bf16.gmra.mxu0 %v3824
    %v8743 = vpop.f32.mrf.mxu0
    %v8744 = vadd.f32 %v7735, %v8743
    %v8745 = vpop.f32.mrf.mxu0
    %v8746 = vadd.f32 %v7737, %v8745
    %8747 = vmatmul.bf16.gmra.mxu0 %v3828
    %v8748 = vpop.f32.mrf.mxu0
    %v8749 = vadd.f32 %v7740, %v8748
    %v8750 = vpop.f32.mrf.mxu0
    %v8751 = vadd.f32 %v7742, %v8750
    %8752 = vmatmul.bf16.gmra.mxu0 %v3832
    %v8753 = vpop.f32.mrf.mxu0
    %v8754 = vadd.f32 %v7745, %v8753
    %v8755 = vpop.f32.mrf.mxu0
    %v8756 = vadd.f32 %v7747, %v8755
    %8757 = vmatmul.bf16.gmra.mxu0 %v3836
    %v8758 = vpop.f32.mrf.mxu0
    %v8759 = vadd.f32 %v7750, %v8758
    %v8760 = vpop.f32.mrf.mxu0
    %v8761 = vadd.f32 %v7752, %v8760
    %8762 = vmatmul.bf16.gmra.mxu0 %v3840
    %v8763 = vpop.f32.mrf.mxu0
    %v8764 = vadd.f32 %v7755, %v8763
    %v8765 = vpop.f32.mrf.mxu0
    %v8766 = vadd.f32 %v7757, %v8765
    %8767 = vmatmul.bf16.gmra.mxu0 %v3844
    %v8768 = vpop.f32.mrf.mxu0
    %v8769 = vadd.f32 %v7760, %v8768
    %v8770 = vpop.f32.mrf.mxu0
    %v8771 = vadd.f32 %v7762, %v8770
    %8772 = vmatmul.bf16.gmra.mxu0 %v3848
    %v8773 = vpop.f32.mrf.mxu0
    %v8774 = vadd.f32 %v7765, %v8773
    %v8775 = vpop.f32.mrf.mxu0
    %v8776 = vadd.f32 %v7767, %v8775
    %8777 = vmatmul.bf16.gmra.mxu0 %v3852
    %v8778 = vpop.f32.mrf.mxu0
    %v8779 = vadd.f32 %v7770, %v8778
    %v8780 = vpop.f32.mrf.mxu0
    %v8781 = vadd.f32 %v7772, %v8780
    %8782 = vmatmul.bf16.gmra.mxu0 %v3856
    %v8783 = vpop.f32.mrf.mxu0
    %v8784 = vadd.f32 %v7775, %v8783
    %v8785 = vpop.f32.mrf.mxu0
    %v8786 = vadd.f32 %v7777, %v8785
    %8787 = vmatmul.bf16.gmra.mxu0 %v3860
    %v8788 = vpop.f32.mrf.mxu0
    %v8789 = vadd.f32 %v7780, %v8788
    %v8790 = vpop.f32.mrf.mxu0
    %v8791 = vadd.f32 %v7782, %v8790
    %8792 = vmatmul.bf16.gmra.mxu0 %v3864
    %v8793 = vpop.f32.mrf.mxu0
    %v8794 = vadd.f32 %v7785, %v8793
    %v8795 = vpop.f32.mrf.mxu0
    %v8796 = vadd.f32 %v7787, %v8795
    %8797 = vmatmul.bf16.gmra.mxu0 %v3868
    %v8798 = vpop.f32.mrf.mxu0
    %v8799 = vadd.f32 %v7790, %v8798
    %v8800 = vpop.f32.mrf.mxu0
    %v8801 = vadd.f32 %v7792, %v8800
    %8802 = vmatmul.bf16.gmra.mxu0 %v3872
    %v8803 = vpop.f32.mrf.mxu0
    %v8804 = vadd.f32 %v7795, %v8803
    %v8805 = vpop.f32.mrf.mxu0
    %v8806 = vadd.f32 %v7797, %v8805
    %8807 = vmatmul.bf16.gmra.mxu0 %v3876
    %v8808 = vpop.f32.mrf.mxu0
    %v8809 = vadd.f32 %v7800, %v8808
    %v8810 = vpop.f32.mrf.mxu0
    %v8811 = vadd.f32 %v7802, %v8810
    %8812 = vmatmul.bf16.gmra.mxu0 %v3880
    %v8813 = vpop.f32.mrf.mxu0
    %v8814 = vadd.f32 %v7805, %v8813
    %v8815 = vpop.f32.mrf.mxu0
    %v8816 = vadd.f32 %v7807, %v8815
    %8817 = vmatmul.bf16.gmra.mxu0 %v3884
    %v8818 = vpop.f32.mrf.mxu0
    %v8819 = vadd.f32 %v7810, %v8818
    %v8820 = vpop.f32.mrf.mxu0
    %v8821 = vadd.f32 %v7812, %v8820
    %8822 = vmatmul.bf16.gmra.mxu0 %v3888
    %v8823 = vpop.f32.mrf.mxu0
    %v8824 = vadd.f32 %v7815, %v8823
    %v8825 = vpop.f32.mrf.mxu0
    %v8826 = vadd.f32 %v7817, %v8825
    %8827 = vmatmul.bf16.gmra.mxu0 %v3892
    %v8828 = vpop.f32.mrf.mxu0
    %v8829 = vadd.f32 %v7820, %v8828
    %v8830 = vpop.f32.mrf.mxu0
    %v8831 = vadd.f32 %v7822, %v8830
    %8832 = vmatmul.bf16.gmra.mxu0 %v3896
    %v8833 = vpop.f32.mrf.mxu0
    %v8834 = vadd.f32 %v7825, %v8833
    %v8835 = vpop.f32.mrf.mxu0
    %v8836 = vadd.f32 %v7827, %v8835
    %8837 = vmatmul.bf16.gmra.mxu0 %v3900
    %v8838 = vpop.f32.mrf.mxu0
    %v8839 = vadd.f32 %v7830, %v8838
    %v8840 = vpop.f32.mrf.mxu0
    %v8841 = vadd.f32 %v7832, %v8840
    %8842 = vmatmul.bf16.gmra.mxu0 %v3904
    %v8843 = vpop.f32.mrf.mxu0
    %v8844 = vadd.f32 %v7835, %v8843
    %v8845 = vpop.f32.mrf.mxu0
    %v8846 = vadd.f32 %v7837, %v8845
    %8847 = vmatmul.bf16.gmra.mxu0 %v3908
    %v8848 = vpop.f32.mrf.mxu0
    %v8849 = vadd.f32 %v7840, %v8848
    %v8850 = vpop.f32.mrf.mxu0
    %v8851 = vadd.f32 %v7842, %v8850
    %8852 = vmatmul.bf16.gmra.mxu0 %v3912
    %v8853 = vpop.f32.mrf.mxu0
    %v8854 = vadd.f32 %v7845, %v8853
    %v8855 = vpop.f32.mrf.mxu0
    %v8856 = vadd.f32 %v7847, %v8855
    %8857 = vmatmul.bf16.gmra.mxu0 %v3916
    %v8858 = vpop.f32.mrf.mxu0
    %v8859 = vadd.f32 %v7850, %v8858
    %v8860 = vpop.f32.mrf.mxu0
    %v8861 = vadd.f32 %v7852, %v8860
    %8862 = vmatmul.bf16.gmra.mxu0 %v3920
    %v8863 = vpop.f32.mrf.mxu0
    %v8864 = vadd.f32 %v7855, %v8863
    %v8865 = vpop.f32.mrf.mxu0
    %v8866 = vadd.f32 %v7857, %v8865
    %8867 = vmatmul.bf16.gmra.mxu0 %v3924
    %v8868 = vpop.f32.mrf.mxu0
    %v8869 = vadd.f32 %v7860, %v8868
    %v8870 = vpop.f32.mrf.mxu0
    %v8871 = vadd.f32 %v7862, %v8870
    %8872 = vmatmul.bf16.gmra.mxu0 %v3928
    %v8873 = vpop.f32.mrf.mxu0
    %v8874 = vadd.f32 %v7865, %v8873
    %v8875 = vpop.f32.mrf.mxu0
    %v8876 = vadd.f32 %v7867, %v8875
    %8877 = vmatmul.bf16.gmra.mxu0 %v3932
    %v8878 = vpop.f32.mrf.mxu0
    %v8879 = vadd.f32 %v7870, %v8878
    %v8880 = vpop.f32.mrf.mxu0
    %v8881 = vadd.f32 %v7872, %v8880
    %8882 = vmatmul.bf16.gmra.mxu0 %v3936
    %v8883 = vpop.f32.mrf.mxu0
    %v8884 = vadd.f32 %v7875, %v8883
    %v8885 = vpop.f32.mrf.mxu0
    %v8886 = vadd.f32 %v7877, %v8885
    %8887 = vmatmul.bf16.gmra.mxu0 %v3940
    %v8888 = vpop.f32.mrf.mxu0
    %v8889 = vadd.f32 %v7880, %v8888
    %v8890 = vpop.f32.mrf.mxu0
    %v8891 = vadd.f32 %v7882, %v8890
    %8892 = vmatmul.bf16.gmra.mxu0 %v3944
    %v8893 = vpop.f32.mrf.mxu0
    %v8894 = vadd.f32 %v7885, %v8893
    %v8895 = vpop.f32.mrf.mxu0
    %v8896 = vadd.f32 %v7887, %v8895
    %8897 = vmatmul.bf16.gmra.mxu0 %v3948
    %v8898 = vpop.f32.mrf.mxu0
    %v8899 = vadd.f32 %v7890, %v8898
    %v8900 = vpop.f32.mrf.mxu0
    %v8901 = vadd.f32 %v7892, %v8900
    %8902 = vmatmul.bf16.gmra.mxu0 %v3952
    %v8903 = vpop.f32.mrf.mxu0
    %v8904 = vadd.f32 %v7895, %v8903
    %v8905 = vpop.f32.mrf.mxu0
    %v8906 = vadd.f32 %v7897, %v8905
    %8907 = vmatmul.bf16.gmra.mxu0 %v3956
    %v8908 = vpop.f32.mrf.mxu0
    %v8909 = vadd.f32 %v7900, %v8908
    %v8910 = vpop.f32.mrf.mxu0
    %v8911 = vadd.f32 %v7902, %v8910
    %8912 = vmatmul.bf16.gmra.mxu0 %v3960
    %v8913 = vpop.f32.mrf.mxu0
    %v8914 = vadd.f32 %v7905, %v8913
    %v8915 = vpop.f32.mrf.mxu0
    %v8916 = vadd.f32 %v7907, %v8915
    %8917 = vmatmul.bf16.gmra.mxu0 %v3964
    %v8918 = vpop.f32.mrf.mxu0
    %v8919 = vadd.f32 %v7910, %v8918
    %v8920 = vpop.f32.mrf.mxu0
    %v8921 = vadd.f32 %v7912, %v8920
    %8922 = vmatmul.bf16.gmra.mxu0 %v3968
    %v8923 = vpop.f32.mrf.mxu0
    %v8924 = vadd.f32 %v7915, %v8923
    %v8925 = vpop.f32.mrf.mxu0
    %v8926 = vadd.f32 %v7917, %v8925
    %8927 = vmatmul.bf16.gmra.mxu0 %v3972
    %v8928 = vpop.f32.mrf.mxu0
    %v8929 = vadd.f32 %v7920, %v8928
    %v8930 = vpop.f32.mrf.mxu0
    %v8931 = vadd.f32 %v7922, %v8930
    %8932 = vmatmul.bf16.gmra.mxu0 %v3976
    %v8933 = vpop.f32.mrf.mxu0
    %v8934 = vadd.f32 %v7925, %v8933
    %v8935 = vpop.f32.mrf.mxu0
    %v8936 = vadd.f32 %v7927, %v8935
    %8937 = vmatmul.bf16.gmra.mxu0 %v3980
    %v8938 = vpop.f32.mrf.mxu0
    %v8939 = vadd.f32 %v7930, %v8938
    %v8940 = vpop.f32.mrf.mxu0
    %v8941 = vadd.f32 %v7932, %v8940
    %8942 = vmatmul.bf16.gmra.mxu0 %v3984
    %v8943 = vpop.f32.mrf.mxu0
    %v8944 = vadd.f32 %v7935, %v8943
    %v8945 = vpop.f32.mrf.mxu0
    %v8946 = vadd.f32 %v7937, %v8945
    %8947 = vmatmul.bf16.gmra.mxu0 %v3988
    %v8948 = vpop.f32.mrf.mxu0
    %v8949 = vadd.f32 %v7940, %v8948
    %v8950 = vpop.f32.mrf.mxu0
    %v8951 = vadd.f32 %v7942, %v8950
    %8952 = vmatmul.bf16.gmra.mxu0 %v3992
    %v8953 = vpop.f32.mrf.mxu0
    %v8954 = vadd.f32 %v7945, %v8953
    %v8955 = vpop.f32.mrf.mxu0
    %v8956 = vadd.f32 %v7947, %v8955
    %8957 = vmatmul.bf16.gmra.mxu0 %v3996
    %v8958 = vpop.f32.mrf.mxu0
    %v8959 = vadd.f32 %v7950, %v8958
    %v8960 = vpop.f32.mrf.mxu0
    %v8961 = vadd.f32 %v7952, %v8960
    %8962 = vmatmul.bf16.gmra.mxu0 %v4000
    %v8963 = vpop.f32.mrf.mxu0
    %v8964 = vadd.f32 %v7955, %v8963
    %v8965 = vpop.f32.mrf.mxu0
    %v8966 = vadd.f32 %v7957, %v8965
    %8967 = vmatmul.bf16.gmra.mxu0 %v4004
    %v8968 = vpop.f32.mrf.mxu0
    %v8969 = vadd.f32 %v7960, %v8968
    %v8970 = vpop.f32.mrf.mxu0
    %v8971 = vadd.f32 %v7962, %v8970
    %8972 = vmatmul.bf16.gmra.mxu0 %v4008
    %v8973 = vpop.f32.mrf.mxu0
    %v8974 = vadd.f32 %v7965, %v8973
    %v8975 = vpop.f32.mrf.mxu0
    %v8976 = vadd.f32 %v7967, %v8975
    %8977 = vmatmul.bf16.gmra.mxu0 %v4012
    %v8978 = vpop.f32.mrf.mxu0
    %v8979 = vadd.f32 %v7970, %v8978
    %v8980 = vpop.f32.mrf.mxu0
    %v8981 = vadd.f32 %v7972, %v8980
    %8982 = vmatmul.bf16.gmra.mxu0 %v4016
    %v8983 = vpop.f32.mrf.mxu0
    %v8984 = vadd.f32 %v7975, %v8983
    %v8985 = vpop.f32.mrf.mxu0
    %v8986 = vadd.f32 %v7977, %v8985
    %8987 = vmatmul.bf16.gmra.mxu0 %v4020
    %v8988 = vpop.f32.mrf.mxu0
    %v8989 = vadd.f32 %v7980, %v8988
    %v8990 = vpop.f32.mrf.mxu0
    %v8991 = vadd.f32 %v7982, %v8990
    %8992 = vmatmul.bf16.gmra.mxu0 %v4024
    %v8993 = vpop.f32.mrf.mxu0
    %v8994 = vadd.f32 %v7985, %v8993
    %v8995 = vpop.f32.mrf.mxu0
    %v8996 = vadd.f32 %v7987, %v8995
    %8997 = vmatmul.bf16.gmra.mxu0 %v4028
    %v8998 = vpop.f32.mrf.mxu0
    %v8999 = vadd.f32 %v7990, %v8998
    %v9000 = vpop.f32.mrf.mxu0
    %v9001 = vadd.f32 %v7992, %v9000
    %9002 = vmatmul.bf16.gmra.mxu0 %v4032
    %v9003 = vpop.f32.mrf.mxu0
    %v9004 = vadd.f32 %v7995, %v9003
    %v9005 = vpop.f32.mrf.mxu0
    %v9006 = vadd.f32 %v7997, %v9005
    %9007 = vmatmul.bf16.gmra.mxu0 %v4036
    %v9008 = vpop.f32.mrf.mxu0
    %v9009 = vadd.f32 %v8000, %v9008
    %v9010 = vpop.f32.mrf.mxu0
    %v9011 = vadd.f32 %v8002, %v9010
    %9012 = vmatmul.bf16.gmra.mxu0 %v4040
    %v9013 = vpop.f32.mrf.mxu0
    %v9014 = vadd.f32 %v8005, %v9013
    %v9015 = vpop.f32.mrf.mxu0
    %v9016 = vadd.f32 %v8007, %v9015
    %9017 = vmatmul.bf16.gmra.mxu0 %v4044
    %v9018 = vpop.f32.mrf.mxu0
    %v9019 = vadd.f32 %v8010, %v9018
    %v9020 = vpop.f32.mrf.mxu0
    %v9021 = vadd.f32 %v8012, %v9020
    %9022 = vmatmul.bf16.gmra.mxu0 %v4048
    %v9023 = vpop.f32.mrf.mxu0
    %v9024 = vadd.f32 %v8015, %v9023
    %v9025 = vpop.f32.mrf.mxu0
    %v9026 = vadd.f32 %v8017, %v9025
    %9027 = vmatmul.bf16.gmra.mxu0 %v4052
    %v9028 = vpop.f32.mrf.mxu0
    %v9029 = vadd.f32 %v8020, %v9028
    %v9030 = vpop.f32.mrf.mxu0
    %v9031 = vadd.f32 %v8022, %v9030
    %9032 = vmatmul.bf16.gmra.mxu0 %v4056
    %v9033 = vpop.f32.mrf.mxu0
    %v9034 = vadd.f32 %v8025, %v9033
    %v9035 = vpop.f32.mrf.mxu0
    %v9036 = vadd.f32 %v8027, %v9035
    %9037 = vmatmul.bf16.gmra.mxu0 %v4060
    %v9038 = vpop.f32.mrf.mxu0
    %v9039 = vadd.f32 %v8030, %v9038
    %v9040 = vpop.f32.mrf.mxu0
    %v9041 = vadd.f32 %v8032, %v9040
    %9042 = vmatmul.bf16.gmra.mxu0 %v4064
    %v9043 = vpop.f32.mrf.mxu0
    %v9044 = vadd.f32 %v8035, %v9043
    %v9045 = vpop.f32.mrf.mxu0
    %v9046 = vadd.f32 %v8037, %v9045
    %9047 = vmatmul.bf16.gmra.mxu0 %v4068
    %v9048 = vpop.f32.mrf.mxu0
    %v9049 = vadd.f32 %v8040, %v9048
    %v9050 = vpop.f32.mrf.mxu0
    %v9051 = vadd.f32 %v8042, %v9050
    %9052 = vmatmul.bf16.gmra.mxu0 %v4072
    %v9053 = vpop.f32.mrf.mxu0
    %v9054 = vadd.f32 %v8045, %v9053
    %v9055 = vpop.f32.mrf.mxu0
    %v9056 = vadd.f32 %v8047, %v9055
    %9057 = vmatmul.bf16.gmra.mxu0 %v4076
    %v9058 = vpop.f32.mrf.mxu0
    %v9059 = vadd.f32 %v8050, %v9058
    %v9060 = vpop.f32.mrf.mxu0
    %v9061 = vadd.f32 %v8052, %v9060
    %9062 = vmatmul.bf16.gmra.mxu0 %v4080
    %v9063 = vpop.f32.mrf.mxu0
    %v9064 = vadd.f32 %v8055, %v9063
    %v9065 = vpop.f32.mrf.mxu0
    %v9066 = vadd.f32 %v8057, %v9065
    %9067 = vmatmul.bf16.gmra.mxu0 %v4084
    %v9068 = vpop.f32.mrf.mxu0
    %v9069 = vadd.f32 %v8060, %v9068
    %v9070 = vpop.f32.mrf.mxu0
    %v9071 = vadd.f32 %v8062, %v9070
    %9072 = vmatmul.bf16.gmra.mxu0 %v4088
    %v9073 = vpop.f32.mrf.mxu0
    %v9074 = vadd.f32 %v8065, %v9073
    %v9075 = vpop.f32.mrf.mxu0
    %v9076 = vadd.f32 %v8067, %v9075
    %9077 = vmatmul.bf16.gmra.mxu0 %v4092
    %v9078 = vpop.f32.mrf.mxu0
    %v9079 = vadd.f32 %v8070, %v9078
    %v9080 = vpop.f32.mrf.mxu0
    %v9081 = vadd.f32 %v8072, %v9080
    %9082 = vmatmul.bf16.gmra.mxu0 %v4096
    %v9083 = vpop.f32.mrf.mxu0
    %v9084 = vadd.f32 %v8075, %v9083
    %v9085 = vpop.f32.mrf.mxu0
    %v9086 = vadd.f32 %v8077, %v9085
    %9087 = vmatmul.bf16.gmra.mxu0 %v4100
    %v9088 = vpop.f32.mrf.mxu0
    %v9089 = vadd.f32 %v8080, %v9088
    %v9090 = vpop.f32.mrf.mxu0
    %v9091 = vadd.f32 %v8082, %v9090
    %9092 = vmatmul.bf16.gmra.mxu0 %v4104
    %v9093 = vpop.f32.mrf.mxu0
    %v9094 = vadd.f32 %v8085, %v9093
    %v9095 = vpop.f32.mrf.mxu0
    %v9096 = vadd.f32 %v8087, %v9095
    %9097 = vmatmul.bf16.gmra.mxu0 %v4108
    %v9098 = vpop.f32.mrf.mxu0
    %v9099 = vadd.f32 %v8090, %v9098
    %v9100 = vpop.f32.mrf.mxu0
    %v9101 = vadd.f32 %v8092, %v9100
    %9102 = vmatmul.bf16.gmra.mxu0 %v4112
    %v9103 = vpop.f32.mrf.mxu0
    %v9104 = vadd.f32 %v8095, %v9103
    %v9105 = vpop.f32.mrf.mxu0
    %v9106 = vadd.f32 %v8097, %v9105
    %9107 = vmatmul.bf16.gmra.mxu0 %v4116
    %v9108 = vpop.f32.mrf.mxu0
    %v9109 = vadd.f32 %v8100, %v9108
    %v9110 = vpop.f32.mrf.mxu0
    %v9111 = vadd.f32 %v8102, %v9110
    %9112 = vmatmul.bf16.gmra.mxu0 %v4120
    %v9113 = vpop.f32.mrf.mxu0
    %v9114 = vadd.f32 %v8105, %v9113
    %v9115 = vpop.f32.mrf.mxu0
    %v9116 = vadd.f32 %v8107, %v9115
    %9117 = vmatmul.bf16.gmra.mxu0 %v4124
    %v9118 = vpop.f32.mrf.mxu0
    %v9119 = vadd.f32 %v8110, %v9118
    %v9120 = vpop.f32.mrf.mxu0
    %v9121 = vadd.f32 %v8112, %v9120
    %9122 = vmatmul.bf16.gmra.mxu0 %v4128
    %v9123 = vpop.f32.mrf.mxu0
    %v9124 = vadd.f32 %v8115, %v9123
    %v9125 = vpop.f32.mrf.mxu0
    %v9126 = vadd.f32 %v8117, %v9125
    %9127 = vmatmul.bf16.gmra.mxu0 %v4132
    %v9128 = vpop.f32.mrf.mxu0
    %v9129 = vadd.f32 %v8120, %v9128
    %v9130 = vpop.f32.mrf.mxu0
    %v9131 = vadd.f32 %v8122, %v9130
    %9132 = vmatmul.bf16.gmra.mxu0 %v4136
    %v9133 = vpop.f32.mrf.mxu0
    %v9134 = vadd.f32 %v8125, %v9133
    %v9135 = vpop.f32.mrf.mxu0
    %v9136 = vadd.f32 %v8127, %v9135
    %9137 = vmatmul.bf16.gmra.mxu0 %v4140
    %v9138 = vpop.f32.mrf.mxu0
    %v9139 = vadd.f32 %v8130, %v9138
    %v9140 = vpop.f32.mrf.mxu0
    %v9141 = vadd.f32 %v8132, %v9140
    %9142 = vmatmul.bf16.gmra.mxu0 %v4144
    %v9143 = vpop.f32.mrf.mxu0
    %v9144 = vadd.f32 %v8135, %v9143
    %v9145 = vpop.f32.mrf.mxu0
    %v9146 = vadd.f32 %v8137, %v9145
    %9147 = vmatmul.bf16.gmra.mxu0 %v4148
    %v9148 = vpop.f32.mrf.mxu0
    %v9149 = vadd.f32 %v8140, %v9148
    %v9150 = vpop.f32.mrf.mxu0
    %v9151 = vadd.f32 %v8142, %v9150
    %9152 = vmatmul.bf16.gmra.mxu0 %v4152
    %v9153 = vpop.f32.mrf.mxu0
    %v9154 = vadd.f32 %v8145, %v9153
    %v9155 = vpop.f32.mrf.mxu0
    %v9156 = vadd.f32 %v8147, %v9155
    %9157 = vmatmul.bf16.gmra.mxu0 %v4156
    %v9158 = vpop.f32.mrf.mxu0
    %v9159 = vadd.f32 %v8150, %v9158
    %v9160 = vpop.f32.mrf.mxu0
    %v9161 = vadd.f32 %v8152, %v9160
    %9162 = vmatmul.bf16.gmra.mxu0 %v4160
    %v9163 = vpop.f32.mrf.mxu0
    %v9164 = vadd.f32 %v8155, %v9163
    %v9165 = vpop.f32.mrf.mxu0
    %v9166 = vadd.f32 %v8157, %v9165
    %9167 = vmatmul.bf16.gmra.mxu0 %v4164
    %v9168 = vpop.f32.mrf.mxu0
    %v9169 = vadd.f32 %v8160, %v9168
    %v9170 = vpop.f32.mrf.mxu0
    %v9171 = vadd.f32 %v8162, %v9170
    %9172 = vmatmul.bf16.gmra.mxu0 %v4168
    %v9173 = vpop.f32.mrf.mxu0
    %v9174 = vadd.f32 %v8165, %v9173
    %v9175 = vpop.f32.mrf.mxu0
    %v9176 = vadd.f32 %v8167, %v9175
    %9177 = vmatmul.bf16.gmra.mxu0 %v4172
    %v9178 = vpop.f32.mrf.mxu0
    %v9179 = vadd.f32 %v8170, %v9178
    %v9180 = vpop.f32.mrf.mxu0
    %v9181 = vadd.f32 %v8172, %v9180
    %9182 = vmatmul.bf16.gmra.mxu0 %v4176
    %v9183 = vpop.f32.mrf.mxu0
    %v9184 = vadd.f32 %v8175, %v9183
    %v9185 = vpop.f32.mrf.mxu0
    %v9186 = vadd.f32 %v8177, %v9185
    %9187 = vmatmul.bf16.gmra.mxu0 %v4180
    %v9188 = vpop.f32.mrf.mxu0
    %v9189 = vadd.f32 %v8180, %v9188
    %v9190 = vpop.f32.mrf.mxu0
    %v9191 = vadd.f32 %v8182, %v9190
    %9192 = vmatmul.bf16.gmra.mxu0 %v4184
    %v9193 = vpop.f32.mrf.mxu0
    %v9194 = vadd.f32 %v8185, %v9193
    %v9195 = vpop.f32.mrf.mxu0
    %v9196 = vadd.f32 %v8187, %v9195
    %9197 = vmatmul.bf16.gmra.mxu0 %v4188
    %v9198 = vpop.f32.mrf.mxu0
    %v9199 = vadd.f32 %v8190, %v9198
    %v9200 = vpop.f32.mrf.mxu0
    %v9201 = vadd.f32 %v8192, %v9200
    %9202 = vmatmul.bf16.gmra.mxu0 %v4192
    %v9203 = vpop.f32.mrf.mxu0
    %v9204 = vadd.f32 %v8195, %v9203
    %v9205 = vpop.f32.mrf.mxu0
    %v9206 = vadd.f32 %v8197, %v9205
    %9207 = vmatmul.bf16.gmra.mxu0 %v4196
    %v9208 = vpop.f32.mrf.mxu0
    %v9209 = vadd.f32 %v8200, %v9208
    %v9210 = vpop.f32.mrf.mxu0
    %v9211 = vadd.f32 %v8202, %v9210
    %9212 = vmatmul.bf16.gmra.mxu0 %v4200
    %v9213 = vpop.f32.mrf.mxu0
    %v9214 = vadd.f32 %v8205, %v9213
    %v9215 = vpop.f32.mrf.mxu0
    %v9216 = vadd.f32 %v8207, %v9215
    %9217 = vmatmul.bf16.gmra.mxu0 %v4204
    %v9218 = vpop.f32.mrf.mxu0
    %v9219 = vadd.f32 %v8210, %v9218
    %v9220 = vpop.f32.mrf.mxu0
    %v9221 = vadd.f32 %v8212, %v9220
    %9222 = vmatmul.bf16.gmra.mxu0 %v4208
    %v9223 = vpop.f32.mrf.mxu0
    %v9224 = vadd.f32 %v8215, %v9223
    %v9225 = vpop.f32.mrf.mxu0
    %v9226 = vadd.f32 %v8217, %v9225
    %9227 = vmatmul.bf16.gmra.mxu0 %v4212
    %v9228 = vpop.f32.mrf.mxu0
    %v9229 = vadd.f32 %v8220, %v9228
    %v9230 = vpop.f32.mrf.mxu0
    %v9231 = vadd.f32 %v8222, %v9230
    %9232 = vmatmul.bf16.gmra.mxu0 %v4216
    %v9233 = vpop.f32.mrf.mxu0
    %v9234 = vadd.f32 %v8225, %v9233
    %v9235 = vpop.f32.mrf.mxu0
    %v9236 = vadd.f32 %v8227, %v9235
    %9237 = vmatmul.bf16.gmra.mxu0 %v4220
    %v9238 = vpop.f32.mrf.mxu0
    %v9239 = vadd.f32 %v8230, %v9238
    %v9240 = vpop.f32.mrf.mxu0
    %v9241 = vadd.f32 %v8232, %v9240
    %9242 = vmatmul.bf16.gmra.mxu0 %v4224
    %v9243 = vpop.f32.mrf.mxu0
    %v9244 = vadd.f32 %v8235, %v9243
    %v9245 = vpop.f32.mrf.mxu0
    %v9246 = vadd.f32 %v8237, %v9245
    %9247 = vmatmul.bf16.gmra.mxu0 %v4228
    %v9248 = vpop.f32.mrf.mxu0
    %v9249 = vadd.f32 %v8240, %v9248
    %v9250 = vpop.f32.mrf.mxu0
    %v9251 = vadd.f32 %v8242, %v9250
    %9252 = vmatmul.bf16.gmra.mxu0 %v4232
    %v9253 = vpop.f32.mrf.mxu0
    %v9254 = vadd.f32 %v8245, %v9253
    %v9255 = vpop.f32.mrf.mxu0
    %v9256 = vadd.f32 %v8247, %v9255
    %9257 = vmatmul.bf16.gmra.mxu0 %v4236
    %v9258 = vpop.f32.mrf.mxu0
    %v9259 = vadd.f32 %v8250, %v9258
    %v9260 = vpop.f32.mrf.mxu0
    %v9261 = vadd.f32 %v8252, %v9260
    %9262 = vmatmul.bf16.gmra.mxu0 %v4240
    %v9263 = vpop.f32.mrf.mxu0
    %v9264 = vadd.f32 %v8255, %v9263
    %v9265 = vpop.f32.mrf.mxu0
    %v9266 = vadd.f32 %v8257, %v9265
    %9267 = vmatmul.bf16.gmra.mxu0 %v4244
    %v9268 = vpop.f32.mrf.mxu0
    %v9269 = vadd.f32 %v8260, %v9268
    %v9270 = vpop.f32.mrf.mxu0
    %v9271 = vadd.f32 %v8262, %v9270
    %9272 = vdwg.mxu0
    %v9273 = vld [vmem:[#allocation4] sm:$0x1]
    %v9274 = vperm.slane %v9273, 0
    %v9275 = vmul.f32 %v8274, %v9274
    %v9276 = vmul.f32 %v8276, %v9274
    %v9277 = vmul.f32 %v8279, %v9274
    %v9278 = vmul.f32 %v8281, %v9274
    %v9279 = vmul.f32 %v8284, %v9274
    %v9280 = vmul.f32 %v8286, %v9274
    %v9281 = vmul.f32 %v8289, %v9274
    %v9282 = vmul.f32 %v8291, %v9274
    %v9283 = vmul.f32 %v8294, %v9274
    %v9284 = vmul.f32 %v8296, %v9274
    %v9285 = vmul.f32 %v8299, %v9274
    %v9286 = vmul.f32 %v8301, %v9274
    %v9287 = vmul.f32 %v8304, %v9274
    %v9288 = vmul.f32 %v8306, %v9274
    %v9289 = vmul.f32 %v8309, %v9274
    %v9290 = vmul.f32 %v8311, %v9274
    %v9291 = vadd.f32 %v9275, 0.0
    %v9292 = vadd.f32 %v9276, 0.0
    %v9293 = vadd.f32 %v9277, 0.0
    %v9294 = vadd.f32 %v9278, 0.0
    %v9295 = vadd.f32 %v9279, 0.0
    %v9296 = vadd.f32 %v9280, 0.0
    %v9297 = vadd.f32 %v9281, 0.0
    %v9298 = vadd.f32 %v9282, 0.0
    %v9299 = vadd.f32 %v9283, 0.0
    %v9300 = vadd.f32 %v9284, 0.0
    %v9301 = vadd.f32 %v9285, 0.0
    %v9302 = vadd.f32 %v9286, 0.0
    %v9303 = vadd.f32 %v9287, 0.0
    %v9304 = vadd.f32 %v9288, 0.0
    %v9305 = vadd.f32 %v9289, 0.0
    %v9306 = vadd.f32 %v9290, 0.0
    %v9307 = vld [vmem:[#allocation4 + $0x1] sm:$0x1]
    %v9308 = vperm.slane %v9307, 0
    %v9309 = vmul.f32 %v8314, %v9308
    %v9310 = vmul.f32 %v8316, %v9308
    %v9311 = vmul.f32 %v8319, %v9308
    %v9312 = vmul.f32 %v8321, %v9308
    %v9313 = vmul.f32 %v8324, %v9308
    %v9314 = vmul.f32 %v8326, %v9308
    %v9315 = vmul.f32 %v8329, %v9308
    %v9316 = vmul.f32 %v8331, %v9308
    %v9317 = vmul.f32 %v8334, %v9308
    %v9318 = vmul.f32 %v8336, %v9308
    %v9319 = vmul.f32 %v8339, %v9308
    %v9320 = vmul.f32 %v8341, %v9308
    %v9321 = vmul.f32 %v8344, %v9308
    %v9322 = vmul.f32 %v8346, %v9308
    %v9323 = vmul.f32 %v8349, %v9308
    %v9324 = vmul.f32 %v8351, %v9308
    %v9325 = vadd.f32 %v9291, %v9309
    %v9326 = vadd.f32 %v9292, %v9310
    %v9327 = vadd.f32 %v9293, %v9311
    %v9328 = vadd.f32 %v9294, %v9312
    %v9329 = vadd.f32 %v9295, %v9313
    %v9330 = vadd.f32 %v9296, %v9314
    %v9331 = vadd.f32 %v9297, %v9315
    %v9332 = vadd.f32 %v9298, %v9316
    %v9333 = vadd.f32 %v9299, %v9317
    %v9334 = vadd.f32 %v9300, %v9318
    %v9335 = vadd.f32 %v9301, %v9319
    %v9336 = vadd.f32 %v9302, %v9320
    %v9337 = vadd.f32 %v9303, %v9321
    %v9338 = vadd.f32 %v9304, %v9322
    %v9339 = vadd.f32 %v9305, %v9323
    %v9340 = vadd.f32 %v9306, %v9324
    %v9341 = vld [vmem:[#allocation4 + $0x2] sm:$0x1]
    %v9342 = vperm.slane %v9341, 0
    %v9343 = vmul.f32 %v8354, %v9342
    %v9344 = vmul.f32 %v8356, %v9342
    %v9345 = vmul.f32 %v8359, %v9342
    %v9346 = vmul.f32 %v8361, %v9342
    %v9347 = vmul.f32 %v8364, %v9342
    %v9348 = vmul.f32 %v8366, %v9342
    %v9349 = vmul.f32 %v8369, %v9342
    %v9350 = vmul.f32 %v8371, %v9342
    %v9351 = vmul.f32 %v8374, %v9342
    %v9352 = vmul.f32 %v8376, %v9342
    %v9353 = vmul.f32 %v8379, %v9342
    %v9354 = vmul.f32 %v8381, %v9342
    %v9355 = vmul.f32 %v8384, %v9342
    %v9356 = vmul.f32 %v8386, %v9342
    %v9357 = vmul.f32 %v8389, %v9342
    %v9358 = vmul.f32 %v8391, %v9342
    %v9359 = vadd.f32 %v9325, %v9343
    %v9360 = vadd.f32 %v9326, %v9344
    %v9361 = vadd.f32 %v9327, %v9345
    %v9362 = vadd.f32 %v9328, %v9346
    %v9363 = vadd.f32 %v9329, %v9347
    %v9364 = vadd.f32 %v9330, %v9348
    %v9365 = vadd.f32 %v9331, %v9349
    %v9366 = vadd.f32 %v9332, %v9350
    %v9367 = vadd.f32 %v9333, %v9351
    %v9368 = vadd.f32 %v9334, %v9352
    %v9369 = vadd.f32 %v9335, %v9353
    %v9370 = vadd.f32 %v9336, %v9354
    %v9371 = vadd.f32 %v9337, %v9355
    %v9372 = vadd.f32 %v9338, %v9356
    %v9373 = vadd.f32 %v9339, %v9357
    %v9374 = vadd.f32 %v9340, %v9358
    %v9375 = vld [vmem:[#allocation4 + $0x3] sm:$0x1]
    %v9376 = vperm.slane %v9375, 0
    %v9377 = vmul.f32 %v8394, %v9376
    %v9378 = vmul.f32 %v8396, %v9376
    %v9379 = vmul.f32 %v8399, %v9376
    %v9380 = vmul.f32 %v8401, %v9376
    %v9381 = vmul.f32 %v8404, %v9376
    %v9382 = vmul.f32 %v8406, %v9376
    %v9383 = vmul.f32 %v8409, %v9376
    %v9384 = vmul.f32 %v8411, %v9376
    %v9385 = vmul.f32 %v8414, %v9376
    %v9386 = vmul.f32 %v8416, %v9376
    %v9387 = vmul.f32 %v8419, %v9376
    %v9388 = vmul.f32 %v8421, %v9376
    %v9389 = vmul.f32 %v8424, %v9376
    %v9390 = vmul.f32 %v8426, %v9376
    %v9391 = vmul.f32 %v8429, %v9376
    %v9392 = vmul.f32 %v8431, %v9376
    %v9393 = vadd.f32 %v9359, %v9377
    %v9394 = vadd.f32 %v9360, %v9378
    %v9395 = vadd.f32 %v9361, %v9379
    %v9396 = vadd.f32 %v9362, %v9380
    %v9397 = vadd.f32 %v9363, %v9381
    %v9398 = vadd.f32 %v9364, %v9382
    %v9399 = vadd.f32 %v9365, %v9383
    %v9400 = vadd.f32 %v9366, %v9384
    %v9401 = vadd.f32 %v9367, %v9385
    %v9402 = vadd.f32 %v9368, %v9386
    %v9403 = vadd.f32 %v9369, %v9387
    %v9404 = vadd.f32 %v9370, %v9388
    %v9405 = vadd.f32 %v9371, %v9389
    %v9406 = vadd.f32 %v9372, %v9390
    %v9407 = vadd.f32 %v9373, %v9391
    %v9408 = vadd.f32 %v9374, %v9392
    %v9409 = vld [vmem:[#allocation4 + $0x4] sm:$0x1]
    %v9410 = vperm.slane %v9409, 0
    %v9411 = vmul.f32 %v8434, %v9410
    %v9412 = vmul.f32 %v8436, %v9410
    %v9413 = vmul.f32 %v8439, %v9410
    %v9414 = vmul.f32 %v8441, %v9410
    %v9415 = vmul.f32 %v8444, %v9410
    %v9416 = vmul.f32 %v8446, %v9410
    %v9417 = vmul.f32 %v8449, %v9410
    %v9418 = vmul.f32 %v8451, %v9410
    %v9419 = vmul.f32 %v8454, %v9410
    %v9420 = vmul.f32 %v8456, %v9410
    %v9421 = vmul.f32 %v8459, %v9410
    %v9422 = vmul.f32 %v8461, %v9410
    %v9423 = vmul.f32 %v8464, %v9410
    %v9424 = vmul.f32 %v8466, %v9410
    %v9425 = vmul.f32 %v8469, %v9410
    %v9426 = vmul.f32 %v8471, %v9410
    %v9427 = vadd.f32 %v9393, %v9411
    %v9428 = vadd.f32 %v9394, %v9412
    %v9429 = vadd.f32 %v9395, %v9413
    %v9430 = vadd.f32 %v9396, %v9414
    %v9431 = vadd.f32 %v9397, %v9415
    %v9432 = vadd.f32 %v9398, %v9416
    %v9433 = vadd.f32 %v9399, %v9417
    %v9434 = vadd.f32 %v9400, %v9418
    %v9435 = vadd.f32 %v9401, %v9419
    %v9436 = vadd.f32 %v9402, %v9420
    %v9437 = vadd.f32 %v9403, %v9421
    %v9438 = vadd.f32 %v9404, %v9422
    %v9439 = vadd.f32 %v9405, %v9423
    %v9440 = vadd.f32 %v9406, %v9424
    %v9441 = vadd.f32 %v9407, %v9425
    %v9442 = vadd.f32 %v9408, %v9426
    %v9443 = vld [vmem:[#allocation4 + $0x5] sm:$0x1]
    %v9444 = vperm.slane %v9443, 0
    %v9445 = vmul.f32 %v8474, %v9444
    %v9446 = vmul.f32 %v8476, %v9444
    %v9447 = vmul.f32 %v8479, %v9444
    %v9448 = vmul.f32 %v8481, %v9444
    %v9449 = vmul.f32 %v8484, %v9444
    %v9450 = vmul.f32 %v8486, %v9444
    %v9451 = vmul.f32 %v8489, %v9444
    %v9452 = vmul.f32 %v8491, %v9444
    %v9453 = vmul.f32 %v8494, %v9444
    %v9454 = vmul.f32 %v8496, %v9444
    %v9455 = vmul.f32 %v8499, %v9444
    %v9456 = vmul.f32 %v8501, %v9444
    %v9457 = vmul.f32 %v8504, %v9444
    %v9458 = vmul.f32 %v8506, %v9444
    %v9459 = vmul.f32 %v8509, %v9444
    %v9460 = vmul.f32 %v8511, %v9444
    %v9461 = vadd.f32 %v9427, %v9445
    %v9462 = vadd.f32 %v9428, %v9446
    %v9463 = vadd.f32 %v9429, %v9447
    %v9464 = vadd.f32 %v9430, %v9448
    %v9465 = vadd.f32 %v9431, %v9449
    %v9466 = vadd.f32 %v9432, %v9450
    %v9467 = vadd.f32 %v9433, %v9451
    %v9468 = vadd.f32 %v9434, %v9452
    %v9469 = vadd.f32 %v9435, %v9453
    %v9470 = vadd.f32 %v9436, %v9454
    %v9471 = vadd.f32 %v9437, %v9455
    %v9472 = vadd.f32 %v9438, %v9456
    %v9473 = vadd.f32 %v9439, %v9457
    %v9474 = vadd.f32 %v9440, %v9458
    %v9475 = vadd.f32 %v9441, %v9459
    %v9476 = vadd.f32 %v9442, %v9460
    %v9477 = vld [vmem:[#allocation4 + $0x6] sm:$0x1]
    %v9478 = vperm.slane %v9477, 0
    %v9479 = vmul.f32 %v8514, %v9478
    %v9480 = vmul.f32 %v8516, %v9478
    %v9481 = vmul.f32 %v8519, %v9478
    %v9482 = vmul.f32 %v8521, %v9478
    %v9483 = vmul.f32 %v8524, %v9478
    %v9484 = vmul.f32 %v8526, %v9478
    %v9485 = vmul.f32 %v8529, %v9478
    %v9486 = vmul.f32 %v8531, %v9478
    %v9487 = vmul.f32 %v8534, %v9478
    %v9488 = vmul.f32 %v8536, %v9478
    %v9489 = vmul.f32 %v8539, %v9478
    %v9490 = vmul.f32 %v8541, %v9478
    %v9491 = vmul.f32 %v8544, %v9478
    %v9492 = vmul.f32 %v8546, %v9478
    %v9493 = vmul.f32 %v8549, %v9478
    %v9494 = vmul.f32 %v8551, %v9478
    %v9495 = vadd.f32 %v9461, %v9479
    %v9496 = vadd.f32 %v9462, %v9480
    %v9497 = vadd.f32 %v9463, %v9481
    %v9498 = vadd.f32 %v9464, %v9482
    %v9499 = vadd.f32 %v9465, %v9483
    %v9500 = vadd.f32 %v9466, %v9484
    %v9501 = vadd.f32 %v9467, %v9485
    %v9502 = vadd.f32 %v9468, %v9486
    %v9503 = vadd.f32 %v9469, %v9487
    %v9504 = vadd.f32 %v9470, %v9488
    %v9505 = vadd.f32 %v9471, %v9489
    %v9506 = vadd.f32 %v9472, %v9490
    %v9507 = vadd.f32 %v9473, %v9491
    %v9508 = vadd.f32 %v9474, %v9492
    %v9509 = vadd.f32 %v9475, %v9493
    %v9510 = vadd.f32 %v9476, %v9494
    %v9511 = vld [vmem:[#allocation4 + $0x7] sm:$0x1]
    %v9512 = vperm.slane %v9511, 0
    %v9513 = vmul.f32 %v8554, %v9512
    %v9514 = vmul.f32 %v8556, %v9512
    %v9515 = vmul.f32 %v8559, %v9512
    %v9516 = vmul.f32 %v8561, %v9512
    %v9517 = vmul.f32 %v8564, %v9512
    %v9518 = vmul.f32 %v8566, %v9512
    %v9519 = vmul.f32 %v8569, %v9512
    %v9520 = vmul.f32 %v8571, %v9512
    %v9521 = vmul.f32 %v8574, %v9512
    %v9522 = vmul.f32 %v8576, %v9512
    %v9523 = vmul.f32 %v8579, %v9512
    %v9524 = vmul.f32 %v8581, %v9512
    %v9525 = vmul.f32 %v8584, %v9512
    %v9526 = vmul.f32 %v8586, %v9512
    %v9527 = vmul.f32 %v8589, %v9512
    %v9528 = vmul.f32 %v8591, %v9512
    %v9529 = vadd.f32 %v9495, %v9513
    %v9530 = vadd.f32 %v9496, %v9514
    %v9531 = vadd.f32 %v9497, %v9515
    %v9532 = vadd.f32 %v9498, %v9516
    %v9533 = vadd.f32 %v9499, %v9517
    %v9534 = vadd.f32 %v9500, %v9518
    %v9535 = vadd.f32 %v9501, %v9519
    %v9536 = vadd.f32 %v9502, %v9520
    %v9537 = vadd.f32 %v9503, %v9521
    %v9538 = vadd.f32 %v9504, %v9522
    %v9539 = vadd.f32 %v9505, %v9523
    %v9540 = vadd.f32 %v9506, %v9524
    %v9541 = vadd.f32 %v9507, %v9525
    %v9542 = vadd.f32 %v9508, %v9526
    %v9543 = vadd.f32 %v9509, %v9527
    %v9544 = vadd.f32 %v9510, %v9528
    %v9545 = vld [vmem:[#allocation4 + $0x8] sm:$0x1]
    %v9546 = vperm.slane %v9545, 0
    %v9547 = vmul.f32 %v8594, %v9546
    %v9548 = vmul.f32 %v8596, %v9546
    %v9549 = vmul.f32 %v8599, %v9546
    %v9550 = vmul.f32 %v8601, %v9546
    %v9551 = vmul.f32 %v8604, %v9546
    %v9552 = vmul.f32 %v8606, %v9546
    %v9553 = vmul.f32 %v8609, %v9546
    %v9554 = vmul.f32 %v8611, %v9546
    %v9555 = vmul.f32 %v8614, %v9546
    %v9556 = vmul.f32 %v8616, %v9546
    %v9557 = vmul.f32 %v8619, %v9546
    %v9558 = vmul.f32 %v8621, %v9546
    %v9559 = vmul.f32 %v8624, %v9546
    %v9560 = vmul.f32 %v8626, %v9546
    %v9561 = vmul.f32 %v8629, %v9546
    %v9562 = vmul.f32 %v8631, %v9546
    %v9563 = vadd.f32 %v9529, %v9547
    %v9564 = vadd.f32 %v9530, %v9548
    %v9565 = vadd.f32 %v9531, %v9549
    %v9566 = vadd.f32 %v9532, %v9550
    %v9567 = vadd.f32 %v9533, %v9551
    %v9568 = vadd.f32 %v9534, %v9552
    %v9569 = vadd.f32 %v9535, %v9553
    %v9570 = vadd.f32 %v9536, %v9554
    %v9571 = vadd.f32 %v9537, %v9555
    %v9572 = vadd.f32 %v9538, %v9556
    %v9573 = vadd.f32 %v9539, %v9557
    %v9574 = vadd.f32 %v9540, %v9558
    %v9575 = vadd.f32 %v9541, %v9559
    %v9576 = vadd.f32 %v9542, %v9560
    %v9577 = vadd.f32 %v9543, %v9561
    %v9578 = vadd.f32 %v9544, %v9562
    %v9579 = vld [vmem:[#allocation4 + $0x9] sm:$0x1]
    %v9580 = vperm.slane %v9579, 0
    %v9581 = vmul.f32 %v8634, %v9580
    %v9582 = vmul.f32 %v8636, %v9580
    %v9583 = vmul.f32 %v8639, %v9580
    %v9584 = vmul.f32 %v8641, %v9580
    %v9585 = vmul.f32 %v8644, %v9580
    %v9586 = vmul.f32 %v8646, %v9580
    %v9587 = vmul.f32 %v8649, %v9580
    %v9588 = vmul.f32 %v8651, %v9580
    %v9589 = vmul.f32 %v8654, %v9580
    %v9590 = vmul.f32 %v8656, %v9580
    %v9591 = vmul.f32 %v8659, %v9580
    %v9592 = vmul.f32 %v8661, %v9580
    %v9593 = vmul.f32 %v8664, %v9580
    %v9594 = vmul.f32 %v8666, %v9580
    %v9595 = vmul.f32 %v8669, %v9580
    %v9596 = vmul.f32 %v8671, %v9580
    %v9597 = vadd.f32 %v9563, %v9581
    %v9598 = vadd.f32 %v9564, %v9582
    %v9599 = vadd.f32 %v9565, %v9583
    %v9600 = vadd.f32 %v9566, %v9584
    %v9601 = vadd.f32 %v9567, %v9585
    %v9602 = vadd.f32 %v9568, %v9586
    %v9603 = vadd.f32 %v9569, %v9587
    %v9604 = vadd.f32 %v9570, %v9588
    %v9605 = vadd.f32 %v9571, %v9589
    %v9606 = vadd.f32 %v9572, %v9590
    %v9607 = vadd.f32 %v9573, %v9591
    %v9608 = vadd.f32 %v9574, %v9592
    %v9609 = vadd.f32 %v9575, %v9593
    %v9610 = vadd.f32 %v9576, %v9594
    %v9611 = vadd.f32 %v9577, %v9595
    %v9612 = vadd.f32 %v9578, %v9596
    %v9613 = vld [vmem:[#allocation4 + $0xa] sm:$0x1]
    %v9614 = vperm.slane %v9613, 0
    %v9615 = vmul.f32 %v8674, %v9614
    %v9616 = vmul.f32 %v8676, %v9614
    %v9617 = vmul.f32 %v8679, %v9614
    %v9618 = vmul.f32 %v8681, %v9614
    %v9619 = vmul.f32 %v8684, %v9614
    %v9620 = vmul.f32 %v8686, %v9614
    %v9621 = vmul.f32 %v8689, %v9614
    %v9622 = vmul.f32 %v8691, %v9614
    %v9623 = vmul.f32 %v8694, %v9614
    %v9624 = vmul.f32 %v8696, %v9614
    %v9625 = vmul.f32 %v8699, %v9614
    %v9626 = vmul.f32 %v8701, %v9614
    %v9627 = vmul.f32 %v8704, %v9614
    %v9628 = vmul.f32 %v8706, %v9614
    %v9629 = vmul.f32 %v8709, %v9614
    %v9630 = vmul.f32 %v8711, %v9614
    %v9631 = vadd.f32 %v9597, %v9615
    %v9632 = vadd.f32 %v9598, %v9616
    %v9633 = vadd.f32 %v9599, %v9617
    %v9634 = vadd.f32 %v9600, %v9618
    %v9635 = vadd.f32 %v9601, %v9619
    %v9636 = vadd.f32 %v9602, %v9620
    %v9637 = vadd.f32 %v9603, %v9621
    %v9638 = vadd.f32 %v9604, %v9622
    %v9639 = vadd.f32 %v9605, %v9623
    %v9640 = vadd.f32 %v9606, %v9624
    %v9641 = vadd.f32 %v9607, %v9625
    %v9642 = vadd.f32 %v9608, %v9626
    %v9643 = vadd.f32 %v9609, %v9627
    %v9644 = vadd.f32 %v9610, %v9628
    %v9645 = vadd.f32 %v9611, %v9629
    %v9646 = vadd.f32 %v9612, %v9630
    %v9647 = vld [vmem:[#allocation4 + $0xb] sm:$0x1]
    %v9648 = vperm.slane %v9647, 0
    %v9649 = vmul.f32 %v8714, %v9648
    %v9650 = vmul.f32 %v8716, %v9648
    %v9651 = vmul.f32 %v8719, %v9648
    %v9652 = vmul.f32 %v8721, %v9648
    %v9653 = vmul.f32 %v8724, %v9648
    %v9654 = vmul.f32 %v8726, %v9648
    %v9655 = vmul.f32 %v8729, %v9648
    %v9656 = vmul.f32 %v8731, %v9648
    %v9657 = vmul.f32 %v8734, %v9648
    %v9658 = vmul.f32 %v8736, %v9648
    %v9659 = vmul.f32 %v8739, %v9648
    %v9660 = vmul.f32 %v8741, %v9648
    %v9661 = vmul.f32 %v8744, %v9648
    %v9662 = vmul.f32 %v8746, %v9648
    %v9663 = vmul.f32 %v8749, %v9648
    %v9664 = vmul.f32 %v8751, %v9648
    %v9665 = vadd.f32 %v9631, %v9649
    %v9666 = vadd.f32 %v9632, %v9650
    %v9667 = vadd.f32 %v9633, %v9651
    %v9668 = vadd.f32 %v9634, %v9652
    %v9669 = vadd.f32 %v9635, %v9653
    %v9670 = vadd.f32 %v9636, %v9654
    %v9671 = vadd.f32 %v9637, %v9655
    %v9672 = vadd.f32 %v9638, %v9656
    %v9673 = vadd.f32 %v9639, %v9657
    %v9674 = vadd.f32 %v9640, %v9658
    %v9675 = vadd.f32 %v9641, %v9659
    %v9676 = vadd.f32 %v9642, %v9660
    %v9677 = vadd.f32 %v9643, %v9661
    %v9678 = vadd.f32 %v9644, %v9662
    %v9679 = vadd.f32 %v9645, %v9663
    %v9680 = vadd.f32 %v9646, %v9664
    %v9681 = vld [vmem:[#allocation4 + $0xc] sm:$0x1]
    %v9682 = vperm.slane %v9681, 0
    %v9683 = vmul.f32 %v8754, %v9682
    %v9684 = vmul.f32 %v8756, %v9682
    %v9685 = vmul.f32 %v8759, %v9682
    %v9686 = vmul.f32 %v8761, %v9682
    %v9687 = vmul.f32 %v8764, %v9682
    %v9688 = vmul.f32 %v8766, %v9682
    %v9689 = vmul.f32 %v8769, %v9682
    %v9690 = vmul.f32 %v8771, %v9682
    %v9691 = vmul.f32 %v8774, %v9682
    %v9692 = vmul.f32 %v8776, %v9682
    %v9693 = vmul.f32 %v8779, %v9682
    %v9694 = vmul.f32 %v8781, %v9682
    %v9695 = vmul.f32 %v8784, %v9682
    %v9696 = vmul.f32 %v8786, %v9682
    %v9697 = vmul.f32 %v8789, %v9682
    %v9698 = vmul.f32 %v8791, %v9682
    %v9699 = vadd.f32 %v9665, %v9683
    %v9700 = vadd.f32 %v9666, %v9684
    %v9701 = vadd.f32 %v9667, %v9685
    %v9702 = vadd.f32 %v9668, %v9686
    %v9703 = vadd.f32 %v9669, %v9687
    %v9704 = vadd.f32 %v9670, %v9688
    %v9705 = vadd.f32 %v9671, %v9689
    %v9706 = vadd.f32 %v9672, %v9690
    %v9707 = vadd.f32 %v9673, %v9691
    %v9708 = vadd.f32 %v9674, %v9692
    %v9709 = vadd.f32 %v9675, %v9693
    %v9710 = vadd.f32 %v9676, %v9694
    %v9711 = vadd.f32 %v9677, %v9695
    %v9712 = vadd.f32 %v9678, %v9696
    %v9713 = vadd.f32 %v9679, %v9697
    %v9714 = vadd.f32 %v9680, %v9698
    %v9715 = vld [vmem:[#allocation4 + $0xd] sm:$0x1]
    %v9716 = vperm.slane %v9715, 0
    %v9717 = vmul.f32 %v8794, %v9716
    %v9718 = vmul.f32 %v8796, %v9716
    %v9719 = vmul.f32 %v8799, %v9716
    %v9720 = vmul.f32 %v8801, %v9716
    %v9721 = vmul.f32 %v8804, %v9716
    %v9722 = vmul.f32 %v8806, %v9716
    %v9723 = vmul.f32 %v8809, %v9716
    %v9724 = vmul.f32 %v8811, %v9716
    %v9725 = vmul.f32 %v8814, %v9716
    %v9726 = vmul.f32 %v8816, %v9716
    %v9727 = vmul.f32 %v8819, %v9716
    %v9728 = vmul.f32 %v8821, %v9716
    %v9729 = vmul.f32 %v8824, %v9716
    %v9730 = vmul.f32 %v8826, %v9716
    %v9731 = vmul.f32 %v8829, %v9716
    %v9732 = vmul.f32 %v8831, %v9716
    %v9733 = vadd.f32 %v9699, %v9717
    %v9734 = vadd.f32 %v9700, %v9718
    %v9735 = vadd.f32 %v9701, %v9719
    %v9736 = vadd.f32 %v9702, %v9720
    %v9737 = vadd.f32 %v9703, %v9721
    %v9738 = vadd.f32 %v9704, %v9722
    %v9739 = vadd.f32 %v9705, %v9723
    %v9740 = vadd.f32 %v9706, %v9724
    %v9741 = vadd.f32 %v9707, %v9725
    %v9742 = vadd.f32 %v9708, %v9726
    %v9743 = vadd.f32 %v9709, %v9727
    %v9744 = vadd.f32 %v9710, %v9728
    %v9745 = vadd.f32 %v9711, %v9729
    %v9746 = vadd.f32 %v9712, %v9730
    %v9747 = vadd.f32 %v9713, %v9731
    %v9748 = vadd.f32 %v9714, %v9732
    %v9749 = vld [vmem:[#allocation4 + $0xe] sm:$0x1]
    %v9750 = vperm.slane %v9749, 0
    %v9751 = vmul.f32 %v8834, %v9750
    %v9752 = vmul.f32 %v8836, %v9750
    %v9753 = vmul.f32 %v8839, %v9750
    %v9754 = vmul.f32 %v8841, %v9750
    %v9755 = vmul.f32 %v8844, %v9750
    %v9756 = vmul.f32 %v8846, %v9750
    %v9757 = vmul.f32 %v8849, %v9750
    %v9758 = vmul.f32 %v8851, %v9750
    %v9759 = vmul.f32 %v8854, %v9750
    %v9760 = vmul.f32 %v8856, %v9750
    %v9761 = vmul.f32 %v8859, %v9750
    %v9762 = vmul.f32 %v8861, %v9750
    %v9763 = vmul.f32 %v8864, %v9750
    %v9764 = vmul.f32 %v8866, %v9750
    %v9765 = vmul.f32 %v8869, %v9750
    %v9766 = vmul.f32 %v8871, %v9750
    %v9767 = vadd.f32 %v9733, %v9751
    %v9768 = vadd.f32 %v9734, %v9752
    %v9769 = vadd.f32 %v9735, %v9753
    %v9770 = vadd.f32 %v9736, %v9754
    %v9771 = vadd.f32 %v9737, %v9755
    %v9772 = vadd.f32 %v9738, %v9756
    %v9773 = vadd.f32 %v9739, %v9757
    %v9774 = vadd.f32 %v9740, %v9758
    %v9775 = vadd.f32 %v9741, %v9759
    %v9776 = vadd.f32 %v9742, %v9760
    %v9777 = vadd.f32 %v9743, %v9761
    %v9778 = vadd.f32 %v9744, %v9762
    %v9779 = vadd.f32 %v9745, %v9763
    %v9780 = vadd.f32 %v9746, %v9764
    %v9781 = vadd.f32 %v9747, %v9765
    %v9782 = vadd.f32 %v9748, %v9766
    %v9783 = vld [vmem:[#allocation4 + $0xf] sm:$0x1]
    %v9784 = vperm.slane %v9783, 0
    %v9785 = vmul.f32 %v8874, %v9784
    %v9786 = vmul.f32 %v8876, %v9784
    %v9787 = vmul.f32 %v8879, %v9784
    %v9788 = vmul.f32 %v8881, %v9784
    %v9789 = vmul.f32 %v8884, %v9784
    %v9790 = vmul.f32 %v8886, %v9784
    %v9791 = vmul.f32 %v8889, %v9784
    %v9792 = vmul.f32 %v8891, %v9784
    %v9793 = vmul.f32 %v8894, %v9784
    %v9794 = vmul.f32 %v8896, %v9784
    %v9795 = vmul.f32 %v8899, %v9784
    %v9796 = vmul.f32 %v8901, %v9784
    %v9797 = vmul.f32 %v8904, %v9784
    %v9798 = vmul.f32 %v8906, %v9784
    %v9799 = vmul.f32 %v8909, %v9784
    %v9800 = vmul.f32 %v8911, %v9784
    %v9801 = vadd.f32 %v9767, %v9785
    %v9802 = vadd.f32 %v9768, %v9786
    %v9803 = vadd.f32 %v9769, %v9787
    %v9804 = vadd.f32 %v9770, %v9788
    %v9805 = vadd.f32 %v9771, %v9789
    %v9806 = vadd.f32 %v9772, %v9790
    %v9807 = vadd.f32 %v9773, %v9791
    %v9808 = vadd.f32 %v9774, %v9792
    %v9809 = vadd.f32 %v9775, %v9793
    %v9810 = vadd.f32 %v9776, %v9794
    %v9811 = vadd.f32 %v9777, %v9795
    %v9812 = vadd.f32 %v9778, %v9796
    %v9813 = vadd.f32 %v9779, %v9797
    %v9814 = vadd.f32 %v9780, %v9798
    %v9815 = vadd.f32 %v9781, %v9799
    %v9816 = vadd.f32 %v9782, %v9800
    %v9817 = vld [vmem:[#allocation4 + $0x10] sm:$0x1]
    %v9818 = vperm.slane %v9817, 0
    %v9819 = vmul.f32 %v8914, %v9818
    %v9820 = vmul.f32 %v8916, %v9818
    %v9821 = vmul.f32 %v8919, %v9818
    %v9822 = vmul.f32 %v8921, %v9818
    %v9823 = vmul.f32 %v8924, %v9818
    %v9824 = vmul.f32 %v8926, %v9818
    %v9825 = vmul.f32 %v8929, %v9818
    %v9826 = vmul.f32 %v8931, %v9818
    %v9827 = vmul.f32 %v8934, %v9818
    %v9828 = vmul.f32 %v8936, %v9818
    %v9829 = vmul.f32 %v8939, %v9818
    %v9830 = vmul.f32 %v8941, %v9818
    %v9831 = vmul.f32 %v8944, %v9818
    %v9832 = vmul.f32 %v8946, %v9818
    %v9833 = vmul.f32 %v8949, %v9818
    %v9834 = vmul.f32 %v8951, %v9818
    %v9835 = vadd.f32 %v9801, %v9819
    %v9836 = vadd.f32 %v9802, %v9820
    %v9837 = vadd.f32 %v9803, %v9821
    %v9838 = vadd.f32 %v9804, %v9822
    %v9839 = vadd.f32 %v9805, %v9823
    %v9840 = vadd.f32 %v9806, %v9824
    %v9841 = vadd.f32 %v9807, %v9825
    %v9842 = vadd.f32 %v9808, %v9826
    %v9843 = vadd.f32 %v9809, %v9827
    %v9844 = vadd.f32 %v9810, %v9828
    %v9845 = vadd.f32 %v9811, %v9829
    %v9846 = vadd.f32 %v9812, %v9830
    %v9847 = vadd.f32 %v9813, %v9831
    %v9848 = vadd.f32 %v9814, %v9832
    %v9849 = vadd.f32 %v9815, %v9833
    %v9850 = vadd.f32 %v9816, %v9834
    %v9851 = vld [vmem:[#allocation4 + $0x11] sm:$0x1]
    %v9852 = vperm.slane %v9851, 0
    %v9853 = vmul.f32 %v8954, %v9852
    %v9854 = vmul.f32 %v8956, %v9852
    %v9855 = vmul.f32 %v8959, %v9852
    %v9856 = vmul.f32 %v8961, %v9852
    %v9857 = vmul.f32 %v8964, %v9852
    %v9858 = vmul.f32 %v8966, %v9852
    %v9859 = vmul.f32 %v8969, %v9852
    %v9860 = vmul.f32 %v8971, %v9852
    %v9861 = vmul.f32 %v8974, %v9852
    %v9862 = vmul.f32 %v8976, %v9852
    %v9863 = vmul.f32 %v8979, %v9852
    %v9864 = vmul.f32 %v8981, %v9852
    %v9865 = vmul.f32 %v8984, %v9852
    %v9866 = vmul.f32 %v8986, %v9852
    %v9867 = vmul.f32 %v8989, %v9852
    %v9868 = vmul.f32 %v8991, %v9852
    %v9869 = vadd.f32 %v9835, %v9853
    %v9870 = vadd.f32 %v9836, %v9854
    %v9871 = vadd.f32 %v9837, %v9855
    %v9872 = vadd.f32 %v9838, %v9856
    %v9873 = vadd.f32 %v9839, %v9857
    %v9874 = vadd.f32 %v9840, %v9858
    %v9875 = vadd.f32 %v9841, %v9859
    %v9876 = vadd.f32 %v9842, %v9860
    %v9877 = vadd.f32 %v9843, %v9861
    %v9878 = vadd.f32 %v9844, %v9862
    %v9879 = vadd.f32 %v9845, %v9863
    %v9880 = vadd.f32 %v9846, %v9864
    %v9881 = vadd.f32 %v9847, %v9865
    %v9882 = vadd.f32 %v9848, %v9866
    %v9883 = vadd.f32 %v9849, %v9867
    %v9884 = vadd.f32 %v9850, %v9868
    %v9885 = vld [vmem:[#allocation4 + $0x12] sm:$0x1]
    %v9886 = vperm.slane %v9885, 0
    %v9887 = vmul.f32 %v8994, %v9886
    %v9888 = vmul.f32 %v8996, %v9886
    %v9889 = vmul.f32 %v8999, %v9886
    %v9890 = vmul.f32 %v9001, %v9886
    %v9891 = vmul.f32 %v9004, %v9886
    %v9892 = vmul.f32 %v9006, %v9886
    %v9893 = vmul.f32 %v9009, %v9886
    %v9894 = vmul.f32 %v9011, %v9886
    %v9895 = vmul.f32 %v9014, %v9886
    %v9896 = vmul.f32 %v9016, %v9886
    %v9897 = vmul.f32 %v9019, %v9886
    %v9898 = vmul.f32 %v9021, %v9886
    %v9899 = vmul.f32 %v9024, %v9886
    %v9900 = vmul.f32 %v9026, %v9886
    %v9901 = vmul.f32 %v9029, %v9886
    %v9902 = vmul.f32 %v9031, %v9886
    %v9903 = vadd.f32 %v9869, %v9887
    %v9904 = vadd.f32 %v9870, %v9888
    %v9905 = vadd.f32 %v9871, %v9889
    %v9906 = vadd.f32 %v9872, %v9890
    %v9907 = vadd.f32 %v9873, %v9891
    %v9908 = vadd.f32 %v9874, %v9892
    %v9909 = vadd.f32 %v9875, %v9893
    %v9910 = vadd.f32 %v9876, %v9894
    %v9911 = vadd.f32 %v9877, %v9895
    %v9912 = vadd.f32 %v9878, %v9896
    %v9913 = vadd.f32 %v9879, %v9897
    %v9914 = vadd.f32 %v9880, %v9898
    %v9915 = vadd.f32 %v9881, %v9899
    %v9916 = vadd.f32 %v9882, %v9900
    %v9917 = vadd.f32 %v9883, %v9901
    %v9918 = vadd.f32 %v9884, %v9902
    %v9919 = vld [vmem:[#allocation4 + $0x13] sm:$0x1]
    %v9920 = vperm.slane %v9919, 0
    %v9921 = vmul.f32 %v9034, %v9920
    %v9922 = vmul.f32 %v9036, %v9920
    %v9923 = vmul.f32 %v9039, %v9920
    %v9924 = vmul.f32 %v9041, %v9920
    %v9925 = vmul.f32 %v9044, %v9920
    %v9926 = vmul.f32 %v9046, %v9920
    %v9927 = vmul.f32 %v9049, %v9920
    %v9928 = vmul.f32 %v9051, %v9920
    %v9929 = vmul.f32 %v9054, %v9920
    %v9930 = vmul.f32 %v9056, %v9920
    %v9931 = vmul.f32 %v9059, %v9920
    %v9932 = vmul.f32 %v9061, %v9920
    %v9933 = vmul.f32 %v9064, %v9920
    %v9934 = vmul.f32 %v9066, %v9920
    %v9935 = vmul.f32 %v9069, %v9920
    %v9936 = vmul.f32 %v9071, %v9920
    %v9937 = vadd.f32 %v9903, %v9921
    %v9938 = vadd.f32 %v9904, %v9922
    %v9939 = vadd.f32 %v9905, %v9923
    %v9940 = vadd.f32 %v9906, %v9924
    %v9941 = vadd.f32 %v9907, %v9925
    %v9942 = vadd.f32 %v9908, %v9926
    %v9943 = vadd.f32 %v9909, %v9927
    %v9944 = vadd.f32 %v9910, %v9928
    %v9945 = vadd.f32 %v9911, %v9929
    %v9946 = vadd.f32 %v9912, %v9930
    %v9947 = vadd.f32 %v9913, %v9931
    %v9948 = vadd.f32 %v9914, %v9932
    %v9949 = vadd.f32 %v9915, %v9933
    %v9950 = vadd.f32 %v9916, %v9934
    %v9951 = vadd.f32 %v9917, %v9935
    %v9952 = vadd.f32 %v9918, %v9936
    %v9953 = vld [vmem:[#allocation4 + $0x14] sm:$0x1]
    %v9954 = vperm.slane %v9953, 0
    %v9955 = vmul.f32 %v9074, %v9954
    %v9956 = vmul.f32 %v9076, %v9954
    %v9957 = vmul.f32 %v9079, %v9954
    %v9958 = vmul.f32 %v9081, %v9954
    %v9959 = vmul.f32 %v9084, %v9954
    %v9960 = vmul.f32 %v9086, %v9954
    %v9961 = vmul.f32 %v9089, %v9954
    %v9962 = vmul.f32 %v9091, %v9954
    %v9963 = vmul.f32 %v9094, %v9954
    %v9964 = vmul.f32 %v9096, %v9954
    %v9965 = vmul.f32 %v9099, %v9954
    %v9966 = vmul.f32 %v9101, %v9954
    %v9967 = vmul.f32 %v9104, %v9954
    %v9968 = vmul.f32 %v9106, %v9954
    %v9969 = vmul.f32 %v9109, %v9954
    %v9970 = vmul.f32 %v9111, %v9954
    %v9971 = vadd.f32 %v9937, %v9955
    %v9972 = vadd.f32 %v9938, %v9956
    %v9973 = vadd.f32 %v9939, %v9957
    %v9974 = vadd.f32 %v9940, %v9958
    %v9975 = vadd.f32 %v9941, %v9959
    %v9976 = vadd.f32 %v9942, %v9960
    %v9977 = vadd.f32 %v9943, %v9961
    %v9978 = vadd.f32 %v9944, %v9962
    %v9979 = vadd.f32 %v9945, %v9963
    %v9980 = vadd.f32 %v9946, %v9964
    %v9981 = vadd.f32 %v9947, %v9965
    %v9982 = vadd.f32 %v9948, %v9966
    %v9983 = vadd.f32 %v9949, %v9967
    %v9984 = vadd.f32 %v9950, %v9968
    %v9985 = vadd.f32 %v9951, %v9969
    %v9986 = vadd.f32 %v9952, %v9970
    %v9987 = vld [vmem:[#allocation4 + $0x15] sm:$0x1]
    %v9988 = vperm.slane %v9987, 0
    %v9989 = vmul.f32 %v9114, %v9988
    %v9990 = vmul.f32 %v9116, %v9988
    %v9991 = vmul.f32 %v9119, %v9988
    %v9992 = vmul.f32 %v9121, %v9988
    %v9993 = vmul.f32 %v9124, %v9988
    %v9994 = vmul.f32 %v9126, %v9988
    %v9995 = vmul.f32 %v9129, %v9988
    %v9996 = vmul.f32 %v9131, %v9988
    %v9997 = vmul.f32 %v9134, %v9988
    %v9998 = vmul.f32 %v9136, %v9988
    %v9999 = vmul.f32 %v9139, %v9988
    %v10000 = vmul.f32 %v9141, %v9988
    %v10001 = vmul.f32 %v9144, %v9988
    %v10002 = vmul.f32 %v9146, %v9988
    %v10003 = vmul.f32 %v9149, %v9988
    %v10004 = vmul.f32 %v9151, %v9988
    %v10005 = vadd.f32 %v9971, %v9989
    %v10006 = vadd.f32 %v9972, %v9990
    %v10007 = vadd.f32 %v9973, %v9991
    %v10008 = vadd.f32 %v9974, %v9992
    %v10009 = vadd.f32 %v9975, %v9993
    %v10010 = vadd.f32 %v9976, %v9994
    %v10011 = vadd.f32 %v9977, %v9995
    %v10012 = vadd.f32 %v9978, %v9996
    %v10013 = vadd.f32 %v9979, %v9997
    %v10014 = vadd.f32 %v9980, %v9998
    %v10015 = vadd.f32 %v9981, %v9999
    %v10016 = vadd.f32 %v9982, %v10000
    %v10017 = vadd.f32 %v9983, %v10001
    %v10018 = vadd.f32 %v9984, %v10002
    %v10019 = vadd.f32 %v9985, %v10003
    %v10020 = vadd.f32 %v9986, %v10004
    %v10021 = vld [vmem:[#allocation4 + $0x16] sm:$0x1]
    %v10022 = vperm.slane %v10021, 0
    %v10023 = vmul.f32 %v9154, %v10022
    %v10024 = vmul.f32 %v9156, %v10022
    %v10025 = vmul.f32 %v9159, %v10022
    %v10026 = vmul.f32 %v9161, %v10022
    %v10027 = vmul.f32 %v9164, %v10022
    %v10028 = vmul.f32 %v9166, %v10022
    %v10029 = vmul.f32 %v9169, %v10022
    %v10030 = vmul.f32 %v9171, %v10022
    %v10031 = vmul.f32 %v9174, %v10022
    %v10032 = vmul.f32 %v9176, %v10022
    %v10033 = vmul.f32 %v9179, %v10022
    %v10034 = vmul.f32 %v9181, %v10022
    %v10035 = vmul.f32 %v9184, %v10022
    %v10036 = vmul.f32 %v9186, %v10022
    %v10037 = vmul.f32 %v9189, %v10022
    %v10038 = vmul.f32 %v9191, %v10022
    %v10039 = vadd.f32 %v10005, %v10023
    %v10040 = vadd.f32 %v10006, %v10024
    %v10041 = vadd.f32 %v10007, %v10025
    %v10042 = vadd.f32 %v10008, %v10026
    %v10043 = vadd.f32 %v10009, %v10027
    %v10044 = vadd.f32 %v10010, %v10028
    %v10045 = vadd.f32 %v10011, %v10029
    %v10046 = vadd.f32 %v10012, %v10030
    %v10047 = vadd.f32 %v10013, %v10031
    %v10048 = vadd.f32 %v10014, %v10032
    %v10049 = vadd.f32 %v10015, %v10033
    %v10050 = vadd.f32 %v10016, %v10034
    %v10051 = vadd.f32 %v10017, %v10035
    %v10052 = vadd.f32 %v10018, %v10036
    %v10053 = vadd.f32 %v10019, %v10037
    %v10054 = vadd.f32 %v10020, %v10038
    %v10055 = vld [vmem:[#allocation4 + $0x17] sm:$0x1]
    %v10056 = vperm.slane %v10055, 0
    %v10057 = vmul.f32 %v9194, %v10056
    %v10058 = vmul.f32 %v9196, %v10056
    %v10059 = vmul.f32 %v9199, %v10056
    %v10060 = vmul.f32 %v9201, %v10056
    %v10061 = vmul.f32 %v9204, %v10056
    %v10062 = vmul.f32 %v9206, %v10056
    %v10063 = vmul.f32 %v9209, %v10056
    %v10064 = vmul.f32 %v9211, %v10056
    %v10065 = vmul.f32 %v9214, %v10056
    %v10066 = vmul.f32 %v9216, %v10056
    %v10067 = vmul.f32 %v9219, %v10056
    %v10068 = vmul.f32 %v9221, %v10056
    %v10069 = vmul.f32 %v9224, %v10056
    %v10070 = vmul.f32 %v9226, %v10056
    %v10071 = vmul.f32 %v9229, %v10056
    %v10072 = vmul.f32 %v9231, %v10056
    %v10073 = vadd.f32 %v10039, %v10057
    %v10074 = vadd.f32 %v10040, %v10058
    %v10075 = vadd.f32 %v10041, %v10059
    %v10076 = vadd.f32 %v10042, %v10060
    %v10077 = vadd.f32 %v10043, %v10061
    %v10078 = vadd.f32 %v10044, %v10062
    %v10079 = vadd.f32 %v10045, %v10063
    %v10080 = vadd.f32 %v10046, %v10064
    %v10081 = vadd.f32 %v10047, %v10065
    %v10082 = vadd.f32 %v10048, %v10066
    %v10083 = vadd.f32 %v10049, %v10067
    %v10084 = vadd.f32 %v10050, %v10068
    %v10085 = vadd.f32 %v10051, %v10069
    %v10086 = vadd.f32 %v10052, %v10070
    %v10087 = vadd.f32 %v10053, %v10071
    %v10088 = vadd.f32 %v10054, %v10072
    %v10089 = vld [vmem:[#allocation4 + $0x18] sm:$0x1]
    %v10090 = vperm.slane %v10089, 0
    %v10091 = vmul.f32 %v9234, %v10090
    %v10092 = vmul.f32 %v9236, %v10090
    %v10093 = vmul.f32 %v9239, %v10090
    %v10094 = vmul.f32 %v9241, %v10090
    %v10095 = vmul.f32 %v9244, %v10090
    %v10096 = vmul.f32 %v9246, %v10090
    %v10097 = vmul.f32 %v9249, %v10090
    %v10098 = vmul.f32 %v9251, %v10090
    %v10099 = vmul.f32 %v9254, %v10090
    %v10100 = vmul.f32 %v9256, %v10090
    %v10101 = vmul.f32 %v9259, %v10090
    %v10102 = vmul.f32 %v9261, %v10090
    %v10103 = vmul.f32 %v9264, %v10090
    %v10104 = vmul.f32 %v9266, %v10090
    %v10105 = vmul.f32 %v9269, %v10090
    %v10106 = vmul.f32 %v9271, %v10090
    %v10107 = vadd.f32 %v10073, %v10091
    %v10108 = vadd.f32 %v10074, %v10092
    %v10109 = vadd.f32 %v10075, %v10093
    %v10110 = vadd.f32 %v10076, %v10094
    %v10111 = vadd.f32 %v10077, %v10095
    %v10112 = vadd.f32 %v10078, %v10096
    %v10113 = vadd.f32 %v10079, %v10097
    %v10114 = vadd.f32 %v10080, %v10098
    %v10115 = vadd.f32 %v10081, %v10099
    %v10116 = vadd.f32 %v10082, %v10100
    %v10117 = vadd.f32 %v10083, %v10101
    %v10118 = vadd.f32 %v10084, %v10102
    %v10119 = vadd.f32 %v10085, %v10103
    %v10120 = vadd.f32 %v10086, %v10104
    %v10121 = vadd.f32 %v10087, %v10105
    %v10122 = vadd.f32 %v10088, %v10106
    %v10123 = vld [vmem:[%s9] sm:$0x1]
    %v10124 = vperm.slane %v10123, 0
    %v10125 = vadd.f32 %v10107, %v10124
    %v10126 = vadd.f32 %v10108, %v10124
    %v10127 = vadd.f32 %v10109, %v10124
    %v10128 = vadd.f32 %v10110, %v10124
    %v10129 = vadd.f32 %v10111, %v10124
    %v10130 = vadd.f32 %v10112, %v10124
    %v10131 = vadd.f32 %v10113, %v10124
    %v10132 = vadd.f32 %v10114, %v10124
    %v10133 = vadd.f32 %v10115, %v10124
    %v10134 = vadd.f32 %v10116, %v10124
    %v10135 = vadd.f32 %v10117, %v10124
    %v10136 = vadd.f32 %v10118, %v10124
    %v10137 = vadd.f32 %v10119, %v10124
    %v10138 = vadd.f32 %v10120, %v10124
    %v10139 = vadd.f32 %v10121, %v10124
    %v10140 = vadd.f32 %v10122, %v10124
    %v10141 = vmax.f32 %v10125, 0.0
    %v10142 = vmax.f32 %v10126, 0.0
    %v10143 = vmax.f32 %v10127, 0.0
    %v10144 = vmax.f32 %v10128, 0.0
    %v10145 = vmax.f32 %v10129, 0.0
    %v10146 = vmax.f32 %v10130, 0.0
    %v10147 = vmax.f32 %v10131, 0.0
    %v10148 = vmax.f32 %v10132, 0.0
    %v10149 = vmax.f32 %v10133, 0.0
    %v10150 = vmax.f32 %v10134, 0.0
    %v10151 = vmax.f32 %v10135, 0.0
    %v10152 = vmax.f32 %v10136, 0.0
    %v10153 = vmax.f32 %v10137, 0.0
    %v10154 = vmax.f32 %v10138, 0.0
    %v10155 = vmax.f32 %v10139, 0.0
    %v10156 = vmax.f32 %v10140, 0.0
    %v10157 = vld [vmem:[%s9 + $0x1] sm:$0x1]
    %v10158 = vperm.slane %v10157, 0
    %v10159 = vmul.f32 %v10141, %v10158
    %v10160 = vmul.f32 %v10142, %v10158
    %v10161 = vmul.f32 %v10143, %v10158
    %v10162 = vmul.f32 %v10144, %v10158
    %v10163 = vmul.f32 %v10145, %v10158
    %v10164 = vmul.f32 %v10146, %v10158
    %v10165 = vmul.f32 %v10147, %v10158
    %v10166 = vmul.f32 %v10148, %v10158
    %v10167 = vmul.f32 %v10149, %v10158
    %v10168 = vmul.f32 %v10150, %v10158
    %v10169 = vmul.f32 %v10151, %v10158
    %v10170 = vmul.f32 %v10152, %v10158
    %v10171 = vmul.f32 %v10153, %v10158
    %v10172 = vmul.f32 %v10154, %v10158
    %v10173 = vmul.f32 %v10155, %v10158
    %v10174 = vmul.f32 %v10156, %v10158
    %v10175 = vld [vmem:[%s9 + $0x2] sm:$0x1]
    %v10176 = vperm.slane %v10175, 0
    %v10177 = vadd.f32 %v10159, %v10176
    %v10178 = vadd.f32 %v10160, %v10176
    %v10179 = vadd.f32 %v10161, %v10176
    %v10180 = vadd.f32 %v10162, %v10176
    %v10181 = vadd.f32 %v10163, %v10176
    %v10182 = vadd.f32 %v10164, %v10176
    %v10183 = vadd.f32 %v10165, %v10176
    %v10184 = vadd.f32 %v10166, %v10176
    %v10185 = vadd.f32 %v10167, %v10176
    %v10186 = vadd.f32 %v10168, %v10176
    %v10187 = vadd.f32 %v10169, %v10176
    %v10188 = vadd.f32 %v10170, %v10176
    %v10189 = vadd.f32 %v10171, %v10176
    %v10190 = vadd.f32 %v10172, %v10176
    %v10191 = vadd.f32 %v10173, %v10176
    %v10192 = vadd.f32 %v10174, %v10176
    %v10193 = vpack.c.bf16 %v10178, %v10177
    %v10194 = vpack.c.bf16 %v10180, %v10179
    %v10195 = vpack.c.bf16 %v10182, %v10181
    %v10196 = vpack.c.bf16 %v10184, %v10183
    %v10197 = vpack.c.bf16 %v10186, %v10185
    %v10198 = vpack.c.bf16 %v10188, %v10187
    %v10199 = vpack.c.bf16 %v10190, %v10189
    %v10200 = vpack.c.bf16 %v10192, %v10191
    %v10201 = vld [vmem:[#allocation6] sm:$0xf]
    %v10202 = vld [vmem:[#allocation6 + $0x4] sm:$0xf]
    %v10203 = vld [vmem:[#allocation6 + $0x8] sm:$0xf]
    %v10204 = vld [vmem:[#allocation6 + $0xc] sm:$0xf]
    %v10205 = vld [vmem:[#allocation6 + $0x10] sm:$0xf]
    %v10206 = vld [vmem:[#allocation6 + $0x14] sm:$0xf]
    %v10207 = vld [vmem:[#allocation6 + $0x18] sm:$0xf]
    %v10208 = vld [vmem:[#allocation6 + $0x1c] sm:$0xf]
    %v10209 = vld [vmem:[#allocation6 + $0x20] sm:$0xf]
    %v10210 = vld [vmem:[#allocation6 + $0x24] sm:$0xf]
    %v10211 = vld [vmem:[#allocation6 + $0x28] sm:$0xf]
    %v10212 = vld [vmem:[#allocation6 + $0x2c] sm:$0xf]
    %v10213 = vld [vmem:[#allocation6 + $0x30] sm:$0xf]
    %v10214 = vld [vmem:[#allocation6 + $0x34] sm:$0xf]
    %v10215 = vld [vmem:[#allocation6 + $0x38] sm:$0xf]
    %v10216 = vld [vmem:[#allocation6 + $0x3c] sm:$0xf]
    %v10217 = vld [vmem:[#allocation6 + $0x40] sm:$0xf]
    %v10218 = vld [vmem:[#allocation6 + $0x44] sm:$0xf]
    %v10219 = vld [vmem:[#allocation6 + $0x48] sm:$0xf]
    %v10220 = vld [vmem:[#allocation6 + $0x4c] sm:$0xf]
    %v10221 = vld [vmem:[#allocation6 + $0x50] sm:$0xf]
    %v10222 = vld [vmem:[#allocation6 + $0x54] sm:$0xf]
    %v10223 = vld [vmem:[#allocation6 + $0x58] sm:$0xf]
    %v10224 = vld [vmem:[#allocation6 + $0x5c] sm:$0xf]
    %v10225 = vld [vmem:[#allocation6 + $0x60] sm:$0xf]
    %v10226 = vld [vmem:[#allocation6 + $0x64] sm:$0xf]
    %v10227 = vld [vmem:[#allocation6 + $0x68] sm:$0xf]
    %v10228 = vld [vmem:[#allocation6 + $0x6c] sm:$0xf]
    %v10229 = vld [vmem:[#allocation6 + $0x70] sm:$0xf]
    %v10230 = vld [vmem:[#allocation6 + $0x74] sm:$0xf]
    %v10231 = vld [vmem:[#allocation6 + $0x78] sm:$0xf]
    %v10232 = vld [vmem:[#allocation6 + $0x7c] sm:$0xf]
    %v10233 = vld [vmem:[#allocation6 + $0x80] sm:$0xf]
    %v10234 = vld [vmem:[#allocation6 + $0x84] sm:$0xf]
    %v10235 = vld [vmem:[#allocation6 + $0x88] sm:$0xf]
    %v10236 = vld [vmem:[#allocation6 + $0x8c] sm:$0xf]
    %v10273 = vunpack.c.l.b16 %v10201
    %v10274 = vunpack.c.l.b16 %v10202
    %v10275 = vunpack.c.l.b16 %v10203
    %v10276 = vunpack.c.l.b16 %v10204
    %v10277 = vunpack.c.l.b16 %v10205
    %v10278 = vunpack.c.l.b16 %v10206
    %v10279 = vunpack.c.l.b16 %v10207
    %v10280 = vunpack.c.l.b16 %v10208
    %v10281 = vunpack.c.l.b16 %v10209
    %v10282 = vunpack.c.l.b16 %v10210
    %v10283 = vunpack.c.l.b16 %v10211
    %v10284 = vunpack.c.l.b16 %v10212
    %v10285 = vunpack.c.l.b16 %v10213
    %v10286 = vunpack.c.l.b16 %v10214
    %v10287 = vunpack.c.l.b16 %v10215
    %v10288 = vunpack.c.l.b16 %v10216
    %v10289 = vunpack.c.l.b16 %v10217
    %v10290 = vunpack.c.l.b16 %v10218
    %v10291 = vunpack.c.l.b16 %v10219
    %v10292 = vunpack.c.l.b16 %v10220
    %v10293 = vunpack.c.l.b16 %v10221
    %v10294 = vunpack.c.l.b16 %v10222
    %v10295 = vunpack.c.l.b16 %v10223
    %v10296 = vunpack.c.l.b16 %v10224
    %v10297 = vunpack.c.l.b16 %v10225
    %v10298 = vunpack.c.l.b16 %v10226
    %v10299 = vunpack.c.l.b16 %v10227
    %v10300 = vunpack.c.l.b16 %v10228
    %v10301 = vunpack.c.l.b16 %v10229
    %v10302 = vunpack.c.l.b16 %v10230
    %v10303 = vunpack.c.l.b16 %v10231
    %v10304 = vunpack.c.l.b16 %v10232
    %v10305 = vunpack.c.l.b16 %v10233
    %v10306 = vunpack.c.l.b16 %v10234
    %v10307 = vunpack.c.l.b16 %v10235
    %v10308 = vunpack.c.l.b16 %v10236
    %v10309 = vpack.c.b16 %v10274, %v10273
    %v10310 = vpack.c.b16 %v10276, %v10275
    %v10311 = vpack.c.b16 %v10278, %v10277
    %v10312 = vpack.c.b16 %v10280, %v10279
    %v10313 = vpack.c.b16 %v10282, %v10281
    %v10314 = vpack.c.b16 %v10284, %v10283
    %v10315 = vpack.c.b16 %v10286, %v10285
    %v10316 = vpack.c.b16 %v10288, %v10287
    %v10317 = vpack.c.b16 %v10290, %v10289
    %v10318 = vpack.c.b16 %v10292, %v10291
    %v10319 = vpack.c.b16 %v10294, %v10293
    %v10320 = vpack.c.b16 %v10296, %v10295
    %v10321 = vpack.c.b16 %v10298, %v10297
    %v10322 = vpack.c.b16 %v10300, %v10299
    %v10323 = vpack.c.b16 %v10302, %v10301
    %v10324 = vpack.c.b16 %v10304, %v10303
    %v10325 = vpack.c.b16 %v10306, %v10305
    %v10326 = vpack.c.b16 %v10308, %v10307
    %10345 = vmatpush.bf16.msra.mxu0 %v10200
    %10346 = vmatpush.bf16.msra.mxu0 %v10199
    %10347 = vmatpush.bf16.msra.mxu0 %v10198
    %10348 = vmatpush.bf16.msra.mxu0 %v10197
    %10349 = vmatpush.bf16.msra.mxu0 %v10196
    %10350 = vmatpush.bf16.msra.mxu0 %v10195
    %10351 = vmatpush.bf16.msra.mxu0 %v10194
    %10352 = vmatpush.bf16.msra.mxu0 %v10193
    %10353 = vmatmul.bf16.gmra.mxu0 %v10309
    %v10354 = vpop.f32.mrf.mxu0
    %v10355 = vadd.f32 0.0, %v10354
    %v10356 = vpop.f32.mrf.mxu0
    %v10357 = vadd.f32 0.0, %v10356
    %10358 = vmatmul.bf16.gmra.mxu0 %v10310
    %v10359 = vpop.f32.mrf.mxu0
    %v10360 = vadd.f32 0.0, %v10359
    %v10361 = vpop.f32.mrf.mxu0
    %v10362 = vadd.f32 0.0, %v10361
    %10363 = vmatmul.bf16.gmra.mxu0 %v10311
    %v10364 = vpop.f32.mrf.mxu0
    %v10365 = vadd.f32 0.0, %v10364
    %v10366 = vpop.f32.mrf.mxu0
    %v10367 = vadd.f32 0.0, %v10366
    %10368 = vmatmul.bf16.gmra.mxu0 %v10312
    %v10369 = vpop.f32.mrf.mxu0
    %v10370 = vadd.f32 0.0, %v10369
    %v10371 = vpop.f32.mrf.mxu0
    %v10372 = vadd.f32 0.0, %v10371
    %10373 = vmatmul.bf16.gmra.mxu0 %v10313
    %v10374 = vpop.f32.mrf.mxu0
    %v10375 = vadd.f32 0.0, %v10374
    %v10376 = vpop.f32.mrf.mxu0
    %v10377 = vadd.f32 0.0, %v10376
    %10378 = vmatmul.bf16.gmra.mxu0 %v10314
    %v10379 = vpop.f32.mrf.mxu0
    %v10380 = vadd.f32 0.0, %v10379
    %v10381 = vpop.f32.mrf.mxu0
    %v10382 = vadd.f32 0.0, %v10381
    %10383 = vmatmul.bf16.gmra.mxu0 %v10315
    %v10384 = vpop.f32.mrf.mxu0
    %v10385 = vadd.f32 0.0, %v10384
    %v10386 = vpop.f32.mrf.mxu0
    %v10387 = vadd.f32 0.0, %v10386
    %10388 = vmatmul.bf16.gmra.mxu0 %v10316
    %v10389 = vpop.f32.mrf.mxu0
    %v10390 = vadd.f32 0.0, %v10389
    %v10391 = vpop.f32.mrf.mxu0
    %v10392 = vadd.f32 0.0, %v10391
    %10393 = vmatmul.bf16.gmra.mxu0 %v10317
    %v10394 = vpop.f32.mrf.mxu0
    %v10395 = vadd.f32 0.0, %v10394
    %v10396 = vpop.f32.mrf.mxu0
    %v10397 = vadd.f32 0.0, %v10396
    %10398 = vmatmul.bf16.gmra.mxu0 %v10318
    %v10399 = vpop.f32.mrf.mxu0
    %v10400 = vadd.f32 0.0, %v10399
    %v10401 = vpop.f32.mrf.mxu0
    %v10402 = vadd.f32 0.0, %v10401
    %10403 = vmatmul.bf16.gmra.mxu0 %v10319
    %v10404 = vpop.f32.mrf.mxu0
    %v10405 = vadd.f32 0.0, %v10404
    %v10406 = vpop.f32.mrf.mxu0
    %v10407 = vadd.f32 0.0, %v10406
    %10408 = vmatmul.bf16.gmra.mxu0 %v10320
    %v10409 = vpop.f32.mrf.mxu0
    %v10410 = vadd.f32 0.0, %v10409
    %v10411 = vpop.f32.mrf.mxu0
    %v10412 = vadd.f32 0.0, %v10411
    %10413 = vmatmul.bf16.gmra.mxu0 %v10321
    %v10414 = vpop.f32.mrf.mxu0
    %v10415 = vadd.f32 0.0, %v10414
    %v10416 = vpop.f32.mrf.mxu0
    %v10417 = vadd.f32 0.0, %v10416
    %10418 = vmatmul.bf16.gmra.mxu0 %v10322
    %v10419 = vpop.f32.mrf.mxu0
    %v10420 = vadd.f32 0.0, %v10419
    %v10421 = vpop.f32.mrf.mxu0
    %v10422 = vadd.f32 0.0, %v10421
    %10423 = vmatmul.bf16.gmra.mxu0 %v10323
    %v10424 = vpop.f32.mrf.mxu0
    %v10425 = vadd.f32 0.0, %v10424
    %v10426 = vpop.f32.mrf.mxu0
    %v10427 = vadd.f32 0.0, %v10426
    %10428 = vmatmul.bf16.gmra.mxu0 %v10324
    %v10429 = vpop.f32.mrf.mxu0
    %v10430 = vadd.f32 0.0, %v10429
    %v10431 = vpop.f32.mrf.mxu0
    %v10432 = vadd.f32 0.0, %v10431
    %10433 = vmatmul.bf16.gmra.mxu0 %v10325
    %v10434 = vpop.f32.mrf.mxu0
    %v10435 = vadd.f32 0.0, %v10434
    %v10436 = vpop.f32.mrf.mxu0
    %v10437 = vadd.f32 0.0, %v10436
    %10438 = vmatmul.bf16.gmra.mxu0 %v10326
    %v10439 = vpop.f32.mrf.mxu0
    %v10440 = vadd.f32 0.0, %v10439
    %v10441 = vpop.f32.mrf.mxu0
    %v10442 = vadd.f32 0.0, %v10441
    %10443 = vdwg.mxu0
    %v10444 = vpack.c.bf16 %v10357, %v10355
    %v10445 = vpack.c.bf16 %v10367, %v10365
    %v10446 = vpack.c.bf16 %v10377, %v10375
    %v10447 = vpack.c.bf16 %v10387, %v10385
    %v10448 = vpack.c.bf16 %v10397, %v10395
    %v10449 = vpack.c.bf16 %v10407, %v10405
    %v10450 = vpack.c.bf16 %v10417, %v10415
    %v10451 = vpack.c.bf16 %v10427, %v10425
    %v10452 = vpack.c.bf16 %v10437, %v10435
    %v10453 = vpack.c.bf16 %v10362, %v10360
    %v10454 = vpack.c.bf16 %v10372, %v10370
    %v10455 = vpack.c.bf16 %v10382, %v10380
    %v10456 = vpack.c.bf16 %v10392, %v10390
    %v10457 = vpack.c.bf16 %v10402, %v10400
    %v10458 = vpack.c.bf16 %v10412, %v10410
    %v10459 = vpack.c.bf16 %v10422, %v10420
    %v10460 = vpack.c.bf16 %v10432, %v10430
    %v10461 = vpack.c.bf16 %v10442, %v10440
    %v10462 = vld [vmem:[#allocation7] sm:$0xf]
    %v10463 = vld [vmem:[#allocation7 + $0x4] sm:$0xf]
    %v10464 = vld [vmem:[#allocation7 + $0x8] sm:$0xf]
    %v10465 = vld [vmem:[#allocation7 + $0xc] sm:$0xf]
    %v10466 = vld [vmem:[#allocation7 + $0x10] sm:$0xf]
    %v10467 = vld [vmem:[#allocation7 + $0x14] sm:$0xf]
    %v10468 = vld [vmem:[#allocation7 + $0x18] sm:$0xf]
    %v10469 = vld [vmem:[#allocation7 + $0x1c] sm:$0xf]
    %v10470 = vld [vmem:[#allocation7 + $0x20] sm:$0xf]
    %v10471 = vld [vmem:[#allocation7 + $0x24] sm:$0xf]
    %v10472 = vld [vmem:[#allocation7 + $0x28] sm:$0xf]
    %v10473 = vld [vmem:[#allocation7 + $0x2c] sm:$0xf]
    %v10474 = vld [vmem:[#allocation7 + $0x30] sm:$0xf]
    %v10475 = vld [vmem:[#allocation7 + $0x34] sm:$0xf]
    %v10476 = vld [vmem:[#allocation7 + $0x38] sm:$0xf]
    %v10477 = vld [vmem:[#allocation7 + $0x3c] sm:$0xf]
    %v10478 = vld [vmem:[#allocation7 + $0x40] sm:$0xf]
    %v10479 = vld [vmem:[#allocation7 + $0x44] sm:$0xf]
    %v10480 = vld [vmem:[#allocation7 + $0x48] sm:$0xf]
    %v10481 = vld [vmem:[#allocation7 + $0x4c] sm:$0xf]
    %v10482 = vld [vmem:[#allocation7 + $0x50] sm:$0xf]
    %v10483 = vld [vmem:[#allocation7 + $0x54] sm:$0xf]
    %v10484 = vld [vmem:[#allocation7 + $0x58] sm:$0xf]
    %v10485 = vld [vmem:[#allocation7 + $0x5c] sm:$0xf]
    %v10486 = vld [vmem:[#allocation7 + $0x60] sm:$0xf]
    %v10487 = vld [vmem:[#allocation7 + $0x64] sm:$0xf]
    %v10488 = vld [vmem:[#allocation7 + $0x68] sm:$0xf]
    %v10489 = vld [vmem:[#allocation7 + $0x6c] sm:$0xf]
    %v10490 = vld [vmem:[#allocation7 + $0x70] sm:$0xf]
    %v10491 = vld [vmem:[#allocation7 + $0x74] sm:$0xf]
    %v10492 = vld [vmem:[#allocation7 + $0x78] sm:$0xf]
    %v10493 = vld [vmem:[#allocation7 + $0x7c] sm:$0xf]
    %v10494 = vld [vmem:[#allocation7 + $0x80] sm:$0xf]
    %v10495 = vld [vmem:[#allocation7 + $0x84] sm:$0xf]
    %v10496 = vld [vmem:[#allocation7 + $0x88] sm:$0xf]
    %v10497 = vld [vmem:[#allocation7 + $0x8c] sm:$0xf]
    %v10498 = vld [vmem:[#allocation7 + $0x90] sm:$0xf]
    %v10499 = vld [vmem:[#allocation7 + $0x94] sm:$0xf]
    %v10500 = vld [vmem:[#allocation7 + $0x98] sm:$0xf]
    %v10501 = vld [vmem:[#allocation7 + $0x9c] sm:$0xf]
    %v10502 = vld [vmem:[#allocation7 + $0xa0] sm:$0xf]
    %v10503 = vld [vmem:[#allocation7 + $0xa4] sm:$0xf]
    %v10504 = vld [vmem:[#allocation7 + $0xa8] sm:$0xf]
    %v10505 = vld [vmem:[#allocation7 + $0xac] sm:$0xf]
    %v10506 = vld [vmem:[#allocation7 + $0xb0] sm:$0xf]
    %v10507 = vld [vmem:[#allocation7 + $0xb4] sm:$0xf]
    %v10508 = vld [vmem:[#allocation7 + $0xb8] sm:$0xf]
    %v10509 = vld [vmem:[#allocation7 + $0xbc] sm:$0xf]
    %v10510 = vld [vmem:[#allocation7 + $0xc0] sm:$0xf]
    %v10511 = vld [vmem:[#allocation7 + $0xc4] sm:$0xf]
    %v10512 = vld [vmem:[#allocation7 + $0xc8] sm:$0xf]
    %v10513 = vld [vmem:[#allocation7 + $0xcc] sm:$0xf]
    %v10514 = vld [vmem:[#allocation7 + $0xd0] sm:$0xf]
    %v10515 = vld [vmem:[#allocation7 + $0xd4] sm:$0xf]
    %v10516 = vld [vmem:[#allocation7 + $0xd8] sm:$0xf]
    %v10517 = vld [vmem:[#allocation7 + $0xdc] sm:$0xf]
    %v10518 = vld [vmem:[#allocation7 + $0xe0] sm:$0xf]
    %v10519 = vld [vmem:[#allocation7 + $0xe4] sm:$0xf]
    %v10520 = vld [vmem:[#allocation7 + $0xe8] sm:$0xf]
    %v10521 = vld [vmem:[#allocation7 + $0xec] sm:$0xf]
    %v10522 = vld [vmem:[#allocation7 + $0xf0] sm:$0xf]
    %v10523 = vld [vmem:[#allocation7 + $0xf4] sm:$0xf]
    %v10524 = vld [vmem:[#allocation7 + $0xf8] sm:$0xf]
    %v10525 = vld [vmem:[#allocation7 + $0xfc] sm:$0xf]
    %v10526 = vld [vmem:[#allocation7 + $0x100] sm:$0xf]
    %v10527 = vld [vmem:[#allocation7 + $0x104] sm:$0xf]
    %v10528 = vld [vmem:[#allocation7 + $0x108] sm:$0xf]
    %v10529 = vld [vmem:[#allocation7 + $0x10c] sm:$0xf]
    %v10530 = vld [vmem:[#allocation7 + $0x110] sm:$0xf]
    %v10531 = vld [vmem:[#allocation7 + $0x114] sm:$0xf]
    %v10532 = vld [vmem:[#allocation7 + $0x118] sm:$0xf]
    %v10533 = vld [vmem:[#allocation7 + $0x11c] sm:$0xf]
    %v10534 = vld [vmem:[#allocation7 + $0x120] sm:$0xf]
    %v10535 = vld [vmem:[#allocation7 + $0x124] sm:$0xf]
    %v10536 = vld [vmem:[#allocation7 + $0x128] sm:$0xf]
    %v10537 = vld [vmem:[#allocation7 + $0x12c] sm:$0xf]
    %v10538 = vld [vmem:[#allocation7 + $0x130] sm:$0xf]
    %v10539 = vld [vmem:[#allocation7 + $0x134] sm:$0xf]
    %v10540 = vld [vmem:[#allocation7 + $0x138] sm:$0xf]
    %v10541 = vld [vmem:[#allocation7 + $0x13c] sm:$0xf]
    %v10542 = vld [vmem:[#allocation7 + $0x140] sm:$0xf]
    %v10543 = vld [vmem:[#allocation7 + $0x144] sm:$0xf]
    %v10544 = vld [vmem:[#allocation7 + $0x148] sm:$0xf]
    %v10545 = vld [vmem:[#allocation7 + $0x14c] sm:$0xf]
    %v10546 = vld [vmem:[#allocation7 + $0x150] sm:$0xf]
    %v10547 = vld [vmem:[#allocation7 + $0x154] sm:$0xf]
    %v10548 = vld [vmem:[#allocation7 + $0x158] sm:$0xf]
    %v10549 = vld [vmem:[#allocation7 + $0x15c] sm:$0xf]
    %v10550 = vld [vmem:[#allocation7 + $0x160] sm:$0xf]
    %v10551 = vld [vmem:[#allocation7 + $0x164] sm:$0xf]
    %v10552 = vld [vmem:[#allocation7 + $0x168] sm:$0xf]
    %v10553 = vld [vmem:[#allocation7 + $0x16c] sm:$0xf]
    %v10554 = vld [vmem:[#allocation7 + $0x170] sm:$0xf]
    %v10555 = vld [vmem:[#allocation7 + $0x174] sm:$0xf]
    %v10556 = vld [vmem:[#allocation7 + $0x178] sm:$0xf]
    %v10557 = vld [vmem:[#allocation7 + $0x17c] sm:$0xf]
    %v10558 = vld [vmem:[#allocation7 + $0x180] sm:$0xf]
    %v10559 = vld [vmem:[#allocation7 + $0x184] sm:$0xf]
    %v10560 = vld [vmem:[#allocation7 + $0x188] sm:$0xf]
    %v10561 = vld [vmem:[#allocation7 + $0x18c] sm:$0xf]
    %v10562 = vld [vmem:[#allocation7 + $0x190] sm:$0xf]
    %v10563 = vld [vmem:[#allocation7 + $0x194] sm:$0xf]
    %v10564 = vld [vmem:[#allocation7 + $0x198] sm:$0xf]
    %v10565 = vld [vmem:[#allocation7 + $0x19c] sm:$0xf]
    %v10566 = vld [vmem:[#allocation7 + $0x1a0] sm:$0xf]
    %v10567 = vld [vmem:[#allocation7 + $0x1a4] sm:$0xf]
    %v10568 = vld [vmem:[#allocation7 + $0x1a8] sm:$0xf]
    %v10569 = vld [vmem:[#allocation7 + $0x1ac] sm:$0xf]
    %v10570 = vld [vmem:[#allocation7 + $0x1b0] sm:$0xf]
    %v10571 = vld [vmem:[#allocation7 + $0x1b4] sm:$0xf]
    %v10572 = vld [vmem:[#allocation7 + $0x1b8] sm:$0xf]
    %v10573 = vld [vmem:[#allocation7 + $0x1bc] sm:$0xf]
    %v10574 = vld [vmem:[#allocation7 + $0x1c0] sm:$0xf]
    %v10575 = vld [vmem:[#allocation7 + $0x1c4] sm:$0xf]
    %v10576 = vld [vmem:[#allocation7 + $0x1c8] sm:$0xf]
    %v10577 = vld [vmem:[#allocation7 + $0x1cc] sm:$0xf]
    %v10578 = vld [vmem:[#allocation7 + $0x1d0] sm:$0xf]
    %v10579 = vld [vmem:[#allocation7 + $0x1d4] sm:$0xf]
    %v10580 = vld [vmem:[#allocation7 + $0x1d8] sm:$0xf]
    %v10581 = vld [vmem:[#allocation7 + $0x1dc] sm:$0xf]
    %v10582 = vld [vmem:[#allocation7 + $0x1e0] sm:$0xf]
    %v10583 = vld [vmem:[#allocation7 + $0x1e4] sm:$0xf]
    %v10584 = vld [vmem:[#allocation7 + $0x1e8] sm:$0xf]
    %v10585 = vld [vmem:[#allocation7 + $0x1ec] sm:$0xf]
    %v10586 = vld [vmem:[#allocation7 + $0x1f0] sm:$0xf]
    %v10587 = vld [vmem:[#allocation7 + $0x1f4] sm:$0xf]
    %v10588 = vld [vmem:[#allocation7 + $0x1f8] sm:$0xf]
    %v10589 = vld [vmem:[#allocation7 + $0x1fc] sm:$0xf]
    %v10590 = vld [vmem:[#allocation7 + $0x200] sm:$0xf]
    %v10591 = vld [vmem:[#allocation7 + $0x204] sm:$0xf]
    %v10592 = vld [vmem:[#allocation7 + $0x208] sm:$0xf]
    %v10593 = vld [vmem:[#allocation7 + $0x20c] sm:$0xf]
    %v10594 = vld [vmem:[#allocation7 + $0x210] sm:$0xf]
    %v10595 = vld [vmem:[#allocation7 + $0x214] sm:$0xf]
    %v10596 = vld [vmem:[#allocation7 + $0x218] sm:$0xf]
    %v10597 = vld [vmem:[#allocation7 + $0x21c] sm:$0xf]
    %v10598 = vld [vmem:[#allocation7 + $0x220] sm:$0xf]
    %v10599 = vld [vmem:[#allocation7 + $0x224] sm:$0xf]
    %v10600 = vld [vmem:[#allocation7 + $0x228] sm:$0xf]
    %v10601 = vld [vmem:[#allocation7 + $0x22c] sm:$0xf]
    %v10602 = vld [vmem:[#allocation7 + $0x230] sm:$0xf]
    %v10603 = vld [vmem:[#allocation7 + $0x234] sm:$0xf]
    %v10604 = vld [vmem:[#allocation7 + $0x238] sm:$0xf]
    %v10605 = vld [vmem:[#allocation7 + $0x23c] sm:$0xf]
    %s10606 = scalar_lea.vmem %s9, 4
    %v10607 = vld [vmem:[%s10606] sm:$0x1]
    %v10608 = vperm.slane %v10607, 0
    %v10753 = vunpack.c.l.b16 %v10462
    %v10754 = vunpack.c.l.b16 %v10463
    %v10755 = vunpack.c.l.b16 %v10464
    %v10756 = vunpack.c.l.b16 %v10465
    %v10757 = vunpack.c.l.b16 %v10466
    %v10758 = vunpack.c.l.b16 %v10467
    %v10759 = vunpack.c.l.b16 %v10468
    %v10760 = vunpack.c.l.b16 %v10469
    %v10761 = vunpack.c.l.b16 %v10470
    %v10762 = vunpack.c.l.b16 %v10471
    %v10763 = vunpack.c.l.b16 %v10472
    %v10764 = vunpack.c.l.b16 %v10473
    %v10765 = vunpack.c.l.b16 %v10474
    %v10766 = vunpack.c.l.b16 %v10475
    %v10767 = vunpack.c.l.b16 %v10476
    %v10768 = vunpack.c.l.b16 %v10477
    %v10769 = vunpack.c.l.b16 %v10478
    %v10770 = vunpack.c.l.b16 %v10479
    %v10771 = vunpack.c.l.b16 %v10480
    %v10772 = vunpack.c.l.b16 %v10481
    %v10773 = vunpack.c.l.b16 %v10482
    %v10774 = vunpack.c.l.b16 %v10483
    %v10775 = vunpack.c.l.b16 %v10484
    %v10776 = vunpack.c.l.b16 %v10485
    %v10777 = vunpack.c.l.b16 %v10486
    %v10778 = vunpack.c.l.b16 %v10487
    %v10779 = vunpack.c.l.b16 %v10488
    %v10780 = vunpack.c.l.b16 %v10489
    %v10781 = vunpack.c.l.b16 %v10490
    %v10782 = vunpack.c.l.b16 %v10491
    %v10783 = vunpack.c.l.b16 %v10492
    %v10784 = vunpack.c.l.b16 %v10493
    %v10785 = vunpack.c.l.b16 %v10494
    %v10786 = vunpack.c.l.b16 %v10495
    %v10787 = vunpack.c.l.b16 %v10496
    %v10788 = vunpack.c.l.b16 %v10497
    %v10789 = vunpack.c.l.b16 %v10498
    %v10790 = vunpack.c.l.b16 %v10499
    %v10791 = vunpack.c.l.b16 %v10500
    %v10792 = vunpack.c.l.b16 %v10501
    %v10793 = vunpack.c.l.b16 %v10502
    %v10794 = vunpack.c.l.b16 %v10503
    %v10795 = vunpack.c.l.b16 %v10504
    %v10796 = vunpack.c.l.b16 %v10505
    %v10797 = vunpack.c.l.b16 %v10506
    %v10798 = vunpack.c.l.b16 %v10507
    %v10799 = vunpack.c.l.b16 %v10508
    %v10800 = vunpack.c.l.b16 %v10509
    %v10801 = vunpack.c.l.b16 %v10510
    %v10802 = vunpack.c.l.b16 %v10511
    %v10803 = vunpack.c.l.b16 %v10512
    %v10804 = vunpack.c.l.b16 %v10513
    %v10805 = vunpack.c.l.b16 %v10514
    %v10806 = vunpack.c.l.b16 %v10515
    %v10807 = vunpack.c.l.b16 %v10516
    %v10808 = vunpack.c.l.b16 %v10517
    %v10809 = vunpack.c.l.b16 %v10518
    %v10810 = vunpack.c.l.b16 %v10519
    %v10811 = vunpack.c.l.b16 %v10520
    %v10812 = vunpack.c.l.b16 %v10521
    %v10813 = vunpack.c.l.b16 %v10522
    %v10814 = vunpack.c.l.b16 %v10523
    %v10815 = vunpack.c.l.b16 %v10524
    %v10816 = vunpack.c.l.b16 %v10525
    %v10817 = vunpack.c.l.b16 %v10526
    %v10818 = vunpack.c.l.b16 %v10527
    %v10819 = vunpack.c.l.b16 %v10528
    %v10820 = vunpack.c.l.b16 %v10529
    %v10821 = vunpack.c.l.b16 %v10530
    %v10822 = vunpack.c.l.b16 %v10531
    %v10823 = vunpack.c.l.b16 %v10532
    %v10824 = vunpack.c.l.b16 %v10533
    %v10825 = vunpack.c.l.b16 %v10534
    %v10826 = vunpack.c.l.b16 %v10535
    %v10827 = vunpack.c.l.b16 %v10536
    %v10828 = vunpack.c.l.b16 %v10537
    %v10829 = vunpack.c.l.b16 %v10538
    %v10830 = vunpack.c.l.b16 %v10539
    %v10831 = vunpack.c.l.b16 %v10540
    %v10832 = vunpack.c.l.b16 %v10541
    %v10833 = vunpack.c.l.b16 %v10542
    %v10834 = vunpack.c.l.b16 %v10543
    %v10835 = vunpack.c.l.b16 %v10544
    %v10836 = vunpack.c.l.b16 %v10545
    %v10837 = vunpack.c.l.b16 %v10546
    %v10838 = vunpack.c.l.b16 %v10547
    %v10839 = vunpack.c.l.b16 %v10548
    %v10840 = vunpack.c.l.b16 %v10549
    %v10841 = vunpack.c.l.b16 %v10550
    %v10842 = vunpack.c.l.b16 %v10551
    %v10843 = vunpack.c.l.b16 %v10552
    %v10844 = vunpack.c.l.b16 %v10553
    %v10845 = vunpack.c.l.b16 %v10554
    %v10846 = vunpack.c.l.b16 %v10555
    %v10847 = vunpack.c.l.b16 %v10556
    %v10848 = vunpack.c.l.b16 %v10557
    %v10849 = vunpack.c.l.b16 %v10558
    %v10850 = vunpack.c.l.b16 %v10559
    %v10851 = vunpack.c.l.b16 %v10560
    %v10852 = vunpack.c.l.b16 %v10561
    %v10853 = vunpack.c.l.b16 %v10562
    %v10854 = vunpack.c.l.b16 %v10563
    %v10855 = vunpack.c.l.b16 %v10564
    %v10856 = vunpack.c.l.b16 %v10565
    %v10857 = vunpack.c.l.b16 %v10566
    %v10858 = vunpack.c.l.b16 %v10567
    %v10859 = vunpack.c.l.b16 %v10568
    %v10860 = vunpack.c.l.b16 %v10569
    %v10861 = vunpack.c.l.b16 %v10570
    %v10862 = vunpack.c.l.b16 %v10571
    %v10863 = vunpack.c.l.b16 %v10572
    %v10864 = vunpack.c.l.b16 %v10573
    %v10865 = vunpack.c.l.b16 %v10574
    %v10866 = vunpack.c.l.b16 %v10575
    %v10867 = vunpack.c.l.b16 %v10576
    %v10868 = vunpack.c.l.b16 %v10577
    %v10869 = vunpack.c.l.b16 %v10578
    %v10870 = vunpack.c.l.b16 %v10579
    %v10871 = vunpack.c.l.b16 %v10580
    %v10872 = vunpack.c.l.b16 %v10581
    %v10873 = vunpack.c.l.b16 %v10582
    %v10874 = vunpack.c.l.b16 %v10583
    %v10875 = vunpack.c.l.b16 %v10584
    %v10876 = vunpack.c.l.b16 %v10585
    %v10877 = vunpack.c.l.b16 %v10586
    %v10878 = vunpack.c.l.b16 %v10587
    %v10879 = vunpack.c.l.b16 %v10588
    %v10880 = vunpack.c.l.b16 %v10589
    %v10881 = vunpack.c.l.b16 %v10590
    %v10882 = vunpack.c.l.b16 %v10591
    %v10883 = vunpack.c.l.b16 %v10592
    %v10884 = vunpack.c.l.b16 %v10593
    %v10885 = vunpack.c.l.b16 %v10594
    %v10886 = vunpack.c.l.b16 %v10595
    %v10887 = vunpack.c.l.b16 %v10596
    %v10888 = vunpack.c.l.b16 %v10597
    %v10889 = vunpack.c.l.b16 %v10598
    %v10890 = vunpack.c.l.b16 %v10599
    %v10891 = vunpack.c.l.b16 %v10600
    %v10892 = vunpack.c.l.b16 %v10601
    %v10893 = vunpack.c.l.b16 %v10602
    %v10894 = vunpack.c.l.b16 %v10603
    %v10895 = vunpack.c.l.b16 %v10604
    %v10896 = vunpack.c.l.b16 %v10605
    %v10897 = vpack.c.b16 %v10754, %v10753
    %v10898 = vpack.c.b16 %v10756, %v10755
    %v10899 = vpack.c.b16 %v10758, %v10757
    %v10900 = vpack.c.b16 %v10760, %v10759
    %v10901 = vpack.c.b16 %v10762, %v10761
    %v10902 = vpack.c.b16 %v10764, %v10763
    %v10903 = vpack.c.b16 %v10766, %v10765
    %v10904 = vpack.c.b16 %v10768, %v10767
    %v10905 = vpack.c.b16 %v10770, %v10769
    %v10906 = vpack.c.b16 %v10772, %v10771
    %v10907 = vpack.c.b16 %v10774, %v10773
    %v10908 = vpack.c.b16 %v10776, %v10775
    %v10909 = vpack.c.b16 %v10778, %v10777
    %v10910 = vpack.c.b16 %v10780, %v10779
    %v10911 = vpack.c.b16 %v10782, %v10781
    %v10912 = vpack.c.b16 %v10784, %v10783
    %v10913 = vpack.c.b16 %v10786, %v10785
    %v10914 = vpack.c.b16 %v10788, %v10787
    %v10915 = vpack.c.b16 %v10790, %v10789
    %v10916 = vpack.c.b16 %v10792, %v10791
    %v10917 = vpack.c.b16 %v10794, %v10793
    %v10918 = vpack.c.b16 %v10796, %v10795
    %v10919 = vpack.c.b16 %v10798, %v10797
    %v10920 = vpack.c.b16 %v10800, %v10799
    %v10921 = vpack.c.b16 %v10802, %v10801
    %v10922 = vpack.c.b16 %v10804, %v10803
    %v10923 = vpack.c.b16 %v10806, %v10805
    %v10924 = vpack.c.b16 %v10808, %v10807
    %v10925 = vpack.c.b16 %v10810, %v10809
    %v10926 = vpack.c.b16 %v10812, %v10811
    %v10927 = vpack.c.b16 %v10814, %v10813
    %v10928 = vpack.c.b16 %v10816, %v10815
    %v10929 = vpack.c.b16 %v10818, %v10817
    %v10930 = vpack.c.b16 %v10820, %v10819
    %v10931 = vpack.c.b16 %v10822, %v10821
    %v10932 = vpack.c.b16 %v10824, %v10823
    %v10933 = vpack.c.b16 %v10826, %v10825
    %v10934 = vpack.c.b16 %v10828, %v10827
    %v10935 = vpack.c.b16 %v10830, %v10829
    %v10936 = vpack.c.b16 %v10832, %v10831
    %v10937 = vpack.c.b16 %v10834, %v10833
    %v10938 = vpack.c.b16 %v10836, %v10835
    %v10939 = vpack.c.b16 %v10838, %v10837
    %v10940 = vpack.c.b16 %v10840, %v10839
    %v10941 = vpack.c.b16 %v10842, %v10841
    %v10942 = vpack.c.b16 %v10844, %v10843
    %v10943 = vpack.c.b16 %v10846, %v10845
    %v10944 = vpack.c.b16 %v10848, %v10847
    %v10945 = vpack.c.b16 %v10850, %v10849
    %v10946 = vpack.c.b16 %v10852, %v10851
    %v10947 = vpack.c.b16 %v10854, %v10853
    %v10948 = vpack.c.b16 %v10856, %v10855
    %v10949 = vpack.c.b16 %v10858, %v10857
    %v10950 = vpack.c.b16 %v10860, %v10859
    %v10951 = vpack.c.b16 %v10862, %v10861
    %v10952 = vpack.c.b16 %v10864, %v10863
    %v10953 = vpack.c.b16 %v10866, %v10865
    %v10954 = vpack.c.b16 %v10868, %v10867
    %v10955 = vpack.c.b16 %v10870, %v10869
    %v10956 = vpack.c.b16 %v10872, %v10871
    %v10957 = vpack.c.b16 %v10874, %v10873
    %v10958 = vpack.c.b16 %v10876, %v10875
    %v10959 = vpack.c.b16 %v10878, %v10877
    %v10960 = vpack.c.b16 %v10880, %v10879
    %v10961 = vpack.c.b16 %v10882, %v10881
    %v10962 = vpack.c.b16 %v10884, %v10883
    %v10963 = vpack.c.b16 %v10886, %v10885
    %v10964 = vpack.c.b16 %v10888, %v10887
    %v10965 = vpack.c.b16 %v10890, %v10889
    %v10966 = vpack.c.b16 %v10892, %v10891
    %v10967 = vpack.c.b16 %v10894, %v10893
    %v10968 = vpack.c.b16 %v10896, %v10895
    %11041 = vmatpush.bf16.msra.mxu0 %v10904
    %11042 = vmatpush.bf16.msra.mxu0 %v10903
    %11043 = vmatpush.bf16.msra.mxu0 %v10902
    %11044 = vmatpush.bf16.msra.mxu0 %v10901
    %11045 = vmatpush.bf16.msra.mxu0 %v10900
    %11046 = vmatpush.bf16.msra.mxu0 %v10899
    %11047 = vmatpush.bf16.msra.mxu0 %v10898
    %11048 = vmatpush.bf16.msra.mxu0 %v10897
    %11049 = vmatmul.bf16.gmra.mxu0 %v10444
    %v11050 = vpop.f32.mrf.mxu0
    %v11051 = vadd.f32 %v10608, %v11050
    %v11052 = vpop.f32.mrf.mxu0
    %v11053 = vadd.f32 %v10608, %v11052
    %11054 = vmatmul.bf16.gmra.mxu0 %v10453
    %v11055 = vpop.f32.mrf.mxu0
    %v11056 = vadd.f32 %v10608, %v11055
    %v11057 = vpop.f32.mrf.mxu0
    %v11058 = vadd.f32 %v10608, %v11057
    %11059 = vdwg.mxu0
    %11060 = vmatpush.bf16.msra.mxu0 %v10912
    %11061 = vmatpush.bf16.msra.mxu0 %v10911
    %11062 = vmatpush.bf16.msra.mxu0 %v10910
    %11063 = vmatpush.bf16.msra.mxu0 %v10909
    %11064 = vmatpush.bf16.msra.mxu0 %v10908
    %11065 = vmatpush.bf16.msra.mxu0 %v10907
    %11066 = vmatpush.bf16.msra.mxu0 %v10906
    %11067 = vmatpush.bf16.msra.mxu0 %v10905
    %11068 = vmatmul.bf16.gmra.mxu0 %v10445
    %v11069 = vpop.f32.mrf.mxu0
    %v11070 = vadd.f32 %v11051, %v11069
    %v11071 = vpop.f32.mrf.mxu0
    %v11072 = vadd.f32 %v11053, %v11071
    %11073 = vmatmul.bf16.gmra.mxu0 %v10454
    %v11074 = vpop.f32.mrf.mxu0
    %v11075 = vadd.f32 %v11056, %v11074
    %v11076 = vpop.f32.mrf.mxu0
    %v11077 = vadd.f32 %v11058, %v11076
    %11078 = vdwg.mxu0
    %11079 = vmatpush.bf16.msra.mxu0 %v10920
    %11080 = vmatpush.bf16.msra.mxu0 %v10919
    %11081 = vmatpush.bf16.msra.mxu0 %v10918
    %11082 = vmatpush.bf16.msra.mxu0 %v10917
    %11083 = vmatpush.bf16.msra.mxu0 %v10916
    %11084 = vmatpush.bf16.msra.mxu0 %v10915
    %11085 = vmatpush.bf16.msra.mxu0 %v10914
    %11086 = vmatpush.bf16.msra.mxu0 %v10913
    %11087 = vmatmul.bf16.gmra.mxu0 %v10446
    %v11088 = vpop.f32.mrf.mxu0
    %v11089 = vadd.f32 %v11070, %v11088
    %v11090 = vpop.f32.mrf.mxu0
    %v11091 = vadd.f32 %v11072, %v11090
    %11092 = vmatmul.bf16.gmra.mxu0 %v10455
    %v11093 = vpop.f32.mrf.mxu0
    %v11094 = vadd.f32 %v11075, %v11093
    %v11095 = vpop.f32.mrf.mxu0
    %v11096 = vadd.f32 %v11077, %v11095
    %11097 = vdwg.mxu0
    %11098 = vmatpush.bf16.msra.mxu0 %v10928
    %11099 = vmatpush.bf16.msra.mxu0 %v10927
    %11100 = vmatpush.bf16.msra.mxu0 %v10926
    %11101 = vmatpush.bf16.msra.mxu0 %v10925
    %11102 = vmatpush.bf16.msra.mxu0 %v10924
    %11103 = vmatpush.bf16.msra.mxu0 %v10923
    %11104 = vmatpush.bf16.msra.mxu0 %v10922
    %11105 = vmatpush.bf16.msra.mxu0 %v10921
    %11106 = vmatmul.bf16.gmra.mxu0 %v10447
    %v11107 = vpop.f32.mrf.mxu0
    %v11108 = vadd.f32 %v11089, %v11107
    %v11109 = vpop.f32.mrf.mxu0
    %v11110 = vadd.f32 %v11091, %v11109
    %11111 = vmatmul.bf16.gmra.mxu0 %v10456
    %v11112 = vpop.f32.mrf.mxu0
    %v11113 = vadd.f32 %v11094, %v11112
    %v11114 = vpop.f32.mrf.mxu0
    %v11115 = vadd.f32 %v11096, %v11114
    %11116 = vdwg.mxu0
    %11117 = vmatpush.bf16.msra.mxu0 %v10936
    %11118 = vmatpush.bf16.msra.mxu0 %v10935
    %11119 = vmatpush.bf16.msra.mxu0 %v10934
    %11120 = vmatpush.bf16.msra.mxu0 %v10933
    %11121 = vmatpush.bf16.msra.mxu0 %v10932
    %11122 = vmatpush.bf16.msra.mxu0 %v10931
    %11123 = vmatpush.bf16.msra.mxu0 %v10930
    %11124 = vmatpush.bf16.msra.mxu0 %v10929
    %11125 = vmatmul.bf16.gmra.mxu0 %v10448
    %v11126 = vpop.f32.mrf.mxu0
    %v11127 = vadd.f32 %v11108, %v11126
    %v11128 = vpop.f32.mrf.mxu0
    %v11129 = vadd.f32 %v11110, %v11128
    %11130 = vmatmul.bf16.gmra.mxu0 %v10457
    %v11131 = vpop.f32.mrf.mxu0
    %v11132 = vadd.f32 %v11113, %v11131
    %v11133 = vpop.f32.mrf.mxu0
    %v11134 = vadd.f32 %v11115, %v11133
    %11135 = vdwg.mxu0
    %11136 = vmatpush.bf16.msra.mxu0 %v10944
    %11137 = vmatpush.bf16.msra.mxu0 %v10943
    %11138 = vmatpush.bf16.msra.mxu0 %v10942
    %11139 = vmatpush.bf16.msra.mxu0 %v10941
    %11140 = vmatpush.bf16.msra.mxu0 %v10940
    %11141 = vmatpush.bf16.msra.mxu0 %v10939
    %11142 = vmatpush.bf16.msra.mxu0 %v10938
    %11143 = vmatpush.bf16.msra.mxu0 %v10937
    %11144 = vmatmul.bf16.gmra.mxu0 %v10449
    %v11145 = vpop.f32.mrf.mxu0
    %v11146 = vadd.f32 %v11127, %v11145
    %v11147 = vpop.f32.mrf.mxu0
    %v11148 = vadd.f32 %v11129, %v11147
    %11149 = vmatmul.bf16.gmra.mxu0 %v10458
    %v11150 = vpop.f32.mrf.mxu0
    %v11151 = vadd.f32 %v11132, %v11150
    %v11152 = vpop.f32.mrf.mxu0
    %v11153 = vadd.f32 %v11134, %v11152
    %11154 = vdwg.mxu0
    %11155 = vmatpush.bf16.msra.mxu0 %v10952
    %11156 = vmatpush.bf16.msra.mxu0 %v10951
    %11157 = vmatpush.bf16.msra.mxu0 %v10950
    %11158 = vmatpush.bf16.msra.mxu0 %v10949
    %11159 = vmatpush.bf16.msra.mxu0 %v10948
    %11160 = vmatpush.bf16.msra.mxu0 %v10947
    %11161 = vmatpush.bf16.msra.mxu0 %v10946
    %11162 = vmatpush.bf16.msra.mxu0 %v10945
    %11163 = vmatmul.bf16.gmra.mxu0 %v10450
    %v11164 = vpop.f32.mrf.mxu0
    %v11165 = vadd.f32 %v11146, %v11164
    %v11166 = vpop.f32.mrf.mxu0
    %v11167 = vadd.f32 %v11148, %v11166
    %11168 = vmatmul.bf16.gmra.mxu0 %v10459
    %v11169 = vpop.f32.mrf.mxu0
    %v11170 = vadd.f32 %v11151, %v11169
    %v11171 = vpop.f32.mrf.mxu0
    %v11172 = vadd.f32 %v11153, %v11171
    %11173 = vdwg.mxu0
    %11174 = vmatpush.bf16.msra.mxu0 %v10960
    %11175 = vmatpush.bf16.msra.mxu0 %v10959
    %11176 = vmatpush.bf16.msra.mxu0 %v10958
    %11177 = vmatpush.bf16.msra.mxu0 %v10957
    %11178 = vmatpush.bf16.msra.mxu0 %v10956
    %11179 = vmatpush.bf16.msra.mxu0 %v10955
    %11180 = vmatpush.bf16.msra.mxu0 %v10954
    %11181 = vmatpush.bf16.msra.mxu0 %v10953
    %11182 = vmatmul.bf16.gmra.mxu0 %v10451
    %v11183 = vpop.f32.mrf.mxu0
    %v11184 = vadd.f32 %v11165, %v11183
    %v11185 = vpop.f32.mrf.mxu0
    %v11186 = vadd.f32 %v11167, %v11185
    %11187 = vmatmul.bf16.gmra.mxu0 %v10460
    %v11188 = vpop.f32.mrf.mxu0
    %v11189 = vadd.f32 %v11170, %v11188
    %v11190 = vpop.f32.mrf.mxu0
    %v11191 = vadd.f32 %v11172, %v11190
    %11192 = vdwg.mxu0
    %11193 = vmatpush.bf16.msra.mxu0 %v10968
    %11194 = vmatpush.bf16.msra.mxu0 %v10967
    %11195 = vmatpush.bf16.msra.mxu0 %v10966
    %11196 = vmatpush.bf16.msra.mxu0 %v10965
    %11197 = vmatpush.bf16.msra.mxu0 %v10964
    %11198 = vmatpush.bf16.msra.mxu0 %v10963
    %11199 = vmatpush.bf16.msra.mxu0 %v10962
    %11200 = vmatpush.bf16.msra.mxu0 %v10961
    %11201 = vmatmul.bf16.gmra.mxu0 %v10452
    %v11202 = vpop.f32.mrf.mxu0
    %v11203 = vadd.f32 %v11184, %v11202
    %v11204 = vpop.f32.mrf.mxu0
    %v11205 = vadd.f32 %v11186, %v11204
    %11206 = vmatmul.bf16.gmra.mxu0 %v10461
    %v11207 = vpop.f32.mrf.mxu0
    %v11208 = vadd.f32 %v11189, %v11207
    %v11209 = vpop.f32.mrf.mxu0
    %v11210 = vadd.f32 %v11191, %v11209
    %11211 = vdwg.mxu0
    %v11212 = vmax.f32 %v11203, 0.0
    %v11213 = vmax.f32 %v11205, 0.0
    %v11214 = vmax.f32 %v11208, 0.0
    %v11215 = vmax.f32 %v11210, 0.0
    %v11216 = vld [vmem:[%s10606 + $0x1] sm:$0x1]
    %v11217 = vperm.slane %v11216, 0
    %v11218 = vmul.f32 %v11212, %v11217
    %v11219 = vmul.f32 %v11213, %v11217
    %v11220 = vmul.f32 %v11214, %v11217
    %v11221 = vmul.f32 %v11215, %v11217
    %v11222 = vld [vmem:[%s10606 + $0x2] sm:$0x1]
    %v11223 = vperm.slane %v11222, 0
    %v11224 = vadd.f32 %v11218, %v11223
    %v11225 = vadd.f32 %v11219, %v11223
    %v11226 = vadd.f32 %v11220, %v11223
    %v11227 = vadd.f32 %v11221, %v11223
    %v11228 = vpack.c.bf16 %v11225, %v11224
    %v11229 = vpack.c.bf16 %v11227, %v11226
    %v11230 = vld [vmem:[%s5] sm:$0xf]
    %v11231 = vld [vmem:[%s5 + $0x4] sm:$0xf]
    %v11232 = vld [vmem:[%s5 + $0x8] sm:$0xf]
    %v11233 = vld [vmem:[%s5 + $0xc] sm:$0xf]
    %v11234 = vld [vmem:[%s5 + $0x10] sm:$0xf]
    %v11235 = vld [vmem:[%s5 + $0x14] sm:$0xf]
    %v11236 = vld [vmem:[%s5 + $0x18] sm:$0xf]
    %v11237 = vld [vmem:[%s5 + $0x1c] sm:$0xf]
    %v11238 = vld [vmem:[%s5 + $0x20] sm:$0xf]
    %v11248 = vunpack.c.l.b16 %v11230
    %v11249 = vunpack.c.l.b16 %v11231
    %v11250 = vunpack.c.l.b16 %v11232
    %v11251 = vunpack.c.l.b16 %v11233
    %v11252 = vunpack.c.l.b16 %v11234
    %v11253 = vunpack.c.l.b16 %v11235
    %v11254 = vunpack.c.l.b16 %v11236
    %v11255 = vunpack.c.l.b16 %v11237
    %v11256 = vunpack.c.l.b16 %v11238
    %v11257 = vpack.c.b16 %v11249, %v11248
    %v11258 = vpack.c.b16 %v11251, %v11250
    %v11259 = vpack.c.b16 %v11253, %v11252
    %v11260 = vpack.c.b16 %v11255, %v11254
    %v11261 = vpack.c.b16 %v11256, %v11256
    %vm11262 = vcmask 261120
    %v11264 = vsel %vm11262, %v11257, 0
    %v11267 = vsel %vm11262, %v11258, 0
    %v11270 = vsel %vm11262, %v11259, 0
    %v11273 = vsel %vm11262, %v11260, 0
    %v11276 = vsel %vm11262, %v11261, 0
    %11278 = vmatpush.bf16.msra.mxu0 0
    %11279 = vmatpush.bf16.msra.mxu0 0
    %11280 = vmatpush.bf16.msra.mxu0 0
    %11281 = vmatpush.bf16.msra.mxu0 0
    %11282 = vmatpush.bf16.msra.mxu0 0
    %11283 = vmatpush.bf16.msra.mxu0 0
    %11284 = vmatpush.bf16.msra.mxu0 %v11229
    %11285 = vmatpush.bf16.msra.mxu0 %v11228
    %11286 = vmatmul.bf16.gmra.mxu0 %v11264
    %v11287 = vpop.f32.mrf.mxu0
    %v11288 = vadd.f32 0.0, %v11287
    %v11289 = vpop.f32.mrf.mxu0
    %v11290 = vadd.f32 0.0, %v11289
    %11291 = vmatmul.bf16.gmra.mxu0 %v11267
    %v11292 = vpop.f32.mrf.mxu0
    %v11293 = vadd.f32 0.0, %v11292
    %v11294 = vpop.f32.mrf.mxu0
    %v11295 = vadd.f32 0.0, %v11294
    %11296 = vmatmul.bf16.gmra.mxu0 %v11270
    %v11297 = vpop.f32.mrf.mxu0
    %v11298 = vadd.f32 0.0, %v11297
    %v11299 = vpop.f32.mrf.mxu0
    %v11300 = vadd.f32 0.0, %v11299
    %11301 = vmatmul.bf16.gmra.mxu0 %v11273
    %v11302 = vpop.f32.mrf.mxu0
    %v11303 = vadd.f32 0.0, %v11302
    %v11304 = vpop.f32.mrf.mxu0
    %v11305 = vadd.f32 0.0, %v11304
    %11306 = vmatmul.bf16.gmra.mxu0 %v11276
    %v11307 = vpop.f32.mrf.mxu0
    %v11308 = vadd.f32 0.0, %v11307
    %v11309 = vpop.f32.mrf.mxu0
    %11310 = vdwg.mxu0
    %v11311 = vpack.c.bf16 %v11288, %v11288
    %v11312 = vpack.c.bf16 %v11290, %v11290
    %v11313 = vpack.c.bf16 %v11293, %v11293
    %v11314 = vpack.c.bf16 %v11295, %v11295
    %v11315 = vpack.c.bf16 %v11298, %v11298
    %v11316 = vpack.c.bf16 %v11300, %v11300
    %v11317 = vpack.c.bf16 %v11303, %v11303
    %v11318 = vpack.c.bf16 %v11305, %v11305
    %v11319 = vpack.c.bf16 %v11308, %v11308
    %v11320 = vld [vmem:[#allocation9] sm:$0xf]
    %v11321 = vld [vmem:[#allocation9 + $0x4] sm:$0xf]
    %v11322 = vld [vmem:[#allocation9 + $0x8] sm:$0xf]
    %v11323 = vld [vmem:[#allocation9 + $0xc] sm:$0xf]
    %v11324 = vld [vmem:[#allocation9 + $0x10] sm:$0xf]
    %v11325 = vld [vmem:[#allocation9 + $0x14] sm:$0xf]
    %v11326 = vld [vmem:[#allocation9 + $0x18] sm:$0xf]
    %v11327 = vld [vmem:[#allocation9 + $0x1c] sm:$0xf]
    %v11328 = vld [vmem:[#allocation9 + $0x20] sm:$0xf]
    %v11329 = vld [vmem:[#allocation9 + $0x24] sm:$0xf]
    %v11330 = vld [vmem:[#allocation9 + $0x28] sm:$0xf]
    %v11331 = vld [vmem:[#allocation9 + $0x2c] sm:$0xf]
    %v11332 = vld [vmem:[#allocation9 + $0x30] sm:$0xf]
    %v11333 = vld [vmem:[#allocation9 + $0x34] sm:$0xf]
    %v11334 = vld [vmem:[#allocation9 + $0x38] sm:$0xf]
    %v11335 = vld [vmem:[#allocation9 + $0x3c] sm:$0xf]
    %v11336 = vld [vmem:[#allocation9 + $0x40] sm:$0xf]
    %v11337 = vld [vmem:[#allocation9 + $0x44] sm:$0xf]
    %v11338 = vld [vmem:[#allocation9 + $0x48] sm:$0xf]
    %v11339 = vld [vmem:[#allocation9 + $0x4c] sm:$0xf]
    %v11340 = vld [vmem:[#allocation9 + $0x50] sm:$0xf]
    %v11341 = vld [vmem:[#allocation9 + $0x54] sm:$0xf]
    %v11342 = vld [vmem:[#allocation9 + $0x58] sm:$0xf]
    %v11343 = vld [vmem:[#allocation9 + $0x5c] sm:$0xf]
    %v11344 = vld [vmem:[#allocation9 + $0x60] sm:$0xf]
    %v11345 = vld [vmem:[#allocation9 + $0x64] sm:$0xf]
    %v11346 = vld [vmem:[#allocation9 + $0x68] sm:$0xf]
    %v11347 = vld [vmem:[#allocation9 + $0x6c] sm:$0xf]
    %v11348 = vld [vmem:[#allocation9 + $0x70] sm:$0xf]
    %v11349 = vld [vmem:[#allocation9 + $0x74] sm:$0xf]
    %v11350 = vld [vmem:[#allocation9 + $0x78] sm:$0xf]
    %v11351 = vld [vmem:[#allocation9 + $0x7c] sm:$0xf]
    %v11352 = vld [vmem:[#allocation9 + $0x80] sm:$0xf]
    %v11353 = vld [vmem:[#allocation9 + $0x84] sm:$0xf]
    %v11354 = vld [vmem:[#allocation9 + $0x88] sm:$0xf]
    %v11355 = vld [vmem:[#allocation9 + $0x8c] sm:$0xf]
    %v11356 = vld [vmem:[#allocation9 + $0x90] sm:$0xf]
    %v11357 = vld [vmem:[#allocation9 + $0x94] sm:$0xf]
    %v11358 = vld [vmem:[#allocation9 + $0x98] sm:$0xf]
    %v11359 = vld [vmem:[#allocation9 + $0x9c] sm:$0xf]
    %v11360 = vld [vmem:[#allocation9 + $0xa0] sm:$0xf]
    %v11361 = vld [vmem:[#allocation9 + $0xa4] sm:$0xf]
    %v11362 = vld [vmem:[#allocation9 + $0xa8] sm:$0xf]
    %v11363 = vld [vmem:[#allocation9 + $0xac] sm:$0xf]
    %v11364 = vld [vmem:[#allocation9 + $0xb0] sm:$0xf]
    %v11365 = vld [vmem:[#allocation9 + $0xb4] sm:$0xf]
    %v11366 = vld [vmem:[#allocation9 + $0xb8] sm:$0xf]
    %v11367 = vld [vmem:[#allocation9 + $0xbc] sm:$0xf]
    %v11368 = vld [vmem:[#allocation9 + $0xc0] sm:$0xf]
    %v11369 = vld [vmem:[#allocation9 + $0xc4] sm:$0xf]
    %v11370 = vld [vmem:[#allocation9 + $0xc8] sm:$0xf]
    %v11371 = vld [vmem:[#allocation9 + $0xcc] sm:$0xf]
    %v11372 = vld [vmem:[#allocation9 + $0xd0] sm:$0xf]
    %v11373 = vld [vmem:[#allocation9 + $0xd4] sm:$0xf]
    %v11374 = vld [vmem:[#allocation9 + $0xd8] sm:$0xf]
    %v11375 = vld [vmem:[#allocation9 + $0xdc] sm:$0xf]
    %v11376 = vld [vmem:[#allocation9 + $0xe0] sm:$0xf]
    %v11377 = vld [vmem:[#allocation9 + $0xe4] sm:$0xf]
    %v11378 = vld [vmem:[#allocation9 + $0xe8] sm:$0xf]
    %v11379 = vld [vmem:[#allocation9 + $0xec] sm:$0xf]
    %v11380 = vld [vmem:[#allocation9 + $0xf0] sm:$0xf]
    %v11381 = vld [vmem:[#allocation9 + $0xf4] sm:$0xf]
    %v11382 = vld [vmem:[#allocation9 + $0xf8] sm:$0xf]
    %v11383 = vld [vmem:[#allocation9 + $0xfc] sm:$0xf]
    %v11384 = vld [vmem:[#allocation9 + $0x100] sm:$0xf]
    %v11385 = vld [vmem:[#allocation9 + $0x104] sm:$0xf]
    %v11386 = vld [vmem:[#allocation9 + $0x108] sm:$0xf]
    %v11387 = vld [vmem:[#allocation9 + $0x10c] sm:$0xf]
    %v11388 = vld [vmem:[#allocation9 + $0x110] sm:$0xf]
    %v11389 = vld [vmem:[#allocation9 + $0x114] sm:$0xf]
    %v11390 = vld [vmem:[#allocation9 + $0x118] sm:$0xf]
    %v11391 = vld [vmem:[#allocation9 + $0x11c] sm:$0xf]
    %v11392 = vld [vmem:[#allocation9 + $0x120] sm:$0xf]
    %v11393 = vld [vmem:[#allocation9 + $0x124] sm:$0xf]
    %v11394 = vld [vmem:[#allocation9 + $0x128] sm:$0xf]
    %v11395 = vld [vmem:[#allocation9 + $0x12c] sm:$0xf]
    %v11396 = vld [vmem:[#allocation9 + $0x130] sm:$0xf]
    %v11397 = vld [vmem:[#allocation9 + $0x134] sm:$0xf]
    %v11398 = vld [vmem:[#allocation9 + $0x138] sm:$0xf]
    %v11399 = vld [vmem:[#allocation9 + $0x13c] sm:$0xf]
    %v11400 = vld [vmem:[#allocation9 + $0x140] sm:$0xf]
    %v11401 = vld [vmem:[#allocation9 + $0x144] sm:$0xf]
    %v11402 = vld [vmem:[#allocation9 + $0x148] sm:$0xf]
    %v11403 = vld [vmem:[#allocation9 + $0x14c] sm:$0xf]
    %v11404 = vld [vmem:[#allocation9 + $0x150] sm:$0xf]
    %v11405 = vld [vmem:[#allocation9 + $0x154] sm:$0xf]
    %v11406 = vld [vmem:[#allocation9 + $0x158] sm:$0xf]
    %v11407 = vld [vmem:[#allocation9 + $0x15c] sm:$0xf]
    %v11408 = vld [vmem:[#allocation9 + $0x160] sm:$0xf]
    %v11409 = vld [vmem:[#allocation9 + $0x164] sm:$0xf]
    %v11410 = vld [vmem:[#allocation9 + $0x168] sm:$0xf]
    %v11411 = vld [vmem:[#allocation9 + $0x16c] sm:$0xf]
    %v11412 = vld [vmem:[#allocation9 + $0x170] sm:$0xf]
    %v11413 = vld [vmem:[#allocation9 + $0x174] sm:$0xf]
    %v11414 = vld [vmem:[#allocation9 + $0x178] sm:$0xf]
    %v11415 = vld [vmem:[#allocation9 + $0x17c] sm:$0xf]
    %v11416 = vld [vmem:[#allocation9 + $0x180] sm:$0xf]
    %v11417 = vld [vmem:[#allocation9 + $0x184] sm:$0xf]
    %v11418 = vld [vmem:[#allocation9 + $0x188] sm:$0xf]
    %v11419 = vld [vmem:[#allocation9 + $0x18c] sm:$0xf]
    %v11420 = vld [vmem:[#allocation9 + $0x190] sm:$0xf]
    %v11421 = vld [vmem:[#allocation9 + $0x194] sm:$0xf]
    %v11422 = vld [vmem:[#allocation9 + $0x198] sm:$0xf]
    %v11423 = vld [vmem:[#allocation9 + $0x19c] sm:$0xf]
    %v11424 = vld [vmem:[#allocation9 + $0x1a0] sm:$0xf]
    %v11425 = vld [vmem:[#allocation9 + $0x1a4] sm:$0xf]
    %v11426 = vld [vmem:[#allocation9 + $0x1a8] sm:$0xf]
    %v11427 = vld [vmem:[#allocation9 + $0x1ac] sm:$0xf]
    %v11428 = vld [vmem:[#allocation9 + $0x1b0] sm:$0xf]
    %v11429 = vld [vmem:[#allocation9 + $0x1b4] sm:$0xf]
    %v11430 = vld [vmem:[#allocation9 + $0x1b8] sm:$0xf]
    %v11431 = vld [vmem:[#allocation9 + $0x1bc] sm:$0xf]
    %v11432 = vld [vmem:[#allocation9 + $0x1c0] sm:$0xf]
    %v11433 = vld [vmem:[#allocation9 + $0x1c4] sm:$0xf]
    %v11434 = vld [vmem:[#allocation9 + $0x1c8] sm:$0xf]
    %v11435 = vld [vmem:[#allocation9 + $0x1cc] sm:$0xf]
    %v11436 = vld [vmem:[#allocation9 + $0x1d0] sm:$0xf]
    %v11437 = vld [vmem:[#allocation9 + $0x1d4] sm:$0xf]
    %v11438 = vld [vmem:[#allocation9 + $0x1d8] sm:$0xf]
    %v11439 = vld [vmem:[#allocation9 + $0x1dc] sm:$0xf]
    %v11440 = vld [vmem:[#allocation9 + $0x1e0] sm:$0xf]
    %v11441 = vld [vmem:[#allocation9 + $0x1e4] sm:$0xf]
    %v11442 = vld [vmem:[#allocation9 + $0x1e8] sm:$0xf]
    %v11443 = vld [vmem:[#allocation9 + $0x1ec] sm:$0xf]
    %v11444 = vld [vmem:[#allocation9 + $0x1f0] sm:$0xf]
    %v11445 = vld [vmem:[#allocation9 + $0x1f4] sm:$0xf]
    %v11446 = vld [vmem:[#allocation9 + $0x1f8] sm:$0xf]
    %v11447 = vld [vmem:[#allocation9 + $0x1fc] sm:$0xf]
    %v11448 = vld [vmem:[#allocation9 + $0x200] sm:$0xf]
    %v11449 = vld [vmem:[#allocation9 + $0x204] sm:$0xf]
    %v11450 = vld [vmem:[#allocation9 + $0x208] sm:$0xf]
    %v11451 = vld [vmem:[#allocation9 + $0x20c] sm:$0xf]
    %v11452 = vld [vmem:[#allocation9 + $0x210] sm:$0xf]
    %v11453 = vld [vmem:[#allocation9 + $0x214] sm:$0xf]
    %v11454 = vld [vmem:[#allocation9 + $0x218] sm:$0xf]
    %v11455 = vld [vmem:[#allocation9 + $0x21c] sm:$0xf]
    %v11456 = vld [vmem:[#allocation9 + $0x220] sm:$0xf]
    %v11457 = vld [vmem:[#allocation9 + $0x224] sm:$0xf]
    %v11458 = vld [vmem:[#allocation9 + $0x228] sm:$0xf]
    %v11459 = vld [vmem:[#allocation9 + $0x22c] sm:$0xf]
    %v11460 = vld [vmem:[#allocation9 + $0x230] sm:$0xf]
    %v11461 = vld [vmem:[#allocation9 + $0x234] sm:$0xf]
    %v11462 = vld [vmem:[#allocation9 + $0x238] sm:$0xf]
    %v11463 = vld [vmem:[#allocation9 + $0x23c] sm:$0xf]
    %s11464 = scalar_lea.vmem %s9, 8
    %v11465 = vld [vmem:[%s11464] sm:$0x1]
    %v11466 = vperm.slane %v11465, 0
    %v11611 = vunpack.c.l.b16 %v11320
    %v11612 = vunpack.c.l.b16 %v11321
    %v11613 = vunpack.c.l.b16 %v11322
    %v11614 = vunpack.c.l.b16 %v11323
    %v11615 = vunpack.c.l.b16 %v11324
    %v11616 = vunpack.c.l.b16 %v11325
    %v11617 = vunpack.c.l.b16 %v11326
    %v11618 = vunpack.c.l.b16 %v11327
    %v11619 = vunpack.c.l.b16 %v11328
    %v11620 = vunpack.c.l.b16 %v11329
    %v11621 = vunpack.c.l.b16 %v11330
    %v11622 = vunpack.c.l.b16 %v11331
    %v11623 = vunpack.c.l.b16 %v11332
    %v11624 = vunpack.c.l.b16 %v11333
    %v11625 = vunpack.c.l.b16 %v11334
    %v11626 = vunpack.c.l.b16 %v11335
    %v11627 = vunpack.c.l.b16 %v11336
    %v11628 = vunpack.c.l.b16 %v11337
    %v11629 = vunpack.c.l.b16 %v11338
    %v11630 = vunpack.c.l.b16 %v11339
    %v11631 = vunpack.c.l.b16 %v11340
    %v11632 = vunpack.c.l.b16 %v11341
    %v11633 = vunpack.c.l.b16 %v11342
    %v11634 = vunpack.c.l.b16 %v11343
    %v11635 = vunpack.c.l.b16 %v11344
    %v11636 = vunpack.c.l.b16 %v11345
    %v11637 = vunpack.c.l.b16 %v11346
    %v11638 = vunpack.c.l.b16 %v11347
    %v11639 = vunpack.c.l.b16 %v11348
    %v11640 = vunpack.c.l.b16 %v11349
    %v11641 = vunpack.c.l.b16 %v11350
    %v11642 = vunpack.c.l.b16 %v11351
    %v11643 = vunpack.c.l.b16 %v11352
    %v11644 = vunpack.c.l.b16 %v11353
    %v11645 = vunpack.c.l.b16 %v11354
    %v11646 = vunpack.c.l.b16 %v11355
    %v11647 = vunpack.c.l.b16 %v11356
    %v11648 = vunpack.c.l.b16 %v11357
    %v11649 = vunpack.c.l.b16 %v11358
    %v11650 = vunpack.c.l.b16 %v11359
    %v11651 = vunpack.c.l.b16 %v11360
    %v11652 = vunpack.c.l.b16 %v11361
    %v11653 = vunpack.c.l.b16 %v11362
    %v11654 = vunpack.c.l.b16 %v11363
    %v11655 = vunpack.c.l.b16 %v11364
    %v11656 = vunpack.c.l.b16 %v11365
    %v11657 = vunpack.c.l.b16 %v11366
    %v11658 = vunpack.c.l.b16 %v11367
    %v11659 = vunpack.c.l.b16 %v11368
    %v11660 = vunpack.c.l.b16 %v11369
    %v11661 = vunpack.c.l.b16 %v11370
    %v11662 = vunpack.c.l.b16 %v11371
    %v11663 = vunpack.c.l.b16 %v11372
    %v11664 = vunpack.c.l.b16 %v11373
    %v11665 = vunpack.c.l.b16 %v11374
    %v11666 = vunpack.c.l.b16 %v11375
    %v11667 = vunpack.c.l.b16 %v11376
    %v11668 = vunpack.c.l.b16 %v11377
    %v11669 = vunpack.c.l.b16 %v11378
    %v11670 = vunpack.c.l.b16 %v11379
    %v11671 = vunpack.c.l.b16 %v11380
    %v11672 = vunpack.c.l.b16 %v11381
    %v11673 = vunpack.c.l.b16 %v11382
    %v11674 = vunpack.c.l.b16 %v11383
    %v11675 = vunpack.c.l.b16 %v11384
    %v11676 = vunpack.c.l.b16 %v11385
    %v11677 = vunpack.c.l.b16 %v11386
    %v11678 = vunpack.c.l.b16 %v11387
    %v11679 = vunpack.c.l.b16 %v11388
    %v11680 = vunpack.c.l.b16 %v11389
    %v11681 = vunpack.c.l.b16 %v11390
    %v11682 = vunpack.c.l.b16 %v11391
    %v11683 = vunpack.c.l.b16 %v11392
    %v11684 = vunpack.c.l.b16 %v11393
    %v11685 = vunpack.c.l.b16 %v11394
    %v11686 = vunpack.c.l.b16 %v11395
    %v11687 = vunpack.c.l.b16 %v11396
    %v11688 = vunpack.c.l.b16 %v11397
    %v11689 = vunpack.c.l.b16 %v11398
    %v11690 = vunpack.c.l.b16 %v11399
    %v11691 = vunpack.c.l.b16 %v11400
    %v11692 = vunpack.c.l.b16 %v11401
    %v11693 = vunpack.c.l.b16 %v11402
    %v11694 = vunpack.c.l.b16 %v11403
    %v11695 = vunpack.c.l.b16 %v11404
    %v11696 = vunpack.c.l.b16 %v11405
    %v11697 = vunpack.c.l.b16 %v11406
    %v11698 = vunpack.c.l.b16 %v11407
    %v11699 = vunpack.c.l.b16 %v11408
    %v11700 = vunpack.c.l.b16 %v11409
    %v11701 = vunpack.c.l.b16 %v11410
    %v11702 = vunpack.c.l.b16 %v11411
    %v11703 = vunpack.c.l.b16 %v11412
    %v11704 = vunpack.c.l.b16 %v11413
    %v11705 = vunpack.c.l.b16 %v11414
    %v11706 = vunpack.c.l.b16 %v11415
    %v11707 = vunpack.c.l.b16 %v11416
    %v11708 = vunpack.c.l.b16 %v11417
    %v11709 = vunpack.c.l.b16 %v11418
    %v11710 = vunpack.c.l.b16 %v11419
    %v11711 = vunpack.c.l.b16 %v11420
    %v11712 = vunpack.c.l.b16 %v11421
    %v11713 = vunpack.c.l.b16 %v11422
    %v11714 = vunpack.c.l.b16 %v11423
    %v11715 = vunpack.c.l.b16 %v11424
    %v11716 = vunpack.c.l.b16 %v11425
    %v11717 = vunpack.c.l.b16 %v11426
    %v11718 = vunpack.c.l.b16 %v11427
    %v11719 = vunpack.c.l.b16 %v11428
    %v11720 = vunpack.c.l.b16 %v11429
    %v11721 = vunpack.c.l.b16 %v11430
    %v11722 = vunpack.c.l.b16 %v11431
    %v11723 = vunpack.c.l.b16 %v11432
    %v11724 = vunpack.c.l.b16 %v11433
    %v11725 = vunpack.c.l.b16 %v11434
    %v11726 = vunpack.c.l.b16 %v11435
    %v11727 = vunpack.c.l.b16 %v11436
    %v11728 = vunpack.c.l.b16 %v11437
    %v11729 = vunpack.c.l.b16 %v11438
    %v11730 = vunpack.c.l.b16 %v11439
    %v11731 = vunpack.c.l.b16 %v11440
    %v11732 = vunpack.c.l.b16 %v11441
    %v11733 = vunpack.c.l.b16 %v11442
    %v11734 = vunpack.c.l.b16 %v11443
    %v11735 = vunpack.c.l.b16 %v11444
    %v11736 = vunpack.c.l.b16 %v11445
    %v11737 = vunpack.c.l.b16 %v11446
    %v11738 = vunpack.c.l.b16 %v11447
    %v11739 = vunpack.c.l.b16 %v11448
    %v11740 = vunpack.c.l.b16 %v11449
    %v11741 = vunpack.c.l.b16 %v11450
    %v11742 = vunpack.c.l.b16 %v11451
    %v11743 = vunpack.c.l.b16 %v11452
    %v11744 = vunpack.c.l.b16 %v11453
    %v11745 = vunpack.c.l.b16 %v11454
    %v11746 = vunpack.c.l.b16 %v11455
    %v11747 = vunpack.c.l.b16 %v11456
    %v11748 = vunpack.c.l.b16 %v11457
    %v11749 = vunpack.c.l.b16 %v11458
    %v11750 = vunpack.c.l.b16 %v11459
    %v11751 = vunpack.c.l.b16 %v11460
    %v11752 = vunpack.c.l.b16 %v11461
    %v11753 = vunpack.c.l.b16 %v11462
    %v11754 = vunpack.c.l.b16 %v11463
    %v11755 = vpack.c.b16 %v11612, %v11611
    %v11756 = vpack.c.b16 %v11614, %v11613
    %v11757 = vpack.c.b16 %v11616, %v11615
    %v11758 = vpack.c.b16 %v11618, %v11617
    %v11759 = vpack.c.b16 %v11620, %v11619
    %v11760 = vpack.c.b16 %v11622, %v11621
    %v11761 = vpack.c.b16 %v11624, %v11623
    %v11762 = vpack.c.b16 %v11626, %v11625
    %v11763 = vpack.c.b16 %v11628, %v11627
    %v11764 = vpack.c.b16 %v11630, %v11629
    %v11765 = vpack.c.b16 %v11632, %v11631
    %v11766 = vpack.c.b16 %v11634, %v11633
    %v11767 = vpack.c.b16 %v11636, %v11635
    %v11768 = vpack.c.b16 %v11638, %v11637
    %v11769 = vpack.c.b16 %v11640, %v11639
    %v11770 = vpack.c.b16 %v11642, %v11641
    %v11771 = vpack.c.b16 %v11644, %v11643
    %v11772 = vpack.c.b16 %v11646, %v11645
    %v11773 = vpack.c.b16 %v11648, %v11647
    %v11774 = vpack.c.b16 %v11650, %v11649
    %v11775 = vpack.c.b16 %v11652, %v11651
    %v11776 = vpack.c.b16 %v11654, %v11653
    %v11777 = vpack.c.b16 %v11656, %v11655
    %v11778 = vpack.c.b16 %v11658, %v11657
    %v11779 = vpack.c.b16 %v11660, %v11659
    %v11780 = vpack.c.b16 %v11662, %v11661
    %v11781 = vpack.c.b16 %v11664, %v11663
    %v11782 = vpack.c.b16 %v11666, %v11665
    %v11783 = vpack.c.b16 %v11668, %v11667
    %v11784 = vpack.c.b16 %v11670, %v11669
    %v11785 = vpack.c.b16 %v11672, %v11671
    %v11786 = vpack.c.b16 %v11674, %v11673
    %v11787 = vpack.c.b16 %v11676, %v11675
    %v11788 = vpack.c.b16 %v11678, %v11677
    %v11789 = vpack.c.b16 %v11680, %v11679
    %v11790 = vpack.c.b16 %v11682, %v11681
    %v11791 = vpack.c.b16 %v11684, %v11683
    %v11792 = vpack.c.b16 %v11686, %v11685
    %v11793 = vpack.c.b16 %v11688, %v11687
    %v11794 = vpack.c.b16 %v11690, %v11689
    %v11795 = vpack.c.b16 %v11692, %v11691
    %v11796 = vpack.c.b16 %v11694, %v11693
    %v11797 = vpack.c.b16 %v11696, %v11695
    %v11798 = vpack.c.b16 %v11698, %v11697
    %v11799 = vpack.c.b16 %v11700, %v11699
    %v11800 = vpack.c.b16 %v11702, %v11701
    %v11801 = vpack.c.b16 %v11704, %v11703
    %v11802 = vpack.c.b16 %v11706, %v11705
    %v11803 = vpack.c.b16 %v11708, %v11707
    %v11804 = vpack.c.b16 %v11710, %v11709
    %v11805 = vpack.c.b16 %v11712, %v11711
    %v11806 = vpack.c.b16 %v11714, %v11713
    %v11807 = vpack.c.b16 %v11716, %v11715
    %v11808 = vpack.c.b16 %v11718, %v11717
    %v11809 = vpack.c.b16 %v11720, %v11719
    %v11810 = vpack.c.b16 %v11722, %v11721
    %v11811 = vpack.c.b16 %v11724, %v11723
    %v11812 = vpack.c.b16 %v11726, %v11725
    %v11813 = vpack.c.b16 %v11728, %v11727
    %v11814 = vpack.c.b16 %v11730, %v11729
    %v11815 = vpack.c.b16 %v11732, %v11731
    %v11816 = vpack.c.b16 %v11734, %v11733
    %v11817 = vpack.c.b16 %v11736, %v11735
    %v11818 = vpack.c.b16 %v11738, %v11737
    %v11819 = vpack.c.b16 %v11740, %v11739
    %v11820 = vpack.c.b16 %v11742, %v11741
    %v11821 = vpack.c.b16 %v11744, %v11743
    %v11822 = vpack.c.b16 %v11746, %v11745
    %v11823 = vpack.c.b16 %v11748, %v11747
    %v11824 = vpack.c.b16 %v11750, %v11749
    %v11825 = vpack.c.b16 %v11752, %v11751
    %v11826 = vpack.c.b16 %v11754, %v11753
    %11899 = vmatpush.bf16.msra.mxu0 %v11762
    %11900 = vmatpush.bf16.msra.mxu0 %v11761
    %11901 = vmatpush.bf16.msra.mxu0 %v11760
    %11902 = vmatpush.bf16.msra.mxu0 %v11759
    %11903 = vmatpush.bf16.msra.mxu0 %v11758
    %11904 = vmatpush.bf16.msra.mxu0 %v11757
    %11905 = vmatpush.bf16.msra.mxu0 %v11756
    %11906 = vmatpush.bf16.msra.mxu0 %v11755
    %11907 = vmatmul.bf16.gmra.mxu0 %v11311
    %v11908 = vpop.f32.mrf.mxu0
    %v11909 = vadd.f32 %v11466, %v11908
    %v11910 = vpop.f32.mrf.mxu0
    %11911 = vdwg.mxu0
    %11912 = vmatpush.bf16.msra.mxu0 %v11770
    %11913 = vmatpush.bf16.msra.mxu0 %v11769
    %11914 = vmatpush.bf16.msra.mxu0 %v11768
    %11915 = vmatpush.bf16.msra.mxu0 %v11767
    %11916 = vmatpush.bf16.msra.mxu0 %v11766
    %11917 = vmatpush.bf16.msra.mxu0 %v11765
    %11918 = vmatpush.bf16.msra.mxu0 %v11764
    %11919 = vmatpush.bf16.msra.mxu0 %v11763
    %11920 = vmatmul.bf16.gmra.mxu0 %v11312
    %v11921 = vpop.f32.mrf.mxu0
    %v11922 = vadd.f32 %v11909, %v11921
    %v11923 = vpop.f32.mrf.mxu0
    %11924 = vdwg.mxu0
    %11925 = vmatpush.bf16.msra.mxu0 %v11778
    %11926 = vmatpush.bf16.msra.mxu0 %v11777
    %11927 = vmatpush.bf16.msra.mxu0 %v11776
    %11928 = vmatpush.bf16.msra.mxu0 %v11775
    %11929 = vmatpush.bf16.msra.mxu0 %v11774
    %11930 = vmatpush.bf16.msra.mxu0 %v11773
    %11931 = vmatpush.bf16.msra.mxu0 %v11772
    %11932 = vmatpush.bf16.msra.mxu0 %v11771
    %11933 = vmatmul.bf16.gmra.mxu0 %v11313
    %v11934 = vpop.f32.mrf.mxu0
    %v11935 = vadd.f32 %v11922, %v11934
    %v11936 = vpop.f32.mrf.mxu0
    %11937 = vdwg.mxu0
    %11938 = vmatpush.bf16.msra.mxu0 %v11786
    %11939 = vmatpush.bf16.msra.mxu0 %v11785
    %11940 = vmatpush.bf16.msra.mxu0 %v11784
    %11941 = vmatpush.bf16.msra.mxu0 %v11783
    %11942 = vmatpush.bf16.msra.mxu0 %v11782
    %11943 = vmatpush.bf16.msra.mxu0 %v11781
    %11944 = vmatpush.bf16.msra.mxu0 %v11780
    %11945 = vmatpush.bf16.msra.mxu0 %v11779
    %11946 = vmatmul.bf16.gmra.mxu0 %v11314
    %v11947 = vpop.f32.mrf.mxu0
    %v11948 = vadd.f32 %v11935, %v11947
    %v11949 = vpop.f32.mrf.mxu0
    %11950 = vdwg.mxu0
    %11951 = vmatpush.bf16.msra.mxu0 %v11794
    %11952 = vmatpush.bf16.msra.mxu0 %v11793
    %11953 = vmatpush.bf16.msra.mxu0 %v11792
    %11954 = vmatpush.bf16.msra.mxu0 %v11791
    %11955 = vmatpush.bf16.msra.mxu0 %v11790
    %11956 = vmatpush.bf16.msra.mxu0 %v11789
    %11957 = vmatpush.bf16.msra.mxu0 %v11788
    %11958 = vmatpush.bf16.msra.mxu0 %v11787
    %11959 = vmatmul.bf16.gmra.mxu0 %v11315
    %v11960 = vpop.f32.mrf.mxu0
    %v11961 = vadd.f32 %v11948, %v11960
    %v11962 = vpop.f32.mrf.mxu0
    %11963 = vdwg.mxu0
    %11964 = vmatpush.bf16.msra.mxu0 %v11802
    %11965 = vmatpush.bf16.msra.mxu0 %v11801
    %11966 = vmatpush.bf16.msra.mxu0 %v11800
    %11967 = vmatpush.bf16.msra.mxu0 %v11799
    %11968 = vmatpush.bf16.msra.mxu0 %v11798
    %11969 = vmatpush.bf16.msra.mxu0 %v11797
    %11970 = vmatpush.bf16.msra.mxu0 %v11796
    %11971 = vmatpush.bf16.msra.mxu0 %v11795
    %11972 = vmatmul.bf16.gmra.mxu0 %v11316
    %v11973 = vpop.f32.mrf.mxu0
    %v11974 = vadd.f32 %v11961, %v11973
    %v11975 = vpop.f32.mrf.mxu0
    %11976 = vdwg.mxu0
    %11977 = vmatpush.bf16.msra.mxu0 %v11810
    %11978 = vmatpush.bf16.msra.mxu0 %v11809
    %11979 = vmatpush.bf16.msra.mxu0 %v11808
    %11980 = vmatpush.bf16.msra.mxu0 %v11807
    %11981 = vmatpush.bf16.msra.mxu0 %v11806
    %11982 = vmatpush.bf16.msra.mxu0 %v11805
    %11983 = vmatpush.bf16.msra.mxu0 %v11804
    %11984 = vmatpush.bf16.msra.mxu0 %v11803
    %11985 = vmatmul.bf16.gmra.mxu0 %v11317
    %v11986 = vpop.f32.mrf.mxu0
    %v11987 = vadd.f32 %v11974, %v11986
    %v11988 = vpop.f32.mrf.mxu0
    %11989 = vdwg.mxu0
    %11990 = vmatpush.bf16.msra.mxu0 %v11818
    %11991 = vmatpush.bf16.msra.mxu0 %v11817
    %11992 = vmatpush.bf16.msra.mxu0 %v11816
    %11993 = vmatpush.bf16.msra.mxu0 %v11815
    %11994 = vmatpush.bf16.msra.mxu0 %v11814
    %11995 = vmatpush.bf16.msra.mxu0 %v11813
    %11996 = vmatpush.bf16.msra.mxu0 %v11812
    %11997 = vmatpush.bf16.msra.mxu0 %v11811
    %11998 = vmatmul.bf16.gmra.mxu0 %v11318
    %v11999 = vpop.f32.mrf.mxu0
    %v12000 = vadd.f32 %v11987, %v11999
    %v12001 = vpop.f32.mrf.mxu0
    %12002 = vdwg.mxu0
    %12003 = vmatpush.bf16.msra.mxu0 %v11826
    %12004 = vmatpush.bf16.msra.mxu0 %v11825
    %12005 = vmatpush.bf16.msra.mxu0 %v11824
    %12006 = vmatpush.bf16.msra.mxu0 %v11823
    %12007 = vmatpush.bf16.msra.mxu0 %v11822
    %12008 = vmatpush.bf16.msra.mxu0 %v11821
    %12009 = vmatpush.bf16.msra.mxu0 %v11820
    %12010 = vmatpush.bf16.msra.mxu0 %v11819
    %12011 = vmatmul.bf16.gmra.mxu0 %v11319
    %v12012 = vpop.f32.mrf.mxu0
    %v12013 = vadd.f32 %v12000, %v12012
    %v12014 = vpop.f32.mrf.mxu0
    %12015 = vdwg.mxu0
    %v12016 = vmax.f32 %v12013, 0.0
    %v12017 = vld [vmem:[%s11464 + $0x1] sm:$0x1]
    %v12018 = vperm.slane %v12017, 0
    %v12019 = vmul.f32 %v12016, %v12018
    %v12020 = vld [vmem:[%s11464 + $0x2] sm:$0x1]
    %v12021 = vperm.slane %v12020, 0
    %v12022 = vadd.f32 %v12019, %v12021
    %v12023 = vpack.c.bf16 %v12022, %v12022
    %v12024 = vld [vmem:[%s7] sm:$0xf]
    %v12025 = vld [vmem:[%s7 + $0x4] sm:$0xf]
    %v12026 = vld [vmem:[%s7 + $0x8] sm:$0xf]
    %v12027 = vld [vmem:[%s7 + $0xc] sm:$0xf]
    %v12028 = vld [vmem:[%s7 + $0x10] sm:$0xf]
    %v12029 = vld [vmem:[%s7 + $0x14] sm:$0xf]
    %v12030 = vld [vmem:[%s7 + $0x18] sm:$0xf]
    %v12031 = vld [vmem:[%s7 + $0x1c] sm:$0xf]
    %v12032 = vld [vmem:[%s7 + $0x20] sm:$0xf]
    %v12042 = vunpack.c.l.b16 %v12024
    %v12043 = vunpack.c.l.b16 %v12025
    %v12044 = vunpack.c.l.b16 %v12026
    %v12045 = vunpack.c.l.b16 %v12027
    %v12046 = vunpack.c.l.b16 %v12028
    %v12047 = vunpack.c.l.b16 %v12029
    %v12048 = vunpack.c.l.b16 %v12030
    %v12049 = vunpack.c.l.b16 %v12031
    %v12050 = vunpack.c.l.b16 %v12032
    %v12051 = vpack.c.b16 %v12043, %v12042
    %v12052 = vpack.c.b16 %v12045, %v12044
    %v12053 = vpack.c.b16 %v12047, %v12046
    %v12054 = vpack.c.b16 %v12049, %v12048
    %v12055 = vpack.c.b16 %v12050, %v12050
    %vm12056 = vcmask 64512
    %v12058 = vsel %vm12056, %v12051, 0
    %v12061 = vsel %vm12056, %v12052, 0
    %v12064 = vsel %vm12056, %v12053, 0
    %v12067 = vsel %vm12056, %v12054, 0
    %v12070 = vsel %vm12056, %v12055, 0
    %vm12072 = vcmask 1043456
    %v12074 = vsel %vm12072, %v12023, 0
    %12076 = vmatpush.bf16.msra.mxu0 0
    %12077 = vmatpush.bf16.msra.mxu0 0
    %12078 = vmatpush.bf16.msra.mxu0 0
    %12079 = vmatpush.bf16.msra.mxu0 0
    %12080 = vmatpush.bf16.msra.mxu0 0
    %12081 = vmatpush.bf16.msra.mxu0 0
    %12082 = vmatpush.bf16.msra.mxu0 0
    %12083 = vmatpush.bf16.msra.mxu0 %v12074
    %12084 = vmatmul.bf16.gmra.mxu0 %v12058
    %v12085 = vpop.f32.mrf.mxu0
    %v12086 = vadd.f32 0.0, %v12085
    %v12087 = vpop.f32.mrf.mxu0
    %v12088 = vadd.f32 0.0, %v12087
    %12089 = vmatmul.bf16.gmra.mxu0 %v12061
    %v12090 = vpop.f32.mrf.mxu0
    %v12091 = vadd.f32 0.0, %v12090
    %v12092 = vpop.f32.mrf.mxu0
    %v12093 = vadd.f32 0.0, %v12092
    %12094 = vmatmul.bf16.gmra.mxu0 %v12064
    %v12095 = vpop.f32.mrf.mxu0
    %v12096 = vadd.f32 0.0, %v12095
    %v12097 = vpop.f32.mrf.mxu0
    %v12098 = vadd.f32 0.0, %v12097
    %12099 = vmatmul.bf16.gmra.mxu0 %v12067
    %v12100 = vpop.f32.mrf.mxu0
    %v12101 = vadd.f32 0.0, %v12100
    %v12102 = vpop.f32.mrf.mxu0
    %v12103 = vadd.f32 0.0, %v12102
    %12104 = vmatmul.bf16.gmra.mxu0 %v12070
    %v12105 = vpop.f32.mrf.mxu0
    %v12106 = vadd.f32 0.0, %v12105
    %v12107 = vpop.f32.mrf.mxu0
    %12108 = vdwg.mxu0
    %v12109 = vpack.c.bf16 %v12086, %v12086
    %v12110 = vpack.c.bf16 %v12088, %v12088
    %v12111 = vpack.c.bf16 %v12091, %v12091
    %v12112 = vpack.c.bf16 %v12093, %v12093
    %v12113 = vpack.c.bf16 %v12096, %v12096
    %v12114 = vpack.c.bf16 %v12098, %v12098
    %v12115 = vpack.c.bf16 %v12101, %v12101
    %v12116 = vpack.c.bf16 %v12103, %v12103
    %v12117 = vpack.c.bf16 %v12106, %v12106
    %v12118 = vld [vmem:[#allocation10] sm:$0xf]
    %v12119 = vld [vmem:[#allocation10 + $0x4] sm:$0xf]
    %v12120 = vld [vmem:[#allocation10 + $0x8] sm:$0xf]
    %v12121 = vld [vmem:[#allocation10 + $0xc] sm:$0xf]
    %v12122 = vld [vmem:[#allocation10 + $0x10] sm:$0xf]
    %v12123 = vld [vmem:[#allocation10 + $0x14] sm:$0xf]
    %v12124 = vld [vmem:[#allocation10 + $0x18] sm:$0xf]
    %v12125 = vld [vmem:[#allocation10 + $0x1c] sm:$0xf]
    %v12126 = vld [vmem:[#allocation10 + $0x20] sm:$0xf]
    %v12127 = vld [vmem:[#allocation10 + $0x24] sm:$0xf]
    %v12128 = vld [vmem:[#allocation10 + $0x28] sm:$0xf]
    %v12129 = vld [vmem:[#allocation10 + $0x2c] sm:$0xf]
    %v12130 = vld [vmem:[#allocation10 + $0x30] sm:$0xf]
    %v12131 = vld [vmem:[#allocation10 + $0x34] sm:$0xf]
    %v12132 = vld [vmem:[#allocation10 + $0x38] sm:$0xf]
    %v12133 = vld [vmem:[#allocation10 + $0x3c] sm:$0xf]
    %v12134 = vld [vmem:[#allocation10 + $0x40] sm:$0xf]
    %v12135 = vld [vmem:[#allocation10 + $0x44] sm:$0xf]
    %v12136 = vld [vmem:[#allocation10 + $0x48] sm:$0xf]
    %v12137 = vld [vmem:[#allocation10 + $0x4c] sm:$0xf]
    %v12138 = vld [vmem:[#allocation10 + $0x50] sm:$0xf]
    %v12139 = vld [vmem:[#allocation10 + $0x54] sm:$0xf]
    %v12140 = vld [vmem:[#allocation10 + $0x58] sm:$0xf]
    %v12141 = vld [vmem:[#allocation10 + $0x5c] sm:$0xf]
    %v12142 = vld [vmem:[#allocation10 + $0x60] sm:$0xf]
    %v12143 = vld [vmem:[#allocation10 + $0x64] sm:$0xf]
    %v12144 = vld [vmem:[#allocation10 + $0x68] sm:$0xf]
    %v12145 = vld [vmem:[#allocation10 + $0x6c] sm:$0xf]
    %v12146 = vld [vmem:[#allocation10 + $0x70] sm:$0xf]
    %v12147 = vld [vmem:[#allocation10 + $0x74] sm:$0xf]
    %v12148 = vld [vmem:[#allocation10 + $0x78] sm:$0xf]
    %v12149 = vld [vmem:[#allocation10 + $0x7c] sm:$0xf]
    %v12150 = vld [vmem:[#allocation10 + $0x80] sm:$0xf]
    %v12151 = vld [vmem:[#allocation10 + $0x84] sm:$0xf]
    %v12152 = vld [vmem:[#allocation10 + $0x88] sm:$0xf]
    %v12153 = vld [vmem:[#allocation10 + $0x8c] sm:$0xf]
    %v12154 = vld [vmem:[#allocation10 + $0x90] sm:$0xf]
    %v12155 = vld [vmem:[#allocation10 + $0x94] sm:$0xf]
    %v12156 = vld [vmem:[#allocation10 + $0x98] sm:$0xf]
    %v12157 = vld [vmem:[#allocation10 + $0x9c] sm:$0xf]
    %v12158 = vld [vmem:[#allocation10 + $0xa0] sm:$0xf]
    %v12159 = vld [vmem:[#allocation10 + $0xa4] sm:$0xf]
    %v12160 = vld [vmem:[#allocation10 + $0xa8] sm:$0xf]
    %v12161 = vld [vmem:[#allocation10 + $0xac] sm:$0xf]
    %v12162 = vld [vmem:[#allocation10 + $0xb0] sm:$0xf]
    %v12163 = vld [vmem:[#allocation10 + $0xb4] sm:$0xf]
    %v12164 = vld [vmem:[#allocation10 + $0xb8] sm:$0xf]
    %v12165 = vld [vmem:[#allocation10 + $0xbc] sm:$0xf]
    %v12166 = vld [vmem:[#allocation10 + $0xc0] sm:$0xf]
    %v12167 = vld [vmem:[#allocation10 + $0xc4] sm:$0xf]
    %v12168 = vld [vmem:[#allocation10 + $0xc8] sm:$0xf]
    %v12169 = vld [vmem:[#allocation10 + $0xcc] sm:$0xf]
    %v12170 = vld [vmem:[#allocation10 + $0xd0] sm:$0xf]
    %v12171 = vld [vmem:[#allocation10 + $0xd4] sm:$0xf]
    %v12172 = vld [vmem:[#allocation10 + $0xd8] sm:$0xf]
    %v12173 = vld [vmem:[#allocation10 + $0xdc] sm:$0xf]
    %v12174 = vld [vmem:[#allocation10 + $0xe0] sm:$0xf]
    %v12175 = vld [vmem:[#allocation10 + $0xe4] sm:$0xf]
    %v12176 = vld [vmem:[#allocation10 + $0xe8] sm:$0xf]
    %v12177 = vld [vmem:[#allocation10 + $0xec] sm:$0xf]
    %v12178 = vld [vmem:[#allocation10 + $0xf0] sm:$0xf]
    %v12179 = vld [vmem:[#allocation10 + $0xf4] sm:$0xf]
    %v12180 = vld [vmem:[#allocation10 + $0xf8] sm:$0xf]
    %v12181 = vld [vmem:[#allocation10 + $0xfc] sm:$0xf]
    %v12182 = vld [vmem:[#allocation10 + $0x100] sm:$0xf]
    %v12183 = vld [vmem:[#allocation10 + $0x104] sm:$0xf]
    %v12184 = vld [vmem:[#allocation10 + $0x108] sm:$0xf]
    %v12185 = vld [vmem:[#allocation10 + $0x10c] sm:$0xf]
    %v12186 = vld [vmem:[#allocation10 + $0x110] sm:$0xf]
    %v12187 = vld [vmem:[#allocation10 + $0x114] sm:$0xf]
    %v12188 = vld [vmem:[#allocation10 + $0x118] sm:$0xf]
    %v12189 = vld [vmem:[#allocation10 + $0x11c] sm:$0xf]
    %v12190 = vld [vmem:[#allocation10 + $0x120] sm:$0xf]
    %v12191 = vld [vmem:[#allocation10 + $0x124] sm:$0xf]
    %v12192 = vld [vmem:[#allocation10 + $0x128] sm:$0xf]
    %v12193 = vld [vmem:[#allocation10 + $0x12c] sm:$0xf]
    %v12194 = vld [vmem:[#allocation10 + $0x130] sm:$0xf]
    %v12195 = vld [vmem:[#allocation10 + $0x134] sm:$0xf]
    %v12196 = vld [vmem:[#allocation10 + $0x138] sm:$0xf]
    %v12197 = vld [vmem:[#allocation10 + $0x13c] sm:$0xf]
    %v12198 = vld [vmem:[#allocation10 + $0x140] sm:$0xf]
    %v12199 = vld [vmem:[#allocation10 + $0x144] sm:$0xf]
    %v12200 = vld [vmem:[#allocation10 + $0x148] sm:$0xf]
    %v12201 = vld [vmem:[#allocation10 + $0x14c] sm:$0xf]
    %v12202 = vld [vmem:[#allocation10 + $0x150] sm:$0xf]
    %v12203 = vld [vmem:[#allocation10 + $0x154] sm:$0xf]
    %v12204 = vld [vmem:[#allocation10 + $0x158] sm:$0xf]
    %v12205 = vld [vmem:[#allocation10 + $0x15c] sm:$0xf]
    %v12206 = vld [vmem:[#allocation10 + $0x160] sm:$0xf]
    %v12207 = vld [vmem:[#allocation10 + $0x164] sm:$0xf]
    %v12208 = vld [vmem:[#allocation10 + $0x168] sm:$0xf]
    %v12209 = vld [vmem:[#allocation10 + $0x16c] sm:$0xf]
    %v12210 = vld [vmem:[#allocation10 + $0x170] sm:$0xf]
    %v12211 = vld [vmem:[#allocation10 + $0x174] sm:$0xf]
    %v12212 = vld [vmem:[#allocation10 + $0x178] sm:$0xf]
    %v12213 = vld [vmem:[#allocation10 + $0x17c] sm:$0xf]
    %v12214 = vld [vmem:[#allocation10 + $0x180] sm:$0xf]
    %v12215 = vld [vmem:[#allocation10 + $0x184] sm:$0xf]
    %v12216 = vld [vmem:[#allocation10 + $0x188] sm:$0xf]
    %v12217 = vld [vmem:[#allocation10 + $0x18c] sm:$0xf]
    %v12218 = vld [vmem:[#allocation10 + $0x190] sm:$0xf]
    %v12219 = vld [vmem:[#allocation10 + $0x194] sm:$0xf]
    %v12220 = vld [vmem:[#allocation10 + $0x198] sm:$0xf]
    %v12221 = vld [vmem:[#allocation10 + $0x19c] sm:$0xf]
    %v12222 = vld [vmem:[#allocation10 + $0x1a0] sm:$0xf]
    %v12223 = vld [vmem:[#allocation10 + $0x1a4] sm:$0xf]
    %v12224 = vld [vmem:[#allocation10 + $0x1a8] sm:$0xf]
    %v12225 = vld [vmem:[#allocation10 + $0x1ac] sm:$0xf]
    %v12226 = vld [vmem:[#allocation10 + $0x1b0] sm:$0xf]
    %v12227 = vld [vmem:[#allocation10 + $0x1b4] sm:$0xf]
    %v12228 = vld [vmem:[#allocation10 + $0x1b8] sm:$0xf]
    %v12229 = vld [vmem:[#allocation10 + $0x1bc] sm:$0xf]
    %v12230 = vld [vmem:[#allocation10 + $0x1c0] sm:$0xf]
    %v12231 = vld [vmem:[#allocation10 + $0x1c4] sm:$0xf]
    %v12232 = vld [vmem:[#allocation10 + $0x1c8] sm:$0xf]
    %v12233 = vld [vmem:[#allocation10 + $0x1cc] sm:$0xf]
    %v12234 = vld [vmem:[#allocation10 + $0x1d0] sm:$0xf]
    %v12235 = vld [vmem:[#allocation10 + $0x1d4] sm:$0xf]
    %v12236 = vld [vmem:[#allocation10 + $0x1d8] sm:$0xf]
    %v12237 = vld [vmem:[#allocation10 + $0x1dc] sm:$0xf]
    %v12238 = vld [vmem:[#allocation10 + $0x1e0] sm:$0xf]
    %v12239 = vld [vmem:[#allocation10 + $0x1e4] sm:$0xf]
    %v12240 = vld [vmem:[#allocation10 + $0x1e8] sm:$0xf]
    %v12241 = vld [vmem:[#allocation10 + $0x1ec] sm:$0xf]
    %v12242 = vld [vmem:[#allocation10 + $0x1f0] sm:$0xf]
    %v12243 = vld [vmem:[#allocation10 + $0x1f4] sm:$0xf]
    %v12244 = vld [vmem:[#allocation10 + $0x1f8] sm:$0xf]
    %v12245 = vld [vmem:[#allocation10 + $0x1fc] sm:$0xf]
    %v12246 = vld [vmem:[#allocation10 + $0x200] sm:$0xf]
    %v12247 = vld [vmem:[#allocation10 + $0x204] sm:$0xf]
    %v12248 = vld [vmem:[#allocation10 + $0x208] sm:$0xf]
    %v12249 = vld [vmem:[#allocation10 + $0x20c] sm:$0xf]
    %v12250 = vld [vmem:[#allocation10 + $0x210] sm:$0xf]
    %v12251 = vld [vmem:[#allocation10 + $0x214] sm:$0xf]
    %v12252 = vld [vmem:[#allocation10 + $0x218] sm:$0xf]
    %v12253 = vld [vmem:[#allocation10 + $0x21c] sm:$0xf]
    %v12254 = vld [vmem:[#allocation10 + $0x220] sm:$0xf]
    %v12255 = vld [vmem:[#allocation10 + $0x224] sm:$0xf]
    %v12256 = vld [vmem:[#allocation10 + $0x228] sm:$0xf]
    %v12257 = vld [vmem:[#allocation10 + $0x22c] sm:$0xf]
    %v12258 = vld [vmem:[#allocation10 + $0x230] sm:$0xf]
    %v12259 = vld [vmem:[#allocation10 + $0x234] sm:$0xf]
    %v12260 = vld [vmem:[#allocation10 + $0x238] sm:$0xf]
    %v12261 = vld [vmem:[#allocation10 + $0x23c] sm:$0xf]
    %s12262 = scalar_lea.vmem %s9, 12
    %v12263 = vld [vmem:[%s12262] sm:$0x1]
    %v12264 = vperm.slane %v12263, 0
    %v12409 = vunpack.c.l.b16 %v12118
    %v12410 = vunpack.c.l.b16 %v12119
    %v12411 = vunpack.c.l.b16 %v12120
    %v12412 = vunpack.c.l.b16 %v12121
    %v12413 = vunpack.c.l.b16 %v12122
    %v12414 = vunpack.c.l.b16 %v12123
    %v12415 = vunpack.c.l.b16 %v12124
    %v12416 = vunpack.c.l.b16 %v12125
    %v12417 = vunpack.c.l.b16 %v12126
    %v12418 = vunpack.c.l.b16 %v12127
    %v12419 = vunpack.c.l.b16 %v12128
    %v12420 = vunpack.c.l.b16 %v12129
    %v12421 = vunpack.c.l.b16 %v12130
    %v12422 = vunpack.c.l.b16 %v12131
    %v12423 = vunpack.c.l.b16 %v12132
    %v12424 = vunpack.c.l.b16 %v12133
    %v12425 = vunpack.c.l.b16 %v12134
    %v12426 = vunpack.c.l.b16 %v12135
    %v12427 = vunpack.c.l.b16 %v12136
    %v12428 = vunpack.c.l.b16 %v12137
    %v12429 = vunpack.c.l.b16 %v12138
    %v12430 = vunpack.c.l.b16 %v12139
    %v12431 = vunpack.c.l.b16 %v12140
    %v12432 = vunpack.c.l.b16 %v12141
    %v12433 = vunpack.c.l.b16 %v12142
    %v12434 = vunpack.c.l.b16 %v12143
    %v12435 = vunpack.c.l.b16 %v12144
    %v12436 = vunpack.c.l.b16 %v12145
    %v12437 = vunpack.c.l.b16 %v12146
    %v12438 = vunpack.c.l.b16 %v12147
    %v12439 = vunpack.c.l.b16 %v12148
    %v12440 = vunpack.c.l.b16 %v12149
    %v12441 = vunpack.c.l.b16 %v12150
    %v12442 = vunpack.c.l.b16 %v12151
    %v12443 = vunpack.c.l.b16 %v12152
    %v12444 = vunpack.c.l.b16 %v12153
    %v12445 = vunpack.c.l.b16 %v12154
    %v12446 = vunpack.c.l.b16 %v12155
    %v12447 = vunpack.c.l.b16 %v12156
    %v12448 = vunpack.c.l.b16 %v12157
    %v12449 = vunpack.c.l.b16 %v12158
    %v12450 = vunpack.c.l.b16 %v12159
    %v12451 = vunpack.c.l.b16 %v12160
    %v12452 = vunpack.c.l.b16 %v12161
    %v12453 = vunpack.c.l.b16 %v12162
    %v12454 = vunpack.c.l.b16 %v12163
    %v12455 = vunpack.c.l.b16 %v12164
    %v12456 = vunpack.c.l.b16 %v12165
    %v12457 = vunpack.c.l.b16 %v12166
    %v12458 = vunpack.c.l.b16 %v12167
    %v12459 = vunpack.c.l.b16 %v12168
    %v12460 = vunpack.c.l.b16 %v12169
    %v12461 = vunpack.c.l.b16 %v12170
    %v12462 = vunpack.c.l.b16 %v12171
    %v12463 = vunpack.c.l.b16 %v12172
    %v12464 = vunpack.c.l.b16 %v12173
    %v12465 = vunpack.c.l.b16 %v12174
    %v12466 = vunpack.c.l.b16 %v12175
    %v12467 = vunpack.c.l.b16 %v12176
    %v12468 = vunpack.c.l.b16 %v12177
    %v12469 = vunpack.c.l.b16 %v12178
    %v12470 = vunpack.c.l.b16 %v12179
    %v12471 = vunpack.c.l.b16 %v12180
    %v12472 = vunpack.c.l.b16 %v12181
    %v12473 = vunpack.c.l.b16 %v12182
    %v12474 = vunpack.c.l.b16 %v12183
    %v12475 = vunpack.c.l.b16 %v12184
    %v12476 = vunpack.c.l.b16 %v12185
    %v12477 = vunpack.c.l.b16 %v12186
    %v12478 = vunpack.c.l.b16 %v12187
    %v12479 = vunpack.c.l.b16 %v12188
    %v12480 = vunpack.c.l.b16 %v12189
    %v12481 = vunpack.c.l.b16 %v12190
    %v12482 = vunpack.c.l.b16 %v12191
    %v12483 = vunpack.c.l.b16 %v12192
    %v12484 = vunpack.c.l.b16 %v12193
    %v12485 = vunpack.c.l.b16 %v12194
    %v12486 = vunpack.c.l.b16 %v12195
    %v12487 = vunpack.c.l.b16 %v12196
    %v12488 = vunpack.c.l.b16 %v12197
    %v12489 = vunpack.c.l.b16 %v12198
    %v12490 = vunpack.c.l.b16 %v12199
    %v12491 = vunpack.c.l.b16 %v12200
    %v12492 = vunpack.c.l.b16 %v12201
    %v12493 = vunpack.c.l.b16 %v12202
    %v12494 = vunpack.c.l.b16 %v12203
    %v12495 = vunpack.c.l.b16 %v12204
    %v12496 = vunpack.c.l.b16 %v12205
    %v12497 = vunpack.c.l.b16 %v12206
    %v12498 = vunpack.c.l.b16 %v12207
    %v12499 = vunpack.c.l.b16 %v12208
    %v12500 = vunpack.c.l.b16 %v12209
    %v12501 = vunpack.c.l.b16 %v12210
    %v12502 = vunpack.c.l.b16 %v12211
    %v12503 = vunpack.c.l.b16 %v12212
    %v12504 = vunpack.c.l.b16 %v12213
    %v12505 = vunpack.c.l.b16 %v12214
    %v12506 = vunpack.c.l.b16 %v12215
    %v12507 = vunpack.c.l.b16 %v12216
    %v12508 = vunpack.c.l.b16 %v12217
    %v12509 = vunpack.c.l.b16 %v12218
    %v12510 = vunpack.c.l.b16 %v12219
    %v12511 = vunpack.c.l.b16 %v12220
    %v12512 = vunpack.c.l.b16 %v12221
    %v12513 = vunpack.c.l.b16 %v12222
    %v12514 = vunpack.c.l.b16 %v12223
    %v12515 = vunpack.c.l.b16 %v12224
    %v12516 = vunpack.c.l.b16 %v12225
    %v12517 = vunpack.c.l.b16 %v12226
    %v12518 = vunpack.c.l.b16 %v12227
    %v12519 = vunpack.c.l.b16 %v12228
    %v12520 = vunpack.c.l.b16 %v12229
    %v12521 = vunpack.c.l.b16 %v12230
    %v12522 = vunpack.c.l.b16 %v12231
    %v12523 = vunpack.c.l.b16 %v12232
    %v12524 = vunpack.c.l.b16 %v12233
    %v12525 = vunpack.c.l.b16 %v12234
    %v12526 = vunpack.c.l.b16 %v12235
    %v12527 = vunpack.c.l.b16 %v12236
    %v12528 = vunpack.c.l.b16 %v12237
    %v12529 = vunpack.c.l.b16 %v12238
    %v12530 = vunpack.c.l.b16 %v12239
    %v12531 = vunpack.c.l.b16 %v12240
    %v12532 = vunpack.c.l.b16 %v12241
    %v12533 = vunpack.c.l.b16 %v12242
    %v12534 = vunpack.c.l.b16 %v12243
    %v12535 = vunpack.c.l.b16 %v12244
    %v12536 = vunpack.c.l.b16 %v12245
    %v12537 = vunpack.c.l.b16 %v12246
    %v12538 = vunpack.c.l.b16 %v12247
    %v12539 = vunpack.c.l.b16 %v12248
    %v12540 = vunpack.c.l.b16 %v12249
    %v12541 = vunpack.c.l.b16 %v12250
    %v12542 = vunpack.c.l.b16 %v12251
    %v12543 = vunpack.c.l.b16 %v12252
    %v12544 = vunpack.c.l.b16 %v12253
    %v12545 = vunpack.c.l.b16 %v12254
    %v12546 = vunpack.c.l.b16 %v12255
    %v12547 = vunpack.c.l.b16 %v12256
    %v12548 = vunpack.c.l.b16 %v12257
    %v12549 = vunpack.c.l.b16 %v12258
    %v12550 = vunpack.c.l.b16 %v12259
    %v12551 = vunpack.c.l.b16 %v12260
    %v12552 = vunpack.c.l.b16 %v12261
    %v12553 = vpack.c.b16 %v12410, %v12409
    %v12554 = vpack.c.b16 %v12412, %v12411
    %v12555 = vpack.c.b16 %v12414, %v12413
    %v12556 = vpack.c.b16 %v12416, %v12415
    %v12557 = vpack.c.b16 %v12418, %v12417
    %v12558 = vpack.c.b16 %v12420, %v12419
    %v12559 = vpack.c.b16 %v12422, %v12421
    %v12560 = vpack.c.b16 %v12424, %v12423
    %v12561 = vpack.c.b16 %v12426, %v12425
    %v12562 = vpack.c.b16 %v12428, %v12427
    %v12563 = vpack.c.b16 %v12430, %v12429
    %v12564 = vpack.c.b16 %v12432, %v12431
    %v12565 = vpack.c.b16 %v12434, %v12433
    %v12566 = vpack.c.b16 %v12436, %v12435
    %v12567 = vpack.c.b16 %v12438, %v12437
    %v12568 = vpack.c.b16 %v12440, %v12439
    %v12569 = vpack.c.b16 %v12442, %v12441
    %v12570 = vpack.c.b16 %v12444, %v12443
    %v12571 = vpack.c.b16 %v12446, %v12445
    %v12572 = vpack.c.b16 %v12448, %v12447
    %v12573 = vpack.c.b16 %v12450, %v12449
    %v12574 = vpack.c.b16 %v12452, %v12451
    %v12575 = vpack.c.b16 %v12454, %v12453
    %v12576 = vpack.c.b16 %v12456, %v12455
    %v12577 = vpack.c.b16 %v12458, %v12457
    %v12578 = vpack.c.b16 %v12460, %v12459
    %v12579 = vpack.c.b16 %v12462, %v12461
    %v12580 = vpack.c.b16 %v12464, %v12463
    %v12581 = vpack.c.b16 %v12466, %v12465
    %v12582 = vpack.c.b16 %v12468, %v12467
    %v12583 = vpack.c.b16 %v12470, %v12469
    %v12584 = vpack.c.b16 %v12472, %v12471
    %v12585 = vpack.c.b16 %v12474, %v12473
    %v12586 = vpack.c.b16 %v12476, %v12475
    %v12587 = vpack.c.b16 %v12478, %v12477
    %v12588 = vpack.c.b16 %v12480, %v12479
    %v12589 = vpack.c.b16 %v12482, %v12481
    %v12590 = vpack.c.b16 %v12484, %v12483
    %v12591 = vpack.c.b16 %v12486, %v12485
    %v12592 = vpack.c.b16 %v12488, %v12487
    %v12593 = vpack.c.b16 %v12490, %v12489
    %v12594 = vpack.c.b16 %v12492, %v12491
    %v12595 = vpack.c.b16 %v12494, %v12493
    %v12596 = vpack.c.b16 %v12496, %v12495
    %v12597 = vpack.c.b16 %v12498, %v12497
    %v12598 = vpack.c.b16 %v12500, %v12499
    %v12599 = vpack.c.b16 %v12502, %v12501
    %v12600 = vpack.c.b16 %v12504, %v12503
    %v12601 = vpack.c.b16 %v12506, %v12505
    %v12602 = vpack.c.b16 %v12508, %v12507
    %v12603 = vpack.c.b16 %v12510, %v12509
    %v12604 = vpack.c.b16 %v12512, %v12511
    %v12605 = vpack.c.b16 %v12514, %v12513
    %v12606 = vpack.c.b16 %v12516, %v12515
    %v12607 = vpack.c.b16 %v12518, %v12517
    %v12608 = vpack.c.b16 %v12520, %v12519
    %v12609 = vpack.c.b16 %v12522, %v12521
    %v12610 = vpack.c.b16 %v12524, %v12523
    %v12611 = vpack.c.b16 %v12526, %v12525
    %v12612 = vpack.c.b16 %v12528, %v12527
    %v12613 = vpack.c.b16 %v12530, %v12529
    %v12614 = vpack.c.b16 %v12532, %v12531
    %v12615 = vpack.c.b16 %v12534, %v12533
    %v12616 = vpack.c.b16 %v12536, %v12535
    %v12617 = vpack.c.b16 %v12538, %v12537
    %v12618 = vpack.c.b16 %v12540, %v12539
    %v12619 = vpack.c.b16 %v12542, %v12541
    %v12620 = vpack.c.b16 %v12544, %v12543
    %v12621 = vpack.c.b16 %v12546, %v12545
    %v12622 = vpack.c.b16 %v12548, %v12547
    %v12623 = vpack.c.b16 %v12550, %v12549
    %v12624 = vpack.c.b16 %v12552, %v12551
    %12697 = vmatpush.bf16.msra.mxu0 %v12560
    %12698 = vmatpush.bf16.msra.mxu0 %v12559
    %12699 = vmatpush.bf16.msra.mxu0 %v12558
    %12700 = vmatpush.bf16.msra.mxu0 %v12557
    %12701 = vmatpush.bf16.msra.mxu0 %v12556
    %12702 = vmatpush.bf16.msra.mxu0 %v12555
    %12703 = vmatpush.bf16.msra.mxu0 %v12554
    %12704 = vmatpush.bf16.msra.mxu0 %v12553
    %12705 = vmatmul.bf16.gmra.mxu0 %v12109
    %v12706 = vpop.f32.mrf.mxu0
    %v12707 = vadd.f32 %v12264, %v12706
    %v12708 = vpop.f32.mrf.mxu0
    %12709 = vdwg.mxu0
    %12710 = vmatpush.bf16.msra.mxu0 %v12568
    %12711 = vmatpush.bf16.msra.mxu0 %v12567
    %12712 = vmatpush.bf16.msra.mxu0 %v12566
    %12713 = vmatpush.bf16.msra.mxu0 %v12565
    %12714 = vmatpush.bf16.msra.mxu0 %v12564
    %12715 = vmatpush.bf16.msra.mxu0 %v12563
    %12716 = vmatpush.bf16.msra.mxu0 %v12562
    %12717 = vmatpush.bf16.msra.mxu0 %v12561
    %12718 = vmatmul.bf16.gmra.mxu0 %v12110
    %v12719 = vpop.f32.mrf.mxu0
    %v12720 = vadd.f32 %v12707, %v12719
    %v12721 = vpop.f32.mrf.mxu0
    %12722 = vdwg.mxu0
    %12723 = vmatpush.bf16.msra.mxu0 %v12576
    %12724 = vmatpush.bf16.msra.mxu0 %v12575
    %12725 = vmatpush.bf16.msra.mxu0 %v12574
    %12726 = vmatpush.bf16.msra.mxu0 %v12573
    %12727 = vmatpush.bf16.msra.mxu0 %v12572
    %12728 = vmatpush.bf16.msra.mxu0 %v12571
    %12729 = vmatpush.bf16.msra.mxu0 %v12570
    %12730 = vmatpush.bf16.msra.mxu0 %v12569
    %12731 = vmatmul.bf16.gmra.mxu0 %v12111
    %v12732 = vpop.f32.mrf.mxu0
    %v12733 = vadd.f32 %v12720, %v12732
    %v12734 = vpop.f32.mrf.mxu0
    %12735 = vdwg.mxu0
    %12736 = vmatpush.bf16.msra.mxu0 %v12584
    %12737 = vmatpush.bf16.msra.mxu0 %v12583
    %12738 = vmatpush.bf16.msra.mxu0 %v12582
    %12739 = vmatpush.bf16.msra.mxu0 %v12581
    %12740 = vmatpush.bf16.msra.mxu0 %v12580
    %12741 = vmatpush.bf16.msra.mxu0 %v12579
    %12742 = vmatpush.bf16.msra.mxu0 %v12578
    %12743 = vmatpush.bf16.msra.mxu0 %v12577
    %12744 = vmatmul.bf16.gmra.mxu0 %v12112
    %v12745 = vpop.f32.mrf.mxu0
    %v12746 = vadd.f32 %v12733, %v12745
    %v12747 = vpop.f32.mrf.mxu0
    %12748 = vdwg.mxu0
    %12749 = vmatpush.bf16.msra.mxu0 %v12592
    %12750 = vmatpush.bf16.msra.mxu0 %v12591
    %12751 = vmatpush.bf16.msra.mxu0 %v12590
    %12752 = vmatpush.bf16.msra.mxu0 %v12589
    %12753 = vmatpush.bf16.msra.mxu0 %v12588
    %12754 = vmatpush.bf16.msra.mxu0 %v12587
    %12755 = vmatpush.bf16.msra.mxu0 %v12586
    %12756 = vmatpush.bf16.msra.mxu0 %v12585
    %12757 = vmatmul.bf16.gmra.mxu0 %v12113
    %v12758 = vpop.f32.mrf.mxu0
    %v12759 = vadd.f32 %v12746, %v12758
    %v12760 = vpop.f32.mrf.mxu0
    %12761 = vdwg.mxu0
    %12762 = vmatpush.bf16.msra.mxu0 %v12600
    %12763 = vmatpush.bf16.msra.mxu0 %v12599
    %12764 = vmatpush.bf16.msra.mxu0 %v12598
    %12765 = vmatpush.bf16.msra.mxu0 %v12597
    %12766 = vmatpush.bf16.msra.mxu0 %v12596
    %12767 = vmatpush.bf16.msra.mxu0 %v12595
    %12768 = vmatpush.bf16.msra.mxu0 %v12594
    %12769 = vmatpush.bf16.msra.mxu0 %v12593
    %12770 = vmatmul.bf16.gmra.mxu0 %v12114
    %v12771 = vpop.f32.mrf.mxu0
    %v12772 = vadd.f32 %v12759, %v12771
    %v12773 = vpop.f32.mrf.mxu0
    %12774 = vdwg.mxu0
    %12775 = vmatpush.bf16.msra.mxu0 %v12608
    %12776 = vmatpush.bf16.msra.mxu0 %v12607
    %12777 = vmatpush.bf16.msra.mxu0 %v12606
    %12778 = vmatpush.bf16.msra.mxu0 %v12605
    %12779 = vmatpush.bf16.msra.mxu0 %v12604
    %12780 = vmatpush.bf16.msra.mxu0 %v12603
    %12781 = vmatpush.bf16.msra.mxu0 %v12602
    %12782 = vmatpush.bf16.msra.mxu0 %v12601
    %12783 = vmatmul.bf16.gmra.mxu0 %v12115
    %v12784 = vpop.f32.mrf.mxu0
    %v12785 = vadd.f32 %v12772, %v12784
    %v12786 = vpop.f32.mrf.mxu0
    %12787 = vdwg.mxu0
    %12788 = vmatpush.bf16.msra.mxu0 %v12616
    %12789 = vmatpush.bf16.msra.mxu0 %v12615
    %12790 = vmatpush.bf16.msra.mxu0 %v12614
    %12791 = vmatpush.bf16.msra.mxu0 %v12613
    %12792 = vmatpush.bf16.msra.mxu0 %v12612
    %12793 = vmatpush.bf16.msra.mxu0 %v12611
    %12794 = vmatpush.bf16.msra.mxu0 %v12610
    %12795 = vmatpush.bf16.msra.mxu0 %v12609
    %12796 = vmatmul.bf16.gmra.mxu0 %v12116
    %v12797 = vpop.f32.mrf.mxu0
    %v12798 = vadd.f32 %v12785, %v12797
    %v12799 = vpop.f32.mrf.mxu0
    %12800 = vdwg.mxu0
    %12801 = vmatpush.bf16.msra.mxu0 %v12624
    %12802 = vmatpush.bf16.msra.mxu0 %v12623
    %12803 = vmatpush.bf16.msra.mxu0 %v12622
    %12804 = vmatpush.bf16.msra.mxu0 %v12621
    %12805 = vmatpush.bf16.msra.mxu0 %v12620
    %12806 = vmatpush.bf16.msra.mxu0 %v12619
    %12807 = vmatpush.bf16.msra.mxu0 %v12618
    %12808 = vmatpush.bf16.msra.mxu0 %v12617
    %12809 = vmatmul.bf16.gmra.mxu0 %v12117
    %v12810 = vpop.f32.mrf.mxu0
    %v12811 = vadd.f32 %v12798, %v12810
    %v12812 = vpop.f32.mrf.mxu0
    %12813 = vdwg.mxu0
    %v12814 = vmax.f32 %v12811, 0.0
    %v12815 = vld [vmem:[%s12262 + $0x1] sm:$0x1]
    %v12816 = vperm.slane %v12815, 0
    %v12817 = vmul.f32 %v12814, %v12816
    %v12818 = vld [vmem:[%s12262 + $0x2] sm:$0x1]
    %v12819 = vperm.slane %v12818, 0
    %v12820 = vadd.f32 %v12817, %v12819
    %v12821 = vld [vmem:[#allocation12] sm:$0xf]
    %v12822 = vpack.c.bf16 %v12820, %v12820
    %v12824 = vsel %vm12056, %v12821, 0
    %v12827 = vsel %vm12072, %v12822, 0
    %12829 = vmatpush.bf16.msra.mxu0 0
    %12830 = vmatpush.bf16.msra.mxu0 0
    %12831 = vmatpush.bf16.msra.mxu0 0
    %12832 = vmatpush.bf16.msra.mxu0 0
    %12833 = vmatpush.bf16.msra.mxu0 0
    %12834 = vmatpush.bf16.msra.mxu0 0
    %12835 = vmatpush.bf16.msra.mxu0 0
    %12836 = vmatpush.bf16.msra.mxu0 %v12827
    %12837 = vmatmul.bf16.gmra.mxu0 %v12824
    %v12838 = vpop.f32.mrf.mxu0
    %v12839 = vadd.f32 0.0, %v12838
    %v12840 = vpop.f32.mrf.mxu0
    %12841 = vdwg.mxu0
    %v12842 = vpack.c.bf16 %v12839, %v12839
    %v12843 = vld [vmem:[#allocation13] sm:$0xf]
    %v12844 = vld [vmem:[#allocation13 + $0x4] sm:$0xf]
    %v12845 = vld [vmem:[#allocation13 + $0x8] sm:$0xf]
    %v12846 = vld [vmem:[#allocation13 + $0xc] sm:$0xf]
    %v12847 = vld [vmem:[#allocation13 + $0x10] sm:$0xf]
    %v12848 = vld [vmem:[#allocation13 + $0x14] sm:$0xf]
    %v12849 = vld [vmem:[#allocation13 + $0x18] sm:$0xf]
    %v12850 = vld [vmem:[#allocation13 + $0x1c] sm:$0xf]
    %v12851 = vld [vmem:[#allocation13 + $0x20] sm:$0xf]
    %v12852 = vld [vmem:[#allocation13 + $0x24] sm:$0xf]
    %v12853 = vld [vmem:[#allocation13 + $0x28] sm:$0xf]
    %v12854 = vld [vmem:[#allocation13 + $0x2c] sm:$0xf]
    %v12855 = vld [vmem:[#allocation13 + $0x30] sm:$0xf]
    %v12856 = vld [vmem:[#allocation13 + $0x34] sm:$0xf]
    %v12857 = vld [vmem:[#allocation13 + $0x38] sm:$0xf]
    %v12858 = vld [vmem:[#allocation13 + $0x3c] sm:$0xf]
    %v12859 = vld [vmem:[#allocation15] sm:$0x1]
    %v12860 = vperm.slane %v12859, 0
    %v12877 = vunpack.c.l.b16 %v12843
    %v12878 = vunpack.c.l.b16 %v12844
    %v12879 = vunpack.c.l.b16 %v12845
    %v12880 = vunpack.c.l.b16 %v12846
    %v12881 = vunpack.c.l.b16 %v12847
    %v12882 = vunpack.c.l.b16 %v12848
    %v12883 = vunpack.c.l.b16 %v12849
    %v12884 = vunpack.c.l.b16 %v12850
    %v12885 = vunpack.c.l.b16 %v12851
    %v12886 = vunpack.c.l.b16 %v12852
    %v12887 = vunpack.c.l.b16 %v12853
    %v12888 = vunpack.c.l.b16 %v12854
    %v12889 = vunpack.c.l.b16 %v12855
    %v12890 = vunpack.c.l.b16 %v12856
    %v12891 = vunpack.c.l.b16 %v12857
    %v12892 = vunpack.c.l.b16 %v12858
    %v12893 = vpack.c.b16 %v12878, %v12877
    %v12894 = vpack.c.b16 %v12880, %v12879
    %v12895 = vpack.c.b16 %v12882, %v12881
    %v12896 = vpack.c.b16 %v12884, %v12883
    %v12897 = vpack.c.b16 %v12886, %v12885
    %v12898 = vpack.c.b16 %v12888, %v12887
    %v12899 = vpack.c.b16 %v12890, %v12889
    %v12900 = vpack.c.b16 %v12892, %v12891
    %12909 = vmatpush.bf16.msra.mxu0 %v12900
    %12910 = vmatpush.bf16.msra.mxu0 %v12899
    %12911 = vmatpush.bf16.msra.mxu0 %v12898
    %12912 = vmatpush.bf16.msra.mxu0 %v12897
    %12913 = vmatpush.bf16.msra.mxu0 %v12896
    %12914 = vmatpush.bf16.msra.mxu0 %v12895
    %12915 = vmatpush.bf16.msra.mxu0 %v12894
    %12916 = vmatpush.bf16.msra.mxu0 %v12893
    %12917 = vmatmul.bf16.gmra.mxu0 %v12842
    %v12918 = vpop.f32.mrf.mxu0
    %v12919 = vadd.f32 %v12860, %v12918
    %v12920 = vpop.f32.mrf.mxu0
    %12921 = vdwg.mxu0
    %v12922 = vmax.f32 %v12919, 0.0
    %v12923 = vpack.c.bf16 %v12922, %v12922
    %s12924 = scalar_lea.vmem [#allocation13], 64
    %v12925 = vld [vmem:[%s12924] sm:$0xf]
    %v12926 = vld [vmem:[%s12924 + $0x4] sm:$0xf]
    %v12927 = vld [vmem:[%s12924 + $0x8] sm:$0xf]
    %v12928 = vld [vmem:[%s12924 + $0xc] sm:$0xf]
    %v12929 = vld [vmem:[%s12924 + $0x10] sm:$0xf]
    %v12930 = vld [vmem:[%s12924 + $0x14] sm:$0xf]
    %v12931 = vld [vmem:[%s12924 + $0x18] sm:$0xf]
    %v12932 = vld [vmem:[%s12924 + $0x1c] sm:$0xf]
    %v12933 = vld [vmem:[%s12924 + $0x20] sm:$0xf]
    %v12934 = vld [vmem:[%s12924 + $0x24] sm:$0xf]
    %v12935 = vld [vmem:[%s12924 + $0x28] sm:$0xf]
    %v12936 = vld [vmem:[%s12924 + $0x2c] sm:$0xf]
    %v12937 = vld [vmem:[%s12924 + $0x30] sm:$0xf]
    %v12938 = vld [vmem:[%s12924 + $0x34] sm:$0xf]
    %v12939 = vld [vmem:[%s12924 + $0x38] sm:$0xf]
    %v12940 = vld [vmem:[%s12924 + $0x3c] sm:$0xf]
    %v12941 = vld [vmem:[#allocation15 + $0x1] sm:$0x1]
    %v12942 = vperm.slane %v12941, 0
    %v12959 = vunpack.c.l.b16 %v12925
    %v12960 = vunpack.c.l.b16 %v12926
    %v12961 = vunpack.c.l.b16 %v12927
    %v12962 = vunpack.c.l.b16 %v12928
    %v12963 = vunpack.c.l.b16 %v12929
    %v12964 = vunpack.c.l.b16 %v12930
    %v12965 = vunpack.c.l.b16 %v12931
    %v12966 = vunpack.c.l.b16 %v12932
    %v12967 = vunpack.c.l.b16 %v12933
    %v12968 = vunpack.c.l.b16 %v12934
    %v12969 = vunpack.c.l.b16 %v12935
    %v12970 = vunpack.c.l.b16 %v12936
    %v12971 = vunpack.c.l.b16 %v12937
    %v12972 = vunpack.c.l.b16 %v12938
    %v12973 = vunpack.c.l.b16 %v12939
    %v12974 = vunpack.c.l.b16 %v12940
    %v12975 = vpack.c.b16 %v12960, %v12959
    %v12976 = vpack.c.b16 %v12962, %v12961
    %v12977 = vpack.c.b16 %v12964, %v12963
    %v12978 = vpack.c.b16 %v12966, %v12965
    %v12979 = vpack.c.b16 %v12968, %v12967
    %v12980 = vpack.c.b16 %v12970, %v12969
    %v12981 = vpack.c.b16 %v12972, %v12971
    %v12982 = vpack.c.b16 %v12974, %v12973
    %12991 = vmatpush.bf16.msra.mxu0 %v12982
    %12992 = vmatpush.bf16.msra.mxu0 %v12981
    %12993 = vmatpush.bf16.msra.mxu0 %v12980
    %12994 = vmatpush.bf16.msra.mxu0 %v12979
    %12995 = vmatpush.bf16.msra.mxu0 %v12978
    %12996 = vmatpush.bf16.msra.mxu0 %v12977
    %12997 = vmatpush.bf16.msra.mxu0 %v12976
    %12998 = vmatpush.bf16.msra.mxu0 %v12975
    %12999 = vmatmul.bf16.gmra.mxu0 %v12923
    %v13000 = vpop.f32.mrf.mxu0
    %v13001 = vadd.f32 %v12942, %v13000
    %v13002 = vpop.f32.mrf.mxu0
    %13003 = vdwg.mxu0
    %13004 = vst [vmem:[%s13] sm:$0xff] %v13001
    // Predicated region
    $region90: #{audio_classifier_forward.1} parent=1 // pred_check
      _
    $region91: #{audio_classifier_forward.1} parent=1 // pred_check_branch
      %13006 = sbr.rel (0) target = $region93
    $region92: #{audio_classifier_forward.1} parent=1 // pred_region
      _
    $region93: #{audio_classifier_forward.1} parent=1 // pred_fallthru
      _
    // Predicated region
    $region94: #{audio_classifier_forward.1} parent=1 // pred_check
      _
    $region95: #{audio_classifier_forward.1} parent=1 // pred_check_branch
      %13008 = sbr.rel (0) target = $region97
    $region96: #{audio_classifier_forward.1} parent=1 // pred_region
      _
    $region97: #{audio_classifier_forward.1} parent=1 // pred_fallthru
      _
    %13009 = vsyncpa [#allocation3], 1
    %13010 = vsyncpa [#allocation5], 1
    %13011 = vsyncpa [#allocation8], 1
    %13012 = vsyncpa [#allocation11], 1
    %13013 = vsyncpa [#allocation14], 1

</llo_original>
